<compile_context>
chip_gen: v7x
topology: tpu7x:2x2x1
jax: 0.10.0
libtpu: 0.0.40
codegen_flags: <defaults>
</compile_context>

<pallas_src>
import functools

import numpy as np
import jax
import jax.numpy as jnp
from jax.experimental import pallas as pl
from jax.experimental.pallas import tpu as pltpu


def _round_up(x, m):
    return ((x + m - 1) // m) * m


# --------------------------------------------------------------------------
# Pallas kernel: fused X @ W + b -> ReLU, single full-array block.
# Operands bf16 (MXU native), accumulation + epilogue f32, store bf16.
# --------------------------------------------------------------------------
def _matmul_bias_relu_kernel(x_ref, w_ref, b_ref, o_ref):
    acc = jnp.dot(x_ref[...], w_ref[...], preferred_element_type=jnp.float32)
    acc = acc + b_ref[...]                      # (1, N) f32 broadcast
    acc = jnp.maximum(acc, 0.0)
    o_ref[...] = acc.astype(o_ref.dtype)


def matmul_bias_relu(x_bf16, w_bf16, b_row_f32):
    """relu(x @ w + b) in one grid step. x:(M,K) bf16, w:(K,N) bf16, b:(1,N) f32.
    Returns (M, N) bf16."""
    M, K = x_bf16.shape
    K2, N = w_bf16.shape
    assert K == K2, (K, K2)
    return pl.pallas_call(
        _matmul_bias_relu_kernel,
        out_shape=jax.ShapeDtypeStruct((M, N), jnp.bfloat16),
        grid_spec=pltpu.PrefetchScalarGridSpec(
            num_scalar_prefetch=0,
            grid=(1,),
            in_specs=[
                pl.BlockSpec((M, K), lambda i: (0, 0)),   # full activations
                pl.BlockSpec((K, N), lambda i: (0, 0)),   # full weight
                pl.BlockSpec((1, N), lambda i: (0, 0)),   # bias row
            ],
            out_specs=pl.BlockSpec((M, N), lambda i: (0, 0)),
        ),
        compiler_params=pltpu.CompilerParams(
            dimension_semantics=("arbitrary",)),
    )(x_bf16, w_bf16, b_row_f32)


# --------------------------------------------------------------------------
# Fused head: flatten-consuming Linear(1152,512) -> [actor | critic], one call.
# (No ReLU after the linear — matches the PyTorch forward exactly.)
# --------------------------------------------------------------------------
def _head_kernel(x_ref, w1_ref, b1_ref, w2_ref, b2_ref, o_ref):
    h = jnp.dot(x_ref[...], w1_ref[...], preferred_element_type=jnp.float32)
    h = h + b1_ref[...]
    out = jnp.dot(h.astype(jnp.bfloat16), w2_ref[...],
                  preferred_element_type=jnp.float32)
    o_ref[...] = out + b2_ref[...]


def fused_head(x_flat_bf16, w1, b1, w2, b2):
    """x_flat:(B,1152) bf16 -> (B, N2) f32; both matmuls in one pallas_call."""
    B, K = x_flat_bf16.shape
    Hn = w1.shape[1]
    N2 = w2.shape[1]
    # Defensive tiny row pad (2 -> 8 sublanes); a few KB, sliced off after.
    Mp = _round_up(B, 8)
    xp = jnp.pad(x_flat_bf16, ((0, Mp - B), (0, 0)))

    out = pl.pallas_call(
        _head_kernel,
        out_shape=jax.ShapeDtypeStruct((Mp, N2), jnp.float32),
        grid_spec=pltpu.PrefetchScalarGridSpec(
            num_scalar_prefetch=0,
            grid=(1,),
            in_specs=[
                pl.BlockSpec((Mp, K), lambda i: (0, 0)),    # flattened acts
                pl.BlockSpec((K, Hn), lambda i: (0, 0)),    # linear W (bf16)
                pl.BlockSpec((1, Hn), lambda i: (0, 0)),    # linear b (f32)
                pl.BlockSpec((Hn, N2), lambda i: (0, 0)),   # [actor|critic] W
                pl.BlockSpec((1, N2), lambda i: (0, 0)),    # [actor|critic] b
            ],
            out_specs=pl.BlockSpec((Mp, N2), lambda i: (0, 0)),
        ),
        compiler_params=pltpu.CompilerParams(
            dimension_semantics=("arbitrary",)),
    )(xp, w1, b1, w2, b2)
    return out[:B]


# --------------------------------------------------------------------------
# Conv2d(k=3, stride=2, pad=1) + bias + ReLU: XLA im2col + Pallas matmul.
# --------------------------------------------------------------------------
def conv2d_s2_p1_relu(x_nhwc_bf16, w_bf16, b_row_f32):
    B, H, W, Cin = x_nhwc_bf16.shape
    Kp, Cout = w_bf16.shape                      # Kp >= 9*Cin (pre-padded once)
    k_pad = Kp - 9 * Cin
    Ho, Wo = (H + 1) // 2, (W + 1) // 2
    xp = jnp.pad(x_nhwc_bf16, ((0, 0), (1, 1), (1, 1), (0, 0)))
    # TODO(synk): the strided 3x3 tap gather stays in XLA; in-kernel strided
    # VMEM slicing over non-lane spatial dims is risky to lower cleanly.
    taps = [xp[:, ky:ky + 2 * Ho:2, kx:kx + 2 * Wo:2, :]
            for ky in range(3) for kx in range(3)]
    if k_pad:
        # Fold the K alignment pad into the concatenate (conv1 only: 36 -> 128).
        taps.append(jnp.zeros((B, Ho, Wo, k_pad), x_nhwc_bf16.dtype))
    p = jnp.concatenate(taps, axis=-1).reshape(B * Ho * Wo, Kp)
    y = matmul_bias_relu(p, w_bf16, b_row_f32)
    return y.reshape(B, Ho, Wo, Cout)


# --------------------------------------------------------------------------
# Deterministic parameter init (orthogonal, gain = sqrt(2); bias = 0),
# mirroring nn.init.orthogonal_ on the PyTorch weight layouts.
# --------------------------------------------------------------------------
def orthogonal_init(key, shape, gain):
    rows = shape[0]
    cols = int(np.prod(shape[1:]))
    n, m = max(rows, cols), min(rows, cols)
    a = jax.random.normal(key, (n, m), dtype=jnp.float32)
    q, r = jnp.linalg.qr(a)
    q = q * jnp.sign(jnp.diagonal(r))
    if rows < cols:
        q = q.T
    return (gain * q[:rows, :cols]).reshape(shape).astype(jnp.float32)


def make_params(key, num_inputs, num_actions):
    gain = float(np.sqrt(2.0))
    ks = jax.random.split(key, 7)
    return {
        "conv1_w": orthogonal_init(ks[0], (32, num_inputs, 3, 3), gain),
        "conv1_b": jnp.zeros((32,), jnp.float32),
        "conv2_w": orthogonal_init(ks[1], (32, 32, 3, 3), gain),
        "conv2_b": jnp.zeros((32,), jnp.float32),
        "conv3_w": orthogonal_init(ks[2], (32, 32, 3, 3), gain),
        "conv3_b": jnp.zeros((32,), jnp.float32),
        "conv4_w": orthogonal_init(ks[3], (32, 32, 3, 3), gain),
        "conv4_b": jnp.zeros((32,), jnp.float32),
        "linear_w": orthogonal_init(ks[4], (512, 32 * 6 * 6), gain),
        "linear_b": jnp.zeros((512,), jnp.float32),
        "critic_w": orthogonal_init(ks[5], (1, 512), gain),
        "critic_b": jnp.zeros((1,), jnp.float32),
        "actor_w": orthogonal_init(ks[6], (num_actions, 512), gain),
        "actor_b": jnp.zeros((num_actions,), jnp.float32),
    }


def prepare_inference_params(params):
    """One-time (hoisted) layout / padding / bf16 prep of all weights."""
    prep = {}
    for i in range(1, 5):
        w = params[f"conv{i}_w"]                              # (Cout, Cin, 3, 3)
        cout, cin = w.shape[0], w.shape[1]
        # (Cout,Cin,kh,kw) -> (kh,kw,Cin,Cout) -> (9*Cin, Cout): matches im2col
        # tap ordering (ky, kx, Cin).
        wm = jnp.transpose(w, (2, 3, 1, 0)).reshape(9 * cin, cout)
        # Only conv1 (K=36) gets K padded (to 128); conv2-4 keep K=288 as-is.
        kp = _round_up(9 * cin, 128) if 9 * cin < 128 else 9 * cin
        prep[f"conv{i}_w"] = jnp.pad(
            wm, ((0, kp - 9 * cin), (0, 0))).astype(jnp.bfloat16)
        prep[f"conv{i}_b"] = params[f"conv{i}_b"].reshape(1, cout).astype(jnp.float32)

    # Fold torch's NCHW x.view(B,-1) flatten into the linear weight by
    # permuting its input rows to consume the NHWC flatten directly.
    c, h, w = 32, 6, 6
    nchw_idx = np.arange(c * h * w).reshape(c, h, w)
    perm = nchw_idx.transpose(1, 2, 0).reshape(-1)            # nhwc pos -> nchw idx
    w1 = params["linear_w"].T[perm, :]                        # (1152, 512)
    prep["linear_w"] = w1.astype(jnp.bfloat16)
    prep["linear_b"] = params["linear_b"].reshape(1, -1).astype(jnp.float32)

    # Fused actor|critic head: one (512, NA+1) matmul, padded to 128 lanes.
    w2 = jnp.concatenate([params["actor_w"].T, params["critic_w"].T], axis=1)
    b2 = jnp.concatenate([params["actor_b"], params["critic_b"]])
    n2 = w2.shape[1]
    n2p = _round_up(n2, 128)
    prep["head_w"] = jnp.pad(w2, ((0, 0), (0, n2p - n2))).astype(jnp.bfloat16)
    prep["head_b"] = jnp.pad(b2, (0, n2p - n2)).reshape(1, n2p).astype(jnp.float32)
    return prep


# --------------------------------------------------------------------------
# Forward pass (== PPOAgent.forward). bf16 MXU operands, f32 accumulation;
# expect ~1e-2 relative deviation from the f32 torch reference.
# --------------------------------------------------------------------------
@functools.partial(jax.jit, static_argnames=("num_actions",))
def ppo_agent_forward(prep, x_nchw, *, num_actions):
    # NCHW -> NHWC + single bf16 cast at the boundary.
    x = jnp.transpose(x_nchw.astype(jnp.bfloat16), (0, 2, 3, 1))
    for i in range(1, 5):
        x = conv2d_s2_p1_relu(x, prep[f"conv{i}_w"], prep[f"conv{i}_b"])
    B = x.shape[0]
    # NHWC flatten is a free contiguous reshape; linear_w rows are pre-permuted.
    x_flat = x.reshape(B, -1)
    head = fused_head(x_flat, prep["linear_w"], prep["linear_b"],
                      prep["head_w"], prep["head_b"])
    actor = head[:, :num_actions]
    critic = head[:, num_actions:num_actions + 1]
    return actor, critic


# --------------------------------------------------------------------------
# Pure-XLA f32 reference (mirrors the PyTorch module op-for-op).
# --------------------------------------------------------------------------
@functools.partial(jax.jit, static_argnames=("num_actions",))
def reference_forward(params, x_nchw, *, num_actions):
    hp = jax.lax.Precision.HIGHEST
    x = x_nchw.astype(jnp.float32)
    for i in range(1, 5):
        w = params[f"conv{i}_w"]
        b = params[f"conv{i}_b"]
        x = jax.lax.conv_general_dilated(
            x, w, window_strides=(2, 2), padding=((1, 1), (1, 1)),
            dimension_numbers=("NCHW", "OIHW", "NCHW"), precision=hp)
        x = jnp.maximum(x + b.reshape(1, -1, 1, 1), 0.0)
    xf = x.reshape(x.shape[0], -1)                            # NCHW flatten
    h = jnp.dot(xf, params["linear_w"].T, precision=hp) + params["linear_b"]
    actor = jnp.dot(h, params["actor_w"].T, precision=hp) + params["actor_b"]
    critic = jnp.dot(h, params["critic_w"].T, precision=hp) + params["critic_b"]
    return actor, critic


if __name__ == "__main__":
    num_inputs, num_actions = 4, 7
    batch = 2

    key = jax.random.PRNGKey(0)
    pkey, xkey = jax.random.split(key)
    params = make_params(pkey, num_inputs, num_actions)
    prep = prepare_inference_params(params)

    # 84x84 input is forced by Linear(32*6*6, 512) in the module
    # (84 -> 42 -> 21 -> 11 -> 6 under four k=3 / stride=2 / pad=1 convs).
    x = jax.random.normal(xkey, (batch, num_inputs, 84, 84), dtype=jnp.float32)

    actor, critic = ppo_agent_forward(prep, x, num_actions=num_actions)
    jax.block_until_ready((actor, critic))

    assert actor.shape == (batch, num_actions), actor.shape
    assert critic.shape == (batch, 1), critic.shape
    assert actor.dtype == jnp.float32 and critic.dtype == jnp.float32
    assert bool(jnp.all(jnp.isfinite(actor))) and bool(jnp.all(jnp.isfinite(critic)))

    # Numerical check vs. f32 reference (bf16 MXU operands -> loose tolerance).
    actor_ref, critic_ref = reference_forward(params, x, num_actions=num_actions)
    np.testing.assert_allclose(np.asarray(actor), np.asarray(actor_ref),
                               rtol=0.15, atol=0.3)
    np.testing.assert_allclose(np.asarray(critic), np.asarray(critic_ref),
                               rtol=0.15, atol=0.3)

    print("KERNEL_OK")
</pallas_src>

<mosaic_0001>
module attributes {stable_mosaic.version = 11 : i64} {
  func.func @_matmul_bias_relu_kernel(%arg0: i32, %arg1: memref<3528x128xbf16, #tpu.memory_space<vmem>>, %arg2: memref<128x32xbf16, #tpu.memory_space<vmem>>, %arg3: memref<1x32xf32, #tpu.memory_space<vmem>>, %arg4: memref<3528x32xbf16, #tpu.memory_space<vmem>>) attributes {dimension_semantics = [#tpu.dimension_semantics<arbitrary>], iteration_bounds = array<i64: 1>, scalar_prefetch = 0 : i64, scratch_operands = 0 : i64, tpu.core_type = #tpu.core_type<tc>, window_params = [{pipeline_mode = #tpu.pipeline_mode<synchronous>, transform_indices = @transform_0, window_bounds = array<i64: 3528, 128>}, {pipeline_mode = #tpu.pipeline_mode<synchronous>, transform_indices = @transform_1, window_bounds = array<i64: 128, 32>}, {pipeline_mode = #tpu.pipeline_mode<synchronous>, transform_indices = @transform_2, window_bounds = array<i64: 1, 32>}, {pipeline_mode = #tpu.pipeline_mode<synchronous>, transform_indices = @transform_3, window_bounds = array<i64: 3528, 32>}]} {
    %c0 = arith.constant 0 : index
    %c0_0 = arith.constant 0 : index
    %0 = vector.load %arg1[%c0, %c0_0] : memref<3528x128xbf16, #tpu.memory_space<vmem>>, vector<3528x128xbf16>
    %c0_1 = arith.constant 0 : index
    %c0_2 = arith.constant 0 : index
    %1 = vector.load %arg2[%c0_1, %c0_2] : memref<128x32xbf16, #tpu.memory_space<vmem>>, vector<128x32xbf16>
    %cst = arith.constant dense<0.000000e+00> : vector<3528x32xf32>
    %2 = tpu.matmul %0, %1, %cst {dimension_numbers = #tpu.dot_dimension_numbers<[1], [0], [0], [1], [0, 0, 1, 1], [], []>} : vector<3528x128xbf16>, vector<128x32xbf16>, vector<3528x32xf32> -> vector<3528x32xf32>
    %c0_3 = arith.constant 0 : index
    %c0_4 = arith.constant 0 : index
    %3 = vector.load %arg3[%c0_3, %c0_4] : memref<1x32xf32, #tpu.memory_space<vmem>>, vector<1x32xf32>
    %4 = vector.broadcast %3 : vector<1x32xf32> to vector<3528x32xf32>
    %5 = arith.addf %2, %4 : vector<3528x32xf32>
    %cst_5 = arith.constant 0.000000e+00 : f32
    %6 = vector.broadcast %cst_5 : f32 to vector<3528x32xf32>
    %7 = arith.maximumf %5, %6 : vector<3528x32xf32>
    %8 = arith.truncf %7 : vector<3528x32xf32> to vector<3528x32xbf16>
    %c0_6 = arith.constant 0 : index
    %c0_7 = arith.constant 0 : index
    %9 = vector.load %arg4[%c0_6, %c0_7] : memref<3528x32xbf16, #tpu.memory_space<vmem>>, vector<3528x32xbf16>
    tpu.vector_store %arg4[%c0_6, %c0_7], %8 {strides = array<i32>} : memref<3528x32xbf16, #tpu.memory_space<vmem>>, vector<3528x32xbf16>,
    return
  }
  func.func @transform_0(%arg0: i32) -> (i32, i32) {
    %c0_i32 = arith.constant 0 : i32
    %c0_i32_0 = arith.constant 0 : i32
    %c0_i32_1 = arith.constant 0 : i32
    return %c0_i32, %c0_i32_0 : i32, i32
  }
  func.func @transform_1(%arg0: i32) -> (i32, i32) {
    %c0_i32 = arith.constant 0 : i32
    %c0_i32_0 = arith.constant 0 : i32
    %c0_i32_1 = arith.constant 0 : i32
    return %c0_i32, %c0_i32_0 : i32, i32
  }
  func.func @transform_2(%arg0: i32) -> (i32, i32) {
    %c0_i32 = arith.constant 0 : i32
    %c0_i32_0 = arith.constant 0 : i32
    %c0_i32_1 = arith.constant 0 : i32
    return %c0_i32, %c0_i32_0 : i32, i32
  }
  func.func @transform_3(%arg0: i32) -> (i32, i32) {
    %c0_i32 = arith.constant 0 : i32
    %c0_i32_0 = arith.constant 0 : i32
    %c0_i32_1 = arith.constant 0 : i32
    return %c0_i32, %c0_i32_0 : i32, i32
  }
}

module attributes {stable_mosaic.version = 11 : i64} {
  func.func @_matmul_bias_relu_kernel(%arg0: i32, %arg1: memref<882x288xbf16, #tpu.memory_space<vmem>>, %arg2: memref<288x32xbf16, #tpu.memory_space<vmem>>, %arg3: memref<1x32xf32, #tpu.memory_space<vmem>>, %arg4: memref<882x32xbf16, #tpu.memory_space<vmem>>) attributes {dimension_semantics = [#tpu.dimension_semantics<arbitrary>], iteration_bounds = array<i64: 1>, scalar_prefetch = 0 : i64, scratch_operands = 0 : i64, tpu.core_type = #tpu.core_type<tc>, window_params = [{pipeline_mode = #tpu.pipeline_mode<synchronous>, transform_indices = @transform_0, window_bounds = array<i64: 882, 288>}, {pipeline_mode = #tpu.pipeline_mode<synchronous>, transform_indices = @transform_1, window_bounds = array<i64: 288, 32>}, {pipeline_mode = #tpu.pipeline_mode<synchronous>, transform_indices = @transform_2, window_bounds = array<i64: 1, 32>}, {pipeline_mode = #tpu.pipeline_mode<synchronous>, transform_indices = @transform_3, window_bounds = array<i64: 882, 32>}]} {
    %c0 = arith.constant 0 : index
    %c0_0 = arith.constant 0 : index
    %0 = vector.load %arg1[%c0, %c0_0] : memref<882x288xbf16, #tpu.memory_space<vmem>>, vector<882x288xbf16>
    %c0_1 = arith.constant 0 : index
    %c0_2 = arith.constant 0 : index
    %1 = vector.load %arg2[%c0_1, %c0_2] : memref<288x32xbf16, #tpu.memory_space<vmem>>, vector<288x32xbf16>
    %cst = arith.constant dense<0.000000e+00> : vector<882x32xf32>
    %2 = tpu.matmul %0, %1, %cst {dimension_numbers = #tpu.dot_dimension_numbers<[1], [0], [0], [1], [0, 0, 1, 1], [], []>} : vector<882x288xbf16>, vector<288x32xbf16>, vector<882x32xf32> -> vector<882x32xf32>
    %c0_3 = arith.constant 0 : index
    %c0_4 = arith.constant 0 : index
    %3 = vector.load %arg3[%c0_3, %c0_4] : memref<1x32xf32, #tpu.memory_space<vmem>>, vector<1x32xf32>
    %4 = vector.broadcast %3 : vector<1x32xf32> to vector<882x32xf32>
    %5 = arith.addf %2, %4 : vector<882x32xf32>
    %cst_5 = arith.constant 0.000000e+00 : f32
    %6 = vector.broadcast %cst_5 : f32 to vector<882x32xf32>
    %7 = arith.maximumf %5, %6 : vector<882x32xf32>
    %8 = arith.truncf %7 : vector<882x32xf32> to vector<882x32xbf16>
    %c0_6 = arith.constant 0 : index
    %c0_7 = arith.constant 0 : index
    %9 = vector.load %arg4[%c0_6, %c0_7] : memref<882x32xbf16, #tpu.memory_space<vmem>>, vector<882x32xbf16>
    tpu.vector_store %arg4[%c0_6, %c0_7], %8 {strides = array<i32>} : memref<882x32xbf16, #tpu.memory_space<vmem>>, vector<882x32xbf16>,
    return
  }
  func.func @transform_0(%arg0: i32) -> (i32, i32) {
    %c0_i32 = arith.constant 0 : i32
    %c0_i32_0 = arith.constant 0 : i32
    %c0_i32_1 = arith.constant 0 : i32
    return %c0_i32, %c0_i32_0 : i32, i32
  }
  func.func @transform_1(%arg0: i32) -> (i32, i32) {
    %c0_i32 = arith.constant 0 : i32
    %c0_i32_0 = arith.constant 0 : i32
    %c0_i32_1 = arith.constant 0 : i32
    return %c0_i32, %c0_i32_0 : i32, i32
  }
  func.func @transform_2(%arg0: i32) -> (i32, i32) {
    %c0_i32 = arith.constant 0 : i32
    %c0_i32_0 = arith.constant 0 : i32
    %c0_i32_1 = arith.constant 0 : i32
    return %c0_i32, %c0_i32_0 : i32, i32
  }
  func.func @transform_3(%arg0: i32) -> (i32, i32) {
    %c0_i32 = arith.constant 0 : i32
    %c0_i32_0 = arith.constant 0 : i32
    %c0_i32_1 = arith.constant 0 : i32
    return %c0_i32, %c0_i32_0 : i32, i32
  }
}

module attributes {stable_mosaic.version = 11 : i64} {
  func.func @_matmul_bias_relu_kernel(%arg0: i32, %arg1: memref<242x288xbf16, #tpu.memory_space<vmem>>, %arg2: memref<288x32xbf16, #tpu.memory_space<vmem>>, %arg3: memref<1x32xf32, #tpu.memory_space<vmem>>, %arg4: memref<242x32xbf16, #tpu.memory_space<vmem>>) attributes {dimension_semantics = [#tpu.dimension_semantics<arbitrary>], iteration_bounds = array<i64: 1>, scalar_prefetch = 0 : i64, scratch_operands = 0 : i64, tpu.core_type = #tpu.core_type<tc>, window_params = [{pipeline_mode = #tpu.pipeline_mode<synchronous>, transform_indices = @transform_0, window_bounds = array<i64: 242, 288>}, {pipeline_mode = #tpu.pipeline_mode<synchronous>, transform_indices = @transform_1, window_bounds = array<i64: 288, 32>}, {pipeline_mode = #tpu.pipeline_mode<synchronous>, transform_indices = @transform_2, window_bounds = array<i64: 1, 32>}, {pipeline_mode = #tpu.pipeline_mode<synchronous>, transform_indices = @transform_3, window_bounds = array<i64: 242, 32>}]} {
    %c0 = arith.constant 0 : index
    %c0_0 = arith.constant 0 : index
    %0 = vector.load %arg1[%c0, %c0_0] : memref<242x288xbf16, #tpu.memory_space<vmem>>, vector<242x288xbf16>
    %c0_1 = arith.constant 0 : index
    %c0_2 = arith.constant 0 : index
    %1 = vector.load %arg2[%c0_1, %c0_2] : memref<288x32xbf16, #tpu.memory_space<vmem>>, vector<288x32xbf16>
    %cst = arith.constant dense<0.000000e+00> : vector<242x32xf32>
    %2 = tpu.matmul %0, %1, %cst {dimension_numbers = #tpu.dot_dimension_numbers<[1], [0], [0], [1], [0, 0, 1, 1], [], []>} : vector<242x288xbf16>, vector<288x32xbf16>, vector<242x32xf32> -> vector<242x32xf32>
    %c0_3 = arith.constant 0 : index
    %c0_4 = arith.constant 0 : index
    %3 = vector.load %arg3[%c0_3, %c0_4] : memref<1x32xf32, #tpu.memory_space<vmem>>, vector<1x32xf32>
    %4 = vector.broadcast %3 : vector<1x32xf32> to vector<242x32xf32>
    %5 = arith.addf %2, %4 : vector<242x32xf32>
    %cst_5 = arith.constant 0.000000e+00 : f32
    %6 = vector.broadcast %cst_5 : f32 to vector<242x32xf32>
    %7 = arith.maximumf %5, %6 : vector<242x32xf32>
    %8 = arith.truncf %7 : vector<242x32xf32> to vector<242x32xbf16>
    %c0_6 = arith.constant 0 : index
    %c0_7 = arith.constant 0 : index
    %9 = vector.load %arg4[%c0_6, %c0_7] : memref<242x32xbf16, #tpu.memory_space<vmem>>, vector<242x32xbf16>
    tpu.vector_store %arg4[%c0_6, %c0_7], %8 {strides = array<i32>} : memref<242x32xbf16, #tpu.memory_space<vmem>>, vector<242x32xbf16>,
    return
  }
  func.func @transform_0(%arg0: i32) -> (i32, i32) {
    %c0_i32 = arith.constant 0 : i32
    %c0_i32_0 = arith.constant 0 : i32
    %c0_i32_1 = arith.constant 0 : i32
    return %c0_i32, %c0_i32_0 : i32, i32
  }
  func.func @transform_1(%arg0: i32) -> (i32, i32) {
    %c0_i32 = arith.constant 0 : i32
    %c0_i32_0 = arith.constant 0 : i32
    %c0_i32_1 = arith.constant 0 : i32
    return %c0_i32, %c0_i32_0 : i32, i32
  }
  func.func @transform_2(%arg0: i32) -> (i32, i32) {
    %c0_i32 = arith.constant 0 : i32
    %c0_i32_0 = arith.constant 0 : i32
    %c0_i32_1 = arith.constant 0 : i32
    return %c0_i32, %c0_i32_0 : i32, i32
  }
  func.func @transform_3(%arg0: i32) -> (i32, i32) {
    %c0_i32 = arith.constant 0 : i32
    %c0_i32_0 = arith.constant 0 : i32
    %c0_i32_1 = arith.constant 0 : i32
    return %c0_i32, %c0_i32_0 : i32, i32
  }
}

module attributes {stable_mosaic.version = 11 : i64} {
  func.func @_matmul_bias_relu_kernel(%arg0: i32, %arg1: memref<72x288xbf16, #tpu.memory_space<vmem>>, %arg2: memref<288x32xbf16, #tpu.memory_space<vmem>>, %arg3: memref<1x32xf32, #tpu.memory_space<vmem>>, %arg4: memref<72x32xbf16, #tpu.memory_space<vmem>>) attributes {dimension_semantics = [#tpu.dimension_semantics<arbitrary>], iteration_bounds = array<i64: 1>, scalar_prefetch = 0 : i64, scratch_operands = 0 : i64, tpu.core_type = #tpu.core_type<tc>, window_params = [{pipeline_mode = #tpu.pipeline_mode<synchronous>, transform_indices = @transform_0, window_bounds = array<i64: 72, 288>}, {pipeline_mode = #tpu.pipeline_mode<synchronous>, transform_indices = @transform_1, window_bounds = array<i64: 288, 32>}, {pipeline_mode = #tpu.pipeline_mode<synchronous>, transform_indices = @transform_2, window_bounds = array<i64: 1, 32>}, {pipeline_mode = #tpu.pipeline_mode<synchronous>, transform_indices = @transform_3, window_bounds = array<i64: 72, 32>}]} {
    %c0 = arith.constant 0 : index
    %c0_0 = arith.constant 0 : index
    %0 = vector.load %arg1[%c0, %c0_0] : memref<72x288xbf16, #tpu.memory_space<vmem>>, vector<72x288xbf16>
    %c0_1 = arith.constant 0 : index
    %c0_2 = arith.constant 0 : index
    %1 = vector.load %arg2[%c0_1, %c0_2] : memref<288x32xbf16, #tpu.memory_space<vmem>>, vector<288x32xbf16>
    %cst = arith.constant dense<0.000000e+00> : vector<72x32xf32>
    %2 = tpu.matmul %0, %1, %cst {dimension_numbers = #tpu.dot_dimension_numbers<[1], [0], [0], [1], [0, 0, 1, 1], [], []>} : vector<72x288xbf16>, vector<288x32xbf16>, vector<72x32xf32> -> vector<72x32xf32>
    %c0_3 = arith.constant 0 : index
    %c0_4 = arith.constant 0 : index
    %3 = vector.load %arg3[%c0_3, %c0_4] : memref<1x32xf32, #tpu.memory_space<vmem>>, vector<1x32xf32>
    %4 = vector.broadcast %3 : vector<1x32xf32> to vector<72x32xf32>
    %5 = arith.addf %2, %4 : vector<72x32xf32>
    %cst_5 = arith.constant 0.000000e+00 : f32
    %6 = vector.broadcast %cst_5 : f32 to vector<72x32xf32>
    %7 = arith.maximumf %5, %6 : vector<72x32xf32>
    %8 = arith.truncf %7 : vector<72x32xf32> to vector<72x32xbf16>
    %c0_6 = arith.constant 0 : index
    %c0_7 = arith.constant 0 : index
    %9 = vector.load %arg4[%c0_6, %c0_7] : memref<72x32xbf16, #tpu.memory_space<vmem>>, vector<72x32xbf16>
    tpu.vector_store %arg4[%c0_6, %c0_7], %8 {strides = array<i32>} : memref<72x32xbf16, #tpu.memory_space<vmem>>, vector<72x32xbf16>,
    return
  }
  func.func @transform_0(%arg0: i32) -> (i32, i32) {
    %c0_i32 = arith.constant 0 : i32
    %c0_i32_0 = arith.constant 0 : i32
    %c0_i32_1 = arith.constant 0 : i32
    return %c0_i32, %c0_i32_0 : i32, i32
  }
  func.func @transform_1(%arg0: i32) -> (i32, i32) {
    %c0_i32 = arith.constant 0 : i32
    %c0_i32_0 = arith.constant 0 : i32
    %c0_i32_1 = arith.constant 0 : i32
    return %c0_i32, %c0_i32_0 : i32, i32
  }
  func.func @transform_2(%arg0: i32) -> (i32, i32) {
    %c0_i32 = arith.constant 0 : i32
    %c0_i32_0 = arith.constant 0 : i32
    %c0_i32_1 = arith.constant 0 : i32
    return %c0_i32, %c0_i32_0 : i32, i32
  }
  func.func @transform_3(%arg0: i32) -> (i32, i32) {
    %c0_i32 = arith.constant 0 : i32
    %c0_i32_0 = arith.constant 0 : i32
    %c0_i32_1 = arith.constant 0 : i32
    return %c0_i32, %c0_i32_0 : i32, i32
  }
}

module attributes {stable_mosaic.version = 11 : i64} {
  func.func @_head_kernel(%arg0: i32, %arg1: memref<8x1152xbf16, #tpu.memory_space<vmem>>, %arg2: memref<1152x512xbf16, #tpu.memory_space<vmem>>, %arg3: memref<1x512xf32, #tpu.memory_space<vmem>>, %arg4: memref<512x128xbf16, #tpu.memory_space<vmem>>, %arg5: memref<1x128xf32, #tpu.memory_space<vmem>>, %arg6: memref<8x128xf32, #tpu.memory_space<vmem>>) attributes {dimension_semantics = [#tpu.dimension_semantics<arbitrary>], iteration_bounds = array<i64: 1>, scalar_prefetch = 0 : i64, scratch_operands = 0 : i64, tpu.core_type = #tpu.core_type<tc>, window_params = [{pipeline_mode = #tpu.pipeline_mode<synchronous>, transform_indices = @transform_0, window_bounds = array<i64: 8, 1152>}, {pipeline_mode = #tpu.pipeline_mode<synchronous>, transform_indices = @transform_1, window_bounds = array<i64: 1152, 512>}, {pipeline_mode = #tpu.pipeline_mode<synchronous>, transform_indices = @transform_2, window_bounds = array<i64: 1, 512>}, {pipeline_mode = #tpu.pipeline_mode<synchronous>, transform_indices = @transform_3, window_bounds = array<i64: 512, 128>}, {pipeline_mode = #tpu.pipeline_mode<synchronous>, transform_indices = @transform_4, window_bounds = array<i64: 1, 128>}, {pipeline_mode = #tpu.pipeline_mode<synchronous>, transform_indices = @transform_5, window_bounds = array<i64: 8, 128>}]} {
    %c0 = arith.constant 0 : index
    %c0_0 = arith.constant 0 : index
    %0 = vector.load %arg1[%c0, %c0_0] : memref<8x1152xbf16, #tpu.memory_space<vmem>>, vector<8x1152xbf16>
    %c0_1 = arith.constant 0 : index
    %c0_2 = arith.constant 0 : index
    %1 = vector.load %arg2[%c0_1, %c0_2] : memref<1152x512xbf16, #tpu.memory_space<vmem>>, vector<1152x512xbf16>
    %cst = arith.constant dense<0.000000e+00> : vector<8x512xf32>
    %2 = tpu.matmul %0, %1, %cst {dimension_numbers = #tpu.dot_dimension_numbers<[1], [0], [0], [1], [0, 0, 1, 1], [], []>} : vector<8x1152xbf16>, vector<1152x512xbf16>, vector<8x512xf32> -> vector<8x512xf32>
    %c0_3 = arith.constant 0 : index
    %c0_4 = arith.constant 0 : index
    %3 = vector.load %arg3[%c0_3, %c0_4] : memref<1x512xf32, #tpu.memory_space<vmem>>, vector<1x512xf32>
    %4 = vector.broadcast %3 : vector<1x512xf32> to vector<8x512xf32>
    %5 = arith.addf %2, %4 : vector<8x512xf32>
    %6 = arith.truncf %5 : vector<8x512xf32> to vector<8x512xbf16>
    %c0_5 = arith.constant 0 : index
    %c0_6 = arith.constant 0 : index
    %7 = vector.load %arg4[%c0_5, %c0_6] : memref<512x128xbf16, #tpu.memory_space<vmem>>, vector<512x128xbf16>
    %cst_7 = arith.constant dense<0.000000e+00> : vector<8x128xf32>
    %8 = tpu.matmul %6, %7, %cst_7 {dimension_numbers = #tpu.dot_dimension_numbers<[1], [0], [0], [1], [0, 0, 1, 1], [], []>} : vector<8x512xbf16>, vector<512x128xbf16>, vector<8x128xf32> -> vector<8x128xf32>
    %c0_8 = arith.constant 0 : index
    %c0_9 = arith.constant 0 : index
    %9 = vector.load %arg5[%c0_8, %c0_9] : memref<1x128xf32, #tpu.memory_space<vmem>>, vector<1x128xf32>
    %10 = vector.broadcast %9 : vector<1x128xf32> to vector<8x128xf32>
    %11 = arith.addf %8, %10 : vector<8x128xf32>
    %c0_10 = arith.constant 0 : index
    %c0_11 = arith.constant 0 : index
    %12 = vector.load %arg6[%c0_10, %c0_11] : memref<8x128xf32, #tpu.memory_space<vmem>>, vector<8x128xf32>
    tpu.vector_store %arg6[%c0_10, %c0_11], %11 {strides = array<i32>} : memref<8x128xf32, #tpu.memory_space<vmem>>, vector<8x128xf32>,
    return
  }
  func.func @transform_0(%arg0: i32) -> (i32, i32) {
    %c0_i32 = arith.constant 0 : i32
    %c0_i32_0 = arith.constant 0 : i32
    %c0_i32_1 = arith.constant 0 : i32
    return %c0_i32, %c0_i32_0 : i32, i32
  }
  func.func @transform_1(%arg0: i32) -> (i32, i32) {
    %c0_i32 = arith.constant 0 : i32
    %c0_i32_0 = arith.constant 0 : i32
    %c0_i32_1 = arith.constant 0 : i32
    return %c0_i32, %c0_i32_0 : i32, i32
  }
  func.func @transform_2(%arg0: i32) -> (i32, i32) {
    %c0_i32 = arith.constant 0 : i32
    %c0_i32_0 = arith.constant 0 : i32
    %c0_i32_1 = arith.constant 0 : i32
    return %c0_i32, %c0_i32_0 : i32, i32
  }
  func.func @transform_3(%arg0: i32) -> (i32, i32) {
    %c0_i32 = arith.constant 0 : i32
    %c0_i32_0 = arith.constant 0 : i32
    %c0_i32_1 = arith.constant 0 : i32
    return %c0_i32, %c0_i32_0 : i32, i32
  }
  func.func @transform_4(%arg0: i32) -> (i32, i32) {
    %c0_i32 = arith.constant 0 : i32
    %c0_i32_0 = arith.constant 0 : i32
    %c0_i32_1 = arith.constant 0 : i32
    return %c0_i32, %c0_i32_0 : i32, i32
  }
  func.func @transform_5(%arg0: i32) -> (i32, i32) {
    %c0_i32 = arith.constant 0 : i32
    %c0_i32_0 = arith.constant 0 : i32
    %c0_i32_1 = arith.constant 0 : i32
    return %c0_i32, %c0_i32_0 : i32, i32
  }
}

</mosaic_0001>

<llo_original>
// kernel: ppo_agent_forward.5
$region0: #{ppo_agent_forward.5}
  #allocation0 [shape = 'u32[]', space=smem, size = 0x4, offset = 0x4, fixed_abs, tag = 'smem constant byte address 0x4 - core index']
  #allocation1 [shape = 'u32[144,128]{1,0:T(1,128)}', space=vmem, size = 0x12000, scoped, tag = 'internal scratch']
  %s0 = inlined_call_operand.vmem [shape: bf16[3528,128], index: 0, kind: input, shape index: {}]
  %s1 = inlined_call_operand.vmem [shape: bf16[128,32], index: 1, kind: input, shape index: {}]
  %s2 = inlined_call_operand.vmem [shape: f32[1,32], index: 2, kind: input, shape index: {}]
  %s3 = inlined_call_operand.vmem [shape: bf16[3528,32], index: 3, kind: output, shape index: {}]
  %s4 = sld [smem:[#allocation0]]
  $region22: #{ppo_agent_forward.5} parent=0
    _
  %s6 = ssub.s32 1, %s4
  %s7 = scalar_select 0, %s6, %s4
  // Predicated region
  $region2: #{ppo_agent_forward.5} parent=0 // pred_check
    _
  $region3: #{ppo_agent_forward.5} parent=0 // pred_check_branch
    %9 = sbr.rel (0) target = $region5
  $region4: #{ppo_agent_forward.5} parent=0 // pred_region
    _
  $region5: #{ppo_agent_forward.5} parent=0 // pred_fallthru
    _
  // Predicated region
  $region6: #{ppo_agent_forward.5} parent=0 // pred_check
    _
  $region7: #{ppo_agent_forward.5} parent=0 // pred_check_branch
    %11 = sbr.rel (0) target = $region9
  $region8: #{ppo_agent_forward.5} parent=0 // pred_region
    _
  $region9: #{ppo_agent_forward.5} parent=0 // pred_fallthru
    _
  // Predicated region
  $region10: #{ppo_agent_forward.5} parent=0 // pred_check
    _
  $region11: #{ppo_agent_forward.5} parent=0 // pred_check_branch
    %13 = sbr.rel (0) target = $region13
  $region12: #{ppo_agent_forward.5} parent=0 // pred_region
    _
  $region13: #{ppo_agent_forward.5} parent=0 // pred_fallthru
    _
  %v15 = vld [vmem:[%s0] sm:$0xf]
  %v16 = vld [vmem:[%s0 + $0x4] sm:$0xf]
  %v17 = vld [vmem:[%s0 + $0x8] sm:$0xf]
  %v18 = vld [vmem:[%s0 + $0xc] sm:$0xf]
  %v19 = vld [vmem:[%s0 + $0x10] sm:$0xf]
  %v20 = vld [vmem:[%s0 + $0x14] sm:$0xf]
  %v21 = vld [vmem:[%s0 + $0x18] sm:$0xf]
  %v22 = vld [vmem:[%s0 + $0x1c] sm:$0xf]
  %v23 = vld [vmem:[%s0 + $0x20] sm:$0xf]
  %v24 = vld [vmem:[%s0 + $0x24] sm:$0xf]
  %v25 = vld [vmem:[%s0 + $0x28] sm:$0xf]
  %v26 = vld [vmem:[%s0 + $0x2c] sm:$0xf]
  %v27 = vld [vmem:[%s0 + $0x30] sm:$0xf]
  %v28 = vld [vmem:[%s0 + $0x34] sm:$0xf]
  %v29 = vld [vmem:[%s0 + $0x38] sm:$0xf]
  %v30 = vld [vmem:[%s0 + $0x3c] sm:$0xf]
  %v31 = vld [vmem:[%s0 + $0x40] sm:$0xf]
  %v32 = vld [vmem:[%s0 + $0x44] sm:$0xf]
  %v33 = vld [vmem:[%s0 + $0x48] sm:$0xf]
  %v34 = vld [vmem:[%s0 + $0x4c] sm:$0xf]
  %v35 = vld [vmem:[%s0 + $0x50] sm:$0xf]
  %v36 = vld [vmem:[%s0 + $0x54] sm:$0xf]
  %v37 = vld [vmem:[%s0 + $0x58] sm:$0xf]
  %v38 = vld [vmem:[%s0 + $0x5c] sm:$0xf]
  %v39 = vld [vmem:[%s0 + $0x60] sm:$0xf]
  %v40 = vld [vmem:[%s0 + $0x64] sm:$0xf]
  %v41 = vld [vmem:[%s0 + $0x68] sm:$0xf]
  %v42 = vld [vmem:[%s0 + $0x6c] sm:$0xf]
  %v43 = vld [vmem:[%s0 + $0x70] sm:$0xf]
  %v44 = vld [vmem:[%s0 + $0x74] sm:$0xf]
  %v45 = vld [vmem:[%s0 + $0x78] sm:$0xf]
  %v46 = vld [vmem:[%s0 + $0x7c] sm:$0xf]
  %v47 = vld [vmem:[%s0 + $0x80] sm:$0xf]
  %v48 = vld [vmem:[%s0 + $0x84] sm:$0xf]
  %v49 = vld [vmem:[%s0 + $0x88] sm:$0xf]
  %v50 = vld [vmem:[%s0 + $0x8c] sm:$0xf]
  %v51 = vld [vmem:[%s0 + $0x90] sm:$0xf]
  %v52 = vld [vmem:[%s0 + $0x94] sm:$0xf]
  %v53 = vld [vmem:[%s0 + $0x98] sm:$0xf]
  %v54 = vld [vmem:[%s0 + $0x9c] sm:$0xf]
  %v55 = vld [vmem:[%s0 + $0xa0] sm:$0xf]
  %v56 = vld [vmem:[%s0 + $0xa4] sm:$0xf]
  %v57 = vld [vmem:[%s0 + $0xa8] sm:$0xf]
  %v58 = vld [vmem:[%s0 + $0xac] sm:$0xf]
  %v59 = vld [vmem:[%s0 + $0xb0] sm:$0xf]
  %v60 = vld [vmem:[%s0 + $0xb4] sm:$0xf]
  %v61 = vld [vmem:[%s0 + $0xb8] sm:$0xf]
  %v62 = vld [vmem:[%s0 + $0xbc] sm:$0xf]
  %v63 = vld [vmem:[%s0 + $0xc0] sm:$0xf]
  %v64 = vld [vmem:[%s0 + $0xc4] sm:$0xf]
  %v65 = vld [vmem:[%s0 + $0xc8] sm:$0xf]
  %v66 = vld [vmem:[%s0 + $0xcc] sm:$0xf]
  %v67 = vld [vmem:[%s0 + $0xd0] sm:$0xf]
  %v68 = vld [vmem:[%s0 + $0xd4] sm:$0xf]
  %v69 = vld [vmem:[%s0 + $0xd8] sm:$0xf]
  %v70 = vld [vmem:[%s0 + $0xdc] sm:$0xf]
  %v71 = vld [vmem:[%s0 + $0xe0] sm:$0xf]
  %v72 = vld [vmem:[%s0 + $0xe4] sm:$0xf]
  %v73 = vld [vmem:[%s0 + $0xe8] sm:$0xf]
  %v74 = vld [vmem:[%s0 + $0xec] sm:$0xf]
  %v75 = vld [vmem:[%s0 + $0xf0] sm:$0xf]
  %v76 = vld [vmem:[%s0 + $0xf4] sm:$0xf]
  %v77 = vld [vmem:[%s0 + $0xf8] sm:$0xf]
  %v78 = vld [vmem:[%s0 + $0xfc] sm:$0xf]
  %v79 = vld [vmem:[%s0 + $0x100] sm:$0xf]
  %v80 = vld [vmem:[%s0 + $0x104] sm:$0xf]
  %v81 = vld [vmem:[%s0 + $0x108] sm:$0xf]
  %v82 = vld [vmem:[%s0 + $0x10c] sm:$0xf]
  %v83 = vld [vmem:[%s0 + $0x110] sm:$0xf]
  %v84 = vld [vmem:[%s0 + $0x114] sm:$0xf]
  %v85 = vld [vmem:[%s0 + $0x118] sm:$0xf]
  %v86 = vld [vmem:[%s0 + $0x11c] sm:$0xf]
  %v87 = vld [vmem:[%s0 + $0x120] sm:$0xf]
  %v88 = vld [vmem:[%s0 + $0x124] sm:$0xf]
  %v89 = vld [vmem:[%s0 + $0x128] sm:$0xf]
  %v90 = vld [vmem:[%s0 + $0x12c] sm:$0xf]
  %v91 = vld [vmem:[%s0 + $0x130] sm:$0xf]
  %v92 = vld [vmem:[%s0 + $0x134] sm:$0xf]
  %v93 = vld [vmem:[%s0 + $0x138] sm:$0xf]
  %v94 = vld [vmem:[%s0 + $0x13c] sm:$0xf]
  %v95 = vld [vmem:[%s0 + $0x140] sm:$0xf]
  %v96 = vld [vmem:[%s0 + $0x144] sm:$0xf]
  %v97 = vld [vmem:[%s0 + $0x148] sm:$0xf]
  %v98 = vld [vmem:[%s0 + $0x14c] sm:$0xf]
  %v99 = vld [vmem:[%s0 + $0x150] sm:$0xf]
  %v100 = vld [vmem:[%s0 + $0x154] sm:$0xf]
  %v101 = vld [vmem:[%s0 + $0x158] sm:$0xf]
  %v102 = vld [vmem:[%s0 + $0x15c] sm:$0xf]
  %v103 = vld [vmem:[%s0 + $0x160] sm:$0xf]
  %v104 = vld [vmem:[%s0 + $0x164] sm:$0xf]
  %v105 = vld [vmem:[%s0 + $0x168] sm:$0xf]
  %v106 = vld [vmem:[%s0 + $0x16c] sm:$0xf]
  %v107 = vld [vmem:[%s0 + $0x170] sm:$0xf]
  %v108 = vld [vmem:[%s0 + $0x174] sm:$0xf]
  %v109 = vld [vmem:[%s0 + $0x178] sm:$0xf]
  %v110 = vld [vmem:[%s0 + $0x17c] sm:$0xf]
  %v111 = vld [vmem:[%s0 + $0x180] sm:$0xf]
  %v112 = vld [vmem:[%s0 + $0x184] sm:$0xf]
  %v113 = vld [vmem:[%s0 + $0x188] sm:$0xf]
  %v114 = vld [vmem:[%s0 + $0x18c] sm:$0xf]
  %v115 = vld [vmem:[%s0 + $0x190] sm:$0xf]
  %v116 = vld [vmem:[%s0 + $0x194] sm:$0xf]
  %v117 = vld [vmem:[%s0 + $0x198] sm:$0xf]
  %v118 = vld [vmem:[%s0 + $0x19c] sm:$0xf]
  %v119 = vld [vmem:[%s0 + $0x1a0] sm:$0xf]
  %v120 = vld [vmem:[%s0 + $0x1a4] sm:$0xf]
  %v121 = vld [vmem:[%s0 + $0x1a8] sm:$0xf]
  %v122 = vld [vmem:[%s0 + $0x1ac] sm:$0xf]
  %v123 = vld [vmem:[%s0 + $0x1b0] sm:$0xf]
  %v124 = vld [vmem:[%s0 + $0x1b4] sm:$0xf]
  %v125 = vld [vmem:[%s0 + $0x1b8] sm:$0xf]
  %v126 = vld [vmem:[%s0 + $0x1bc] sm:$0xf]
  %v127 = vld [vmem:[%s0 + $0x1c0] sm:$0xf]
  %v128 = vld [vmem:[%s0 + $0x1c4] sm:$0xf]
  %v129 = vld [vmem:[%s0 + $0x1c8] sm:$0xf]
  %v130 = vld [vmem:[%s0 + $0x1cc] sm:$0xf]
  %v131 = vld [vmem:[%s0 + $0x1d0] sm:$0xf]
  %v132 = vld [vmem:[%s0 + $0x1d4] sm:$0xf]
  %v133 = vld [vmem:[%s0 + $0x1d8] sm:$0xf]
  %v134 = vld [vmem:[%s0 + $0x1dc] sm:$0xf]
  %v135 = vld [vmem:[%s0 + $0x1e0] sm:$0xf]
  %v136 = vld [vmem:[%s0 + $0x1e4] sm:$0xf]
  %v137 = vld [vmem:[%s0 + $0x1e8] sm:$0xf]
  %v138 = vld [vmem:[%s0 + $0x1ec] sm:$0xf]
  %v139 = vld [vmem:[%s0 + $0x1f0] sm:$0xf]
  %v140 = vld [vmem:[%s0 + $0x1f4] sm:$0xf]
  %v141 = vld [vmem:[%s0 + $0x1f8] sm:$0xf]
  %v142 = vld [vmem:[%s0 + $0x1fc] sm:$0xf]
  %v143 = vld [vmem:[%s0 + $0x200] sm:$0xf]
  %v144 = vld [vmem:[%s0 + $0x204] sm:$0xf]
  %v145 = vld [vmem:[%s0 + $0x208] sm:$0xf]
  %v146 = vld [vmem:[%s0 + $0x20c] sm:$0xf]
  %v147 = vld [vmem:[%s0 + $0x210] sm:$0xf]
  %v148 = vld [vmem:[%s0 + $0x214] sm:$0xf]
  %v149 = vld [vmem:[%s0 + $0x218] sm:$0xf]
  %v150 = vld [vmem:[%s0 + $0x21c] sm:$0xf]
  %v151 = vld [vmem:[%s0 + $0x220] sm:$0xf]
  %v152 = vld [vmem:[%s0 + $0x224] sm:$0xf]
  %v153 = vld [vmem:[%s0 + $0x228] sm:$0xf]
  %v154 = vld [vmem:[%s0 + $0x22c] sm:$0xf]
  %v155 = vld [vmem:[%s0 + $0x230] sm:$0xf]
  %v156 = vld [vmem:[%s0 + $0x234] sm:$0xf]
  %v157 = vld [vmem:[%s0 + $0x238] sm:$0xf]
  %v158 = vld [vmem:[%s0 + $0x23c] sm:$0xf]
  %v159 = vld [vmem:[%s0 + $0x240] sm:$0xf]
  %v160 = vld [vmem:[%s0 + $0x244] sm:$0xf]
  %v161 = vld [vmem:[%s0 + $0x248] sm:$0xf]
  %v162 = vld [vmem:[%s0 + $0x24c] sm:$0xf]
  %v163 = vld [vmem:[%s0 + $0x250] sm:$0xf]
  %v164 = vld [vmem:[%s0 + $0x254] sm:$0xf]
  %v165 = vld [vmem:[%s0 + $0x258] sm:$0xf]
  %v166 = vld [vmem:[%s0 + $0x25c] sm:$0xf]
  %v167 = vld [vmem:[%s0 + $0x260] sm:$0xf]
  %v168 = vld [vmem:[%s0 + $0x264] sm:$0xf]
  %v169 = vld [vmem:[%s0 + $0x268] sm:$0xf]
  %v170 = vld [vmem:[%s0 + $0x26c] sm:$0xf]
  %v171 = vld [vmem:[%s0 + $0x270] sm:$0xf]
  %v172 = vld [vmem:[%s0 + $0x274] sm:$0xf]
  %v173 = vld [vmem:[%s0 + $0x278] sm:$0xf]
  %v174 = vld [vmem:[%s0 + $0x27c] sm:$0xf]
  %v175 = vld [vmem:[%s0 + $0x280] sm:$0xf]
  %v176 = vld [vmem:[%s0 + $0x284] sm:$0xf]
  %v177 = vld [vmem:[%s0 + $0x288] sm:$0xf]
  %v178 = vld [vmem:[%s0 + $0x28c] sm:$0xf]
  %v179 = vld [vmem:[%s0 + $0x290] sm:$0xf]
  %v180 = vld [vmem:[%s0 + $0x294] sm:$0xf]
  %v181 = vld [vmem:[%s0 + $0x298] sm:$0xf]
  %v182 = vld [vmem:[%s0 + $0x29c] sm:$0xf]
  %v183 = vld [vmem:[%s0 + $0x2a0] sm:$0xf]
  %v184 = vld [vmem:[%s0 + $0x2a4] sm:$0xf]
  %v185 = vld [vmem:[%s0 + $0x2a8] sm:$0xf]
  %v186 = vld [vmem:[%s0 + $0x2ac] sm:$0xf]
  %v187 = vld [vmem:[%s0 + $0x2b0] sm:$0xf]
  %v188 = vld [vmem:[%s0 + $0x2b4] sm:$0xf]
  %v189 = vld [vmem:[%s0 + $0x2b8] sm:$0xf]
  %v190 = vld [vmem:[%s0 + $0x2bc] sm:$0xf]
  %v191 = vld [vmem:[%s0 + $0x2c0] sm:$0xf]
  %v192 = vld [vmem:[%s0 + $0x2c4] sm:$0xf]
  %v193 = vld [vmem:[%s0 + $0x2c8] sm:$0xf]
  %v194 = vld [vmem:[%s0 + $0x2cc] sm:$0xf]
  %v195 = vld [vmem:[%s0 + $0x2d0] sm:$0xf]
  %v196 = vld [vmem:[%s0 + $0x2d4] sm:$0xf]
  %v197 = vld [vmem:[%s0 + $0x2d8] sm:$0xf]
  %v198 = vld [vmem:[%s0 + $0x2dc] sm:$0xf]
  %v199 = vld [vmem:[%s0 + $0x2e0] sm:$0xf]
  %v200 = vld [vmem:[%s0 + $0x2e4] sm:$0xf]
  %v201 = vld [vmem:[%s0 + $0x2e8] sm:$0xf]
  %v202 = vld [vmem:[%s0 + $0x2ec] sm:$0xf]
  %v203 = vld [vmem:[%s0 + $0x2f0] sm:$0xf]
  %v204 = vld [vmem:[%s0 + $0x2f4] sm:$0xf]
  %v205 = vld [vmem:[%s0 + $0x2f8] sm:$0xf]
  %v206 = vld [vmem:[%s0 + $0x2fc] sm:$0xf]
  %v207 = vld [vmem:[%s0 + $0x300] sm:$0xf]
  %v208 = vld [vmem:[%s0 + $0x304] sm:$0xf]
  %v209 = vld [vmem:[%s0 + $0x308] sm:$0xf]
  %v210 = vld [vmem:[%s0 + $0x30c] sm:$0xf]
  %v211 = vld [vmem:[%s0 + $0x310] sm:$0xf]
  %v212 = vld [vmem:[%s0 + $0x314] sm:$0xf]
  %v213 = vld [vmem:[%s0 + $0x318] sm:$0xf]
  %v214 = vld [vmem:[%s0 + $0x31c] sm:$0xf]
  %v215 = vld [vmem:[%s0 + $0x320] sm:$0xf]
  %v216 = vld [vmem:[%s0 + $0x324] sm:$0xf]
  %v217 = vld [vmem:[%s0 + $0x328] sm:$0xf]
  %v218 = vld [vmem:[%s0 + $0x32c] sm:$0xf]
  %v219 = vld [vmem:[%s0 + $0x330] sm:$0xf]
  %v220 = vld [vmem:[%s0 + $0x334] sm:$0xf]
  %v221 = vld [vmem:[%s0 + $0x338] sm:$0xf]
  %v222 = vld [vmem:[%s0 + $0x33c] sm:$0xf]
  %v223 = vld [vmem:[%s0 + $0x340] sm:$0xf]
  %v224 = vld [vmem:[%s0 + $0x344] sm:$0xf]
  %v225 = vld [vmem:[%s0 + $0x348] sm:$0xf]
  %v226 = vld [vmem:[%s0 + $0x34c] sm:$0xf]
  %v227 = vld [vmem:[%s0 + $0x350] sm:$0xf]
  %v228 = vld [vmem:[%s0 + $0x354] sm:$0xf]
  %v229 = vld [vmem:[%s0 + $0x358] sm:$0xf]
  %v230 = vld [vmem:[%s0 + $0x35c] sm:$0xf]
  %v231 = vld [vmem:[%s0 + $0x360] sm:$0xf]
  %v232 = vld [vmem:[%s0 + $0x364] sm:$0xf]
  %v233 = vld [vmem:[%s0 + $0x368] sm:$0xf]
  %v234 = vld [vmem:[%s0 + $0x36c] sm:$0xf]
  %v235 = vld [vmem:[%s0 + $0x370] sm:$0xf]
  %v236 = vld [vmem:[%s0 + $0x374] sm:$0xf]
  %v237 = vld [vmem:[%s0 + $0x378] sm:$0xf]
  %v238 = vld [vmem:[%s0 + $0x37c] sm:$0xf]
  %v239 = vld [vmem:[%s0 + $0x380] sm:$0xf]
  %v240 = vld [vmem:[%s0 + $0x384] sm:$0xf]
  %v241 = vld [vmem:[%s0 + $0x388] sm:$0xf]
  %v242 = vld [vmem:[%s0 + $0x38c] sm:$0xf]
  %v243 = vld [vmem:[%s0 + $0x390] sm:$0xf]
  %v244 = vld [vmem:[%s0 + $0x394] sm:$0xf]
  %v245 = vld [vmem:[%s0 + $0x398] sm:$0xf]
  %v246 = vld [vmem:[%s0 + $0x39c] sm:$0xf]
  %v247 = vld [vmem:[%s0 + $0x3a0] sm:$0xf]
  %v248 = vld [vmem:[%s0 + $0x3a4] sm:$0xf]
  %v249 = vld [vmem:[%s0 + $0x3a8] sm:$0xf]
  %v250 = vld [vmem:[%s0 + $0x3ac] sm:$0xf]
  %v251 = vld [vmem:[%s0 + $0x3b0] sm:$0xf]
  %v252 = vld [vmem:[%s0 + $0x3b4] sm:$0xf]
  %v253 = vld [vmem:[%s0 + $0x3b8] sm:$0xf]
  %v254 = vld [vmem:[%s0 + $0x3bc] sm:$0xf]
  %v255 = vld [vmem:[%s0 + $0x3c0] sm:$0xf]
  %v256 = vld [vmem:[%s0 + $0x3c4] sm:$0xf]
  %v257 = vld [vmem:[%s0 + $0x3c8] sm:$0xf]
  %v258 = vld [vmem:[%s0 + $0x3cc] sm:$0xf]
  %v259 = vld [vmem:[%s0 + $0x3d0] sm:$0xf]
  %v260 = vld [vmem:[%s0 + $0x3d4] sm:$0xf]
  %v261 = vld [vmem:[%s0 + $0x3d8] sm:$0xf]
  %v262 = vld [vmem:[%s0 + $0x3dc] sm:$0xf]
  %v263 = vld [vmem:[%s0 + $0x3e0] sm:$0xf]
  %v264 = vld [vmem:[%s0 + $0x3e4] sm:$0xf]
  %v265 = vld [vmem:[%s0 + $0x3e8] sm:$0xf]
  %v266 = vld [vmem:[%s0 + $0x3ec] sm:$0xf]
  %v267 = vld [vmem:[%s0 + $0x3f0] sm:$0xf]
  %v268 = vld [vmem:[%s0 + $0x3f4] sm:$0xf]
  %v269 = vld [vmem:[%s0 + $0x3f8] sm:$0xf]
  %v270 = vld [vmem:[%s0 + $0x3fc] sm:$0xf]
  %v271 = vld [vmem:[%s0 + $0x400] sm:$0xf]
  %v272 = vld [vmem:[%s0 + $0x404] sm:$0xf]
  %v273 = vld [vmem:[%s0 + $0x408] sm:$0xf]
  %v274 = vld [vmem:[%s0 + $0x40c] sm:$0xf]
  %v275 = vld [vmem:[%s0 + $0x410] sm:$0xf]
  %v276 = vld [vmem:[%s0 + $0x414] sm:$0xf]
  %v277 = vld [vmem:[%s0 + $0x418] sm:$0xf]
  %v278 = vld [vmem:[%s0 + $0x41c] sm:$0xf]
  %v279 = vld [vmem:[%s0 + $0x420] sm:$0xf]
  %v280 = vld [vmem:[%s0 + $0x424] sm:$0xf]
  %v281 = vld [vmem:[%s0 + $0x428] sm:$0xf]
  %v282 = vld [vmem:[%s0 + $0x42c] sm:$0xf]
  %v283 = vld [vmem:[%s0 + $0x430] sm:$0xf]
  %v284 = vld [vmem:[%s0 + $0x434] sm:$0xf]
  %v285 = vld [vmem:[%s0 + $0x438] sm:$0xf]
  %v286 = vld [vmem:[%s0 + $0x43c] sm:$0xf]
  %v287 = vld [vmem:[%s0 + $0x440] sm:$0xf]
  %v288 = vld [vmem:[%s0 + $0x444] sm:$0xf]
  %v289 = vld [vmem:[%s0 + $0x448] sm:$0xf]
  %v290 = vld [vmem:[%s0 + $0x44c] sm:$0xf]
  %v291 = vld [vmem:[%s0 + $0x450] sm:$0xf]
  %v292 = vld [vmem:[%s0 + $0x454] sm:$0xf]
  %v293 = vld [vmem:[%s0 + $0x458] sm:$0xf]
  %v294 = vld [vmem:[%s0 + $0x45c] sm:$0xf]
  %v295 = vld [vmem:[%s0 + $0x460] sm:$0xf]
  %v296 = vld [vmem:[%s0 + $0x464] sm:$0xf]
  %v297 = vld [vmem:[%s0 + $0x468] sm:$0xf]
  %v298 = vld [vmem:[%s0 + $0x46c] sm:$0xf]
  %v299 = vld [vmem:[%s0 + $0x470] sm:$0xf]
  %v300 = vld [vmem:[%s0 + $0x474] sm:$0xf]
  %v301 = vld [vmem:[%s0 + $0x478] sm:$0xf]
  %v302 = vld [vmem:[%s0 + $0x47c] sm:$0xf]
  %v303 = vld [vmem:[%s0 + $0x480] sm:$0xf]
  %v304 = vld [vmem:[%s0 + $0x484] sm:$0xf]
  %v305 = vld [vmem:[%s0 + $0x488] sm:$0xf]
  %v306 = vld [vmem:[%s0 + $0x48c] sm:$0xf]
  %v307 = vld [vmem:[%s0 + $0x490] sm:$0xf]
  %v308 = vld [vmem:[%s0 + $0x494] sm:$0xf]
  %v309 = vld [vmem:[%s0 + $0x498] sm:$0xf]
  %v310 = vld [vmem:[%s0 + $0x49c] sm:$0xf]
  %v311 = vld [vmem:[%s0 + $0x4a0] sm:$0xf]
  %v312 = vld [vmem:[%s0 + $0x4a4] sm:$0xf]
  %v313 = vld [vmem:[%s0 + $0x4a8] sm:$0xf]
  %v314 = vld [vmem:[%s0 + $0x4ac] sm:$0xf]
  %v315 = vld [vmem:[%s0 + $0x4b0] sm:$0xf]
  %v316 = vld [vmem:[%s0 + $0x4b4] sm:$0xf]
  %v317 = vld [vmem:[%s0 + $0x4b8] sm:$0xf]
  %v318 = vld [vmem:[%s0 + $0x4bc] sm:$0xf]
  %v319 = vld [vmem:[%s0 + $0x4c0] sm:$0xf]
  %v320 = vld [vmem:[%s0 + $0x4c4] sm:$0xf]
  %v321 = vld [vmem:[%s0 + $0x4c8] sm:$0xf]
  %v322 = vld [vmem:[%s0 + $0x4cc] sm:$0xf]
  %v323 = vld [vmem:[%s0 + $0x4d0] sm:$0xf]
  %v324 = vld [vmem:[%s0 + $0x4d4] sm:$0xf]
  %v325 = vld [vmem:[%s0 + $0x4d8] sm:$0xf]
  %v326 = vld [vmem:[%s0 + $0x4dc] sm:$0xf]
  %v327 = vld [vmem:[%s0 + $0x4e0] sm:$0xf]
  %v328 = vld [vmem:[%s0 + $0x4e4] sm:$0xf]
  %v329 = vld [vmem:[%s0 + $0x4e8] sm:$0xf]
  %v330 = vld [vmem:[%s0 + $0x4ec] sm:$0xf]
  %v331 = vld [vmem:[%s0 + $0x4f0] sm:$0xf]
  %v332 = vld [vmem:[%s0 + $0x4f4] sm:$0xf]
  %v333 = vld [vmem:[%s0 + $0x4f8] sm:$0xf]
  %v334 = vld [vmem:[%s0 + $0x4fc] sm:$0xf]
  %v335 = vld [vmem:[%s0 + $0x500] sm:$0xf]
  %v336 = vld [vmem:[%s0 + $0x504] sm:$0xf]
  %v337 = vld [vmem:[%s0 + $0x508] sm:$0xf]
  %v338 = vld [vmem:[%s0 + $0x50c] sm:$0xf]
  %v339 = vld [vmem:[%s0 + $0x510] sm:$0xf]
  %v340 = vld [vmem:[%s0 + $0x514] sm:$0xf]
  %v341 = vld [vmem:[%s0 + $0x518] sm:$0xf]
  %v342 = vld [vmem:[%s0 + $0x51c] sm:$0xf]
  %v343 = vld [vmem:[%s0 + $0x520] sm:$0xf]
  %v344 = vld [vmem:[%s0 + $0x524] sm:$0xf]
  %v345 = vld [vmem:[%s0 + $0x528] sm:$0xf]
  %v346 = vld [vmem:[%s0 + $0x52c] sm:$0xf]
  %v347 = vld [vmem:[%s0 + $0x530] sm:$0xf]
  %v348 = vld [vmem:[%s0 + $0x534] sm:$0xf]
  %v349 = vld [vmem:[%s0 + $0x538] sm:$0xf]
  %v350 = vld [vmem:[%s0 + $0x53c] sm:$0xf]
  %v351 = vld [vmem:[%s0 + $0x540] sm:$0xf]
  %v352 = vld [vmem:[%s0 + $0x544] sm:$0xf]
  %v353 = vld [vmem:[%s0 + $0x548] sm:$0xf]
  %v354 = vld [vmem:[%s0 + $0x54c] sm:$0xf]
  %v355 = vld [vmem:[%s0 + $0x550] sm:$0xf]
  %v356 = vld [vmem:[%s0 + $0x554] sm:$0xf]
  %v357 = vld [vmem:[%s0 + $0x558] sm:$0xf]
  %v358 = vld [vmem:[%s0 + $0x55c] sm:$0xf]
  %v359 = vld [vmem:[%s0 + $0x560] sm:$0xf]
  %v360 = vld [vmem:[%s0 + $0x564] sm:$0xf]
  %v361 = vld [vmem:[%s0 + $0x568] sm:$0xf]
  %v362 = vld [vmem:[%s0 + $0x56c] sm:$0xf]
  %v363 = vld [vmem:[%s0 + $0x570] sm:$0xf]
  %v364 = vld [vmem:[%s0 + $0x574] sm:$0xf]
  %v365 = vld [vmem:[%s0 + $0x578] sm:$0xf]
  %v366 = vld [vmem:[%s0 + $0x57c] sm:$0xf]
  %v367 = vld [vmem:[%s0 + $0x580] sm:$0xf]
  %v368 = vld [vmem:[%s0 + $0x584] sm:$0xf]
  %v369 = vld [vmem:[%s0 + $0x588] sm:$0xf]
  %v370 = vld [vmem:[%s0 + $0x58c] sm:$0xf]
  %v371 = vld [vmem:[%s0 + $0x590] sm:$0xf]
  %v372 = vld [vmem:[%s0 + $0x594] sm:$0xf]
  %v373 = vld [vmem:[%s0 + $0x598] sm:$0xf]
  %v374 = vld [vmem:[%s0 + $0x59c] sm:$0xf]
  %v375 = vld [vmem:[%s0 + $0x5a0] sm:$0xf]
  %v376 = vld [vmem:[%s0 + $0x5a4] sm:$0xf]
  %v377 = vld [vmem:[%s0 + $0x5a8] sm:$0xf]
  %v378 = vld [vmem:[%s0 + $0x5ac] sm:$0xf]
  %v379 = vld [vmem:[%s0 + $0x5b0] sm:$0xf]
  %v380 = vld [vmem:[%s0 + $0x5b4] sm:$0xf]
  %v381 = vld [vmem:[%s0 + $0x5b8] sm:$0xf]
  %v382 = vld [vmem:[%s0 + $0x5bc] sm:$0xf]
  %v383 = vld [vmem:[%s0 + $0x5c0] sm:$0xf]
  %v384 = vld [vmem:[%s0 + $0x5c4] sm:$0xf]
  %v385 = vld [vmem:[%s0 + $0x5c8] sm:$0xf]
  %v386 = vld [vmem:[%s0 + $0x5cc] sm:$0xf]
  %v387 = vld [vmem:[%s0 + $0x5d0] sm:$0xf]
  %v388 = vld [vmem:[%s0 + $0x5d4] sm:$0xf]
  %v389 = vld [vmem:[%s0 + $0x5d8] sm:$0xf]
  %v390 = vld [vmem:[%s0 + $0x5dc] sm:$0xf]
  %v391 = vld [vmem:[%s0 + $0x5e0] sm:$0xf]
  %v392 = vld [vmem:[%s0 + $0x5e4] sm:$0xf]
  %v393 = vld [vmem:[%s0 + $0x5e8] sm:$0xf]
  %v394 = vld [vmem:[%s0 + $0x5ec] sm:$0xf]
  %v395 = vld [vmem:[%s0 + $0x5f0] sm:$0xf]
  %v396 = vld [vmem:[%s0 + $0x5f4] sm:$0xf]
  %v397 = vld [vmem:[%s0 + $0x5f8] sm:$0xf]
  %v398 = vld [vmem:[%s0 + $0x5fc] sm:$0xf]
  %v399 = vld [vmem:[%s0 + $0x600] sm:$0xf]
  %v400 = vld [vmem:[%s0 + $0x604] sm:$0xf]
  %v401 = vld [vmem:[%s0 + $0x608] sm:$0xf]
  %v402 = vld [vmem:[%s0 + $0x60c] sm:$0xf]
  %v403 = vld [vmem:[%s0 + $0x610] sm:$0xf]
  %v404 = vld [vmem:[%s0 + $0x614] sm:$0xf]
  %v405 = vld [vmem:[%s0 + $0x618] sm:$0xf]
  %v406 = vld [vmem:[%s0 + $0x61c] sm:$0xf]
  %v407 = vld [vmem:[%s0 + $0x620] sm:$0xf]
  %v408 = vld [vmem:[%s0 + $0x624] sm:$0xf]
  %v409 = vld [vmem:[%s0 + $0x628] sm:$0xf]
  %v410 = vld [vmem:[%s0 + $0x62c] sm:$0xf]
  %v411 = vld [vmem:[%s0 + $0x630] sm:$0xf]
  %v412 = vld [vmem:[%s0 + $0x634] sm:$0xf]
  %v413 = vld [vmem:[%s0 + $0x638] sm:$0xf]
  %v414 = vld [vmem:[%s0 + $0x63c] sm:$0xf]
  %v415 = vld [vmem:[%s0 + $0x640] sm:$0xf]
  %v416 = vld [vmem:[%s0 + $0x644] sm:$0xf]
  %v417 = vld [vmem:[%s0 + $0x648] sm:$0xf]
  %v418 = vld [vmem:[%s0 + $0x64c] sm:$0xf]
  %v419 = vld [vmem:[%s0 + $0x650] sm:$0xf]
  %v420 = vld [vmem:[%s0 + $0x654] sm:$0xf]
  %v421 = vld [vmem:[%s0 + $0x658] sm:$0xf]
  %v422 = vld [vmem:[%s0 + $0x65c] sm:$0xf]
  %v423 = vld [vmem:[%s0 + $0x660] sm:$0xf]
  %v424 = vld [vmem:[%s0 + $0x664] sm:$0xf]
  %v425 = vld [vmem:[%s0 + $0x668] sm:$0xf]
  %v426 = vld [vmem:[%s0 + $0x66c] sm:$0xf]
  %v427 = vld [vmem:[%s0 + $0x670] sm:$0xf]
  %v428 = vld [vmem:[%s0 + $0x674] sm:$0xf]
  %v429 = vld [vmem:[%s0 + $0x678] sm:$0xf]
  %v430 = vld [vmem:[%s0 + $0x67c] sm:$0xf]
  %v431 = vld [vmem:[%s0 + $0x680] sm:$0xf]
  %v432 = vld [vmem:[%s0 + $0x684] sm:$0xf]
  %v433 = vld [vmem:[%s0 + $0x688] sm:$0xf]
  %v434 = vld [vmem:[%s0 + $0x68c] sm:$0xf]
  %v435 = vld [vmem:[%s0 + $0x690] sm:$0xf]
  %v436 = vld [vmem:[%s0 + $0x694] sm:$0xf]
  %v437 = vld [vmem:[%s0 + $0x698] sm:$0xf]
  %v438 = vld [vmem:[%s0 + $0x69c] sm:$0xf]
  %v439 = vld [vmem:[%s0 + $0x6a0] sm:$0xf]
  %v440 = vld [vmem:[%s0 + $0x6a4] sm:$0xf]
  %v441 = vld [vmem:[%s0 + $0x6a8] sm:$0xf]
  %v442 = vld [vmem:[%s0 + $0x6ac] sm:$0xf]
  %v443 = vld [vmem:[%s0 + $0x6b0] sm:$0xf]
  %v444 = vld [vmem:[%s0 + $0x6b4] sm:$0xf]
  %v445 = vld [vmem:[%s0 + $0x6b8] sm:$0xf]
  %v446 = vld [vmem:[%s0 + $0x6bc] sm:$0xf]
  %v447 = vld [vmem:[%s0 + $0x6c0] sm:$0xf]
  %v448 = vld [vmem:[%s0 + $0x6c4] sm:$0xf]
  %v449 = vld [vmem:[%s0 + $0x6c8] sm:$0xf]
  %v450 = vld [vmem:[%s0 + $0x6cc] sm:$0xf]
  %v451 = vld [vmem:[%s0 + $0x6d0] sm:$0xf]
  %v452 = vld [vmem:[%s0 + $0x6d4] sm:$0xf]
  %v453 = vld [vmem:[%s0 + $0x6d8] sm:$0xf]
  %v454 = vld [vmem:[%s0 + $0x6dc] sm:$0xf]
  %v455 = vld [vmem:[%s0 + $0x6e0] sm:$0xf]
  %v456 = vld [vmem:[%s1] sm:$0xf]
  %v457 = vld [vmem:[%s1 + $0x4] sm:$0xf]
  %v458 = vld [vmem:[%s1 + $0x8] sm:$0xf]
  %v459 = vld [vmem:[%s1 + $0xc] sm:$0xf]
  %v460 = vld [vmem:[%s1 + $0x10] sm:$0xf]
  %v461 = vld [vmem:[%s1 + $0x14] sm:$0xf]
  %v462 = vld [vmem:[%s1 + $0x18] sm:$0xf]
  %v463 = vld [vmem:[%s1 + $0x1c] sm:$0xf]
  %v464 = vld [vmem:[%s1 + $0x20] sm:$0xf]
  %v465 = vld [vmem:[%s1 + $0x24] sm:$0xf]
  %v466 = vld [vmem:[%s1 + $0x28] sm:$0xf]
  %v467 = vld [vmem:[%s1 + $0x2c] sm:$0xf]
  %v468 = vld [vmem:[%s1 + $0x30] sm:$0xf]
  %v469 = vld [vmem:[%s1 + $0x34] sm:$0xf]
  %v470 = vld [vmem:[%s1 + $0x38] sm:$0xf]
  %v471 = vld [vmem:[%s1 + $0x3c] sm:$0xf]
  %v472 = vld [vmem:[%s2] sm:$0x1]
  %v474 = vlaneseq
  %v475 = vshrl.u32 %v474, 7
  %v476 = vsub.s32 0, %v475
  %v477 = vrot.slane %v472, %v476
  %v920 = vunpack.c.l.b16 %v15
  %v921 = vunpack.c.l.b16 %v16
  %v922 = vunpack.c.l.b16 %v17
  %v923 = vunpack.c.l.b16 %v18
  %v924 = vunpack.c.l.b16 %v19
  %v925 = vunpack.c.l.b16 %v20
  %v926 = vunpack.c.l.b16 %v21
  %v927 = vunpack.c.l.b16 %v22
  %v928 = vunpack.c.l.b16 %v23
  %v929 = vunpack.c.l.b16 %v24
  %v930 = vunpack.c.l.b16 %v25
  %v931 = vunpack.c.l.b16 %v26
  %v932 = vunpack.c.l.b16 %v27
  %v933 = vunpack.c.l.b16 %v28
  %v934 = vunpack.c.l.b16 %v29
  %v935 = vunpack.c.l.b16 %v30
  %v936 = vunpack.c.l.b16 %v31
  %v937 = vunpack.c.l.b16 %v32
  %v938 = vunpack.c.l.b16 %v33
  %v939 = vunpack.c.l.b16 %v34
  %v940 = vunpack.c.l.b16 %v35
  %v941 = vunpack.c.l.b16 %v36
  %v942 = vunpack.c.l.b16 %v37
  %v943 = vunpack.c.l.b16 %v38
  %v944 = vunpack.c.l.b16 %v39
  %v945 = vunpack.c.l.b16 %v40
  %v946 = vunpack.c.l.b16 %v41
  %v947 = vunpack.c.l.b16 %v42
  %v948 = vunpack.c.l.b16 %v43
  %v949 = vunpack.c.l.b16 %v44
  %v950 = vunpack.c.l.b16 %v45
  %v951 = vunpack.c.l.b16 %v46
  %v952 = vunpack.c.l.b16 %v47
  %v953 = vunpack.c.l.b16 %v48
  %v954 = vunpack.c.l.b16 %v49
  %v955 = vunpack.c.l.b16 %v50
  %v956 = vunpack.c.l.b16 %v51
  %v957 = vunpack.c.l.b16 %v52
  %v958 = vunpack.c.l.b16 %v53
  %v959 = vunpack.c.l.b16 %v54
  %v960 = vunpack.c.l.b16 %v55
  %v961 = vunpack.c.l.b16 %v56
  %v962 = vunpack.c.l.b16 %v57
  %v963 = vunpack.c.l.b16 %v58
  %v964 = vunpack.c.l.b16 %v59
  %v965 = vunpack.c.l.b16 %v60
  %v966 = vunpack.c.l.b16 %v61
  %v967 = vunpack.c.l.b16 %v62
  %v968 = vunpack.c.l.b16 %v63
  %v969 = vunpack.c.l.b16 %v64
  %v970 = vunpack.c.l.b16 %v65
  %v971 = vunpack.c.l.b16 %v66
  %v972 = vunpack.c.l.b16 %v67
  %v973 = vunpack.c.l.b16 %v68
  %v974 = vunpack.c.l.b16 %v69
  %v975 = vunpack.c.l.b16 %v70
  %v976 = vunpack.c.l.b16 %v71
  %v977 = vunpack.c.l.b16 %v72
  %v978 = vunpack.c.l.b16 %v73
  %v979 = vunpack.c.l.b16 %v74
  %v980 = vunpack.c.l.b16 %v75
  %v981 = vunpack.c.l.b16 %v76
  %v982 = vunpack.c.l.b16 %v77
  %v983 = vunpack.c.l.b16 %v78
  %v984 = vunpack.c.l.b16 %v79
  %v985 = vunpack.c.l.b16 %v80
  %v986 = vunpack.c.l.b16 %v81
  %v987 = vunpack.c.l.b16 %v82
  %v988 = vunpack.c.l.b16 %v83
  %v989 = vunpack.c.l.b16 %v84
  %v990 = vunpack.c.l.b16 %v85
  %v991 = vunpack.c.l.b16 %v86
  %v992 = vunpack.c.l.b16 %v87
  %v993 = vunpack.c.l.b16 %v88
  %v994 = vunpack.c.l.b16 %v89
  %v995 = vunpack.c.l.b16 %v90
  %v996 = vunpack.c.l.b16 %v91
  %v997 = vunpack.c.l.b16 %v92
  %v998 = vunpack.c.l.b16 %v93
  %v999 = vunpack.c.l.b16 %v94
  %v1000 = vunpack.c.l.b16 %v95
  %v1001 = vunpack.c.l.b16 %v96
  %v1002 = vunpack.c.l.b16 %v97
  %v1003 = vunpack.c.l.b16 %v98
  %v1004 = vunpack.c.l.b16 %v99
  %v1005 = vunpack.c.l.b16 %v100
  %v1006 = vunpack.c.l.b16 %v101
  %v1007 = vunpack.c.l.b16 %v102
  %v1008 = vunpack.c.l.b16 %v103
  %v1009 = vunpack.c.l.b16 %v104
  %v1010 = vunpack.c.l.b16 %v105
  %v1011 = vunpack.c.l.b16 %v106
  %v1012 = vunpack.c.l.b16 %v107
  %v1013 = vunpack.c.l.b16 %v108
  %v1014 = vunpack.c.l.b16 %v109
  %v1015 = vunpack.c.l.b16 %v110
  %v1016 = vunpack.c.l.b16 %v111
  %v1017 = vunpack.c.l.b16 %v112
  %v1018 = vunpack.c.l.b16 %v113
  %v1019 = vunpack.c.l.b16 %v114
  %v1020 = vunpack.c.l.b16 %v115
  %v1021 = vunpack.c.l.b16 %v116
  %v1022 = vunpack.c.l.b16 %v117
  %v1023 = vunpack.c.l.b16 %v118
  %v1024 = vunpack.c.l.b16 %v119
  %v1025 = vunpack.c.l.b16 %v120
  %v1026 = vunpack.c.l.b16 %v121
  %v1027 = vunpack.c.l.b16 %v122
  %v1028 = vunpack.c.l.b16 %v123
  %v1029 = vunpack.c.l.b16 %v124
  %v1030 = vunpack.c.l.b16 %v125
  %v1031 = vunpack.c.l.b16 %v126
  %v1032 = vunpack.c.l.b16 %v127
  %v1033 = vunpack.c.l.b16 %v128
  %v1034 = vunpack.c.l.b16 %v129
  %v1035 = vunpack.c.l.b16 %v130
  %v1036 = vunpack.c.l.b16 %v131
  %v1037 = vunpack.c.l.b16 %v132
  %v1038 = vunpack.c.l.b16 %v133
  %v1039 = vunpack.c.l.b16 %v134
  %v1040 = vunpack.c.l.b16 %v135
  %v1041 = vunpack.c.l.b16 %v136
  %v1042 = vunpack.c.l.b16 %v137
  %v1043 = vunpack.c.l.b16 %v138
  %v1044 = vunpack.c.l.b16 %v139
  %v1045 = vunpack.c.l.b16 %v140
  %v1046 = vunpack.c.l.b16 %v141
  %v1047 = vunpack.c.l.b16 %v142
  %v1048 = vunpack.c.l.b16 %v143
  %v1049 = vunpack.c.l.b16 %v144
  %v1050 = vunpack.c.l.b16 %v145
  %v1051 = vunpack.c.l.b16 %v146
  %v1052 = vunpack.c.l.b16 %v147
  %v1053 = vunpack.c.l.b16 %v148
  %v1054 = vunpack.c.l.b16 %v149
  %v1055 = vunpack.c.l.b16 %v150
  %v1056 = vunpack.c.l.b16 %v151
  %v1057 = vunpack.c.l.b16 %v152
  %v1058 = vunpack.c.l.b16 %v153
  %v1059 = vunpack.c.l.b16 %v154
  %v1060 = vunpack.c.l.b16 %v155
  %v1061 = vunpack.c.l.b16 %v156
  %v1062 = vunpack.c.l.b16 %v157
  %v1063 = vunpack.c.l.b16 %v158
  %v1064 = vunpack.c.l.b16 %v159
  %v1065 = vunpack.c.l.b16 %v160
  %v1066 = vunpack.c.l.b16 %v161
  %v1067 = vunpack.c.l.b16 %v162
  %v1068 = vunpack.c.l.b16 %v163
  %v1069 = vunpack.c.l.b16 %v164
  %v1070 = vunpack.c.l.b16 %v165
  %v1071 = vunpack.c.l.b16 %v166
  %v1072 = vunpack.c.l.b16 %v167
  %v1073 = vunpack.c.l.b16 %v168
  %v1074 = vunpack.c.l.b16 %v169
  %v1075 = vunpack.c.l.b16 %v170
  %v1076 = vunpack.c.l.b16 %v171
  %v1077 = vunpack.c.l.b16 %v172
  %v1078 = vunpack.c.l.b16 %v173
  %v1079 = vunpack.c.l.b16 %v174
  %v1080 = vunpack.c.l.b16 %v175
  %v1081 = vunpack.c.l.b16 %v176
  %v1082 = vunpack.c.l.b16 %v177
  %v1083 = vunpack.c.l.b16 %v178
  %v1084 = vunpack.c.l.b16 %v179
  %v1085 = vunpack.c.l.b16 %v180
  %v1086 = vunpack.c.l.b16 %v181
  %v1087 = vunpack.c.l.b16 %v182
  %v1088 = vunpack.c.l.b16 %v183
  %v1089 = vunpack.c.l.b16 %v184
  %v1090 = vunpack.c.l.b16 %v185
  %v1091 = vunpack.c.l.b16 %v186
  %v1092 = vunpack.c.l.b16 %v187
  %v1093 = vunpack.c.l.b16 %v188
  %v1094 = vunpack.c.l.b16 %v189
  %v1095 = vunpack.c.l.b16 %v190
  %v1096 = vunpack.c.l.b16 %v191
  %v1097 = vunpack.c.l.b16 %v192
  %v1098 = vunpack.c.l.b16 %v193
  %v1099 = vunpack.c.l.b16 %v194
  %v1100 = vunpack.c.l.b16 %v195
  %v1101 = vunpack.c.l.b16 %v196
  %v1102 = vunpack.c.l.b16 %v197
  %v1103 = vunpack.c.l.b16 %v198
  %v1104 = vunpack.c.l.b16 %v199
  %v1105 = vunpack.c.l.b16 %v200
  %v1106 = vunpack.c.l.b16 %v201
  %v1107 = vunpack.c.l.b16 %v202
  %v1108 = vunpack.c.l.b16 %v203
  %v1109 = vunpack.c.l.b16 %v204
  %v1110 = vunpack.c.l.b16 %v205
  %v1111 = vunpack.c.l.b16 %v206
  %v1112 = vunpack.c.l.b16 %v207
  %v1113 = vunpack.c.l.b16 %v208
  %v1114 = vunpack.c.l.b16 %v209
  %v1115 = vunpack.c.l.b16 %v210
  %v1116 = vunpack.c.l.b16 %v211
  %v1117 = vunpack.c.l.b16 %v212
  %v1118 = vunpack.c.l.b16 %v213
  %v1119 = vunpack.c.l.b16 %v214
  %v1120 = vunpack.c.l.b16 %v215
  %v1121 = vunpack.c.l.b16 %v216
  %v1122 = vunpack.c.l.b16 %v217
  %v1123 = vunpack.c.l.b16 %v218
  %v1124 = vunpack.c.l.b16 %v219
  %v1125 = vunpack.c.l.b16 %v220
  %v1126 = vunpack.c.l.b16 %v221
  %v1127 = vunpack.c.l.b16 %v222
  %v1128 = vunpack.c.l.b16 %v223
  %v1129 = vunpack.c.l.b16 %v224
  %v1130 = vunpack.c.l.b16 %v225
  %v1131 = vunpack.c.l.b16 %v226
  %v1132 = vunpack.c.l.b16 %v227
  %v1133 = vunpack.c.l.b16 %v228
  %v1134 = vunpack.c.l.b16 %v229
  %v1135 = vunpack.c.l.b16 %v230
  %v1136 = vunpack.c.l.b16 %v231
  %v1137 = vunpack.c.l.b16 %v232
  %v1138 = vunpack.c.l.b16 %v233
  %v1139 = vunpack.c.l.b16 %v234
  %v1140 = vunpack.c.l.b16 %v235
  %v1141 = vunpack.c.l.b16 %v236
  %v1142 = vunpack.c.l.b16 %v237
  %v1143 = vunpack.c.l.b16 %v238
  %v1144 = vunpack.c.l.b16 %v239
  %v1145 = vunpack.c.l.b16 %v240
  %v1146 = vunpack.c.l.b16 %v241
  %v1147 = vunpack.c.l.b16 %v242
  %v1148 = vunpack.c.l.b16 %v243
  %v1149 = vunpack.c.l.b16 %v244
  %v1150 = vunpack.c.l.b16 %v245
  %v1151 = vunpack.c.l.b16 %v246
  %v1152 = vunpack.c.l.b16 %v247
  %v1153 = vunpack.c.l.b16 %v248
  %v1154 = vunpack.c.l.b16 %v249
  %v1155 = vunpack.c.l.b16 %v250
  %v1156 = vunpack.c.l.b16 %v251
  %v1157 = vunpack.c.l.b16 %v252
  %v1158 = vunpack.c.l.b16 %v253
  %v1159 = vunpack.c.l.b16 %v254
  %v1160 = vunpack.c.l.b16 %v255
  %v1161 = vunpack.c.l.b16 %v256
  %v1162 = vunpack.c.l.b16 %v257
  %v1163 = vunpack.c.l.b16 %v258
  %v1164 = vunpack.c.l.b16 %v259
  %v1165 = vunpack.c.l.b16 %v260
  %v1166 = vunpack.c.l.b16 %v261
  %v1167 = vunpack.c.l.b16 %v262
  %v1168 = vunpack.c.l.b16 %v263
  %v1169 = vunpack.c.l.b16 %v264
  %v1170 = vunpack.c.l.b16 %v265
  %v1171 = vunpack.c.l.b16 %v266
  %v1172 = vunpack.c.l.b16 %v267
  %v1173 = vunpack.c.l.b16 %v268
  %v1174 = vunpack.c.l.b16 %v269
  %v1175 = vunpack.c.l.b16 %v270
  %v1176 = vunpack.c.l.b16 %v271
  %v1177 = vunpack.c.l.b16 %v272
  %v1178 = vunpack.c.l.b16 %v273
  %v1179 = vunpack.c.l.b16 %v274
  %v1180 = vunpack.c.l.b16 %v275
  %v1181 = vunpack.c.l.b16 %v276
  %v1182 = vunpack.c.l.b16 %v277
  %v1183 = vunpack.c.l.b16 %v278
  %v1184 = vunpack.c.l.b16 %v279
  %v1185 = vunpack.c.l.b16 %v280
  %v1186 = vunpack.c.l.b16 %v281
  %v1187 = vunpack.c.l.b16 %v282
  %v1188 = vunpack.c.l.b16 %v283
  %v1189 = vunpack.c.l.b16 %v284
  %v1190 = vunpack.c.l.b16 %v285
  %v1191 = vunpack.c.l.b16 %v286
  %v1192 = vunpack.c.l.b16 %v287
  %v1193 = vunpack.c.l.b16 %v288
  %v1194 = vunpack.c.l.b16 %v289
  %v1195 = vunpack.c.l.b16 %v290
  %v1196 = vunpack.c.l.b16 %v291
  %v1197 = vunpack.c.l.b16 %v292
  %v1198 = vunpack.c.l.b16 %v293
  %v1199 = vunpack.c.l.b16 %v294
  %v1200 = vunpack.c.l.b16 %v295
  %v1201 = vunpack.c.l.b16 %v296
  %v1202 = vunpack.c.l.b16 %v297
  %v1203 = vunpack.c.l.b16 %v298
  %v1204 = vunpack.c.l.b16 %v299
  %v1205 = vunpack.c.l.b16 %v300
  %v1206 = vunpack.c.l.b16 %v301
  %v1207 = vunpack.c.l.b16 %v302
  %v1208 = vunpack.c.l.b16 %v303
  %v1209 = vunpack.c.l.b16 %v304
  %v1210 = vunpack.c.l.b16 %v305
  %v1211 = vunpack.c.l.b16 %v306
  %v1212 = vunpack.c.l.b16 %v307
  %v1213 = vunpack.c.l.b16 %v308
  %v1214 = vunpack.c.l.b16 %v309
  %v1215 = vunpack.c.l.b16 %v310
  %v1216 = vunpack.c.l.b16 %v311
  %v1217 = vunpack.c.l.b16 %v312
  %v1218 = vunpack.c.l.b16 %v313
  %v1219 = vunpack.c.l.b16 %v314
  %v1220 = vunpack.c.l.b16 %v315
  %v1221 = vunpack.c.l.b16 %v316
  %v1222 = vunpack.c.l.b16 %v317
  %v1223 = vunpack.c.l.b16 %v318
  %v1224 = vunpack.c.l.b16 %v319
  %v1225 = vunpack.c.l.b16 %v320
  %v1226 = vunpack.c.l.b16 %v321
  %v1227 = vunpack.c.l.b16 %v322
  %v1228 = vunpack.c.l.b16 %v323
  %v1229 = vunpack.c.l.b16 %v324
  %v1230 = vunpack.c.l.b16 %v325
  %v1231 = vunpack.c.l.b16 %v326
  %v1232 = vunpack.c.l.b16 %v327
  %v1233 = vunpack.c.l.b16 %v328
  %v1234 = vunpack.c.l.b16 %v329
  %v1235 = vunpack.c.l.b16 %v330
  %v1236 = vunpack.c.l.b16 %v331
  %v1237 = vunpack.c.l.b16 %v332
  %v1238 = vunpack.c.l.b16 %v333
  %v1239 = vunpack.c.l.b16 %v334
  %v1240 = vunpack.c.l.b16 %v335
  %v1241 = vunpack.c.l.b16 %v336
  %v1242 = vunpack.c.l.b16 %v337
  %v1243 = vunpack.c.l.b16 %v338
  %v1244 = vunpack.c.l.b16 %v339
  %v1245 = vunpack.c.l.b16 %v340
  %v1246 = vunpack.c.l.b16 %v341
  %v1247 = vunpack.c.l.b16 %v342
  %v1248 = vunpack.c.l.b16 %v343
  %v1249 = vunpack.c.l.b16 %v344
  %v1250 = vunpack.c.l.b16 %v345
  %v1251 = vunpack.c.l.b16 %v346
  %v1252 = vunpack.c.l.b16 %v347
  %v1253 = vunpack.c.l.b16 %v348
  %v1254 = vunpack.c.l.b16 %v349
  %v1255 = vunpack.c.l.b16 %v350
  %v1256 = vunpack.c.l.b16 %v351
  %v1257 = vunpack.c.l.b16 %v352
  %v1258 = vunpack.c.l.b16 %v353
  %v1259 = vunpack.c.l.b16 %v354
  %v1260 = vunpack.c.l.b16 %v355
  %v1261 = vunpack.c.l.b16 %v356
  %v1262 = vunpack.c.l.b16 %v357
  %v1263 = vunpack.c.l.b16 %v358
  %v1264 = vunpack.c.l.b16 %v359
  %v1265 = vunpack.c.l.b16 %v360
  %v1266 = vunpack.c.l.b16 %v361
  %v1267 = vunpack.c.l.b16 %v362
  %v1268 = vunpack.c.l.b16 %v363
  %v1269 = vunpack.c.l.b16 %v364
  %v1270 = vunpack.c.l.b16 %v365
  %v1271 = vunpack.c.l.b16 %v366
  %v1272 = vunpack.c.l.b16 %v367
  %v1273 = vunpack.c.l.b16 %v368
  %v1274 = vunpack.c.l.b16 %v369
  %v1275 = vunpack.c.l.b16 %v370
  %v1276 = vunpack.c.l.b16 %v371
  %v1277 = vunpack.c.l.b16 %v372
  %v1278 = vunpack.c.l.b16 %v373
  %v1279 = vunpack.c.l.b16 %v374
  %v1280 = vunpack.c.l.b16 %v375
  %v1281 = vunpack.c.l.b16 %v376
  %v1282 = vunpack.c.l.b16 %v377
  %v1283 = vunpack.c.l.b16 %v378
  %v1284 = vunpack.c.l.b16 %v379
  %v1285 = vunpack.c.l.b16 %v380
  %v1286 = vunpack.c.l.b16 %v381
  %v1287 = vunpack.c.l.b16 %v382
  %v1288 = vunpack.c.l.b16 %v383
  %v1289 = vunpack.c.l.b16 %v384
  %v1290 = vunpack.c.l.b16 %v385
  %v1291 = vunpack.c.l.b16 %v386
  %v1292 = vunpack.c.l.b16 %v387
  %v1293 = vunpack.c.l.b16 %v388
  %v1294 = vunpack.c.l.b16 %v389
  %v1295 = vunpack.c.l.b16 %v390
  %v1296 = vunpack.c.l.b16 %v391
  %v1297 = vunpack.c.l.b16 %v392
  %v1298 = vunpack.c.l.b16 %v393
  %v1299 = vunpack.c.l.b16 %v394
  %v1300 = vunpack.c.l.b16 %v395
  %v1301 = vunpack.c.l.b16 %v396
  %v1302 = vunpack.c.l.b16 %v397
  %v1303 = vunpack.c.l.b16 %v398
  %v1304 = vunpack.c.l.b16 %v399
  %v1305 = vunpack.c.l.b16 %v400
  %v1306 = vunpack.c.l.b16 %v401
  %v1307 = vunpack.c.l.b16 %v402
  %v1308 = vunpack.c.l.b16 %v403
  %v1309 = vunpack.c.l.b16 %v404
  %v1310 = vunpack.c.l.b16 %v405
  %v1311 = vunpack.c.l.b16 %v406
  %v1312 = vunpack.c.l.b16 %v407
  %v1313 = vunpack.c.l.b16 %v408
  %v1314 = vunpack.c.l.b16 %v409
  %v1315 = vunpack.c.l.b16 %v410
  %v1316 = vunpack.c.l.b16 %v411
  %v1317 = vunpack.c.l.b16 %v412
  %v1318 = vunpack.c.l.b16 %v413
  %v1319 = vunpack.c.l.b16 %v414
  %v1320 = vunpack.c.l.b16 %v415
  %v1321 = vunpack.c.l.b16 %v416
  %v1322 = vunpack.c.l.b16 %v417
  %v1323 = vunpack.c.l.b16 %v418
  %v1324 = vunpack.c.l.b16 %v419
  %v1325 = vunpack.c.l.b16 %v420
  %v1326 = vunpack.c.l.b16 %v421
  %v1327 = vunpack.c.l.b16 %v422
  %v1328 = vunpack.c.l.b16 %v423
  %v1329 = vunpack.c.l.b16 %v424
  %v1330 = vunpack.c.l.b16 %v425
  %v1331 = vunpack.c.l.b16 %v426
  %v1332 = vunpack.c.l.b16 %v427
  %v1333 = vunpack.c.l.b16 %v428
  %v1334 = vunpack.c.l.b16 %v429
  %v1335 = vunpack.c.l.b16 %v430
  %v1336 = vunpack.c.l.b16 %v431
  %v1337 = vunpack.c.l.b16 %v432
  %v1338 = vunpack.c.l.b16 %v433
  %v1339 = vunpack.c.l.b16 %v434
  %v1340 = vunpack.c.l.b16 %v435
  %v1341 = vunpack.c.l.b16 %v436
  %v1342 = vunpack.c.l.b16 %v437
  %v1343 = vunpack.c.l.b16 %v438
  %v1344 = vunpack.c.l.b16 %v439
  %v1345 = vunpack.c.l.b16 %v440
  %v1346 = vunpack.c.l.b16 %v441
  %v1347 = vunpack.c.l.b16 %v442
  %v1348 = vunpack.c.l.b16 %v443
  %v1349 = vunpack.c.l.b16 %v444
  %v1350 = vunpack.c.l.b16 %v445
  %v1351 = vunpack.c.l.b16 %v446
  %v1352 = vunpack.c.l.b16 %v447
  %v1353 = vunpack.c.l.b16 %v448
  %v1354 = vunpack.c.l.b16 %v449
  %v1355 = vunpack.c.l.b16 %v450
  %v1356 = vunpack.c.l.b16 %v451
  %v1357 = vunpack.c.l.b16 %v452
  %v1358 = vunpack.c.l.b16 %v453
  %v1359 = vunpack.c.l.b16 %v454
  %v1360 = vunpack.c.l.b16 %v455
  %v1361 = vpack.c.b16 %v921, %v920
  %v1362 = vpack.c.b16 %v923, %v922
  %v1363 = vpack.c.b16 %v925, %v924
  %v1364 = vpack.c.b16 %v927, %v926
  %v1365 = vpack.c.b16 %v929, %v928
  %v1366 = vpack.c.b16 %v931, %v930
  %v1367 = vpack.c.b16 %v933, %v932
  %v1368 = vpack.c.b16 %v935, %v934
  %v1369 = vpack.c.b16 %v937, %v936
  %v1370 = vpack.c.b16 %v939, %v938
  %v1371 = vpack.c.b16 %v941, %v940
  %v1372 = vpack.c.b16 %v943, %v942
  %v1373 = vpack.c.b16 %v945, %v944
  %v1374 = vpack.c.b16 %v947, %v946
  %v1375 = vpack.c.b16 %v949, %v948
  %v1376 = vpack.c.b16 %v951, %v950
  %v1377 = vpack.c.b16 %v953, %v952
  %v1378 = vpack.c.b16 %v955, %v954
  %v1379 = vpack.c.b16 %v957, %v956
  %v1380 = vpack.c.b16 %v959, %v958
  %v1381 = vpack.c.b16 %v961, %v960
  %v1382 = vpack.c.b16 %v963, %v962
  %v1383 = vpack.c.b16 %v965, %v964
  %v1384 = vpack.c.b16 %v967, %v966
  %v1385 = vpack.c.b16 %v969, %v968
  %v1386 = vpack.c.b16 %v971, %v970
  %v1387 = vpack.c.b16 %v973, %v972
  %v1388 = vpack.c.b16 %v975, %v974
  %v1389 = vpack.c.b16 %v977, %v976
  %v1390 = vpack.c.b16 %v979, %v978
  %v1391 = vpack.c.b16 %v981, %v980
  %v1392 = vpack.c.b16 %v983, %v982
  %v1393 = vpack.c.b16 %v985, %v984
  %v1394 = vpack.c.b16 %v987, %v986
  %v1395 = vpack.c.b16 %v989, %v988
  %v1396 = vpack.c.b16 %v991, %v990
  %v1397 = vpack.c.b16 %v993, %v992
  %v1398 = vpack.c.b16 %v995, %v994
  %v1399 = vpack.c.b16 %v997, %v996
  %v1400 = vpack.c.b16 %v999, %v998
  %v1401 = vpack.c.b16 %v1001, %v1000
  %v1402 = vpack.c.b16 %v1003, %v1002
  %v1403 = vpack.c.b16 %v1005, %v1004
  %v1404 = vpack.c.b16 %v1007, %v1006
  %v1405 = vpack.c.b16 %v1009, %v1008
  %v1406 = vpack.c.b16 %v1011, %v1010
  %v1407 = vpack.c.b16 %v1013, %v1012
  %v1408 = vpack.c.b16 %v1015, %v1014
  %v1409 = vpack.c.b16 %v1017, %v1016
  %v1410 = vpack.c.b16 %v1019, %v1018
  %v1411 = vpack.c.b16 %v1021, %v1020
  %v1412 = vpack.c.b16 %v1023, %v1022
  %v1413 = vpack.c.b16 %v1025, %v1024
  %v1414 = vpack.c.b16 %v1027, %v1026
  %v1415 = vpack.c.b16 %v1029, %v1028
  %v1416 = vpack.c.b16 %v1031, %v1030
  %v1417 = vpack.c.b16 %v1033, %v1032
  %v1418 = vpack.c.b16 %v1035, %v1034
  %v1419 = vpack.c.b16 %v1037, %v1036
  %v1420 = vpack.c.b16 %v1039, %v1038
  %v1421 = vpack.c.b16 %v1041, %v1040
  %v1422 = vpack.c.b16 %v1043, %v1042
  %v1423 = vpack.c.b16 %v1045, %v1044
  %v1424 = vpack.c.b16 %v1047, %v1046
  %v1425 = vpack.c.b16 %v1049, %v1048
  %v1426 = vpack.c.b16 %v1051, %v1050
  %v1427 = vpack.c.b16 %v1053, %v1052
  %v1428 = vpack.c.b16 %v1055, %v1054
  %v1429 = vpack.c.b16 %v1057, %v1056
  %v1430 = vpack.c.b16 %v1059, %v1058
  %v1431 = vpack.c.b16 %v1061, %v1060
  %v1432 = vpack.c.b16 %v1063, %v1062
  %v1433 = vpack.c.b16 %v1065, %v1064
  %v1434 = vpack.c.b16 %v1067, %v1066
  %v1435 = vpack.c.b16 %v1069, %v1068
  %v1436 = vpack.c.b16 %v1071, %v1070
  %v1437 = vpack.c.b16 %v1073, %v1072
  %v1438 = vpack.c.b16 %v1075, %v1074
  %v1439 = vpack.c.b16 %v1077, %v1076
  %v1440 = vpack.c.b16 %v1079, %v1078
  %v1441 = vpack.c.b16 %v1081, %v1080
  %v1442 = vpack.c.b16 %v1083, %v1082
  %v1443 = vpack.c.b16 %v1085, %v1084
  %v1444 = vpack.c.b16 %v1087, %v1086
  %v1445 = vpack.c.b16 %v1089, %v1088
  %v1446 = vpack.c.b16 %v1091, %v1090
  %v1447 = vpack.c.b16 %v1093, %v1092
  %v1448 = vpack.c.b16 %v1095, %v1094
  %v1449 = vpack.c.b16 %v1097, %v1096
  %v1450 = vpack.c.b16 %v1099, %v1098
  %v1451 = vpack.c.b16 %v1101, %v1100
  %v1452 = vpack.c.b16 %v1103, %v1102
  %v1453 = vpack.c.b16 %v1105, %v1104
  %v1454 = vpack.c.b16 %v1107, %v1106
  %v1455 = vpack.c.b16 %v1109, %v1108
  %v1456 = vpack.c.b16 %v1111, %v1110
  %v1457 = vpack.c.b16 %v1113, %v1112
  %v1458 = vpack.c.b16 %v1115, %v1114
  %v1459 = vpack.c.b16 %v1117, %v1116
  %v1460 = vpack.c.b16 %v1119, %v1118
  %v1461 = vpack.c.b16 %v1121, %v1120
  %v1462 = vpack.c.b16 %v1123, %v1122
  %v1463 = vpack.c.b16 %v1125, %v1124
  %v1464 = vpack.c.b16 %v1127, %v1126
  %v1465 = vpack.c.b16 %v1129, %v1128
  %v1466 = vpack.c.b16 %v1131, %v1130
  %v1467 = vpack.c.b16 %v1133, %v1132
  %v1468 = vpack.c.b16 %v1135, %v1134
  %v1469 = vpack.c.b16 %v1137, %v1136
  %v1470 = vpack.c.b16 %v1139, %v1138
  %v1471 = vpack.c.b16 %v1141, %v1140
  %v1472 = vpack.c.b16 %v1143, %v1142
  %v1473 = vpack.c.b16 %v1145, %v1144
  %v1474 = vpack.c.b16 %v1147, %v1146
  %v1475 = vpack.c.b16 %v1149, %v1148
  %v1476 = vpack.c.b16 %v1151, %v1150
  %v1477 = vpack.c.b16 %v1153, %v1152
  %v1478 = vpack.c.b16 %v1155, %v1154
  %v1479 = vpack.c.b16 %v1157, %v1156
  %v1480 = vpack.c.b16 %v1159, %v1158
  %v1481 = vpack.c.b16 %v1161, %v1160
  %v1482 = vpack.c.b16 %v1163, %v1162
  %v1483 = vpack.c.b16 %v1165, %v1164
  %v1484 = vpack.c.b16 %v1167, %v1166
  %v1485 = vpack.c.b16 %v1169, %v1168
  %v1486 = vpack.c.b16 %v1171, %v1170
  %v1487 = vpack.c.b16 %v1173, %v1172
  %v1488 = vpack.c.b16 %v1175, %v1174
  %v1489 = vpack.c.b16 %v1177, %v1176
  %v1490 = vpack.c.b16 %v1179, %v1178
  %v1491 = vpack.c.b16 %v1181, %v1180
  %v1492 = vpack.c.b16 %v1183, %v1182
  %v1493 = vpack.c.b16 %v1185, %v1184
  %v1494 = vpack.c.b16 %v1187, %v1186
  %v1495 = vpack.c.b16 %v1189, %v1188
  %v1496 = vpack.c.b16 %v1191, %v1190
  %v1497 = vpack.c.b16 %v1193, %v1192
  %v1498 = vpack.c.b16 %v1195, %v1194
  %v1499 = vpack.c.b16 %v1197, %v1196
  %v1500 = vpack.c.b16 %v1199, %v1198
  %v1501 = vpack.c.b16 %v1201, %v1200
  %v1502 = vpack.c.b16 %v1203, %v1202
  %v1503 = vpack.c.b16 %v1205, %v1204
  %v1504 = vpack.c.b16 %v1207, %v1206
  %v1505 = vpack.c.b16 %v1209, %v1208
  %v1506 = vpack.c.b16 %v1211, %v1210
  %v1507 = vpack.c.b16 %v1213, %v1212
  %v1508 = vpack.c.b16 %v1215, %v1214
  %v1509 = vpack.c.b16 %v1217, %v1216
  %v1510 = vpack.c.b16 %v1219, %v1218
  %v1511 = vpack.c.b16 %v1221, %v1220
  %v1512 = vpack.c.b16 %v1223, %v1222
  %v1513 = vpack.c.b16 %v1225, %v1224
  %v1514 = vpack.c.b16 %v1227, %v1226
  %v1515 = vpack.c.b16 %v1229, %v1228
  %v1516 = vpack.c.b16 %v1231, %v1230
  %v1517 = vpack.c.b16 %v1233, %v1232
  %v1518 = vpack.c.b16 %v1235, %v1234
  %v1519 = vpack.c.b16 %v1237, %v1236
  %v1520 = vpack.c.b16 %v1239, %v1238
  %v1521 = vpack.c.b16 %v1241, %v1240
  %v1522 = vpack.c.b16 %v1243, %v1242
  %v1523 = vpack.c.b16 %v1245, %v1244
  %v1524 = vpack.c.b16 %v1247, %v1246
  %v1525 = vpack.c.b16 %v1249, %v1248
  %v1526 = vpack.c.b16 %v1251, %v1250
  %v1527 = vpack.c.b16 %v1253, %v1252
  %v1528 = vpack.c.b16 %v1255, %v1254
  %v1529 = vpack.c.b16 %v1257, %v1256
  %v1530 = vpack.c.b16 %v1259, %v1258
  %v1531 = vpack.c.b16 %v1261, %v1260
  %v1532 = vpack.c.b16 %v1263, %v1262
  %v1533 = vpack.c.b16 %v1265, %v1264
  %v1534 = vpack.c.b16 %v1267, %v1266
  %v1535 = vpack.c.b16 %v1269, %v1268
  %v1536 = vpack.c.b16 %v1271, %v1270
  %v1537 = vpack.c.b16 %v1273, %v1272
  %v1538 = vpack.c.b16 %v1275, %v1274
  %v1539 = vpack.c.b16 %v1277, %v1276
  %v1540 = vpack.c.b16 %v1279, %v1278
  %v1541 = vpack.c.b16 %v1281, %v1280
  %v1542 = vpack.c.b16 %v1283, %v1282
  %v1543 = vpack.c.b16 %v1285, %v1284
  %v1544 = vpack.c.b16 %v1287, %v1286
  %v1545 = vpack.c.b16 %v1289, %v1288
  %v1546 = vpack.c.b16 %v1291, %v1290
  %v1547 = vpack.c.b16 %v1293, %v1292
  %v1548 = vpack.c.b16 %v1295, %v1294
  %v1549 = vpack.c.b16 %v1297, %v1296
  %v1550 = vpack.c.b16 %v1299, %v1298
  %v1551 = vpack.c.b16 %v1301, %v1300
  %v1552 = vpack.c.b16 %v1303, %v1302
  %v1553 = vpack.c.b16 %v1305, %v1304
  %v1554 = vpack.c.b16 %v1307, %v1306
  %v1555 = vpack.c.b16 %v1309, %v1308
  %v1556 = vpack.c.b16 %v1311, %v1310
  %v1557 = vpack.c.b16 %v1313, %v1312
  %v1558 = vpack.c.b16 %v1315, %v1314
  %v1559 = vpack.c.b16 %v1317, %v1316
  %v1560 = vpack.c.b16 %v1319, %v1318
  %v1561 = vpack.c.b16 %v1321, %v1320
  %v1562 = vpack.c.b16 %v1323, %v1322
  %v1563 = vpack.c.b16 %v1325, %v1324
  %v1564 = vpack.c.b16 %v1327, %v1326
  %v1565 = vpack.c.b16 %v1329, %v1328
  %v1566 = vpack.c.b16 %v1331, %v1330
  %v1567 = vpack.c.b16 %v1333, %v1332
  %v1568 = vpack.c.b16 %v1335, %v1334
  %v1569 = vpack.c.b16 %v1337, %v1336
  %v1570 = vpack.c.b16 %v1339, %v1338
  %v1571 = vpack.c.b16 %v1341, %v1340
  %v1572 = vpack.c.b16 %v1343, %v1342
  %v1573 = vpack.c.b16 %v1345, %v1344
  %v1574 = vpack.c.b16 %v1347, %v1346
  %v1575 = vpack.c.b16 %v1349, %v1348
  %v1576 = vpack.c.b16 %v1351, %v1350
  %v1577 = vpack.c.b16 %v1353, %v1352
  %v1578 = vpack.c.b16 %v1355, %v1354
  %v1579 = vpack.c.b16 %v1357, %v1356
  %v1580 = vpack.c.b16 %v1359, %v1358
  %v1581 = vpack.c.b16 %v1360, %v1360
  %v1819 = vunpack.c.l.b16 %v456
  %v1820 = vunpack.c.l.b16 %v457
  %v1821 = vunpack.c.l.b16 %v458
  %v1822 = vunpack.c.l.b16 %v459
  %v1823 = vunpack.c.l.b16 %v460
  %v1824 = vunpack.c.l.b16 %v461
  %v1825 = vunpack.c.l.b16 %v462
  %v1826 = vunpack.c.l.b16 %v463
  %v1827 = vunpack.c.l.b16 %v464
  %v1828 = vunpack.c.l.b16 %v465
  %v1829 = vunpack.c.l.b16 %v466
  %v1830 = vunpack.c.l.b16 %v467
  %v1831 = vunpack.c.l.b16 %v468
  %v1832 = vunpack.c.l.b16 %v469
  %v1833 = vunpack.c.l.b16 %v470
  %v1834 = vunpack.c.l.b16 %v471
  %v1835 = vpack.c.b16 %v1820, %v1819
  %v1836 = vpack.c.b16 %v1822, %v1821
  %v1837 = vpack.c.b16 %v1824, %v1823
  %v1838 = vpack.c.b16 %v1826, %v1825
  %v1839 = vpack.c.b16 %v1828, %v1827
  %v1840 = vpack.c.b16 %v1830, %v1829
  %v1841 = vpack.c.b16 %v1832, %v1831
  %v1842 = vpack.c.b16 %v1834, %v1833
  %1851 = vmatprep.subr.bf16.mxu0 0
  %1852 = vmatpush1.bf16.msra.mxu0 %v1835
  %1853 = vmatprep.subr.bf16.mxu0 0
  %1854 = vmatpush1.bf16.msra.mxu0 %v1836
  %1855 = vmatprep.subr.bf16.mxu0 0
  %1856 = vmatpush1.bf16.msra.mxu0 %v1837
  %1857 = vmatprep.subr.bf16.mxu0 0
  %1858 = vmatpush1.bf16.msra.mxu0 %v1838
  %1859 = vmatprep.subr.bf16.mxu0 0
  %1860 = vmatpush1.bf16.msra.mxu0 %v1839
  %1861 = vmatprep.subr.bf16.mxu0 0
  %1862 = vmatpush1.bf16.msra.mxu0 %v1840
  %1863 = vmatprep.subr.bf16.mxu0 0
  %1864 = vmatpush1.bf16.msra.mxu0 %v1841
  %1865 = vmatprep.subr.bf16.mxu0 0
  %1866 = vmatpush1.bf16.msra.mxu0 %v1842
  %1867 = vmatprep.subr.bf16.mxu0 0
  %1868 = vmatpush1.bf16.msra.mxu0 0
  %1869 = vmatprep.subr.bf16.mxu0 0
  %1870 = vmatpush1.bf16.msra.mxu0 0
  %1871 = vmatprep.subr.bf16.mxu0 0
  %1872 = vmatpush1.bf16.msra.mxu0 0
  %1873 = vmatprep.subr.bf16.mxu0 0
  %1874 = vmatpush1.bf16.msra.mxu0 0
  %1875 = vmatprep.subr.bf16.mxu0 0
  %1876 = vmatpush1.bf16.msra.mxu0 0
  %1877 = vmatprep.subr.bf16.mxu0 0
  %1878 = vmatpush1.bf16.msra.mxu0 0
  %1879 = vmatprep.subr.bf16.mxu0 0
  %1880 = vmatpush1.bf16.msra.mxu0 0
  %1881 = vmatprep.subr.bf16.mxu0 0
  %1882 = vmatpush1.bf16.msra.mxu0 0
  %1883 = vmatprep.mubr.bf16.mxu0 0
  %1884 = vmatmul.mubr.bf16.gmra.mrb[0].mxu0 %v1361
  %v1885 = vpop.f32.mrb[0].mxu0
  %v1886 = vadd.f32 %v477, %v1885
  %v1887 = vpop.f32.mrb[0].mxu0
  %v1888 = vpop.f32.mrb[0].mxu0
  %v1889 = vadd.f32 %v477, %v1888
  %v1890 = vpop.f32.mrb[0].mxu0
  %1891 = vmatprep.mubr.bf16.mxu0 0
  %1892 = vmatmul.mubr.bf16.gmra.mrb[0].mxu0 %v1362
  %v1893 = vpop.f32.mrb[0].mxu0
  %v1894 = vadd.f32 %v477, %v1893
  %v1895 = vpop.f32.mrb[0].mxu0
  %v1896 = vpop.f32.mrb[0].mxu0
  %v1897 = vadd.f32 %v477, %v1896
  %v1898 = vpop.f32.mrb[0].mxu0
  %1899 = vmatprep.mubr.bf16.mxu0 0
  %1900 = vmatmul.mubr.bf16.gmra.mrb[0].mxu0 %v1363
  %v1901 = vpop.f32.mrb[0].mxu0
  %v1902 = vadd.f32 %v477, %v1901
  %v1903 = vpop.f32.mrb[0].mxu0
  %v1904 = vpop.f32.mrb[0].mxu0
  %v1905 = vadd.f32 %v477, %v1904
  %v1906 = vpop.f32.mrb[0].mxu0
  %1907 = vmatprep.mubr.bf16.mxu0 0
  %1908 = vmatmul.mubr.bf16.gmra.mrb[0].mxu0 %v1364
  %v1909 = vpop.f32.mrb[0].mxu0
  %v1910 = vadd.f32 %v477, %v1909
  %v1911 = vpop.f32.mrb[0].mxu0
  %v1912 = vpop.f32.mrb[0].mxu0
  %v1913 = vadd.f32 %v477, %v1912
  %v1914 = vpop.f32.mrb[0].mxu0
  %1915 = vmatprep.mubr.bf16.mxu0 0
  %1916 = vmatmul.mubr.bf16.gmra.mrb[0].mxu0 %v1365
  %v1917 = vpop.f32.mrb[0].mxu0
  %v1918 = vadd.f32 %v477, %v1917
  %v1919 = vpop.f32.mrb[0].mxu0
  %v1920 = vpop.f32.mrb[0].mxu0
  %v1921 = vadd.f32 %v477, %v1920
  %v1922 = vpop.f32.mrb[0].mxu0
  %1923 = vmatprep.mubr.bf16.mxu0 0
  %1924 = vmatmul.mubr.bf16.gmra.mrb[0].mxu0 %v1366
  %v1925 = vpop.f32.mrb[0].mxu0
  %v1926 = vadd.f32 %v477, %v1925
  %v1927 = vpop.f32.mrb[0].mxu0
  %v1928 = vpop.f32.mrb[0].mxu0
  %v1929 = vadd.f32 %v477, %v1928
  %v1930 = vpop.f32.mrb[0].mxu0
  %1931 = vmatprep.mubr.bf16.mxu0 0
  %1932 = vmatmul.mubr.bf16.gmra.mrb[0].mxu0 %v1367
  %v1933 = vpop.f32.mrb[0].mxu0
  %v1934 = vadd.f32 %v477, %v1933
  %v1935 = vpop.f32.mrb[0].mxu0
  %v1936 = vpop.f32.mrb[0].mxu0
  %v1937 = vadd.f32 %v477, %v1936
  %v1938 = vpop.f32.mrb[0].mxu0
  %1939 = vmatprep.mubr.bf16.mxu0 0
  %1940 = vmatmul.mubr.bf16.gmra.mrb[0].mxu0 %v1368
  %v1941 = vpop.f32.mrb[0].mxu0
  %v1942 = vadd.f32 %v477, %v1941
  %v1943 = vpop.f32.mrb[0].mxu0
  %v1944 = vpop.f32.mrb[0].mxu0
  %v1945 = vadd.f32 %v477, %v1944
  %v1946 = vpop.f32.mrb[0].mxu0
  %1947 = vmatprep.mubr.bf16.mxu0 0
  %1948 = vmatmul.mubr.bf16.gmra.mrb[0].mxu0 %v1369
  %v1949 = vpop.f32.mrb[0].mxu0
  %v1950 = vadd.f32 %v477, %v1949
  %v1951 = vpop.f32.mrb[0].mxu0
  %v1952 = vpop.f32.mrb[0].mxu0
  %v1953 = vadd.f32 %v477, %v1952
  %v1954 = vpop.f32.mrb[0].mxu0
  %1955 = vmatprep.mubr.bf16.mxu0 0
  %1956 = vmatmul.mubr.bf16.gmra.mrb[0].mxu0 %v1370
  %v1957 = vpop.f32.mrb[0].mxu0
  %v1958 = vadd.f32 %v477, %v1957
  %v1959 = vpop.f32.mrb[0].mxu0
  %v1960 = vpop.f32.mrb[0].mxu0
  %v1961 = vadd.f32 %v477, %v1960
  %v1962 = vpop.f32.mrb[0].mxu0
  %1963 = vmatprep.mubr.bf16.mxu0 0
  %1964 = vmatmul.mubr.bf16.gmra.mrb[0].mxu0 %v1371
  %v1965 = vpop.f32.mrb[0].mxu0
  %v1966 = vadd.f32 %v477, %v1965
  %v1967 = vpop.f32.mrb[0].mxu0
  %v1968 = vpop.f32.mrb[0].mxu0
  %v1969 = vadd.f32 %v477, %v1968
  %v1970 = vpop.f32.mrb[0].mxu0
  %1971 = vmatprep.mubr.bf16.mxu0 0
  %1972 = vmatmul.mubr.bf16.gmra.mrb[0].mxu0 %v1372
  %v1973 = vpop.f32.mrb[0].mxu0
  %v1974 = vadd.f32 %v477, %v1973
  %v1975 = vpop.f32.mrb[0].mxu0
  %v1976 = vpop.f32.mrb[0].mxu0
  %v1977 = vadd.f32 %v477, %v1976
  %v1978 = vpop.f32.mrb[0].mxu0
  %1979 = vmatprep.mubr.bf16.mxu0 0
  %1980 = vmatmul.mubr.bf16.gmra.mrb[0].mxu0 %v1373
  %v1981 = vpop.f32.mrb[0].mxu0
  %v1982 = vadd.f32 %v477, %v1981
  %v1983 = vpop.f32.mrb[0].mxu0
  %v1984 = vpop.f32.mrb[0].mxu0
  %v1985 = vadd.f32 %v477, %v1984
  %v1986 = vpop.f32.mrb[0].mxu0
  %1987 = vmatprep.mubr.bf16.mxu0 0
  %1988 = vmatmul.mubr.bf16.gmra.mrb[0].mxu0 %v1374
  %v1989 = vpop.f32.mrb[0].mxu0
  %v1990 = vadd.f32 %v477, %v1989
  %v1991 = vpop.f32.mrb[0].mxu0
  %v1992 = vpop.f32.mrb[0].mxu0
  %v1993 = vadd.f32 %v477, %v1992
  %v1994 = vpop.f32.mrb[0].mxu0
  %1995 = vmatprep.mubr.bf16.mxu0 0
  %1996 = vmatmul.mubr.bf16.gmra.mrb[0].mxu0 %v1375
  %v1997 = vpop.f32.mrb[0].mxu0
  %v1998 = vadd.f32 %v477, %v1997
  %v1999 = vpop.f32.mrb[0].mxu0
  %v2000 = vpop.f32.mrb[0].mxu0
  %v2001 = vadd.f32 %v477, %v2000
  %v2002 = vpop.f32.mrb[0].mxu0
  %2003 = vmatprep.mubr.bf16.mxu0 0
  %2004 = vmatmul.mubr.bf16.gmra.mrb[0].mxu0 %v1376
  %v2005 = vpop.f32.mrb[0].mxu0
  %v2006 = vadd.f32 %v477, %v2005
  %v2007 = vpop.f32.mrb[0].mxu0
  %v2008 = vpop.f32.mrb[0].mxu0
  %v2009 = vadd.f32 %v477, %v2008
  %v2010 = vpop.f32.mrb[0].mxu0
  %2011 = vmatprep.mubr.bf16.mxu0 0
  %2012 = vmatmul.mubr.bf16.gmra.mrb[0].mxu0 %v1377
  %v2013 = vpop.f32.mrb[0].mxu0
  %v2014 = vadd.f32 %v477, %v2013
  %v2015 = vpop.f32.mrb[0].mxu0
  %v2016 = vpop.f32.mrb[0].mxu0
  %v2017 = vadd.f32 %v477, %v2016
  %v2018 = vpop.f32.mrb[0].mxu0
  %2019 = vmatprep.mubr.bf16.mxu0 0
  %2020 = vmatmul.mubr.bf16.gmra.mrb[0].mxu0 %v1378
  %v2021 = vpop.f32.mrb[0].mxu0
  %v2022 = vadd.f32 %v477, %v2021
  %v2023 = vpop.f32.mrb[0].mxu0
  %v2024 = vpop.f32.mrb[0].mxu0
  %v2025 = vadd.f32 %v477, %v2024
  %v2026 = vpop.f32.mrb[0].mxu0
  %2027 = vmatprep.mubr.bf16.mxu0 0
  %2028 = vmatmul.mubr.bf16.gmra.mrb[0].mxu0 %v1379
  %v2029 = vpop.f32.mrb[0].mxu0
  %v2030 = vadd.f32 %v477, %v2029
  %v2031 = vpop.f32.mrb[0].mxu0
  %v2032 = vpop.f32.mrb[0].mxu0
  %v2033 = vadd.f32 %v477, %v2032
  %v2034 = vpop.f32.mrb[0].mxu0
  %2035 = vmatprep.mubr.bf16.mxu0 0
  %2036 = vmatmul.mubr.bf16.gmra.mrb[0].mxu0 %v1380
  %v2037 = vpop.f32.mrb[0].mxu0
  %v2038 = vadd.f32 %v477, %v2037
  %v2039 = vpop.f32.mrb[0].mxu0
  %v2040 = vpop.f32.mrb[0].mxu0
  %v2041 = vadd.f32 %v477, %v2040
  %v2042 = vpop.f32.mrb[0].mxu0
  %2043 = vmatprep.mubr.bf16.mxu0 0
  %2044 = vmatmul.mubr.bf16.gmra.mrb[0].mxu0 %v1381
  %v2045 = vpop.f32.mrb[0].mxu0
  %v2046 = vadd.f32 %v477, %v2045
  %v2047 = vpop.f32.mrb[0].mxu0
  %v2048 = vpop.f32.mrb[0].mxu0
  %v2049 = vadd.f32 %v477, %v2048
  %v2050 = vpop.f32.mrb[0].mxu0
  %2051 = vmatprep.mubr.bf16.mxu0 0
  %2052 = vmatmul.mubr.bf16.gmra.mrb[0].mxu0 %v1382
  %v2053 = vpop.f32.mrb[0].mxu0
  %v2054 = vadd.f32 %v477, %v2053
  %v2055 = vpop.f32.mrb[0].mxu0
  %v2056 = vpop.f32.mrb[0].mxu0
  %v2057 = vadd.f32 %v477, %v2056
  %v2058 = vpop.f32.mrb[0].mxu0
  %2059 = vmatprep.mubr.bf16.mxu0 0
  %2060 = vmatmul.mubr.bf16.gmra.mrb[0].mxu0 %v1383
  %v2061 = vpop.f32.mrb[0].mxu0
  %v2062 = vadd.f32 %v477, %v2061
  %v2063 = vpop.f32.mrb[0].mxu0
  %v2064 = vpop.f32.mrb[0].mxu0
  %v2065 = vadd.f32 %v477, %v2064
  %v2066 = vpop.f32.mrb[0].mxu0
  %2067 = vmatprep.mubr.bf16.mxu0 0
  %2068 = vmatmul.mubr.bf16.gmra.mrb[0].mxu0 %v1384
  %v2069 = vpop.f32.mrb[0].mxu0
  %v2070 = vadd.f32 %v477, %v2069
  %v2071 = vpop.f32.mrb[0].mxu0
  %v2072 = vpop.f32.mrb[0].mxu0
  %v2073 = vadd.f32 %v477, %v2072
  %v2074 = vpop.f32.mrb[0].mxu0
  %2075 = vmatprep.mubr.bf16.mxu0 0
  %2076 = vmatmul.mubr.bf16.gmra.mrb[0].mxu0 %v1385
  %v2077 = vpop.f32.mrb[0].mxu0
  %v2078 = vadd.f32 %v477, %v2077
  %v2079 = vpop.f32.mrb[0].mxu0
  %v2080 = vpop.f32.mrb[0].mxu0
  %v2081 = vadd.f32 %v477, %v2080
  %v2082 = vpop.f32.mrb[0].mxu0
  %2083 = vmatprep.mubr.bf16.mxu0 0
  %2084 = vmatmul.mubr.bf16.gmra.mrb[0].mxu0 %v1386
  %v2085 = vpop.f32.mrb[0].mxu0
  %v2086 = vadd.f32 %v477, %v2085
  %v2087 = vpop.f32.mrb[0].mxu0
  %v2088 = vpop.f32.mrb[0].mxu0
  %v2089 = vadd.f32 %v477, %v2088
  %v2090 = vpop.f32.mrb[0].mxu0
  %2091 = vmatprep.mubr.bf16.mxu0 0
  %2092 = vmatmul.mubr.bf16.gmra.mrb[0].mxu0 %v1387
  %v2093 = vpop.f32.mrb[0].mxu0
  %v2094 = vadd.f32 %v477, %v2093
  %v2095 = vpop.f32.mrb[0].mxu0
  %v2096 = vpop.f32.mrb[0].mxu0
  %v2097 = vadd.f32 %v477, %v2096
  %v2098 = vpop.f32.mrb[0].mxu0
  %2099 = vmatprep.mubr.bf16.mxu0 0
  %2100 = vmatmul.mubr.bf16.gmra.mrb[0].mxu0 %v1388
  %v2101 = vpop.f32.mrb[0].mxu0
  %v2102 = vadd.f32 %v477, %v2101
  %v2103 = vpop.f32.mrb[0].mxu0
  %v2104 = vpop.f32.mrb[0].mxu0
  %v2105 = vadd.f32 %v477, %v2104
  %v2106 = vpop.f32.mrb[0].mxu0
  %2107 = vmatprep.mubr.bf16.mxu0 0
  %2108 = vmatmul.mubr.bf16.gmra.mrb[0].mxu0 %v1389
  %v2109 = vpop.f32.mrb[0].mxu0
  %v2110 = vadd.f32 %v477, %v2109
  %v2111 = vpop.f32.mrb[0].mxu0
  %v2112 = vpop.f32.mrb[0].mxu0
  %v2113 = vadd.f32 %v477, %v2112
  %v2114 = vpop.f32.mrb[0].mxu0
  %2115 = vmatprep.mubr.bf16.mxu0 0
  %2116 = vmatmul.mubr.bf16.gmra.mrb[0].mxu0 %v1390
  %v2117 = vpop.f32.mrb[0].mxu0
  %v2118 = vadd.f32 %v477, %v2117
  %v2119 = vpop.f32.mrb[0].mxu0
  %v2120 = vpop.f32.mrb[0].mxu0
  %v2121 = vadd.f32 %v477, %v2120
  %v2122 = vpop.f32.mrb[0].mxu0
  %2123 = vmatprep.mubr.bf16.mxu0 0
  %2124 = vmatmul.mubr.bf16.gmra.mrb[0].mxu0 %v1391
  %v2125 = vpop.f32.mrb[0].mxu0
  %v2126 = vadd.f32 %v477, %v2125
  %v2127 = vpop.f32.mrb[0].mxu0
  %v2128 = vpop.f32.mrb[0].mxu0
  %v2129 = vadd.f32 %v477, %v2128
  %v2130 = vpop.f32.mrb[0].mxu0
  %2131 = vmatprep.mubr.bf16.mxu0 0
  %2132 = vmatmul.mubr.bf16.gmra.mrb[0].mxu0 %v1392
  %v2133 = vpop.f32.mrb[0].mxu0
  %v2134 = vadd.f32 %v477, %v2133
  %v2135 = vpop.f32.mrb[0].mxu0
  %v2136 = vpop.f32.mrb[0].mxu0
  %v2137 = vadd.f32 %v477, %v2136
  %v2138 = vpop.f32.mrb[0].mxu0
  %2139 = vmatprep.mubr.bf16.mxu0 0
  %2140 = vmatmul.mubr.bf16.gmra.mrb[0].mxu0 %v1393
  %v2141 = vpop.f32.mrb[0].mxu0
  %v2142 = vadd.f32 %v477, %v2141
  %v2143 = vpop.f32.mrb[0].mxu0
  %v2144 = vpop.f32.mrb[0].mxu0
  %v2145 = vadd.f32 %v477, %v2144
  %v2146 = vpop.f32.mrb[0].mxu0
  %2147 = vmatprep.mubr.bf16.mxu0 0
  %2148 = vmatmul.mubr.bf16.gmra.mrb[0].mxu0 %v1394
  %v2149 = vpop.f32.mrb[0].mxu0
  %v2150 = vadd.f32 %v477, %v2149
  %v2151 = vpop.f32.mrb[0].mxu0
  %v2152 = vpop.f32.mrb[0].mxu0
  %v2153 = vadd.f32 %v477, %v2152
  %v2154 = vpop.f32.mrb[0].mxu0
  %2155 = vmatprep.mubr.bf16.mxu0 0
  %2156 = vmatmul.mubr.bf16.gmra.mrb[0].mxu0 %v1395
  %v2157 = vpop.f32.mrb[0].mxu0
  %v2158 = vadd.f32 %v477, %v2157
  %v2159 = vpop.f32.mrb[0].mxu0
  %v2160 = vpop.f32.mrb[0].mxu0
  %v2161 = vadd.f32 %v477, %v2160
  %v2162 = vpop.f32.mrb[0].mxu0
  %2163 = vmatprep.mubr.bf16.mxu0 0
  %2164 = vmatmul.mubr.bf16.gmra.mrb[0].mxu0 %v1396
  %v2165 = vpop.f32.mrb[0].mxu0
  %v2166 = vadd.f32 %v477, %v2165
  %v2167 = vpop.f32.mrb[0].mxu0
  %v2168 = vpop.f32.mrb[0].mxu0
  %v2169 = vadd.f32 %v477, %v2168
  %v2170 = vpop.f32.mrb[0].mxu0
  %2171 = vmatprep.mubr.bf16.mxu0 0
  %2172 = vmatmul.mubr.bf16.gmra.mrb[0].mxu0 %v1397
  %v2173 = vpop.f32.mrb[0].mxu0
  %v2174 = vadd.f32 %v477, %v2173
  %v2175 = vpop.f32.mrb[0].mxu0
  %v2176 = vpop.f32.mrb[0].mxu0
  %v2177 = vadd.f32 %v477, %v2176
  %v2178 = vpop.f32.mrb[0].mxu0
  %2179 = vmatprep.mubr.bf16.mxu0 0
  %2180 = vmatmul.mubr.bf16.gmra.mrb[0].mxu0 %v1398
  %v2181 = vpop.f32.mrb[0].mxu0
  %v2182 = vadd.f32 %v477, %v2181
  %v2183 = vpop.f32.mrb[0].mxu0
  %v2184 = vpop.f32.mrb[0].mxu0
  %v2185 = vadd.f32 %v477, %v2184
  %v2186 = vpop.f32.mrb[0].mxu0
  %2187 = vmatprep.mubr.bf16.mxu0 0
  %2188 = vmatmul.mubr.bf16.gmra.mrb[0].mxu0 %v1399
  %v2189 = vpop.f32.mrb[0].mxu0
  %v2190 = vadd.f32 %v477, %v2189
  %v2191 = vpop.f32.mrb[0].mxu0
  %v2192 = vpop.f32.mrb[0].mxu0
  %v2193 = vadd.f32 %v477, %v2192
  %v2194 = vpop.f32.mrb[0].mxu0
  %2195 = vmatprep.mubr.bf16.mxu0 0
  %2196 = vmatmul.mubr.bf16.gmra.mrb[0].mxu0 %v1400
  %v2197 = vpop.f32.mrb[0].mxu0
  %v2198 = vadd.f32 %v477, %v2197
  %v2199 = vpop.f32.mrb[0].mxu0
  %v2200 = vpop.f32.mrb[0].mxu0
  %v2201 = vadd.f32 %v477, %v2200
  %v2202 = vpop.f32.mrb[0].mxu0
  %2203 = vmatprep.mubr.bf16.mxu0 0
  %2204 = vmatmul.mubr.bf16.gmra.mrb[0].mxu0 %v1401
  %v2205 = vpop.f32.mrb[0].mxu0
  %v2206 = vadd.f32 %v477, %v2205
  %v2207 = vpop.f32.mrb[0].mxu0
  %v2208 = vpop.f32.mrb[0].mxu0
  %v2209 = vadd.f32 %v477, %v2208
  %v2210 = vpop.f32.mrb[0].mxu0
  %2211 = vmatprep.mubr.bf16.mxu0 0
  %2212 = vmatmul.mubr.bf16.gmra.mrb[0].mxu0 %v1402
  %v2213 = vpop.f32.mrb[0].mxu0
  %v2214 = vadd.f32 %v477, %v2213
  %v2215 = vpop.f32.mrb[0].mxu0
  %v2216 = vpop.f32.mrb[0].mxu0
  %v2217 = vadd.f32 %v477, %v2216
  %v2218 = vpop.f32.mrb[0].mxu0
  %2219 = vmatprep.mubr.bf16.mxu0 0
  %2220 = vmatmul.mubr.bf16.gmra.mrb[0].mxu0 %v1403
  %v2221 = vpop.f32.mrb[0].mxu0
  %v2222 = vadd.f32 %v477, %v2221
  %v2223 = vpop.f32.mrb[0].mxu0
  %v2224 = vpop.f32.mrb[0].mxu0
  %v2225 = vadd.f32 %v477, %v2224
  %v2226 = vpop.f32.mrb[0].mxu0
  %2227 = vmatprep.mubr.bf16.mxu0 0
  %2228 = vmatmul.mubr.bf16.gmra.mrb[0].mxu0 %v1404
  %v2229 = vpop.f32.mrb[0].mxu0
  %v2230 = vadd.f32 %v477, %v2229
  %v2231 = vpop.f32.mrb[0].mxu0
  %v2232 = vpop.f32.mrb[0].mxu0
  %v2233 = vadd.f32 %v477, %v2232
  %v2234 = vpop.f32.mrb[0].mxu0
  %2235 = vmatprep.mubr.bf16.mxu0 0
  %2236 = vmatmul.mubr.bf16.gmra.mrb[0].mxu0 %v1405
  %v2237 = vpop.f32.mrb[0].mxu0
  %v2238 = vadd.f32 %v477, %v2237
  %v2239 = vpop.f32.mrb[0].mxu0
  %v2240 = vpop.f32.mrb[0].mxu0
  %v2241 = vadd.f32 %v477, %v2240
  %v2242 = vpop.f32.mrb[0].mxu0
  %2243 = vmatprep.mubr.bf16.mxu0 0
  %2244 = vmatmul.mubr.bf16.gmra.mrb[0].mxu0 %v1406
  %v2245 = vpop.f32.mrb[0].mxu0
  %v2246 = vadd.f32 %v477, %v2245
  %v2247 = vpop.f32.mrb[0].mxu0
  %v2248 = vpop.f32.mrb[0].mxu0
  %v2249 = vadd.f32 %v477, %v2248
  %v2250 = vpop.f32.mrb[0].mxu0
  %2251 = vmatprep.mubr.bf16.mxu0 0
  %2252 = vmatmul.mubr.bf16.gmra.mrb[0].mxu0 %v1407
  %v2253 = vpop.f32.mrb[0].mxu0
  %v2254 = vadd.f32 %v477, %v2253
  %v2255 = vpop.f32.mrb[0].mxu0
  %v2256 = vpop.f32.mrb[0].mxu0
  %v2257 = vadd.f32 %v477, %v2256
  %v2258 = vpop.f32.mrb[0].mxu0
  %2259 = vmatprep.mubr.bf16.mxu0 0
  %2260 = vmatmul.mubr.bf16.gmra.mrb[0].mxu0 %v1408
  %v2261 = vpop.f32.mrb[0].mxu0
  %v2262 = vadd.f32 %v477, %v2261
  %v2263 = vpop.f32.mrb[0].mxu0
  %v2264 = vpop.f32.mrb[0].mxu0
  %v2265 = vadd.f32 %v477, %v2264
  %v2266 = vpop.f32.mrb[0].mxu0
  %2267 = vmatprep.mubr.bf16.mxu0 0
  %2268 = vmatmul.mubr.bf16.gmra.mrb[0].mxu0 %v1409
  %v2269 = vpop.f32.mrb[0].mxu0
  %v2270 = vadd.f32 %v477, %v2269
  %v2271 = vpop.f32.mrb[0].mxu0
  %v2272 = vpop.f32.mrb[0].mxu0
  %v2273 = vadd.f32 %v477, %v2272
  %v2274 = vpop.f32.mrb[0].mxu0
  %2275 = vmatprep.mubr.bf16.mxu0 0
  %2276 = vmatmul.mubr.bf16.gmra.mrb[0].mxu0 %v1410
  %v2277 = vpop.f32.mrb[0].mxu0
  %v2278 = vadd.f32 %v477, %v2277
  %v2279 = vpop.f32.mrb[0].mxu0
  %v2280 = vpop.f32.mrb[0].mxu0
  %v2281 = vadd.f32 %v477, %v2280
  %v2282 = vpop.f32.mrb[0].mxu0
  %2283 = vmatprep.mubr.bf16.mxu0 0
  %2284 = vmatmul.mubr.bf16.gmra.mrb[0].mxu0 %v1411
  %v2285 = vpop.f32.mrb[0].mxu0
  %v2286 = vadd.f32 %v477, %v2285
  %v2287 = vpop.f32.mrb[0].mxu0
  %v2288 = vpop.f32.mrb[0].mxu0
  %v2289 = vadd.f32 %v477, %v2288
  %v2290 = vpop.f32.mrb[0].mxu0
  %2291 = vmatprep.mubr.bf16.mxu0 0
  %2292 = vmatmul.mubr.bf16.gmra.mrb[0].mxu0 %v1412
  %v2293 = vpop.f32.mrb[0].mxu0
  %v2294 = vadd.f32 %v477, %v2293
  %v2295 = vpop.f32.mrb[0].mxu0
  %v2296 = vpop.f32.mrb[0].mxu0
  %v2297 = vadd.f32 %v477, %v2296
  %v2298 = vpop.f32.mrb[0].mxu0
  %2299 = vmatprep.mubr.bf16.mxu0 0
  %2300 = vmatmul.mubr.bf16.gmra.mrb[0].mxu0 %v1413
  %v2301 = vpop.f32.mrb[0].mxu0
  %v2302 = vadd.f32 %v477, %v2301
  %v2303 = vpop.f32.mrb[0].mxu0
  %v2304 = vpop.f32.mrb[0].mxu0
  %v2305 = vadd.f32 %v477, %v2304
  %v2306 = vpop.f32.mrb[0].mxu0
  %2307 = vmatprep.mubr.bf16.mxu0 0
  %2308 = vmatmul.mubr.bf16.gmra.mrb[0].mxu0 %v1414
  %v2309 = vpop.f32.mrb[0].mxu0
  %v2310 = vadd.f32 %v477, %v2309
  %v2311 = vpop.f32.mrb[0].mxu0
  %v2312 = vpop.f32.mrb[0].mxu0
  %v2313 = vadd.f32 %v477, %v2312
  %v2314 = vpop.f32.mrb[0].mxu0
  %2315 = vmatprep.mubr.bf16.mxu0 0
  %2316 = vmatmul.mubr.bf16.gmra.mrb[0].mxu0 %v1415
  %v2317 = vpop.f32.mrb[0].mxu0
  %v2318 = vadd.f32 %v477, %v2317
  %v2319 = vpop.f32.mrb[0].mxu0
  %v2320 = vpop.f32.mrb[0].mxu0
  %v2321 = vadd.f32 %v477, %v2320
  %v2322 = vpop.f32.mrb[0].mxu0
  %2323 = vmatprep.mubr.bf16.mxu0 0
  %2324 = vmatmul.mubr.bf16.gmra.mrb[0].mxu0 %v1416
  %v2325 = vpop.f32.mrb[0].mxu0
  %v2326 = vadd.f32 %v477, %v2325
  %v2327 = vpop.f32.mrb[0].mxu0
  %v2328 = vpop.f32.mrb[0].mxu0
  %v2329 = vadd.f32 %v477, %v2328
  %v2330 = vpop.f32.mrb[0].mxu0
  %2331 = vmatprep.mubr.bf16.mxu0 0
  %2332 = vmatmul.mubr.bf16.gmra.mrb[0].mxu0 %v1417
  %v2333 = vpop.f32.mrb[0].mxu0
  %v2334 = vadd.f32 %v477, %v2333
  %v2335 = vpop.f32.mrb[0].mxu0
  %v2336 = vpop.f32.mrb[0].mxu0
  %v2337 = vadd.f32 %v477, %v2336
  %v2338 = vpop.f32.mrb[0].mxu0
  %2339 = vmatprep.mubr.bf16.mxu0 0
  %2340 = vmatmul.mubr.bf16.gmra.mrb[0].mxu0 %v1418
  %v2341 = vpop.f32.mrb[0].mxu0
  %v2342 = vadd.f32 %v477, %v2341
  %v2343 = vpop.f32.mrb[0].mxu0
  %v2344 = vpop.f32.mrb[0].mxu0
  %v2345 = vadd.f32 %v477, %v2344
  %v2346 = vpop.f32.mrb[0].mxu0
  %2347 = vmatprep.mubr.bf16.mxu0 0
  %2348 = vmatmul.mubr.bf16.gmra.mrb[0].mxu0 %v1419
  %v2349 = vpop.f32.mrb[0].mxu0
  %v2350 = vadd.f32 %v477, %v2349
  %v2351 = vpop.f32.mrb[0].mxu0
  %v2352 = vpop.f32.mrb[0].mxu0
  %v2353 = vadd.f32 %v477, %v2352
  %v2354 = vpop.f32.mrb[0].mxu0
  %2355 = vmatprep.mubr.bf16.mxu0 0
  %2356 = vmatmul.mubr.bf16.gmra.mrb[0].mxu0 %v1420
  %v2357 = vpop.f32.mrb[0].mxu0
  %v2358 = vadd.f32 %v477, %v2357
  %v2359 = vpop.f32.mrb[0].mxu0
  %v2360 = vpop.f32.mrb[0].mxu0
  %v2361 = vadd.f32 %v477, %v2360
  %v2362 = vpop.f32.mrb[0].mxu0
  %2363 = vmatprep.mubr.bf16.mxu0 0
  %2364 = vmatmul.mubr.bf16.gmra.mrb[0].mxu0 %v1421
  %v2365 = vpop.f32.mrb[0].mxu0
  %v2366 = vadd.f32 %v477, %v2365
  %v2367 = vpop.f32.mrb[0].mxu0
  %v2368 = vpop.f32.mrb[0].mxu0
  %v2369 = vadd.f32 %v477, %v2368
  %v2370 = vpop.f32.mrb[0].mxu0
  %2371 = vmatprep.mubr.bf16.mxu0 0
  %2372 = vmatmul.mubr.bf16.gmra.mrb[0].mxu0 %v1422
  %v2373 = vpop.f32.mrb[0].mxu0
  %v2374 = vadd.f32 %v477, %v2373
  %v2375 = vpop.f32.mrb[0].mxu0
  %v2376 = vpop.f32.mrb[0].mxu0
  %v2377 = vadd.f32 %v477, %v2376
  %v2378 = vpop.f32.mrb[0].mxu0
  %2379 = vmatprep.mubr.bf16.mxu0 0
  %2380 = vmatmul.mubr.bf16.gmra.mrb[0].mxu0 %v1423
  %v2381 = vpop.f32.mrb[0].mxu0
  %v2382 = vadd.f32 %v477, %v2381
  %v2383 = vpop.f32.mrb[0].mxu0
  %v2384 = vpop.f32.mrb[0].mxu0
  %v2385 = vadd.f32 %v477, %v2384
  %v2386 = vpop.f32.mrb[0].mxu0
  %2387 = vmatprep.mubr.bf16.mxu0 0
  %2388 = vmatmul.mubr.bf16.gmra.mrb[0].mxu0 %v1424
  %v2389 = vpop.f32.mrb[0].mxu0
  %v2390 = vadd.f32 %v477, %v2389
  %v2391 = vpop.f32.mrb[0].mxu0
  %v2392 = vpop.f32.mrb[0].mxu0
  %v2393 = vadd.f32 %v477, %v2392
  %v2394 = vpop.f32.mrb[0].mxu0
  %2395 = vmatprep.mubr.bf16.mxu0 0
  %2396 = vmatmul.mubr.bf16.gmra.mrb[0].mxu0 %v1425
  %v2397 = vpop.f32.mrb[0].mxu0
  %v2398 = vadd.f32 %v477, %v2397
  %v2399 = vpop.f32.mrb[0].mxu0
  %v2400 = vpop.f32.mrb[0].mxu0
  %v2401 = vadd.f32 %v477, %v2400
  %v2402 = vpop.f32.mrb[0].mxu0
  %2403 = vmatprep.mubr.bf16.mxu0 0
  %2404 = vmatmul.mubr.bf16.gmra.mrb[0].mxu0 %v1426
  %v2405 = vpop.f32.mrb[0].mxu0
  %v2406 = vadd.f32 %v477, %v2405
  %v2407 = vpop.f32.mrb[0].mxu0
  %v2408 = vpop.f32.mrb[0].mxu0
  %v2409 = vadd.f32 %v477, %v2408
  %v2410 = vpop.f32.mrb[0].mxu0
  %2411 = vmatprep.mubr.bf16.mxu0 0
  %2412 = vmatmul.mubr.bf16.gmra.mrb[0].mxu0 %v1427
  %v2413 = vpop.f32.mrb[0].mxu0
  %v2414 = vadd.f32 %v477, %v2413
  %v2415 = vpop.f32.mrb[0].mxu0
  %v2416 = vpop.f32.mrb[0].mxu0
  %v2417 = vadd.f32 %v477, %v2416
  %v2418 = vpop.f32.mrb[0].mxu0
  %2419 = vmatprep.mubr.bf16.mxu0 0
  %2420 = vmatmul.mubr.bf16.gmra.mrb[0].mxu0 %v1428
  %v2421 = vpop.f32.mrb[0].mxu0
  %v2422 = vadd.f32 %v477, %v2421
  %v2423 = vpop.f32.mrb[0].mxu0
  %v2424 = vpop.f32.mrb[0].mxu0
  %v2425 = vadd.f32 %v477, %v2424
  %v2426 = vpop.f32.mrb[0].mxu0
  %2427 = vmatprep.mubr.bf16.mxu0 0
  %2428 = vmatmul.mubr.bf16.gmra.mrb[0].mxu0 %v1429
  %v2429 = vpop.f32.mrb[0].mxu0
  %v2430 = vadd.f32 %v477, %v2429
  %v2431 = vpop.f32.mrb[0].mxu0
  %v2432 = vpop.f32.mrb[0].mxu0
  %v2433 = vadd.f32 %v477, %v2432
  %v2434 = vpop.f32.mrb[0].mxu0
  %2435 = vmatprep.mubr.bf16.mxu0 0
  %2436 = vmatmul.mubr.bf16.gmra.mrb[0].mxu0 %v1430
  %v2437 = vpop.f32.mrb[0].mxu0
  %v2438 = vadd.f32 %v477, %v2437
  %v2439 = vpop.f32.mrb[0].mxu0
  %v2440 = vpop.f32.mrb[0].mxu0
  %v2441 = vadd.f32 %v477, %v2440
  %v2442 = vpop.f32.mrb[0].mxu0
  %2443 = vmatprep.mubr.bf16.mxu0 0
  %2444 = vmatmul.mubr.bf16.gmra.mrb[0].mxu0 %v1431
  %v2445 = vpop.f32.mrb[0].mxu0
  %v2446 = vadd.f32 %v477, %v2445
  %v2447 = vpop.f32.mrb[0].mxu0
  %v2448 = vpop.f32.mrb[0].mxu0
  %v2449 = vadd.f32 %v477, %v2448
  %v2450 = vpop.f32.mrb[0].mxu0
  %2451 = vmatprep.mubr.bf16.mxu0 0
  %2452 = vmatmul.mubr.bf16.gmra.mrb[0].mxu0 %v1432
  %v2453 = vpop.f32.mrb[0].mxu0
  %v2454 = vadd.f32 %v477, %v2453
  %v2455 = vpop.f32.mrb[0].mxu0
  %v2456 = vpop.f32.mrb[0].mxu0
  %v2457 = vadd.f32 %v477, %v2456
  %v2458 = vpop.f32.mrb[0].mxu0
  %2459 = vmatprep.mubr.bf16.mxu0 0
  %2460 = vmatmul.mubr.bf16.gmra.mrb[0].mxu0 %v1433
  %v2461 = vpop.f32.mrb[0].mxu0
  %v2462 = vadd.f32 %v477, %v2461
  %v2463 = vpop.f32.mrb[0].mxu0
  %v2464 = vpop.f32.mrb[0].mxu0
  %v2465 = vadd.f32 %v477, %v2464
  %v2466 = vpop.f32.mrb[0].mxu0
  %2467 = vmatprep.mubr.bf16.mxu0 0
  %2468 = vmatmul.mubr.bf16.gmra.mrb[0].mxu0 %v1434
  %v2469 = vpop.f32.mrb[0].mxu0
  %v2470 = vadd.f32 %v477, %v2469
  %v2471 = vpop.f32.mrb[0].mxu0
  %v2472 = vpop.f32.mrb[0].mxu0
  %v2473 = vadd.f32 %v477, %v2472
  %v2474 = vpop.f32.mrb[0].mxu0
  %2475 = vmatprep.mubr.bf16.mxu0 0
  %2476 = vmatmul.mubr.bf16.gmra.mrb[0].mxu0 %v1435
  %v2477 = vpop.f32.mrb[0].mxu0
  %v2478 = vadd.f32 %v477, %v2477
  %v2479 = vpop.f32.mrb[0].mxu0
  %v2480 = vpop.f32.mrb[0].mxu0
  %v2481 = vadd.f32 %v477, %v2480
  %v2482 = vpop.f32.mrb[0].mxu0
  %2483 = vmatprep.mubr.bf16.mxu0 0
  %2484 = vmatmul.mubr.bf16.gmra.mrb[0].mxu0 %v1436
  %v2485 = vpop.f32.mrb[0].mxu0
  %v2486 = vadd.f32 %v477, %v2485
  %v2487 = vpop.f32.mrb[0].mxu0
  %v2488 = vpop.f32.mrb[0].mxu0
  %v2489 = vadd.f32 %v477, %v2488
  %v2490 = vpop.f32.mrb[0].mxu0
  %2491 = vmatprep.mubr.bf16.mxu0 0
  %2492 = vmatmul.mubr.bf16.gmra.mrb[0].mxu0 %v1437
  %v2493 = vpop.f32.mrb[0].mxu0
  %v2494 = vadd.f32 %v477, %v2493
  %v2495 = vpop.f32.mrb[0].mxu0
  %v2496 = vpop.f32.mrb[0].mxu0
  %v2497 = vadd.f32 %v477, %v2496
  %v2498 = vpop.f32.mrb[0].mxu0
  %2499 = vmatprep.mubr.bf16.mxu0 0
  %2500 = vmatmul.mubr.bf16.gmra.mrb[0].mxu0 %v1438
  %v2501 = vpop.f32.mrb[0].mxu0
  %v2502 = vadd.f32 %v477, %v2501
  %v2503 = vpop.f32.mrb[0].mxu0
  %v2504 = vpop.f32.mrb[0].mxu0
  %v2505 = vadd.f32 %v477, %v2504
  %v2506 = vpop.f32.mrb[0].mxu0
  %2507 = vmatprep.mubr.bf16.mxu0 0
  %2508 = vmatmul.mubr.bf16.gmra.mrb[0].mxu0 %v1439
  %v2509 = vpop.f32.mrb[0].mxu0
  %v2510 = vadd.f32 %v477, %v2509
  %v2511 = vpop.f32.mrb[0].mxu0
  %v2512 = vpop.f32.mrb[0].mxu0
  %v2513 = vadd.f32 %v477, %v2512
  %v2514 = vpop.f32.mrb[0].mxu0
  %2515 = vmatprep.mubr.bf16.mxu0 0
  %2516 = vmatmul.mubr.bf16.gmra.mrb[0].mxu0 %v1440
  %v2517 = vpop.f32.mrb[0].mxu0
  %v2518 = vadd.f32 %v477, %v2517
  %v2519 = vpop.f32.mrb[0].mxu0
  %v2520 = vpop.f32.mrb[0].mxu0
  %v2521 = vadd.f32 %v477, %v2520
  %v2522 = vpop.f32.mrb[0].mxu0
  %2523 = vmatprep.mubr.bf16.mxu0 0
  %2524 = vmatmul.mubr.bf16.gmra.mrb[0].mxu0 %v1441
  %v2525 = vpop.f32.mrb[0].mxu0
  %v2526 = vadd.f32 %v477, %v2525
  %v2527 = vpop.f32.mrb[0].mxu0
  %v2528 = vpop.f32.mrb[0].mxu0
  %v2529 = vadd.f32 %v477, %v2528
  %v2530 = vpop.f32.mrb[0].mxu0
  %2531 = vmatprep.mubr.bf16.mxu0 0
  %2532 = vmatmul.mubr.bf16.gmra.mrb[0].mxu0 %v1442
  %v2533 = vpop.f32.mrb[0].mxu0
  %v2534 = vadd.f32 %v477, %v2533
  %v2535 = vpop.f32.mrb[0].mxu0
  %v2536 = vpop.f32.mrb[0].mxu0
  %v2537 = vadd.f32 %v477, %v2536
  %v2538 = vpop.f32.mrb[0].mxu0
  %2539 = vmatprep.mubr.bf16.mxu0 0
  %2540 = vmatmul.mubr.bf16.gmra.mrb[0].mxu0 %v1443
  %v2541 = vpop.f32.mrb[0].mxu0
  %v2542 = vadd.f32 %v477, %v2541
  %v2543 = vpop.f32.mrb[0].mxu0
  %v2544 = vpop.f32.mrb[0].mxu0
  %v2545 = vadd.f32 %v477, %v2544
  %v2546 = vpop.f32.mrb[0].mxu0
  %2547 = vmatprep.mubr.bf16.mxu0 0
  %2548 = vmatmul.mubr.bf16.gmra.mrb[0].mxu0 %v1444
  %v2549 = vpop.f32.mrb[0].mxu0
  %v2550 = vadd.f32 %v477, %v2549
  %v2551 = vpop.f32.mrb[0].mxu0
  %v2552 = vpop.f32.mrb[0].mxu0
  %v2553 = vadd.f32 %v477, %v2552
  %v2554 = vpop.f32.mrb[0].mxu0
  %2555 = vmatprep.mubr.bf16.mxu0 0
  %2556 = vmatmul.mubr.bf16.gmra.mrb[0].mxu0 %v1445
  %v2557 = vpop.f32.mrb[0].mxu0
  %v2558 = vadd.f32 %v477, %v2557
  %v2559 = vpop.f32.mrb[0].mxu0
  %v2560 = vpop.f32.mrb[0].mxu0
  %v2561 = vadd.f32 %v477, %v2560
  %v2562 = vpop.f32.mrb[0].mxu0
  %2563 = vmatprep.mubr.bf16.mxu0 0
  %2564 = vmatmul.mubr.bf16.gmra.mrb[0].mxu0 %v1446
  %v2565 = vpop.f32.mrb[0].mxu0
  %v2566 = vadd.f32 %v477, %v2565
  %v2567 = vpop.f32.mrb[0].mxu0
  %v2568 = vpop.f32.mrb[0].mxu0
  %v2569 = vadd.f32 %v477, %v2568
  %v2570 = vpop.f32.mrb[0].mxu0
  %2571 = vmatprep.mubr.bf16.mxu0 0
  %2572 = vmatmul.mubr.bf16.gmra.mrb[0].mxu0 %v1447
  %v2573 = vpop.f32.mrb[0].mxu0
  %v2574 = vadd.f32 %v477, %v2573
  %v2575 = vpop.f32.mrb[0].mxu0
  %v2576 = vpop.f32.mrb[0].mxu0
  %v2577 = vadd.f32 %v477, %v2576
  %v2578 = vpop.f32.mrb[0].mxu0
  %2579 = vmatprep.mubr.bf16.mxu0 0
  %2580 = vmatmul.mubr.bf16.gmra.mrb[0].mxu0 %v1448
  %v2581 = vpop.f32.mrb[0].mxu0
  %v2582 = vadd.f32 %v477, %v2581
  %v2583 = vpop.f32.mrb[0].mxu0
  %v2584 = vpop.f32.mrb[0].mxu0
  %v2585 = vadd.f32 %v477, %v2584
  %v2586 = vpop.f32.mrb[0].mxu0
  %2587 = vmatprep.mubr.bf16.mxu0 0
  %2588 = vmatmul.mubr.bf16.gmra.mrb[0].mxu0 %v1449
  %v2589 = vpop.f32.mrb[0].mxu0
  %v2590 = vadd.f32 %v477, %v2589
  %v2591 = vpop.f32.mrb[0].mxu0
  %v2592 = vpop.f32.mrb[0].mxu0
  %v2593 = vadd.f32 %v477, %v2592
  %v2594 = vpop.f32.mrb[0].mxu0
  %2595 = vmatprep.mubr.bf16.mxu0 0
  %2596 = vmatmul.mubr.bf16.gmra.mrb[0].mxu0 %v1450
  %v2597 = vpop.f32.mrb[0].mxu0
  %v2598 = vadd.f32 %v477, %v2597
  %v2599 = vpop.f32.mrb[0].mxu0
  %v2600 = vpop.f32.mrb[0].mxu0
  %v2601 = vadd.f32 %v477, %v2600
  %v2602 = vpop.f32.mrb[0].mxu0
  %2603 = vmatprep.mubr.bf16.mxu0 0
  %2604 = vmatmul.mubr.bf16.gmra.mrb[0].mxu0 %v1451
  %v2605 = vpop.f32.mrb[0].mxu0
  %v2606 = vadd.f32 %v477, %v2605
  %v2607 = vpop.f32.mrb[0].mxu0
  %v2608 = vpop.f32.mrb[0].mxu0
  %v2609 = vadd.f32 %v477, %v2608
  %v2610 = vpop.f32.mrb[0].mxu0
  %2611 = vmatprep.mubr.bf16.mxu0 0
  %2612 = vmatmul.mubr.bf16.gmra.mrb[0].mxu0 %v1452
  %v2613 = vpop.f32.mrb[0].mxu0
  %v2614 = vadd.f32 %v477, %v2613
  %v2615 = vpop.f32.mrb[0].mxu0
  %v2616 = vpop.f32.mrb[0].mxu0
  %v2617 = vadd.f32 %v477, %v2616
  %v2618 = vpop.f32.mrb[0].mxu0
  %2619 = vmatprep.mubr.bf16.mxu0 0
  %2620 = vmatmul.mubr.bf16.gmra.mrb[0].mxu0 %v1453
  %v2621 = vpop.f32.mrb[0].mxu0
  %v2622 = vadd.f32 %v477, %v2621
  %v2623 = vpop.f32.mrb[0].mxu0
  %v2624 = vpop.f32.mrb[0].mxu0
  %v2625 = vadd.f32 %v477, %v2624
  %v2626 = vpop.f32.mrb[0].mxu0
  %2627 = vmatprep.mubr.bf16.mxu0 0
  %2628 = vmatmul.mubr.bf16.gmra.mrb[0].mxu0 %v1454
  %v2629 = vpop.f32.mrb[0].mxu0
  %v2630 = vadd.f32 %v477, %v2629
  %v2631 = vpop.f32.mrb[0].mxu0
  %v2632 = vpop.f32.mrb[0].mxu0
  %v2633 = vadd.f32 %v477, %v2632
  %v2634 = vpop.f32.mrb[0].mxu0
  %2635 = vmatprep.mubr.bf16.mxu0 0
  %2636 = vmatmul.mubr.bf16.gmra.mrb[0].mxu0 %v1455
  %v2637 = vpop.f32.mrb[0].mxu0
  %v2638 = vadd.f32 %v477, %v2637
  %v2639 = vpop.f32.mrb[0].mxu0
  %v2640 = vpop.f32.mrb[0].mxu0
  %v2641 = vadd.f32 %v477, %v2640
  %v2642 = vpop.f32.mrb[0].mxu0
  %2643 = vmatprep.mubr.bf16.mxu0 0
  %2644 = vmatmul.mubr.bf16.gmra.mrb[0].mxu0 %v1456
  %v2645 = vpop.f32.mrb[0].mxu0
  %v2646 = vadd.f32 %v477, %v2645
  %v2647 = vpop.f32.mrb[0].mxu0
  %v2648 = vpop.f32.mrb[0].mxu0
  %v2649 = vadd.f32 %v477, %v2648
  %v2650 = vpop.f32.mrb[0].mxu0
  %2651 = vmatprep.mubr.bf16.mxu0 0
  %2652 = vmatmul.mubr.bf16.gmra.mrb[0].mxu0 %v1457
  %v2653 = vpop.f32.mrb[0].mxu0
  %v2654 = vadd.f32 %v477, %v2653
  %v2655 = vpop.f32.mrb[0].mxu0
  %v2656 = vpop.f32.mrb[0].mxu0
  %v2657 = vadd.f32 %v477, %v2656
  %v2658 = vpop.f32.mrb[0].mxu0
  %2659 = vmatprep.mubr.bf16.mxu0 0
  %2660 = vmatmul.mubr.bf16.gmra.mrb[0].mxu0 %v1458
  %v2661 = vpop.f32.mrb[0].mxu0
  %v2662 = vadd.f32 %v477, %v2661
  %v2663 = vpop.f32.mrb[0].mxu0
  %v2664 = vpop.f32.mrb[0].mxu0
  %v2665 = vadd.f32 %v477, %v2664
  %v2666 = vpop.f32.mrb[0].mxu0
  %2667 = vmatprep.mubr.bf16.mxu0 0
  %2668 = vmatmul.mubr.bf16.gmra.mrb[0].mxu0 %v1459
  %v2669 = vpop.f32.mrb[0].mxu0
  %v2670 = vadd.f32 %v477, %v2669
  %v2671 = vpop.f32.mrb[0].mxu0
  %v2672 = vpop.f32.mrb[0].mxu0
  %v2673 = vadd.f32 %v477, %v2672
  %v2674 = vpop.f32.mrb[0].mxu0
  %2675 = vmatprep.mubr.bf16.mxu0 0
  %2676 = vmatmul.mubr.bf16.gmra.mrb[0].mxu0 %v1460
  %v2677 = vpop.f32.mrb[0].mxu0
  %v2678 = vadd.f32 %v477, %v2677
  %v2679 = vpop.f32.mrb[0].mxu0
  %v2680 = vpop.f32.mrb[0].mxu0
  %v2681 = vadd.f32 %v477, %v2680
  %v2682 = vpop.f32.mrb[0].mxu0
  %2683 = vmatprep.mubr.bf16.mxu0 0
  %2684 = vmatmul.mubr.bf16.gmra.mrb[0].mxu0 %v1461
  %v2685 = vpop.f32.mrb[0].mxu0
  %v2686 = vadd.f32 %v477, %v2685
  %v2687 = vpop.f32.mrb[0].mxu0
  %v2688 = vpop.f32.mrb[0].mxu0
  %v2689 = vadd.f32 %v477, %v2688
  %v2690 = vpop.f32.mrb[0].mxu0
  %2691 = vmatprep.mubr.bf16.mxu0 0
  %2692 = vmatmul.mubr.bf16.gmra.mrb[0].mxu0 %v1462
  %v2693 = vpop.f32.mrb[0].mxu0
  %v2694 = vadd.f32 %v477, %v2693
  %v2695 = vpop.f32.mrb[0].mxu0
  %v2696 = vpop.f32.mrb[0].mxu0
  %v2697 = vadd.f32 %v477, %v2696
  %v2698 = vpop.f32.mrb[0].mxu0
  %2699 = vmatprep.mubr.bf16.mxu0 0
  %2700 = vmatmul.mubr.bf16.gmra.mrb[0].mxu0 %v1463
  %v2701 = vpop.f32.mrb[0].mxu0
  %v2702 = vadd.f32 %v477, %v2701
  %v2703 = vpop.f32.mrb[0].mxu0
  %v2704 = vpop.f32.mrb[0].mxu0
  %v2705 = vadd.f32 %v477, %v2704
  %v2706 = vpop.f32.mrb[0].mxu0
  %2707 = vmatprep.mubr.bf16.mxu0 0
  %2708 = vmatmul.mubr.bf16.gmra.mrb[0].mxu0 %v1464
  %v2709 = vpop.f32.mrb[0].mxu0
  %v2710 = vadd.f32 %v477, %v2709
  %v2711 = vpop.f32.mrb[0].mxu0
  %v2712 = vpop.f32.mrb[0].mxu0
  %v2713 = vadd.f32 %v477, %v2712
  %v2714 = vpop.f32.mrb[0].mxu0
  %2715 = vmatprep.mubr.bf16.mxu0 0
  %2716 = vmatmul.mubr.bf16.gmra.mrb[0].mxu0 %v1465
  %v2717 = vpop.f32.mrb[0].mxu0
  %v2718 = vadd.f32 %v477, %v2717
  %v2719 = vpop.f32.mrb[0].mxu0
  %v2720 = vpop.f32.mrb[0].mxu0
  %v2721 = vadd.f32 %v477, %v2720
  %v2722 = vpop.f32.mrb[0].mxu0
  %2723 = vmatprep.mubr.bf16.mxu0 0
  %2724 = vmatmul.mubr.bf16.gmra.mrb[0].mxu0 %v1466
  %v2725 = vpop.f32.mrb[0].mxu0
  %v2726 = vadd.f32 %v477, %v2725
  %v2727 = vpop.f32.mrb[0].mxu0
  %v2728 = vpop.f32.mrb[0].mxu0
  %v2729 = vadd.f32 %v477, %v2728
  %v2730 = vpop.f32.mrb[0].mxu0
  %2731 = vmatprep.mubr.bf16.mxu0 0
  %2732 = vmatmul.mubr.bf16.gmra.mrb[0].mxu0 %v1467
  %v2733 = vpop.f32.mrb[0].mxu0
  %v2734 = vadd.f32 %v477, %v2733
  %v2735 = vpop.f32.mrb[0].mxu0
  %v2736 = vpop.f32.mrb[0].mxu0
  %v2737 = vadd.f32 %v477, %v2736
  %v2738 = vpop.f32.mrb[0].mxu0
  %2739 = vmatprep.mubr.bf16.mxu0 0
  %2740 = vmatmul.mubr.bf16.gmra.mrb[0].mxu0 %v1468
  %v2741 = vpop.f32.mrb[0].mxu0
  %v2742 = vadd.f32 %v477, %v2741
  %v2743 = vpop.f32.mrb[0].mxu0
  %v2744 = vpop.f32.mrb[0].mxu0
  %v2745 = vadd.f32 %v477, %v2744
  %v2746 = vpop.f32.mrb[0].mxu0
  %2747 = vmatprep.mubr.bf16.mxu0 0
  %2748 = vmatmul.mubr.bf16.gmra.mrb[0].mxu0 %v1469
  %v2749 = vpop.f32.mrb[0].mxu0
  %v2750 = vadd.f32 %v477, %v2749
  %v2751 = vpop.f32.mrb[0].mxu0
  %v2752 = vpop.f32.mrb[0].mxu0
  %v2753 = vadd.f32 %v477, %v2752
  %v2754 = vpop.f32.mrb[0].mxu0
  %2755 = vmatprep.mubr.bf16.mxu0 0
  %2756 = vmatmul.mubr.bf16.gmra.mrb[0].mxu0 %v1470
  %v2757 = vpop.f32.mrb[0].mxu0
  %v2758 = vadd.f32 %v477, %v2757
  %v2759 = vpop.f32.mrb[0].mxu0
  %v2760 = vpop.f32.mrb[0].mxu0
  %v2761 = vadd.f32 %v477, %v2760
  %v2762 = vpop.f32.mrb[0].mxu0
  %2763 = vmatprep.mubr.bf16.mxu0 0
  %2764 = vmatmul.mubr.bf16.gmra.mrb[0].mxu0 %v1471
  %v2765 = vpop.f32.mrb[0].mxu0
  %v2766 = vadd.f32 %v477, %v2765
  %v2767 = vpop.f32.mrb[0].mxu0
  %v2768 = vpop.f32.mrb[0].mxu0
  %v2769 = vadd.f32 %v477, %v2768
  %v2770 = vpop.f32.mrb[0].mxu0
  %2771 = vmatprep.mubr.bf16.mxu0 0
  %2772 = vmatmul.mubr.bf16.gmra.mrb[0].mxu0 %v1472
  %v2773 = vpop.f32.mrb[0].mxu0
  %v2774 = vadd.f32 %v477, %v2773
  %v2775 = vpop.f32.mrb[0].mxu0
  %v2776 = vpop.f32.mrb[0].mxu0
  %v2777 = vadd.f32 %v477, %v2776
  %v2778 = vpop.f32.mrb[0].mxu0
  %2779 = vmatprep.mubr.bf16.mxu0 0
  %2780 = vmatmul.mubr.bf16.gmra.mrb[0].mxu0 %v1473
  %v2781 = vpop.f32.mrb[0].mxu0
  %v2782 = vadd.f32 %v477, %v2781
  %v2783 = vpop.f32.mrb[0].mxu0
  %v2784 = vpop.f32.mrb[0].mxu0
  %v2785 = vadd.f32 %v477, %v2784
  %v2786 = vpop.f32.mrb[0].mxu0
  %2787 = vmatprep.mubr.bf16.mxu0 0
  %2788 = vmatmul.mubr.bf16.gmra.mrb[0].mxu0 %v1474
  %v2789 = vpop.f32.mrb[0].mxu0
  %v2790 = vadd.f32 %v477, %v2789
  %v2791 = vpop.f32.mrb[0].mxu0
  %v2792 = vpop.f32.mrb[0].mxu0
  %v2793 = vadd.f32 %v477, %v2792
  %v2794 = vpop.f32.mrb[0].mxu0
  %2795 = vmatprep.mubr.bf16.mxu0 0
  %2796 = vmatmul.mubr.bf16.gmra.mrb[0].mxu0 %v1475
  %v2797 = vpop.f32.mrb[0].mxu0
  %v2798 = vadd.f32 %v477, %v2797
  %v2799 = vpop.f32.mrb[0].mxu0
  %v2800 = vpop.f32.mrb[0].mxu0
  %v2801 = vadd.f32 %v477, %v2800
  %v2802 = vpop.f32.mrb[0].mxu0
  %2803 = vmatprep.mubr.bf16.mxu0 0
  %2804 = vmatmul.mubr.bf16.gmra.mrb[0].mxu0 %v1476
  %v2805 = vpop.f32.mrb[0].mxu0
  %v2806 = vadd.f32 %v477, %v2805
  %v2807 = vpop.f32.mrb[0].mxu0
  %v2808 = vpop.f32.mrb[0].mxu0
  %v2809 = vadd.f32 %v477, %v2808
  %v2810 = vpop.f32.mrb[0].mxu0
  %2811 = vmatprep.mubr.bf16.mxu0 0
  %2812 = vmatmul.mubr.bf16.gmra.mrb[0].mxu0 %v1477
  %v2813 = vpop.f32.mrb[0].mxu0
  %v2814 = vadd.f32 %v477, %v2813
  %v2815 = vpop.f32.mrb[0].mxu0
  %v2816 = vpop.f32.mrb[0].mxu0
  %v2817 = vadd.f32 %v477, %v2816
  %v2818 = vpop.f32.mrb[0].mxu0
  %2819 = vmatprep.mubr.bf16.mxu0 0
  %2820 = vmatmul.mubr.bf16.gmra.mrb[0].mxu0 %v1478
  %v2821 = vpop.f32.mrb[0].mxu0
  %v2822 = vadd.f32 %v477, %v2821
  %v2823 = vpop.f32.mrb[0].mxu0
  %v2824 = vpop.f32.mrb[0].mxu0
  %v2825 = vadd.f32 %v477, %v2824
  %v2826 = vpop.f32.mrb[0].mxu0
  %2827 = vmatprep.mubr.bf16.mxu0 0
  %2828 = vmatmul.mubr.bf16.gmra.mrb[0].mxu0 %v1479
  %v2829 = vpop.f32.mrb[0].mxu0
  %v2830 = vadd.f32 %v477, %v2829
  %v2831 = vpop.f32.mrb[0].mxu0
  %v2832 = vpop.f32.mrb[0].mxu0
  %v2833 = vadd.f32 %v477, %v2832
  %v2834 = vpop.f32.mrb[0].mxu0
  %2835 = vmatprep.mubr.bf16.mxu0 0
  %2836 = vmatmul.mubr.bf16.gmra.mrb[0].mxu0 %v1480
  %v2837 = vpop.f32.mrb[0].mxu0
  %v2838 = vadd.f32 %v477, %v2837
  %v2839 = vpop.f32.mrb[0].mxu0
  %v2840 = vpop.f32.mrb[0].mxu0
  %v2841 = vadd.f32 %v477, %v2840
  %v2842 = vpop.f32.mrb[0].mxu0
  %2843 = vmatprep.mubr.bf16.mxu0 0
  %2844 = vmatmul.mubr.bf16.gmra.mrb[0].mxu0 %v1481
  %v2845 = vpop.f32.mrb[0].mxu0
  %v2846 = vadd.f32 %v477, %v2845
  %v2847 = vpop.f32.mrb[0].mxu0
  %v2848 = vpop.f32.mrb[0].mxu0
  %v2849 = vadd.f32 %v477, %v2848
  %v2850 = vpop.f32.mrb[0].mxu0
  %2851 = vmatprep.mubr.bf16.mxu0 0
  %2852 = vmatmul.mubr.bf16.gmra.mrb[0].mxu0 %v1482
  %v2853 = vpop.f32.mrb[0].mxu0
  %v2854 = vadd.f32 %v477, %v2853
  %v2855 = vpop.f32.mrb[0].mxu0
  %v2856 = vpop.f32.mrb[0].mxu0
  %v2857 = vadd.f32 %v477, %v2856
  %v2858 = vpop.f32.mrb[0].mxu0
  %2859 = vmatprep.mubr.bf16.mxu0 0
  %2860 = vmatmul.mubr.bf16.gmra.mrb[0].mxu0 %v1483
  %v2861 = vpop.f32.mrb[0].mxu0
  %v2862 = vadd.f32 %v477, %v2861
  %v2863 = vpop.f32.mrb[0].mxu0
  %v2864 = vpop.f32.mrb[0].mxu0
  %v2865 = vadd.f32 %v477, %v2864
  %v2866 = vpop.f32.mrb[0].mxu0
  %2867 = vmatprep.mubr.bf16.mxu0 0
  %2868 = vmatmul.mubr.bf16.gmra.mrb[0].mxu0 %v1484
  %v2869 = vpop.f32.mrb[0].mxu0
  %v2870 = vadd.f32 %v477, %v2869
  %v2871 = vpop.f32.mrb[0].mxu0
  %v2872 = vpop.f32.mrb[0].mxu0
  %v2873 = vadd.f32 %v477, %v2872
  %v2874 = vpop.f32.mrb[0].mxu0
  %2875 = vmatprep.mubr.bf16.mxu0 0
  %2876 = vmatmul.mubr.bf16.gmra.mrb[0].mxu0 %v1485
  %v2877 = vpop.f32.mrb[0].mxu0
  %v2878 = vadd.f32 %v477, %v2877
  %v2879 = vpop.f32.mrb[0].mxu0
  %v2880 = vpop.f32.mrb[0].mxu0
  %v2881 = vadd.f32 %v477, %v2880
  %v2882 = vpop.f32.mrb[0].mxu0
  %2883 = vmatprep.mubr.bf16.mxu0 0
  %2884 = vmatmul.mubr.bf16.gmra.mrb[0].mxu0 %v1486
  %v2885 = vpop.f32.mrb[0].mxu0
  %v2886 = vadd.f32 %v477, %v2885
  %v2887 = vpop.f32.mrb[0].mxu0
  %v2888 = vpop.f32.mrb[0].mxu0
  %v2889 = vadd.f32 %v477, %v2888
  %v2890 = vpop.f32.mrb[0].mxu0
  %2891 = vmatprep.mubr.bf16.mxu0 0
  %2892 = vmatmul.mubr.bf16.gmra.mrb[0].mxu0 %v1487
  %v2893 = vpop.f32.mrb[0].mxu0
  %v2894 = vadd.f32 %v477, %v2893
  %v2895 = vpop.f32.mrb[0].mxu0
  %v2896 = vpop.f32.mrb[0].mxu0
  %v2897 = vadd.f32 %v477, %v2896
  %v2898 = vpop.f32.mrb[0].mxu0
  %2899 = vmatprep.mubr.bf16.mxu0 0
  %2900 = vmatmul.mubr.bf16.gmra.mrb[0].mxu0 %v1488
  %v2901 = vpop.f32.mrb[0].mxu0
  %v2902 = vadd.f32 %v477, %v2901
  %v2903 = vpop.f32.mrb[0].mxu0
  %v2904 = vpop.f32.mrb[0].mxu0
  %v2905 = vadd.f32 %v477, %v2904
  %v2906 = vpop.f32.mrb[0].mxu0
  %2907 = vmatprep.mubr.bf16.mxu0 0
  %2908 = vmatmul.mubr.bf16.gmra.mrb[0].mxu0 %v1489
  %v2909 = vpop.f32.mrb[0].mxu0
  %v2910 = vadd.f32 %v477, %v2909
  %v2911 = vpop.f32.mrb[0].mxu0
  %v2912 = vpop.f32.mrb[0].mxu0
  %v2913 = vadd.f32 %v477, %v2912
  %v2914 = vpop.f32.mrb[0].mxu0
  %2915 = vmatprep.mubr.bf16.mxu0 0
  %2916 = vmatmul.mubr.bf16.gmra.mrb[0].mxu0 %v1490
  %v2917 = vpop.f32.mrb[0].mxu0
  %v2918 = vadd.f32 %v477, %v2917
  %v2919 = vpop.f32.mrb[0].mxu0
  %v2920 = vpop.f32.mrb[0].mxu0
  %v2921 = vadd.f32 %v477, %v2920
  %v2922 = vpop.f32.mrb[0].mxu0
  %2923 = vmatprep.mubr.bf16.mxu0 0
  %2924 = vmatmul.mubr.bf16.gmra.mrb[0].mxu0 %v1491
  %v2925 = vpop.f32.mrb[0].mxu0
  %v2926 = vadd.f32 %v477, %v2925
  %v2927 = vpop.f32.mrb[0].mxu0
  %v2928 = vpop.f32.mrb[0].mxu0
  %v2929 = vadd.f32 %v477, %v2928
  %v2930 = vpop.f32.mrb[0].mxu0
  %2931 = vmatprep.mubr.bf16.mxu0 0
  %2932 = vmatmul.mubr.bf16.gmra.mrb[0].mxu0 %v1492
  %v2933 = vpop.f32.mrb[0].mxu0
  %v2934 = vadd.f32 %v477, %v2933
  %v2935 = vpop.f32.mrb[0].mxu0
  %v2936 = vpop.f32.mrb[0].mxu0
  %v2937 = vadd.f32 %v477, %v2936
  %v2938 = vpop.f32.mrb[0].mxu0
  %2939 = vmatprep.mubr.bf16.mxu0 0
  %2940 = vmatmul.mubr.bf16.gmra.mrb[0].mxu0 %v1493
  %v2941 = vpop.f32.mrb[0].mxu0
  %v2942 = vadd.f32 %v477, %v2941
  %v2943 = vpop.f32.mrb[0].mxu0
  %v2944 = vpop.f32.mrb[0].mxu0
  %v2945 = vadd.f32 %v477, %v2944
  %v2946 = vpop.f32.mrb[0].mxu0
  %2947 = vmatprep.mubr.bf16.mxu0 0
  %2948 = vmatmul.mubr.bf16.gmra.mrb[0].mxu0 %v1494
  %v2949 = vpop.f32.mrb[0].mxu0
  %v2950 = vadd.f32 %v477, %v2949
  %v2951 = vpop.f32.mrb[0].mxu0
  %v2952 = vpop.f32.mrb[0].mxu0
  %v2953 = vadd.f32 %v477, %v2952
  %v2954 = vpop.f32.mrb[0].mxu0
  %2955 = vmatprep.mubr.bf16.mxu0 0
  %2956 = vmatmul.mubr.bf16.gmra.mrb[0].mxu0 %v1495
  %v2957 = vpop.f32.mrb[0].mxu0
  %v2958 = vadd.f32 %v477, %v2957
  %v2959 = vpop.f32.mrb[0].mxu0
  %v2960 = vpop.f32.mrb[0].mxu0
  %v2961 = vadd.f32 %v477, %v2960
  %v2962 = vpop.f32.mrb[0].mxu0
  %2963 = vmatprep.mubr.bf16.mxu0 0
  %2964 = vmatmul.mubr.bf16.gmra.mrb[0].mxu0 %v1496
  %v2965 = vpop.f32.mrb[0].mxu0
  %v2966 = vadd.f32 %v477, %v2965
  %v2967 = vpop.f32.mrb[0].mxu0
  %v2968 = vpop.f32.mrb[0].mxu0
  %v2969 = vadd.f32 %v477, %v2968
  %v2970 = vpop.f32.mrb[0].mxu0
  %2971 = vmatprep.mubr.bf16.mxu0 0
  %2972 = vmatmul.mubr.bf16.gmra.mrb[0].mxu0 %v1497
  %v2973 = vpop.f32.mrb[0].mxu0
  %v2974 = vadd.f32 %v477, %v2973
  %v2975 = vpop.f32.mrb[0].mxu0
  %v2976 = vpop.f32.mrb[0].mxu0
  %v2977 = vadd.f32 %v477, %v2976
  %v2978 = vpop.f32.mrb[0].mxu0
  %2979 = vmatprep.mubr.bf16.mxu0 0
  %2980 = vmatmul.mubr.bf16.gmra.mrb[0].mxu0 %v1498
  %v2981 = vpop.f32.mrb[0].mxu0
  %v2982 = vadd.f32 %v477, %v2981
  %v2983 = vpop.f32.mrb[0].mxu0
  %v2984 = vpop.f32.mrb[0].mxu0
  %v2985 = vadd.f32 %v477, %v2984
  %v2986 = vpop.f32.mrb[0].mxu0
  %2987 = vmatprep.mubr.bf16.mxu0 0
  %2988 = vmatmul.mubr.bf16.gmra.mrb[0].mxu0 %v1499
  %v2989 = vpop.f32.mrb[0].mxu0
  %v2990 = vadd.f32 %v477, %v2989
  %v2991 = vpop.f32.mrb[0].mxu0
  %v2992 = vpop.f32.mrb[0].mxu0
  %v2993 = vadd.f32 %v477, %v2992
  %v2994 = vpop.f32.mrb[0].mxu0
  %2995 = vmatprep.mubr.bf16.mxu0 0
  %2996 = vmatmul.mubr.bf16.gmra.mrb[0].mxu0 %v1500
  %v2997 = vpop.f32.mrb[0].mxu0
  %v2998 = vadd.f32 %v477, %v2997
  %v2999 = vpop.f32.mrb[0].mxu0
  %v3000 = vpop.f32.mrb[0].mxu0
  %v3001 = vadd.f32 %v477, %v3000
  %v3002 = vpop.f32.mrb[0].mxu0
  %3003 = vmatprep.mubr.bf16.mxu0 0
  %3004 = vmatmul.mubr.bf16.gmra.mrb[0].mxu0 %v1501
  %v3005 = vpop.f32.mrb[0].mxu0
  %v3006 = vadd.f32 %v477, %v3005
  %v3007 = vpop.f32.mrb[0].mxu0
  %v3008 = vpop.f32.mrb[0].mxu0
  %v3009 = vadd.f32 %v477, %v3008
  %v3010 = vpop.f32.mrb[0].mxu0
  %3011 = vmatprep.mubr.bf16.mxu0 0
  %3012 = vmatmul.mubr.bf16.gmra.mrb[0].mxu0 %v1502
  %v3013 = vpop.f32.mrb[0].mxu0
  %v3014 = vadd.f32 %v477, %v3013
  %v3015 = vpop.f32.mrb[0].mxu0
  %v3016 = vpop.f32.mrb[0].mxu0
  %v3017 = vadd.f32 %v477, %v3016
  %v3018 = vpop.f32.mrb[0].mxu0
  %3019 = vmatprep.mubr.bf16.mxu0 0
  %3020 = vmatmul.mubr.bf16.gmra.mrb[0].mxu0 %v1503
  %v3021 = vpop.f32.mrb[0].mxu0
  %v3022 = vadd.f32 %v477, %v3021
  %v3023 = vpop.f32.mrb[0].mxu0
  %v3024 = vpop.f32.mrb[0].mxu0
  %v3025 = vadd.f32 %v477, %v3024
  %v3026 = vpop.f32.mrb[0].mxu0
  %3027 = vmatprep.mubr.bf16.mxu0 0
  %3028 = vmatmul.mubr.bf16.gmra.mrb[0].mxu0 %v1504
  %v3029 = vpop.f32.mrb[0].mxu0
  %v3030 = vadd.f32 %v477, %v3029
  %v3031 = vpop.f32.mrb[0].mxu0
  %v3032 = vpop.f32.mrb[0].mxu0
  %v3033 = vadd.f32 %v477, %v3032
  %v3034 = vpop.f32.mrb[0].mxu0
  %3035 = vmatprep.mubr.bf16.mxu0 0
  %3036 = vmatmul.mubr.bf16.gmra.mrb[0].mxu0 %v1505
  %v3037 = vpop.f32.mrb[0].mxu0
  %v3038 = vadd.f32 %v477, %v3037
  %v3039 = vpop.f32.mrb[0].mxu0
  %v3040 = vpop.f32.mrb[0].mxu0
  %v3041 = vadd.f32 %v477, %v3040
  %v3042 = vpop.f32.mrb[0].mxu0
  %3043 = vmatprep.mubr.bf16.mxu0 0
  %3044 = vmatmul.mubr.bf16.gmra.mrb[0].mxu0 %v1506
  %v3045 = vpop.f32.mrb[0].mxu0
  %v3046 = vadd.f32 %v477, %v3045
  %v3047 = vpop.f32.mrb[0].mxu0
  %v3048 = vpop.f32.mrb[0].mxu0
  %v3049 = vadd.f32 %v477, %v3048
  %v3050 = vpop.f32.mrb[0].mxu0
  %3051 = vmatprep.mubr.bf16.mxu0 0
  %3052 = vmatmul.mubr.bf16.gmra.mrb[0].mxu0 %v1507
  %v3053 = vpop.f32.mrb[0].mxu0
  %v3054 = vadd.f32 %v477, %v3053
  %v3055 = vpop.f32.mrb[0].mxu0
  %v3056 = vpop.f32.mrb[0].mxu0
  %v3057 = vadd.f32 %v477, %v3056
  %v3058 = vpop.f32.mrb[0].mxu0
  %3059 = vmatprep.mubr.bf16.mxu0 0
  %3060 = vmatmul.mubr.bf16.gmra.mrb[0].mxu0 %v1508
  %v3061 = vpop.f32.mrb[0].mxu0
  %v3062 = vadd.f32 %v477, %v3061
  %v3063 = vpop.f32.mrb[0].mxu0
  %v3064 = vpop.f32.mrb[0].mxu0
  %v3065 = vadd.f32 %v477, %v3064
  %v3066 = vpop.f32.mrb[0].mxu0
  %3067 = vmatprep.mubr.bf16.mxu0 0
  %3068 = vmatmul.mubr.bf16.gmra.mrb[0].mxu0 %v1509
  %v3069 = vpop.f32.mrb[0].mxu0
  %v3070 = vadd.f32 %v477, %v3069
  %v3071 = vpop.f32.mrb[0].mxu0
  %v3072 = vpop.f32.mrb[0].mxu0
  %v3073 = vadd.f32 %v477, %v3072
  %v3074 = vpop.f32.mrb[0].mxu0
  %3075 = vmatprep.mubr.bf16.mxu0 0
  %3076 = vmatmul.mubr.bf16.gmra.mrb[0].mxu0 %v1510
  %v3077 = vpop.f32.mrb[0].mxu0
  %v3078 = vadd.f32 %v477, %v3077
  %v3079 = vpop.f32.mrb[0].mxu0
  %v3080 = vpop.f32.mrb[0].mxu0
  %v3081 = vadd.f32 %v477, %v3080
  %v3082 = vpop.f32.mrb[0].mxu0
  %3083 = vmatprep.mubr.bf16.mxu0 0
  %3084 = vmatmul.mubr.bf16.gmra.mrb[0].mxu0 %v1511
  %v3085 = vpop.f32.mrb[0].mxu0
  %v3086 = vadd.f32 %v477, %v3085
  %v3087 = vpop.f32.mrb[0].mxu0
  %v3088 = vpop.f32.mrb[0].mxu0
  %v3089 = vadd.f32 %v477, %v3088
  %v3090 = vpop.f32.mrb[0].mxu0
  %3091 = vmatprep.mubr.bf16.mxu0 0
  %3092 = vmatmul.mubr.bf16.gmra.mrb[0].mxu0 %v1512
  %v3093 = vpop.f32.mrb[0].mxu0
  %v3094 = vadd.f32 %v477, %v3093
  %v3095 = vpop.f32.mrb[0].mxu0
  %v3096 = vpop.f32.mrb[0].mxu0
  %v3097 = vadd.f32 %v477, %v3096
  %v3098 = vpop.f32.mrb[0].mxu0
  %3099 = vmatprep.mubr.bf16.mxu0 0
  %3100 = vmatmul.mubr.bf16.gmra.mrb[0].mxu0 %v1513
  %v3101 = vpop.f32.mrb[0].mxu0
  %v3102 = vadd.f32 %v477, %v3101
  %v3103 = vpop.f32.mrb[0].mxu0
  %v3104 = vpop.f32.mrb[0].mxu0
  %v3105 = vadd.f32 %v477, %v3104
  %v3106 = vpop.f32.mrb[0].mxu0
  %3107 = vmatprep.mubr.bf16.mxu0 0
  %3108 = vmatmul.mubr.bf16.gmra.mrb[0].mxu0 %v1514
  %v3109 = vpop.f32.mrb[0].mxu0
  %v3110 = vadd.f32 %v477, %v3109
  %v3111 = vpop.f32.mrb[0].mxu0
  %v3112 = vpop.f32.mrb[0].mxu0
  %v3113 = vadd.f32 %v477, %v3112
  %v3114 = vpop.f32.mrb[0].mxu0
  %3115 = vmatprep.mubr.bf16.mxu0 0
  %3116 = vmatmul.mubr.bf16.gmra.mrb[0].mxu0 %v1515
  %v3117 = vpop.f32.mrb[0].mxu0
  %v3118 = vadd.f32 %v477, %v3117
  %v3119 = vpop.f32.mrb[0].mxu0
  %v3120 = vpop.f32.mrb[0].mxu0
  %v3121 = vadd.f32 %v477, %v3120
  %v3122 = vpop.f32.mrb[0].mxu0
  %3123 = vmatprep.mubr.bf16.mxu0 0
  %3124 = vmatmul.mubr.bf16.gmra.mrb[0].mxu0 %v1516
  %v3125 = vpop.f32.mrb[0].mxu0
  %v3126 = vadd.f32 %v477, %v3125
  %v3127 = vpop.f32.mrb[0].mxu0
  %v3128 = vpop.f32.mrb[0].mxu0
  %v3129 = vadd.f32 %v477, %v3128
  %v3130 = vpop.f32.mrb[0].mxu0
  %3131 = vmatprep.mubr.bf16.mxu0 0
  %3132 = vmatmul.mubr.bf16.gmra.mrb[0].mxu0 %v1517
  %v3133 = vpop.f32.mrb[0].mxu0
  %v3134 = vadd.f32 %v477, %v3133
  %v3135 = vpop.f32.mrb[0].mxu0
  %v3136 = vpop.f32.mrb[0].mxu0
  %v3137 = vadd.f32 %v477, %v3136
  %v3138 = vpop.f32.mrb[0].mxu0
  %3139 = vmatprep.mubr.bf16.mxu0 0
  %3140 = vmatmul.mubr.bf16.gmra.mrb[0].mxu0 %v1518
  %v3141 = vpop.f32.mrb[0].mxu0
  %v3142 = vadd.f32 %v477, %v3141
  %v3143 = vpop.f32.mrb[0].mxu0
  %v3144 = vpop.f32.mrb[0].mxu0
  %v3145 = vadd.f32 %v477, %v3144
  %v3146 = vpop.f32.mrb[0].mxu0
  %3147 = vmatprep.mubr.bf16.mxu0 0
  %3148 = vmatmul.mubr.bf16.gmra.mrb[0].mxu0 %v1519
  %v3149 = vpop.f32.mrb[0].mxu0
  %v3150 = vadd.f32 %v477, %v3149
  %v3151 = vpop.f32.mrb[0].mxu0
  %v3152 = vpop.f32.mrb[0].mxu0
  %v3153 = vadd.f32 %v477, %v3152
  %v3154 = vpop.f32.mrb[0].mxu0
  %3155 = vmatprep.mubr.bf16.mxu0 0
  %3156 = vmatmul.mubr.bf16.gmra.mrb[0].mxu0 %v1520
  %v3157 = vpop.f32.mrb[0].mxu0
  %v3158 = vadd.f32 %v477, %v3157
  %v3159 = vpop.f32.mrb[0].mxu0
  %v3160 = vpop.f32.mrb[0].mxu0
  %v3161 = vadd.f32 %v477, %v3160
  %v3162 = vpop.f32.mrb[0].mxu0
  %3163 = vmatprep.mubr.bf16.mxu0 0
  %3164 = vmatmul.mubr.bf16.gmra.mrb[0].mxu0 %v1521
  %v3165 = vpop.f32.mrb[0].mxu0
  %v3166 = vadd.f32 %v477, %v3165
  %v3167 = vpop.f32.mrb[0].mxu0
  %v3168 = vpop.f32.mrb[0].mxu0
  %v3169 = vadd.f32 %v477, %v3168
  %v3170 = vpop.f32.mrb[0].mxu0
  %3171 = vmatprep.mubr.bf16.mxu0 0
  %3172 = vmatmul.mubr.bf16.gmra.mrb[0].mxu0 %v1522
  %v3173 = vpop.f32.mrb[0].mxu0
  %v3174 = vadd.f32 %v477, %v3173
  %v3175 = vpop.f32.mrb[0].mxu0
  %v3176 = vpop.f32.mrb[0].mxu0
  %v3177 = vadd.f32 %v477, %v3176
  %v3178 = vpop.f32.mrb[0].mxu0
  %3179 = vmatprep.mubr.bf16.mxu0 0
  %3180 = vmatmul.mubr.bf16.gmra.mrb[0].mxu0 %v1523
  %v3181 = vpop.f32.mrb[0].mxu0
  %v3182 = vadd.f32 %v477, %v3181
  %v3183 = vpop.f32.mrb[0].mxu0
  %v3184 = vpop.f32.mrb[0].mxu0
  %v3185 = vadd.f32 %v477, %v3184
  %v3186 = vpop.f32.mrb[0].mxu0
  %3187 = vmatprep.mubr.bf16.mxu0 0
  %3188 = vmatmul.mubr.bf16.gmra.mrb[0].mxu0 %v1524
  %v3189 = vpop.f32.mrb[0].mxu0
  %v3190 = vadd.f32 %v477, %v3189
  %v3191 = vpop.f32.mrb[0].mxu0
  %v3192 = vpop.f32.mrb[0].mxu0
  %v3193 = vadd.f32 %v477, %v3192
  %v3194 = vpop.f32.mrb[0].mxu0
  %3195 = vmatprep.mubr.bf16.mxu0 0
  %3196 = vmatmul.mubr.bf16.gmra.mrb[0].mxu0 %v1525
  %v3197 = vpop.f32.mrb[0].mxu0
  %v3198 = vadd.f32 %v477, %v3197
  %v3199 = vpop.f32.mrb[0].mxu0
  %v3200 = vpop.f32.mrb[0].mxu0
  %v3201 = vadd.f32 %v477, %v3200
  %v3202 = vpop.f32.mrb[0].mxu0
  %3203 = vmatprep.mubr.bf16.mxu0 0
  %3204 = vmatmul.mubr.bf16.gmra.mrb[0].mxu0 %v1526
  %v3205 = vpop.f32.mrb[0].mxu0
  %v3206 = vadd.f32 %v477, %v3205
  %v3207 = vpop.f32.mrb[0].mxu0
  %v3208 = vpop.f32.mrb[0].mxu0
  %v3209 = vadd.f32 %v477, %v3208
  %v3210 = vpop.f32.mrb[0].mxu0
  %3211 = vmatprep.mubr.bf16.mxu0 0
  %3212 = vmatmul.mubr.bf16.gmra.mrb[0].mxu0 %v1527
  %v3213 = vpop.f32.mrb[0].mxu0
  %v3214 = vadd.f32 %v477, %v3213
  %v3215 = vpop.f32.mrb[0].mxu0
  %v3216 = vpop.f32.mrb[0].mxu0
  %v3217 = vadd.f32 %v477, %v3216
  %v3218 = vpop.f32.mrb[0].mxu0
  %3219 = vmatprep.mubr.bf16.mxu0 0
  %3220 = vmatmul.mubr.bf16.gmra.mrb[0].mxu0 %v1528
  %v3221 = vpop.f32.mrb[0].mxu0
  %v3222 = vadd.f32 %v477, %v3221
  %v3223 = vpop.f32.mrb[0].mxu0
  %v3224 = vpop.f32.mrb[0].mxu0
  %v3225 = vadd.f32 %v477, %v3224
  %v3226 = vpop.f32.mrb[0].mxu0
  %3227 = vmatprep.mubr.bf16.mxu0 0
  %3228 = vmatmul.mubr.bf16.gmra.mrb[0].mxu0 %v1529
  %v3229 = vpop.f32.mrb[0].mxu0
  %v3230 = vadd.f32 %v477, %v3229
  %v3231 = vpop.f32.mrb[0].mxu0
  %v3232 = vpop.f32.mrb[0].mxu0
  %v3233 = vadd.f32 %v477, %v3232
  %v3234 = vpop.f32.mrb[0].mxu0
  %3235 = vmatprep.mubr.bf16.mxu0 0
  %3236 = vmatmul.mubr.bf16.gmra.mrb[0].mxu0 %v1530
  %v3237 = vpop.f32.mrb[0].mxu0
  %v3238 = vadd.f32 %v477, %v3237
  %v3239 = vpop.f32.mrb[0].mxu0
  %v3240 = vpop.f32.mrb[0].mxu0
  %v3241 = vadd.f32 %v477, %v3240
  %v3242 = vpop.f32.mrb[0].mxu0
  %3243 = vmatprep.mubr.bf16.mxu0 0
  %3244 = vmatmul.mubr.bf16.gmra.mrb[0].mxu0 %v1531
  %v3245 = vpop.f32.mrb[0].mxu0
  %v3246 = vadd.f32 %v477, %v3245
  %v3247 = vpop.f32.mrb[0].mxu0
  %v3248 = vpop.f32.mrb[0].mxu0
  %v3249 = vadd.f32 %v477, %v3248
  %v3250 = vpop.f32.mrb[0].mxu0
  %3251 = vmatprep.mubr.bf16.mxu0 0
  %3252 = vmatmul.mubr.bf16.gmra.mrb[0].mxu0 %v1532
  %v3253 = vpop.f32.mrb[0].mxu0
  %v3254 = vadd.f32 %v477, %v3253
  %v3255 = vpop.f32.mrb[0].mxu0
  %v3256 = vpop.f32.mrb[0].mxu0
  %v3257 = vadd.f32 %v477, %v3256
  %v3258 = vpop.f32.mrb[0].mxu0
  %3259 = vmatprep.mubr.bf16.mxu0 0
  %3260 = vmatmul.mubr.bf16.gmra.mrb[0].mxu0 %v1533
  %v3261 = vpop.f32.mrb[0].mxu0
  %v3262 = vadd.f32 %v477, %v3261
  %v3263 = vpop.f32.mrb[0].mxu0
  %v3264 = vpop.f32.mrb[0].mxu0
  %v3265 = vadd.f32 %v477, %v3264
  %v3266 = vpop.f32.mrb[0].mxu0
  %3267 = vmatprep.mubr.bf16.mxu0 0
  %3268 = vmatmul.mubr.bf16.gmra.mrb[0].mxu0 %v1534
  %v3269 = vpop.f32.mrb[0].mxu0
  %v3270 = vadd.f32 %v477, %v3269
  %v3271 = vpop.f32.mrb[0].mxu0
  %v3272 = vpop.f32.mrb[0].mxu0
  %v3273 = vadd.f32 %v477, %v3272
  %v3274 = vpop.f32.mrb[0].mxu0
  %3275 = vmatprep.mubr.bf16.mxu0 0
  %3276 = vmatmul.mubr.bf16.gmra.mrb[0].mxu0 %v1535
  %v3277 = vpop.f32.mrb[0].mxu0
  %v3278 = vadd.f32 %v477, %v3277
  %v3279 = vpop.f32.mrb[0].mxu0
  %v3280 = vpop.f32.mrb[0].mxu0
  %v3281 = vadd.f32 %v477, %v3280
  %v3282 = vpop.f32.mrb[0].mxu0
  %3283 = vmatprep.mubr.bf16.mxu0 0
  %3284 = vmatmul.mubr.bf16.gmra.mrb[0].mxu0 %v1536
  %v3285 = vpop.f32.mrb[0].mxu0
  %v3286 = vadd.f32 %v477, %v3285
  %v3287 = vpop.f32.mrb[0].mxu0
  %v3288 = vpop.f32.mrb[0].mxu0
  %v3289 = vadd.f32 %v477, %v3288
  %v3290 = vpop.f32.mrb[0].mxu0
  %3291 = vmatprep.mubr.bf16.mxu0 0
  %3292 = vmatmul.mubr.bf16.gmra.mrb[0].mxu0 %v1537
  %v3293 = vpop.f32.mrb[0].mxu0
  %v3294 = vadd.f32 %v477, %v3293
  %v3295 = vpop.f32.mrb[0].mxu0
  %v3296 = vpop.f32.mrb[0].mxu0
  %v3297 = vadd.f32 %v477, %v3296
  %v3298 = vpop.f32.mrb[0].mxu0
  %3299 = vmatprep.mubr.bf16.mxu0 0
  %3300 = vmatmul.mubr.bf16.gmra.mrb[0].mxu0 %v1538
  %v3301 = vpop.f32.mrb[0].mxu0
  %v3302 = vadd.f32 %v477, %v3301
  %v3303 = vpop.f32.mrb[0].mxu0
  %v3304 = vpop.f32.mrb[0].mxu0
  %v3305 = vadd.f32 %v477, %v3304
  %v3306 = vpop.f32.mrb[0].mxu0
  %3307 = vmatprep.mubr.bf16.mxu0 0
  %3308 = vmatmul.mubr.bf16.gmra.mrb[0].mxu0 %v1539
  %v3309 = vpop.f32.mrb[0].mxu0
  %v3310 = vadd.f32 %v477, %v3309
  %v3311 = vpop.f32.mrb[0].mxu0
  %v3312 = vpop.f32.mrb[0].mxu0
  %v3313 = vadd.f32 %v477, %v3312
  %v3314 = vpop.f32.mrb[0].mxu0
  %3315 = vmatprep.mubr.bf16.mxu0 0
  %3316 = vmatmul.mubr.bf16.gmra.mrb[0].mxu0 %v1540
  %v3317 = vpop.f32.mrb[0].mxu0
  %v3318 = vadd.f32 %v477, %v3317
  %v3319 = vpop.f32.mrb[0].mxu0
  %v3320 = vpop.f32.mrb[0].mxu0
  %v3321 = vadd.f32 %v477, %v3320
  %v3322 = vpop.f32.mrb[0].mxu0
  %3323 = vmatprep.mubr.bf16.mxu0 0
  %3324 = vmatmul.mubr.bf16.gmra.mrb[0].mxu0 %v1541
  %v3325 = vpop.f32.mrb[0].mxu0
  %v3326 = vadd.f32 %v477, %v3325
  %v3327 = vpop.f32.mrb[0].mxu0
  %v3328 = vpop.f32.mrb[0].mxu0
  %v3329 = vadd.f32 %v477, %v3328
  %v3330 = vpop.f32.mrb[0].mxu0
  %3331 = vmatprep.mubr.bf16.mxu0 0
  %3332 = vmatmul.mubr.bf16.gmra.mrb[0].mxu0 %v1542
  %v3333 = vpop.f32.mrb[0].mxu0
  %v3334 = vadd.f32 %v477, %v3333
  %v3335 = vpop.f32.mrb[0].mxu0
  %v3336 = vpop.f32.mrb[0].mxu0
  %v3337 = vadd.f32 %v477, %v3336
  %v3338 = vpop.f32.mrb[0].mxu0
  %3339 = vmatprep.mubr.bf16.mxu0 0
  %3340 = vmatmul.mubr.bf16.gmra.mrb[0].mxu0 %v1543
  %v3341 = vpop.f32.mrb[0].mxu0
  %v3342 = vadd.f32 %v477, %v3341
  %v3343 = vpop.f32.mrb[0].mxu0
  %v3344 = vpop.f32.mrb[0].mxu0
  %v3345 = vadd.f32 %v477, %v3344
  %v3346 = vpop.f32.mrb[0].mxu0
  %3347 = vmatprep.mubr.bf16.mxu0 0
  %3348 = vmatmul.mubr.bf16.gmra.mrb[0].mxu0 %v1544
  %v3349 = vpop.f32.mrb[0].mxu0
  %v3350 = vadd.f32 %v477, %v3349
  %v3351 = vpop.f32.mrb[0].mxu0
  %v3352 = vpop.f32.mrb[0].mxu0
  %v3353 = vadd.f32 %v477, %v3352
  %v3354 = vpop.f32.mrb[0].mxu0
  %3355 = vmatprep.mubr.bf16.mxu0 0
  %3356 = vmatmul.mubr.bf16.gmra.mrb[0].mxu0 %v1545
  %v3357 = vpop.f32.mrb[0].mxu0
  %v3358 = vadd.f32 %v477, %v3357
  %v3359 = vpop.f32.mrb[0].mxu0
  %v3360 = vpop.f32.mrb[0].mxu0
  %v3361 = vadd.f32 %v477, %v3360
  %v3362 = vpop.f32.mrb[0].mxu0
  %3363 = vmatprep.mubr.bf16.mxu0 0
  %3364 = vmatmul.mubr.bf16.gmra.mrb[0].mxu0 %v1546
  %v3365 = vpop.f32.mrb[0].mxu0
  %v3366 = vadd.f32 %v477, %v3365
  %v3367 = vpop.f32.mrb[0].mxu0
  %v3368 = vpop.f32.mrb[0].mxu0
  %v3369 = vadd.f32 %v477, %v3368
  %v3370 = vpop.f32.mrb[0].mxu0
  %3371 = vmatprep.mubr.bf16.mxu0 0
  %3372 = vmatmul.mubr.bf16.gmra.mrb[0].mxu0 %v1547
  %v3373 = vpop.f32.mrb[0].mxu0
  %v3374 = vadd.f32 %v477, %v3373
  %v3375 = vpop.f32.mrb[0].mxu0
  %v3376 = vpop.f32.mrb[0].mxu0
  %v3377 = vadd.f32 %v477, %v3376
  %v3378 = vpop.f32.mrb[0].mxu0
  %3379 = vmatprep.mubr.bf16.mxu0 0
  %3380 = vmatmul.mubr.bf16.gmra.mrb[0].mxu0 %v1548
  %v3381 = vpop.f32.mrb[0].mxu0
  %v3382 = vadd.f32 %v477, %v3381
  %v3383 = vpop.f32.mrb[0].mxu0
  %v3384 = vpop.f32.mrb[0].mxu0
  %v3385 = vadd.f32 %v477, %v3384
  %v3386 = vpop.f32.mrb[0].mxu0
  %3387 = vmatprep.mubr.bf16.mxu0 0
  %3388 = vmatmul.mubr.bf16.gmra.mrb[0].mxu0 %v1549
  %v3389 = vpop.f32.mrb[0].mxu0
  %v3390 = vadd.f32 %v477, %v3389
  %v3391 = vpop.f32.mrb[0].mxu0
  %v3392 = vpop.f32.mrb[0].mxu0
  %v3393 = vadd.f32 %v477, %v3392
  %v3394 = vpop.f32.mrb[0].mxu0
  %3395 = vmatprep.mubr.bf16.mxu0 0
  %3396 = vmatmul.mubr.bf16.gmra.mrb[0].mxu0 %v1550
  %v3397 = vpop.f32.mrb[0].mxu0
  %v3398 = vadd.f32 %v477, %v3397
  %v3399 = vpop.f32.mrb[0].mxu0
  %v3400 = vpop.f32.mrb[0].mxu0
  %v3401 = vadd.f32 %v477, %v3400
  %v3402 = vpop.f32.mrb[0].mxu0
  %3403 = vmatprep.mubr.bf16.mxu0 0
  %3404 = vmatmul.mubr.bf16.gmra.mrb[0].mxu0 %v1551
  %v3405 = vpop.f32.mrb[0].mxu0
  %v3406 = vadd.f32 %v477, %v3405
  %v3407 = vpop.f32.mrb[0].mxu0
  %v3408 = vpop.f32.mrb[0].mxu0
  %v3409 = vadd.f32 %v477, %v3408
  %v3410 = vpop.f32.mrb[0].mxu0
  %3411 = vmatprep.mubr.bf16.mxu0 0
  %3412 = vmatmul.mubr.bf16.gmra.mrb[0].mxu0 %v1552
  %v3413 = vpop.f32.mrb[0].mxu0
  %v3414 = vadd.f32 %v477, %v3413
  %v3415 = vpop.f32.mrb[0].mxu0
  %v3416 = vpop.f32.mrb[0].mxu0
  %v3417 = vadd.f32 %v477, %v3416
  %v3418 = vpop.f32.mrb[0].mxu0
  %3419 = vmatprep.mubr.bf16.mxu0 0
  %3420 = vmatmul.mubr.bf16.gmra.mrb[0].mxu0 %v1553
  %v3421 = vpop.f32.mrb[0].mxu0
  %v3422 = vadd.f32 %v477, %v3421
  %v3423 = vpop.f32.mrb[0].mxu0
  %v3424 = vpop.f32.mrb[0].mxu0
  %v3425 = vadd.f32 %v477, %v3424
  %v3426 = vpop.f32.mrb[0].mxu0
  %3427 = vmatprep.mubr.bf16.mxu0 0
  %3428 = vmatmul.mubr.bf16.gmra.mrb[0].mxu0 %v1554
  %v3429 = vpop.f32.mrb[0].mxu0
  %v3430 = vadd.f32 %v477, %v3429
  %v3431 = vpop.f32.mrb[0].mxu0
  %v3432 = vpop.f32.mrb[0].mxu0
  %v3433 = vadd.f32 %v477, %v3432
  %v3434 = vpop.f32.mrb[0].mxu0
  %3435 = vmatprep.mubr.bf16.mxu0 0
  %3436 = vmatmul.mubr.bf16.gmra.mrb[0].mxu0 %v1555
  %v3437 = vpop.f32.mrb[0].mxu0
  %v3438 = vadd.f32 %v477, %v3437
  %v3439 = vpop.f32.mrb[0].mxu0
  %v3440 = vpop.f32.mrb[0].mxu0
  %v3441 = vadd.f32 %v477, %v3440
  %v3442 = vpop.f32.mrb[0].mxu0
  %3443 = vmatprep.mubr.bf16.mxu0 0
  %3444 = vmatmul.mubr.bf16.gmra.mrb[0].mxu0 %v1556
  %v3445 = vpop.f32.mrb[0].mxu0
  %v3446 = vadd.f32 %v477, %v3445
  %v3447 = vpop.f32.mrb[0].mxu0
  %v3448 = vpop.f32.mrb[0].mxu0
  %v3449 = vadd.f32 %v477, %v3448
  %v3450 = vpop.f32.mrb[0].mxu0
  %3451 = vmatprep.mubr.bf16.mxu0 0
  %3452 = vmatmul.mubr.bf16.gmra.mrb[0].mxu0 %v1557
  %v3453 = vpop.f32.mrb[0].mxu0
  %v3454 = vadd.f32 %v477, %v3453
  %v3455 = vpop.f32.mrb[0].mxu0
  %v3456 = vpop.f32.mrb[0].mxu0
  %v3457 = vadd.f32 %v477, %v3456
  %v3458 = vpop.f32.mrb[0].mxu0
  %3459 = vmatprep.mubr.bf16.mxu0 0
  %3460 = vmatmul.mubr.bf16.gmra.mrb[0].mxu0 %v1558
  %v3461 = vpop.f32.mrb[0].mxu0
  %v3462 = vadd.f32 %v477, %v3461
  %v3463 = vpop.f32.mrb[0].mxu0
  %v3464 = vpop.f32.mrb[0].mxu0
  %v3465 = vadd.f32 %v477, %v3464
  %v3466 = vpop.f32.mrb[0].mxu0
  %3467 = vmatprep.mubr.bf16.mxu0 0
  %3468 = vmatmul.mubr.bf16.gmra.mrb[0].mxu0 %v1559
  %v3469 = vpop.f32.mrb[0].mxu0
  %v3470 = vadd.f32 %v477, %v3469
  %v3471 = vpop.f32.mrb[0].mxu0
  %v3472 = vpop.f32.mrb[0].mxu0
  %v3473 = vadd.f32 %v477, %v3472
  %v3474 = vpop.f32.mrb[0].mxu0
  %3475 = vmatprep.mubr.bf16.mxu0 0
  %3476 = vmatmul.mubr.bf16.gmra.mrb[0].mxu0 %v1560
  %v3477 = vpop.f32.mrb[0].mxu0
  %v3478 = vadd.f32 %v477, %v3477
  %v3479 = vpop.f32.mrb[0].mxu0
  %v3480 = vpop.f32.mrb[0].mxu0
  %v3481 = vadd.f32 %v477, %v3480
  %v3482 = vpop.f32.mrb[0].mxu0
  %3483 = vmatprep.mubr.bf16.mxu0 0
  %3484 = vmatmul.mubr.bf16.gmra.mrb[0].mxu0 %v1561
  %v3485 = vpop.f32.mrb[0].mxu0
  %v3486 = vadd.f32 %v477, %v3485
  %v3487 = vpop.f32.mrb[0].mxu0
  %v3488 = vpop.f32.mrb[0].mxu0
  %v3489 = vadd.f32 %v477, %v3488
  %v3490 = vpop.f32.mrb[0].mxu0
  %3491 = vmatprep.mubr.bf16.mxu0 0
  %3492 = vmatmul.mubr.bf16.gmra.mrb[0].mxu0 %v1562
  %v3493 = vpop.f32.mrb[0].mxu0
  %v3494 = vadd.f32 %v477, %v3493
  %v3495 = vpop.f32.mrb[0].mxu0
  %v3496 = vpop.f32.mrb[0].mxu0
  %v3497 = vadd.f32 %v477, %v3496
  %v3498 = vpop.f32.mrb[0].mxu0
  %3499 = vmatprep.mubr.bf16.mxu0 0
  %3500 = vmatmul.mubr.bf16.gmra.mrb[0].mxu0 %v1563
  %v3501 = vpop.f32.mrb[0].mxu0
  %v3502 = vadd.f32 %v477, %v3501
  %v3503 = vpop.f32.mrb[0].mxu0
  %v3504 = vpop.f32.mrb[0].mxu0
  %v3505 = vadd.f32 %v477, %v3504
  %v3506 = vpop.f32.mrb[0].mxu0
  %3507 = vmatprep.mubr.bf16.mxu0 0
  %3508 = vmatmul.mubr.bf16.gmra.mrb[0].mxu0 %v1564
  %v3509 = vpop.f32.mrb[0].mxu0
  %v3510 = vadd.f32 %v477, %v3509
  %v3511 = vpop.f32.mrb[0].mxu0
  %v3512 = vpop.f32.mrb[0].mxu0
  %v3513 = vadd.f32 %v477, %v3512
  %v3514 = vpop.f32.mrb[0].mxu0
  %3515 = vmatprep.mubr.bf16.mxu0 0
  %3516 = vmatmul.mubr.bf16.gmra.mrb[0].mxu0 %v1565
  %v3517 = vpop.f32.mrb[0].mxu0
  %v3518 = vadd.f32 %v477, %v3517
  %v3519 = vpop.f32.mrb[0].mxu0
  %v3520 = vpop.f32.mrb[0].mxu0
  %v3521 = vadd.f32 %v477, %v3520
  %v3522 = vpop.f32.mrb[0].mxu0
  %3523 = vmatprep.mubr.bf16.mxu0 0
  %3524 = vmatmul.mubr.bf16.gmra.mrb[0].mxu0 %v1566
  %v3525 = vpop.f32.mrb[0].mxu0
  %v3526 = vadd.f32 %v477, %v3525
  %v3527 = vpop.f32.mrb[0].mxu0
  %v3528 = vpop.f32.mrb[0].mxu0
  %v3529 = vadd.f32 %v477, %v3528
  %v3530 = vpop.f32.mrb[0].mxu0
  %3531 = vmatprep.mubr.bf16.mxu0 0
  %3532 = vmatmul.mubr.bf16.gmra.mrb[0].mxu0 %v1567
  %v3533 = vpop.f32.mrb[0].mxu0
  %v3534 = vadd.f32 %v477, %v3533
  %v3535 = vpop.f32.mrb[0].mxu0
  %v3536 = vpop.f32.mrb[0].mxu0
  %v3537 = vadd.f32 %v477, %v3536
  %v3538 = vpop.f32.mrb[0].mxu0
  %3539 = vmatprep.mubr.bf16.mxu0 0
  %3540 = vmatmul.mubr.bf16.gmra.mrb[0].mxu0 %v1568
  %v3541 = vpop.f32.mrb[0].mxu0
  %v3542 = vadd.f32 %v477, %v3541
  %v3543 = vpop.f32.mrb[0].mxu0
  %v3544 = vpop.f32.mrb[0].mxu0
  %v3545 = vadd.f32 %v477, %v3544
  %v3546 = vpop.f32.mrb[0].mxu0
  %3547 = vmatprep.mubr.bf16.mxu0 0
  %3548 = vmatmul.mubr.bf16.gmra.mrb[0].mxu0 %v1569
  %v3549 = vpop.f32.mrb[0].mxu0
  %v3550 = vadd.f32 %v477, %v3549
  %v3551 = vpop.f32.mrb[0].mxu0
  %v3552 = vpop.f32.mrb[0].mxu0
  %v3553 = vadd.f32 %v477, %v3552
  %v3554 = vpop.f32.mrb[0].mxu0
  %3555 = vmatprep.mubr.bf16.mxu0 0
  %3556 = vmatmul.mubr.bf16.gmra.mrb[0].mxu0 %v1570
  %v3557 = vpop.f32.mrb[0].mxu0
  %v3558 = vadd.f32 %v477, %v3557
  %v3559 = vpop.f32.mrb[0].mxu0
  %v3560 = vpop.f32.mrb[0].mxu0
  %v3561 = vadd.f32 %v477, %v3560
  %v3562 = vpop.f32.mrb[0].mxu0
  %3563 = vmatprep.mubr.bf16.mxu0 0
  %3564 = vmatmul.mubr.bf16.gmra.mrb[0].mxu0 %v1571
  %v3565 = vpop.f32.mrb[0].mxu0
  %v3566 = vadd.f32 %v477, %v3565
  %v3567 = vpop.f32.mrb[0].mxu0
  %v3568 = vpop.f32.mrb[0].mxu0
  %v3569 = vadd.f32 %v477, %v3568
  %v3570 = vpop.f32.mrb[0].mxu0
  %3571 = vmatprep.mubr.bf16.mxu0 0
  %3572 = vmatmul.mubr.bf16.gmra.mrb[0].mxu0 %v1572
  %v3573 = vpop.f32.mrb[0].mxu0
  %v3574 = vadd.f32 %v477, %v3573
  %v3575 = vpop.f32.mrb[0].mxu0
  %v3576 = vpop.f32.mrb[0].mxu0
  %v3577 = vadd.f32 %v477, %v3576
  %v3578 = vpop.f32.mrb[0].mxu0
  %3579 = vmatprep.mubr.bf16.mxu0 0
  %3580 = vmatmul.mubr.bf16.gmra.mrb[0].mxu0 %v1573
  %v3581 = vpop.f32.mrb[0].mxu0
  %v3582 = vadd.f32 %v477, %v3581
  %v3583 = vpop.f32.mrb[0].mxu0
  %v3584 = vpop.f32.mrb[0].mxu0
  %v3585 = vadd.f32 %v477, %v3584
  %v3586 = vpop.f32.mrb[0].mxu0
  %3587 = vmatprep.mubr.bf16.mxu0 0
  %3588 = vmatmul.mubr.bf16.gmra.mrb[0].mxu0 %v1574
  %v3589 = vpop.f32.mrb[0].mxu0
  %v3590 = vadd.f32 %v477, %v3589
  %v3591 = vpop.f32.mrb[0].mxu0
  %v3592 = vpop.f32.mrb[0].mxu0
  %v3593 = vadd.f32 %v477, %v3592
  %v3594 = vpop.f32.mrb[0].mxu0
  %3595 = vmatprep.mubr.bf16.mxu0 0
  %3596 = vmatmul.mubr.bf16.gmra.mrb[0].mxu0 %v1575
  %v3597 = vpop.f32.mrb[0].mxu0
  %v3598 = vadd.f32 %v477, %v3597
  %v3599 = vpop.f32.mrb[0].mxu0
  %v3600 = vpop.f32.mrb[0].mxu0
  %v3601 = vadd.f32 %v477, %v3600
  %v3602 = vpop.f32.mrb[0].mxu0
  %3603 = vmatprep.mubr.bf16.mxu0 0
  %3604 = vmatmul.mubr.bf16.gmra.mrb[0].mxu0 %v1576
  %v3605 = vpop.f32.mrb[0].mxu0
  %v3606 = vadd.f32 %v477, %v3605
  %v3607 = vpop.f32.mrb[0].mxu0
  %v3608 = vpop.f32.mrb[0].mxu0
  %v3609 = vadd.f32 %v477, %v3608
  %v3610 = vpop.f32.mrb[0].mxu0
  %3611 = vmatprep.mubr.bf16.mxu0 0
  %3612 = vmatmul.mubr.bf16.gmra.mrb[0].mxu0 %v1577
  %v3613 = vpop.f32.mrb[0].mxu0
  %v3614 = vadd.f32 %v477, %v3613
  %v3615 = vpop.f32.mrb[0].mxu0
  %v3616 = vpop.f32.mrb[0].mxu0
  %v3617 = vadd.f32 %v477, %v3616
  %v3618 = vpop.f32.mrb[0].mxu0
  %3619 = vmatprep.mubr.bf16.mxu0 0
  %3620 = vmatmul.mubr.bf16.gmra.mrb[0].mxu0 %v1578
  %v3621 = vpop.f32.mrb[0].mxu0
  %v3622 = vadd.f32 %v477, %v3621
  %v3623 = vpop.f32.mrb[0].mxu0
  %v3624 = vpop.f32.mrb[0].mxu0
  %v3625 = vadd.f32 %v477, %v3624
  %v3626 = vpop.f32.mrb[0].mxu0
  %3627 = vmatprep.mubr.bf16.mxu0 0
  %3628 = vmatmul.mubr.bf16.gmra.mrb[0].mxu0 %v1579
  %v3629 = vpop.f32.mrb[0].mxu0
  %v3630 = vadd.f32 %v477, %v3629
  %v3631 = vpop.f32.mrb[0].mxu0
  %v3632 = vpop.f32.mrb[0].mxu0
  %v3633 = vadd.f32 %v477, %v3632
  %v3634 = vpop.f32.mrb[0].mxu0
  %3635 = vmatprep.mubr.bf16.mxu0 0
  %3636 = vmatmul.mubr.bf16.gmra.mrb[0].mxu0 %v1580
  %v3637 = vpop.f32.mrb[0].mxu0
  %v3638 = vadd.f32 %v477, %v3637
  %v3639 = vpop.f32.mrb[0].mxu0
  %v3640 = vpop.f32.mrb[0].mxu0
  %v3641 = vadd.f32 %v477, %v3640
  %v3642 = vpop.f32.mrb[0].mxu0
  %3643 = vmatprep.mubr.bf16.mxu0 0
  %3644 = vmatmul.mubr.bf16.gmra.mrb[0].mxu0 %v1581
  %v3645 = vpop.f32.mrb[0].mxu0
  %v3646 = vadd.f32 %v477, %v3645
  %v3647 = vpop.f32.mrb[0].mxu0
  %v3648 = vpop.f32.mrb[0].mxu0
  %v3649 = vpop.f32.mrb[0].mxu0
  %3650 = vdwg.mxu0
  %v3651 = vmax.f32 %v1886, 0.0
  %v3652 = vmax.f32 %v1889, 0.0
  %v3653 = vmax.f32 %v1894, 0.0
  %v3654 = vmax.f32 %v1897, 0.0
  %v3655 = vmax.f32 %v1902, 0.0
  %v3656 = vmax.f32 %v1905, 0.0
  %v3657 = vmax.f32 %v1910, 0.0
  %v3658 = vmax.f32 %v1913, 0.0
  %v3659 = vmax.f32 %v1918, 0.0
  %v3660 = vmax.f32 %v1921, 0.0
  %v3661 = vmax.f32 %v1926, 0.0
  %v3662 = vmax.f32 %v1929, 0.0
  %v3663 = vmax.f32 %v1934, 0.0
  %v3664 = vmax.f32 %v1937, 0.0
  %v3665 = vmax.f32 %v1942, 0.0
  %v3666 = vmax.f32 %v1945, 0.0
  %v3667 = vmax.f32 %v1950, 0.0
  %v3668 = vmax.f32 %v1953, 0.0
  %v3669 = vmax.f32 %v1958, 0.0
  %v3670 = vmax.f32 %v1961, 0.0
  %v3671 = vmax.f32 %v1966, 0.0
  %v3672 = vmax.f32 %v1969, 0.0
  %v3673 = vmax.f32 %v1974, 0.0
  %v3674 = vmax.f32 %v1977, 0.0
  %v3675 = vmax.f32 %v1982, 0.0
  %v3676 = vmax.f32 %v1985, 0.0
  %v3677 = vmax.f32 %v1990, 0.0
  %v3678 = vmax.f32 %v1993, 0.0
  %v3679 = vmax.f32 %v1998, 0.0
  %v3680 = vmax.f32 %v2001, 0.0
  %v3681 = vmax.f32 %v2006, 0.0
  %v3682 = vmax.f32 %v2009, 0.0
  %v3683 = vmax.f32 %v2014, 0.0
  %v3684 = vmax.f32 %v2017, 0.0
  %v3685 = vmax.f32 %v2022, 0.0
  %v3686 = vmax.f32 %v2025, 0.0
  %v3687 = vmax.f32 %v2030, 0.0
  %v3688 = vmax.f32 %v2033, 0.0
  %v3689 = vmax.f32 %v2038, 0.0
  %v3690 = vmax.f32 %v2041, 0.0
  %v3691 = vmax.f32 %v2046, 0.0
  %v3692 = vmax.f32 %v2049, 0.0
  %v3693 = vmax.f32 %v2054, 0.0
  %v3694 = vmax.f32 %v2057, 0.0
  %v3695 = vmax.f32 %v2062, 0.0
  %v3696 = vmax.f32 %v2065, 0.0
  %v3697 = vmax.f32 %v2070, 0.0
  %v3698 = vmax.f32 %v2073, 0.0
  %v3699 = vmax.f32 %v2078, 0.0
  %v3700 = vmax.f32 %v2081, 0.0
  %v3701 = vmax.f32 %v2086, 0.0
  %v3702 = vmax.f32 %v2089, 0.0
  %v3703 = vmax.f32 %v2094, 0.0
  %v3704 = vmax.f32 %v2097, 0.0
  %v3705 = vmax.f32 %v2102, 0.0
  %v3706 = vmax.f32 %v2105, 0.0
  %v3707 = vmax.f32 %v2110, 0.0
  %v3708 = vmax.f32 %v2113, 0.0
  %v3709 = vmax.f32 %v2118, 0.0
  %v3710 = vmax.f32 %v2121, 0.0
  %v3711 = vmax.f32 %v2126, 0.0
  %v3712 = vmax.f32 %v2129, 0.0
  %v3713 = vmax.f32 %v2134, 0.0
  %v3714 = vmax.f32 %v2137, 0.0
  %v3715 = vmax.f32 %v2142, 0.0
  %v3716 = vmax.f32 %v2145, 0.0
  %v3717 = vmax.f32 %v2150, 0.0
  %v3718 = vmax.f32 %v2153, 0.0
  %v3719 = vmax.f32 %v2158, 0.0
  %v3720 = vmax.f32 %v2161, 0.0
  %v3721 = vmax.f32 %v2166, 0.0
  %v3722 = vmax.f32 %v2169, 0.0
  %v3723 = vmax.f32 %v2174, 0.0
  %v3724 = vmax.f32 %v2177, 0.0
  %v3725 = vmax.f32 %v2182, 0.0
  %v3726 = vmax.f32 %v2185, 0.0
  %v3727 = vmax.f32 %v2190, 0.0
  %v3728 = vmax.f32 %v2193, 0.0
  %v3729 = vmax.f32 %v2198, 0.0
  %v3730 = vmax.f32 %v2201, 0.0
  %v3731 = vmax.f32 %v2206, 0.0
  %v3732 = vmax.f32 %v2209, 0.0
  %v3733 = vmax.f32 %v2214, 0.0
  %v3734 = vmax.f32 %v2217, 0.0
  %v3735 = vmax.f32 %v2222, 0.0
  %v3736 = vmax.f32 %v2225, 0.0
  %v3737 = vmax.f32 %v2230, 0.0
  %v3738 = vmax.f32 %v2233, 0.0
  %v3739 = vmax.f32 %v2238, 0.0
  %v3740 = vmax.f32 %v2241, 0.0
  %v3741 = vmax.f32 %v2246, 0.0
  %v3742 = vmax.f32 %v2249, 0.0
  %v3743 = vmax.f32 %v2254, 0.0
  %v3744 = vmax.f32 %v2257, 0.0
  %v3745 = vmax.f32 %v2262, 0.0
  %v3746 = vmax.f32 %v2265, 0.0
  %v3747 = vmax.f32 %v2270, 0.0
  %v3748 = vmax.f32 %v2273, 0.0
  %v3749 = vmax.f32 %v2278, 0.0
  %v3750 = vmax.f32 %v2281, 0.0
  %v3751 = vmax.f32 %v2286, 0.0
  %v3752 = vmax.f32 %v2289, 0.0
  %v3753 = vmax.f32 %v2294, 0.0
  %v3754 = vmax.f32 %v2297, 0.0
  %v3755 = vmax.f32 %v2302, 0.0
  %v3756 = vmax.f32 %v2305, 0.0
  %v3757 = vmax.f32 %v2310, 0.0
  %v3758 = vmax.f32 %v2313, 0.0
  %v3759 = vmax.f32 %v2318, 0.0
  %v3760 = vmax.f32 %v2321, 0.0
  %v3761 = vmax.f32 %v2326, 0.0
  %v3762 = vmax.f32 %v2329, 0.0
  %v3763 = vmax.f32 %v2334, 0.0
  %v3764 = vmax.f32 %v2337, 0.0
  %v3765 = vmax.f32 %v2342, 0.0
  %v3766 = vmax.f32 %v2345, 0.0
  %v3767 = vmax.f32 %v2350, 0.0
  %v3768 = vmax.f32 %v2353, 0.0
  %v3769 = vmax.f32 %v2358, 0.0
  %v3770 = vmax.f32 %v2361, 0.0
  %v3771 = vmax.f32 %v2366, 0.0
  %v3772 = vmax.f32 %v2369, 0.0
  %v3773 = vmax.f32 %v2374, 0.0
  %v3774 = vmax.f32 %v2377, 0.0
  %v3775 = vmax.f32 %v2382, 0.0
  %v3776 = vmax.f32 %v2385, 0.0
  %v3777 = vmax.f32 %v2390, 0.0
  %v3778 = vmax.f32 %v2393, 0.0
  %v3779 = vmax.f32 %v2398, 0.0
  %v3780 = vmax.f32 %v2401, 0.0
  %v3781 = vmax.f32 %v2406, 0.0
  %v3782 = vmax.f32 %v2409, 0.0
  %v3783 = vmax.f32 %v2414, 0.0
  %v3784 = vmax.f32 %v2417, 0.0
  %v3785 = vmax.f32 %v2422, 0.0
  %v3786 = vmax.f32 %v2425, 0.0
  %v3787 = vmax.f32 %v2430, 0.0
  %v3788 = vmax.f32 %v2433, 0.0
  %v3789 = vmax.f32 %v2438, 0.0
  %v3790 = vmax.f32 %v2441, 0.0
  %v3791 = vmax.f32 %v2446, 0.0
  %v3792 = vmax.f32 %v2449, 0.0
  %v3793 = vmax.f32 %v2454, 0.0
  %v3794 = vmax.f32 %v2457, 0.0
  %v3795 = vmax.f32 %v2462, 0.0
  %v3796 = vmax.f32 %v2465, 0.0
  %v3797 = vmax.f32 %v2470, 0.0
  %v3798 = vmax.f32 %v2473, 0.0
  %v3799 = vmax.f32 %v2478, 0.0
  %v3800 = vmax.f32 %v2481, 0.0
  %v3801 = vmax.f32 %v2486, 0.0
  %v3802 = vmax.f32 %v2489, 0.0
  %v3803 = vmax.f32 %v2494, 0.0
  %v3804 = vmax.f32 %v2497, 0.0
  %v3805 = vmax.f32 %v2502, 0.0
  %v3806 = vmax.f32 %v2505, 0.0
  %v3807 = vmax.f32 %v2510, 0.0
  %v3808 = vmax.f32 %v2513, 0.0
  %v3809 = vmax.f32 %v2518, 0.0
  %v3810 = vmax.f32 %v2521, 0.0
  %v3811 = vmax.f32 %v2526, 0.0
  %v3812 = vmax.f32 %v2529, 0.0
  %v3813 = vmax.f32 %v2534, 0.0
  %v3814 = vmax.f32 %v2537, 0.0
  %v3815 = vmax.f32 %v2542, 0.0
  %v3816 = vmax.f32 %v2545, 0.0
  %v3817 = vmax.f32 %v2550, 0.0
  %v3818 = vmax.f32 %v2553, 0.0
  %v3819 = vmax.f32 %v2558, 0.0
  %v3820 = vmax.f32 %v2561, 0.0
  %v3821 = vmax.f32 %v2566, 0.0
  %v3822 = vmax.f32 %v2569, 0.0
  %v3823 = vmax.f32 %v2574, 0.0
  %v3824 = vmax.f32 %v2577, 0.0
  %v3825 = vmax.f32 %v2582, 0.0
  %v3826 = vmax.f32 %v2585, 0.0
  %v3827 = vmax.f32 %v2590, 0.0
  %v3828 = vmax.f32 %v2593, 0.0
  %v3829 = vmax.f32 %v2598, 0.0
  %v3830 = vmax.f32 %v2601, 0.0
  %v3831 = vmax.f32 %v2606, 0.0
  %v3832 = vmax.f32 %v2609, 0.0
  %v3833 = vmax.f32 %v2614, 0.0
  %v3834 = vmax.f32 %v2617, 0.0
  %v3835 = vmax.f32 %v2622, 0.0
  %v3836 = vmax.f32 %v2625, 0.0
  %v3837 = vmax.f32 %v2630, 0.0
  %v3838 = vmax.f32 %v2633, 0.0
  %v3839 = vmax.f32 %v2638, 0.0
  %v3840 = vmax.f32 %v2641, 0.0
  %v3841 = vmax.f32 %v2646, 0.0
  %v3842 = vmax.f32 %v2649, 0.0
  %v3843 = vmax.f32 %v2654, 0.0
  %v3844 = vmax.f32 %v2657, 0.0
  %v3845 = vmax.f32 %v2662, 0.0
  %v3846 = vmax.f32 %v2665, 0.0
  %v3847 = vmax.f32 %v2670, 0.0
  %v3848 = vmax.f32 %v2673, 0.0
  %v3849 = vmax.f32 %v2678, 0.0
  %v3850 = vmax.f32 %v2681, 0.0
  %v3851 = vmax.f32 %v2686, 0.0
  %v3852 = vmax.f32 %v2689, 0.0
  %v3853 = vmax.f32 %v2694, 0.0
  %v3854 = vmax.f32 %v2697, 0.0
  %v3855 = vmax.f32 %v2702, 0.0
  %v3856 = vmax.f32 %v2705, 0.0
  %v3857 = vmax.f32 %v2710, 0.0
  %v3858 = vmax.f32 %v2713, 0.0
  %v3859 = vmax.f32 %v2718, 0.0
  %v3860 = vmax.f32 %v2721, 0.0
  %v3861 = vmax.f32 %v2726, 0.0
  %v3862 = vmax.f32 %v2729, 0.0
  %v3863 = vmax.f32 %v2734, 0.0
  %v3864 = vmax.f32 %v2737, 0.0
  %v3865 = vmax.f32 %v2742, 0.0
  %v3866 = vmax.f32 %v2745, 0.0
  %v3867 = vmax.f32 %v2750, 0.0
  %v3868 = vmax.f32 %v2753, 0.0
  %v3869 = vmax.f32 %v2758, 0.0
  %v3870 = vmax.f32 %v2761, 0.0
  %v3871 = vmax.f32 %v2766, 0.0
  %v3872 = vmax.f32 %v2769, 0.0
  %v3873 = vmax.f32 %v2774, 0.0
  %v3874 = vmax.f32 %v2777, 0.0
  %v3875 = vmax.f32 %v2782, 0.0
  %v3876 = vmax.f32 %v2785, 0.0
  %v3877 = vmax.f32 %v2790, 0.0
  %v3878 = vmax.f32 %v2793, 0.0
  %v3879 = vmax.f32 %v2798, 0.0
  %v3880 = vmax.f32 %v2801, 0.0
  %v3881 = vmax.f32 %v2806, 0.0
  %v3882 = vmax.f32 %v2809, 0.0
  %v3883 = vmax.f32 %v2814, 0.0
  %v3884 = vmax.f32 %v2817, 0.0
  %v3885 = vmax.f32 %v2822, 0.0
  %v3886 = vmax.f32 %v2825, 0.0
  %v3887 = vmax.f32 %v2830, 0.0
  %v3888 = vmax.f32 %v2833, 0.0
  %v3889 = vmax.f32 %v2838, 0.0
  %v3890 = vmax.f32 %v2841, 0.0
  %v3891 = vmax.f32 %v2846, 0.0
  %v3892 = vmax.f32 %v2849, 0.0
  %v3893 = vmax.f32 %v2854, 0.0
  %v3894 = vmax.f32 %v2857, 0.0
  %v3895 = vmax.f32 %v2862, 0.0
  %v3896 = vmax.f32 %v2865, 0.0
  %v3897 = vmax.f32 %v2870, 0.0
  %v3898 = vmax.f32 %v2873, 0.0
  %v3899 = vmax.f32 %v2878, 0.0
  %v3900 = vmax.f32 %v2881, 0.0
  %v3901 = vmax.f32 %v2886, 0.0
  %v3902 = vmax.f32 %v2889, 0.0
  %v3903 = vmax.f32 %v2894, 0.0
  %v3904 = vmax.f32 %v2897, 0.0
  %v3905 = vmax.f32 %v2902, 0.0
  %v3906 = vmax.f32 %v2905, 0.0
  %v3907 = vmax.f32 %v2910, 0.0
  %v3908 = vmax.f32 %v2913, 0.0
  %v3909 = vmax.f32 %v2918, 0.0
  %v3910 = vmax.f32 %v2921, 0.0
  %v3911 = vmax.f32 %v2926, 0.0
  %v3912 = vmax.f32 %v2929, 0.0
  %v3913 = vmax.f32 %v2934, 0.0
  %v3914 = vmax.f32 %v2937, 0.0
  %v3915 = vmax.f32 %v2942, 0.0
  %v3916 = vmax.f32 %v2945, 0.0
  %v3917 = vmax.f32 %v2950, 0.0
  %v3918 = vmax.f32 %v2953, 0.0
  %v3919 = vmax.f32 %v2958, 0.0
  %v3920 = vmax.f32 %v2961, 0.0
  %v3921 = vmax.f32 %v2966, 0.0
  %v3922 = vmax.f32 %v2969, 0.0
  %v3923 = vmax.f32 %v2974, 0.0
  %v3924 = vmax.f32 %v2977, 0.0
  %v3925 = vmax.f32 %v2982, 0.0
  %v3926 = vmax.f32 %v2985, 0.0
  %v3927 = vmax.f32 %v2990, 0.0
  %v3928 = vmax.f32 %v2993, 0.0
  %v3929 = vmax.f32 %v2998, 0.0
  %v3930 = vmax.f32 %v3001, 0.0
  %v3931 = vmax.f32 %v3006, 0.0
  %v3932 = vmax.f32 %v3009, 0.0
  %v3933 = vmax.f32 %v3014, 0.0
  %v3934 = vmax.f32 %v3017, 0.0
  %v3935 = vmax.f32 %v3022, 0.0
  %v3936 = vmax.f32 %v3025, 0.0
  %v3937 = vmax.f32 %v3030, 0.0
  %v3938 = vmax.f32 %v3033, 0.0
  %v3939 = vmax.f32 %v3038, 0.0
  %v3940 = vmax.f32 %v3041, 0.0
  %v3941 = vmax.f32 %v3046, 0.0
  %v3942 = vmax.f32 %v3049, 0.0
  %v3943 = vmax.f32 %v3054, 0.0
  %v3944 = vmax.f32 %v3057, 0.0
  %v3945 = vmax.f32 %v3062, 0.0
  %v3946 = vmax.f32 %v3065, 0.0
  %v3947 = vmax.f32 %v3070, 0.0
  %v3948 = vmax.f32 %v3073, 0.0
  %v3949 = vmax.f32 %v3078, 0.0
  %v3950 = vmax.f32 %v3081, 0.0
  %v3951 = vmax.f32 %v3086, 0.0
  %v3952 = vmax.f32 %v3089, 0.0
  %v3953 = vmax.f32 %v3094, 0.0
  %v3954 = vmax.f32 %v3097, 0.0
  %v3955 = vmax.f32 %v3102, 0.0
  %v3956 = vmax.f32 %v3105, 0.0
  %v3957 = vmax.f32 %v3110, 0.0
  %v3958 = vmax.f32 %v3113, 0.0
  %v3959 = vmax.f32 %v3118, 0.0
  %v3960 = vmax.f32 %v3121, 0.0
  %v3961 = vmax.f32 %v3126, 0.0
  %v3962 = vmax.f32 %v3129, 0.0
  %v3963 = vmax.f32 %v3134, 0.0
  %v3964 = vmax.f32 %v3137, 0.0
  %v3965 = vmax.f32 %v3142, 0.0
  %v3966 = vmax.f32 %v3145, 0.0
  %v3967 = vmax.f32 %v3150, 0.0
  %v3968 = vmax.f32 %v3153, 0.0
  %v3969 = vmax.f32 %v3158, 0.0
  %v3970 = vmax.f32 %v3161, 0.0
  %v3971 = vmax.f32 %v3166, 0.0
  %v3972 = vmax.f32 %v3169, 0.0
  %v3973 = vmax.f32 %v3174, 0.0
  %v3974 = vmax.f32 %v3177, 0.0
  %v3975 = vmax.f32 %v3182, 0.0
  %v3976 = vmax.f32 %v3185, 0.0
  %v3977 = vmax.f32 %v3190, 0.0
  %v3978 = vmax.f32 %v3193, 0.0
  %v3979 = vmax.f32 %v3198, 0.0
  %v3980 = vmax.f32 %v3201, 0.0
  %v3981 = vmax.f32 %v3206, 0.0
  %v3982 = vmax.f32 %v3209, 0.0
  %v3983 = vmax.f32 %v3214, 0.0
  %v3984 = vmax.f32 %v3217, 0.0
  %v3985 = vmax.f32 %v3222, 0.0
  %v3986 = vmax.f32 %v3225, 0.0
  %v3987 = vmax.f32 %v3230, 0.0
  %v3988 = vmax.f32 %v3233, 0.0
  %v3989 = vmax.f32 %v3238, 0.0
  %v3990 = vmax.f32 %v3241, 0.0
  %v3991 = vmax.f32 %v3246, 0.0
  %v3992 = vmax.f32 %v3249, 0.0
  %v3993 = vmax.f32 %v3254, 0.0
  %v3994 = vmax.f32 %v3257, 0.0
  %v3995 = vmax.f32 %v3262, 0.0
  %v3996 = vmax.f32 %v3265, 0.0
  %v3997 = vmax.f32 %v3270, 0.0
  %v3998 = vmax.f32 %v3273, 0.0
  %v3999 = vmax.f32 %v3278, 0.0
  %v4000 = vmax.f32 %v3281, 0.0
  %v4001 = vmax.f32 %v3286, 0.0
  %v4002 = vmax.f32 %v3289, 0.0
  %v4003 = vmax.f32 %v3294, 0.0
  %v4004 = vmax.f32 %v3297, 0.0
  %v4005 = vmax.f32 %v3302, 0.0
  %v4006 = vmax.f32 %v3305, 0.0
  %v4007 = vmax.f32 %v3310, 0.0
  %v4008 = vmax.f32 %v3313, 0.0
  %v4009 = vmax.f32 %v3318, 0.0
  %v4010 = vmax.f32 %v3321, 0.0
  %v4011 = vmax.f32 %v3326, 0.0
  %v4012 = vmax.f32 %v3329, 0.0
  %v4013 = vmax.f32 %v3334, 0.0
  %v4014 = vmax.f32 %v3337, 0.0
  %v4015 = vmax.f32 %v3342, 0.0
  %v4016 = vmax.f32 %v3345, 0.0
  %v4017 = vmax.f32 %v3350, 0.0
  %v4018 = vmax.f32 %v3353, 0.0
  %v4019 = vmax.f32 %v3358, 0.0
  %v4020 = vmax.f32 %v3361, 0.0
  %v4021 = vmax.f32 %v3366, 0.0
  %v4022 = vmax.f32 %v3369, 0.0
  %v4023 = vmax.f32 %v3374, 0.0
  %v4024 = vmax.f32 %v3377, 0.0
  %v4025 = vmax.f32 %v3382, 0.0
  %v4026 = vmax.f32 %v3385, 0.0
  %v4027 = vmax.f32 %v3390, 0.0
  %v4028 = vmax.f32 %v3393, 0.0
  %v4029 = vmax.f32 %v3398, 0.0
  %v4030 = vmax.f32 %v3401, 0.0
  %v4031 = vmax.f32 %v3406, 0.0
  %v4032 = vmax.f32 %v3409, 0.0
  %v4033 = vmax.f32 %v3414, 0.0
  %v4034 = vmax.f32 %v3417, 0.0
  %v4035 = vmax.f32 %v3422, 0.0
  %v4036 = vmax.f32 %v3425, 0.0
  %v4037 = vmax.f32 %v3430, 0.0
  %v4038 = vmax.f32 %v3433, 0.0
  %v4039 = vmax.f32 %v3438, 0.0
  %v4040 = vmax.f32 %v3441, 0.0
  %v4041 = vmax.f32 %v3446, 0.0
  %v4042 = vmax.f32 %v3449, 0.0
  %v4043 = vmax.f32 %v3454, 0.0
  %v4044 = vmax.f32 %v3457, 0.0
  %v4045 = vmax.f32 %v3462, 0.0
  %v4046 = vmax.f32 %v3465, 0.0
  %v4047 = vmax.f32 %v3470, 0.0
  %v4048 = vmax.f32 %v3473, 0.0
  %v4049 = vmax.f32 %v3478, 0.0
  %v4050 = vmax.f32 %v3481, 0.0
  %v4051 = vmax.f32 %v3486, 0.0
  %v4052 = vmax.f32 %v3489, 0.0
  %v4053 = vmax.f32 %v3494, 0.0
  %v4054 = vmax.f32 %v3497, 0.0
  %v4055 = vmax.f32 %v3502, 0.0
  %v4056 = vmax.f32 %v3505, 0.0
  %v4057 = vmax.f32 %v3510, 0.0
  %v4058 = vmax.f32 %v3513, 0.0
  %v4059 = vmax.f32 %v3518, 0.0
  %v4060 = vmax.f32 %v3521, 0.0
  %v4061 = vmax.f32 %v3526, 0.0
  %v4062 = vmax.f32 %v3529, 0.0
  %v4063 = vmax.f32 %v3534, 0.0
  %v4064 = vmax.f32 %v3537, 0.0
  %v4065 = vmax.f32 %v3542, 0.0
  %v4066 = vmax.f32 %v3545, 0.0
  %v4067 = vmax.f32 %v3550, 0.0
  %v4068 = vmax.f32 %v3553, 0.0
  %v4069 = vmax.f32 %v3558, 0.0
  %v4070 = vmax.f32 %v3561, 0.0
  %v4071 = vmax.f32 %v3566, 0.0
  %v4072 = vmax.f32 %v3569, 0.0
  %v4073 = vmax.f32 %v3574, 0.0
  %v4074 = vmax.f32 %v3577, 0.0
  %v4075 = vmax.f32 %v3582, 0.0
  %v4076 = vmax.f32 %v3585, 0.0
  %v4077 = vmax.f32 %v3590, 0.0
  %v4078 = vmax.f32 %v3593, 0.0
  %v4079 = vmax.f32 %v3598, 0.0
  %v4080 = vmax.f32 %v3601, 0.0
  %v4081 = vmax.f32 %v3606, 0.0
  %v4082 = vmax.f32 %v3609, 0.0
  %v4083 = vmax.f32 %v3614, 0.0
  %v4084 = vmax.f32 %v3617, 0.0
  %v4085 = vmax.f32 %v3622, 0.0
  %v4086 = vmax.f32 %v3625, 0.0
  %v4087 = vmax.f32 %v3630, 0.0
  %v4088 = vmax.f32 %v3633, 0.0
  %v4089 = vmax.f32 %v3638, 0.0
  %v4090 = vmax.f32 %v3641, 0.0
  %v4091 = vmax.f32 %v3646, 0.0
  %v4092 = vpack.c.bf16 %v3652, %v3651
  %v4093 = vpack.c.bf16 %v3654, %v3653
  %v4094 = vpack.c.bf16 %v3656, %v3655
  %v4095 = vpack.c.bf16 %v3658, %v3657
  %v4096 = vpack.c.bf16 %v3660, %v3659
  %v4097 = vpack.c.bf16 %v3662, %v3661
  %v4098 = vpack.c.bf16 %v3664, %v3663
  %v4099 = vpack.c.bf16 %v3666, %v3665
  %v4100 = vpack.c.bf16 %v3668, %v3667
  %v4101 = vpack.c.bf16 %v3670, %v3669
  %v4102 = vpack.c.bf16 %v3672, %v3671
  %v4103 = vpack.c.bf16 %v3674, %v3673
  %v4104 = vpack.c.bf16 %v3676, %v3675
  %v4105 = vpack.c.bf16 %v3678, %v3677
  %v4106 = vpack.c.bf16 %v3680, %v3679
  %v4107 = vpack.c.bf16 %v3682, %v3681
  %v4108 = vpack.c.bf16 %v3684, %v3683
  %v4109 = vpack.c.bf16 %v3686, %v3685
  %v4110 = vpack.c.bf16 %v3688, %v3687
  %v4111 = vpack.c.bf16 %v3690, %v3689
  %v4112 = vpack.c.bf16 %v3692, %v3691
  %v4113 = vpack.c.bf16 %v3694, %v3693
  %v4114 = vpack.c.bf16 %v3696, %v3695
  %v4115 = vpack.c.bf16 %v3698, %v3697
  %v4116 = vpack.c.bf16 %v3700, %v3699
  %v4117 = vpack.c.bf16 %v3702, %v3701
  %v4118 = vpack.c.bf16 %v3704, %v3703
  %v4119 = vpack.c.bf16 %v3706, %v3705
  %v4120 = vpack.c.bf16 %v3708, %v3707
  %v4121 = vpack.c.bf16 %v3710, %v3709
  %v4122 = vpack.c.bf16 %v3712, %v3711
  %v4123 = vpack.c.bf16 %v3714, %v3713
  %v4124 = vpack.c.bf16 %v3716, %v3715
  %v4125 = vpack.c.bf16 %v3718, %v3717
  %v4126 = vpack.c.bf16 %v3720, %v3719
  %v4127 = vpack.c.bf16 %v3722, %v3721
  %v4128 = vpack.c.bf16 %v3724, %v3723
  %v4129 = vpack.c.bf16 %v3726, %v3725
  %v4130 = vpack.c.bf16 %v3728, %v3727
  %v4131 = vpack.c.bf16 %v3730, %v3729
  %v4132 = vpack.c.bf16 %v3732, %v3731
  %v4133 = vpack.c.bf16 %v3734, %v3733
  %v4134 = vpack.c.bf16 %v3736, %v3735
  %v4135 = vpack.c.bf16 %v3738, %v3737
  %v4136 = vpack.c.bf16 %v3740, %v3739
  %v4137 = vpack.c.bf16 %v3742, %v3741
  %v4138 = vpack.c.bf16 %v3744, %v3743
  %v4139 = vpack.c.bf16 %v3746, %v3745
  %v4140 = vpack.c.bf16 %v3748, %v3747
  %v4141 = vpack.c.bf16 %v3750, %v3749
  %v4142 = vpack.c.bf16 %v3752, %v3751
  %v4143 = vpack.c.bf16 %v3754, %v3753
  %v4144 = vpack.c.bf16 %v3756, %v3755
  %v4145 = vpack.c.bf16 %v3758, %v3757
  %v4146 = vpack.c.bf16 %v3760, %v3759
  %v4147 = vpack.c.bf16 %v3762, %v3761
  %v4148 = vpack.c.bf16 %v3764, %v3763
  %v4149 = vpack.c.bf16 %v3766, %v3765
  %v4150 = vpack.c.bf16 %v3768, %v3767
  %v4151 = vpack.c.bf16 %v3770, %v3769
  %v4152 = vpack.c.bf16 %v3772, %v3771
  %v4153 = vpack.c.bf16 %v3774, %v3773
  %v4154 = vpack.c.bf16 %v3776, %v3775
  %v4155 = vpack.c.bf16 %v3778, %v3777
  %v4156 = vpack.c.bf16 %v3780, %v3779
  %v4157 = vpack.c.bf16 %v3782, %v3781
  %v4158 = vpack.c.bf16 %v3784, %v3783
  %v4159 = vpack.c.bf16 %v3786, %v3785
  %v4160 = vpack.c.bf16 %v3788, %v3787
  %v4161 = vpack.c.bf16 %v3790, %v3789
  %v4162 = vpack.c.bf16 %v3792, %v3791
  %v4163 = vpack.c.bf16 %v3794, %v3793
  %v4164 = vpack.c.bf16 %v3796, %v3795
  %v4165 = vpack.c.bf16 %v3798, %v3797
  %v4166 = vpack.c.bf16 %v3800, %v3799
  %v4167 = vpack.c.bf16 %v3802, %v3801
  %v4168 = vpack.c.bf16 %v3804, %v3803
  %v4169 = vpack.c.bf16 %v3806, %v3805
  %v4170 = vpack.c.bf16 %v3808, %v3807
  %v4171 = vpack.c.bf16 %v3810, %v3809
  %v4172 = vpack.c.bf16 %v3812, %v3811
  %v4173 = vpack.c.bf16 %v3814, %v3813
  %v4174 = vpack.c.bf16 %v3816, %v3815
  %v4175 = vpack.c.bf16 %v3818, %v3817
  %v4176 = vpack.c.bf16 %v3820, %v3819
  %v4177 = vpack.c.bf16 %v3822, %v3821
  %v4178 = vpack.c.bf16 %v3824, %v3823
  %v4179 = vpack.c.bf16 %v3826, %v3825
  %v4180 = vpack.c.bf16 %v3828, %v3827
  %v4181 = vpack.c.bf16 %v3830, %v3829
  %v4182 = vpack.c.bf16 %v3832, %v3831
  %v4183 = vpack.c.bf16 %v3834, %v3833
  %v4184 = vpack.c.bf16 %v3836, %v3835
  %v4185 = vpack.c.bf16 %v3838, %v3837
  %v4186 = vpack.c.bf16 %v3840, %v3839
  %v4187 = vpack.c.bf16 %v3842, %v3841
  %v4188 = vpack.c.bf16 %v3844, %v3843
  %v4189 = vpack.c.bf16 %v3846, %v3845
  %v4190 = vpack.c.bf16 %v3848, %v3847
  %v4191 = vpack.c.bf16 %v3850, %v3849
  %v4192 = vpack.c.bf16 %v3852, %v3851
  %v4193 = vpack.c.bf16 %v3854, %v3853
  %v4194 = vpack.c.bf16 %v3856, %v3855
  %v4195 = vpack.c.bf16 %v3858, %v3857
  %v4196 = vpack.c.bf16 %v3860, %v3859
  %v4197 = vpack.c.bf16 %v3862, %v3861
  %v4198 = vpack.c.bf16 %v3864, %v3863
  %v4199 = vpack.c.bf16 %v3866, %v3865
  %v4200 = vpack.c.bf16 %v3868, %v3867
  %v4201 = vpack.c.bf16 %v3870, %v3869
  %v4202 = vpack.c.bf16 %v3872, %v3871
  %v4203 = vpack.c.bf16 %v3874, %v3873
  %v4204 = vpack.c.bf16 %v3876, %v3875
  %v4205 = vpack.c.bf16 %v3878, %v3877
  %v4206 = vpack.c.bf16 %v3880, %v3879
  %v4207 = vpack.c.bf16 %v3882, %v3881
  %v4208 = vpack.c.bf16 %v3884, %v3883
  %v4209 = vpack.c.bf16 %v3886, %v3885
  %v4210 = vpack.c.bf16 %v3888, %v3887
  %v4211 = vpack.c.bf16 %v3890, %v3889
  %v4212 = vpack.c.bf16 %v3892, %v3891
  %v4213 = vpack.c.bf16 %v3894, %v3893
  %v4214 = vpack.c.bf16 %v3896, %v3895
  %v4215 = vpack.c.bf16 %v3898, %v3897
  %v4216 = vpack.c.bf16 %v3900, %v3899
  %v4217 = vpack.c.bf16 %v3902, %v3901
  %v4218 = vpack.c.bf16 %v3904, %v3903
  %v4219 = vpack.c.bf16 %v3906, %v3905
  %v4220 = vpack.c.bf16 %v3908, %v3907
  %v4221 = vpack.c.bf16 %v3910, %v3909
  %v4222 = vpack.c.bf16 %v3912, %v3911
  %v4223 = vpack.c.bf16 %v3914, %v3913
  %v4224 = vpack.c.bf16 %v3916, %v3915
  %v4225 = vpack.c.bf16 %v3918, %v3917
  %v4226 = vpack.c.bf16 %v3920, %v3919
  %v4227 = vpack.c.bf16 %v3922, %v3921
  %v4228 = vpack.c.bf16 %v3924, %v3923
  %v4229 = vpack.c.bf16 %v3926, %v3925
  %v4230 = vpack.c.bf16 %v3928, %v3927
  %v4231 = vpack.c.bf16 %v3930, %v3929
  %v4232 = vpack.c.bf16 %v3932, %v3931
  %v4233 = vpack.c.bf16 %v3934, %v3933
  %v4234 = vpack.c.bf16 %v3936, %v3935
  %v4235 = vpack.c.bf16 %v3938, %v3937
  %v4236 = vpack.c.bf16 %v3940, %v3939
  %v4237 = vpack.c.bf16 %v3942, %v3941
  %v4238 = vpack.c.bf16 %v3944, %v3943
  %v4239 = vpack.c.bf16 %v3946, %v3945
  %v4240 = vpack.c.bf16 %v3948, %v3947
  %v4241 = vpack.c.bf16 %v3950, %v3949
  %v4242 = vpack.c.bf16 %v3952, %v3951
  %v4243 = vpack.c.bf16 %v3954, %v3953
  %v4244 = vpack.c.bf16 %v3956, %v3955
  %v4245 = vpack.c.bf16 %v3958, %v3957
  %v4246 = vpack.c.bf16 %v3960, %v3959
  %v4247 = vpack.c.bf16 %v3962, %v3961
  %v4248 = vpack.c.bf16 %v3964, %v3963
  %v4249 = vpack.c.bf16 %v3966, %v3965
  %v4250 = vpack.c.bf16 %v3968, %v3967
  %v4251 = vpack.c.bf16 %v3970, %v3969
  %v4252 = vpack.c.bf16 %v3972, %v3971
  %v4253 = vpack.c.bf16 %v3974, %v3973
  %v4254 = vpack.c.bf16 %v3976, %v3975
  %v4255 = vpack.c.bf16 %v3978, %v3977
  %v4256 = vpack.c.bf16 %v3980, %v3979
  %v4257 = vpack.c.bf16 %v3982, %v3981
  %v4258 = vpack.c.bf16 %v3984, %v3983
  %v4259 = vpack.c.bf16 %v3986, %v3985
  %v4260 = vpack.c.bf16 %v3988, %v3987
  %v4261 = vpack.c.bf16 %v3990, %v3989
  %v4262 = vpack.c.bf16 %v3992, %v3991
  %v4263 = vpack.c.bf16 %v3994, %v3993
  %v4264 = vpack.c.bf16 %v3996, %v3995
  %v4265 = vpack.c.bf16 %v3998, %v3997
  %v4266 = vpack.c.bf16 %v4000, %v3999
  %v4267 = vpack.c.bf16 %v4002, %v4001
  %v4268 = vpack.c.bf16 %v4004, %v4003
  %v4269 = vpack.c.bf16 %v4006, %v4005
  %v4270 = vpack.c.bf16 %v4008, %v4007
  %v4271 = vpack.c.bf16 %v4010, %v4009
  %v4272 = vpack.c.bf16 %v4012, %v4011
  %v4273 = vpack.c.bf16 %v4014, %v4013
  %v4274 = vpack.c.bf16 %v4016, %v4015
  %v4275 = vpack.c.bf16 %v4018, %v4017
  %v4276 = vpack.c.bf16 %v4020, %v4019
  %v4277 = vpack.c.bf16 %v4022, %v4021
  %v4278 = vpack.c.bf16 %v4024, %v4023
  %v4279 = vpack.c.bf16 %v4026, %v4025
  %v4280 = vpack.c.bf16 %v4028, %v4027
  %v4281 = vpack.c.bf16 %v4030, %v4029
  %v4282 = vpack.c.bf16 %v4032, %v4031
  %v4283 = vpack.c.bf16 %v4034, %v4033
  %v4284 = vpack.c.bf16 %v4036, %v4035
  %v4285 = vpack.c.bf16 %v4038, %v4037
  %v4286 = vpack.c.bf16 %v4040, %v4039
  %v4287 = vpack.c.bf16 %v4042, %v4041
  %v4288 = vpack.c.bf16 %v4044, %v4043
  %v4289 = vpack.c.bf16 %v4046, %v4045
  %v4290 = vpack.c.bf16 %v4048, %v4047
  %v4291 = vpack.c.bf16 %v4050, %v4049
  %v4292 = vpack.c.bf16 %v4052, %v4051
  %v4293 = vpack.c.bf16 %v4054, %v4053
  %v4294 = vpack.c.bf16 %v4056, %v4055
  %v4295 = vpack.c.bf16 %v4058, %v4057
  %v4296 = vpack.c.bf16 %v4060, %v4059
  %v4297 = vpack.c.bf16 %v4062, %v4061
  %v4298 = vpack.c.bf16 %v4064, %v4063
  %v4299 = vpack.c.bf16 %v4066, %v4065
  %v4300 = vpack.c.bf16 %v4068, %v4067
  %v4301 = vpack.c.bf16 %v4070, %v4069
  %v4302 = vpack.c.bf16 %v4072, %v4071
  %v4303 = vpack.c.bf16 %v4074, %v4073
  %v4304 = vpack.c.bf16 %v4076, %v4075
  %v4305 = vpack.c.bf16 %v4078, %v4077
  %v4306 = vpack.c.bf16 %v4080, %v4079
  %v4307 = vpack.c.bf16 %v4082, %v4081
  %v4308 = vpack.c.bf16 %v4084, %v4083
  %v4309 = vpack.c.bf16 %v4086, %v4085
  %v4310 = vpack.c.bf16 %v4088, %v4087
  %v4311 = vpack.c.bf16 %v4090, %v4089
  %v4312 = vpack.c.bf16 %v4091, %v4091
  %v4534 = vunpack.c.l.b16 %v4092
  %v4535 = vunpack.c.h.b16 %v4092
  %v4536 = vunpack.c.l.b16 %v4093
  %v4537 = vunpack.c.h.b16 %v4093
  %v4538 = vunpack.c.l.b16 %v4094
  %v4539 = vunpack.c.h.b16 %v4094
  %v4540 = vunpack.c.l.b16 %v4095
  %v4541 = vunpack.c.h.b16 %v4095
  %v4542 = vunpack.c.l.b16 %v4096
  %v4543 = vunpack.c.h.b16 %v4096
  %v4544 = vunpack.c.l.b16 %v4097
  %v4545 = vunpack.c.h.b16 %v4097
  %v4546 = vunpack.c.l.b16 %v4098
  %v4547 = vunpack.c.h.b16 %v4098
  %v4548 = vunpack.c.l.b16 %v4099
  %v4549 = vunpack.c.h.b16 %v4099
  %v4550 = vunpack.c.l.b16 %v4100
  %v4551 = vunpack.c.h.b16 %v4100
  %v4552 = vunpack.c.l.b16 %v4101
  %v4553 = vunpack.c.h.b16 %v4101
  %v4554 = vunpack.c.l.b16 %v4102
  %v4555 = vunpack.c.h.b16 %v4102
  %v4556 = vunpack.c.l.b16 %v4103
  %v4557 = vunpack.c.h.b16 %v4103
  %v4558 = vunpack.c.l.b16 %v4104
  %v4559 = vunpack.c.h.b16 %v4104
  %v4560 = vunpack.c.l.b16 %v4105
  %v4561 = vunpack.c.h.b16 %v4105
  %v4562 = vunpack.c.l.b16 %v4106
  %v4563 = vunpack.c.h.b16 %v4106
  %v4564 = vunpack.c.l.b16 %v4107
  %v4565 = vunpack.c.h.b16 %v4107
  %v4566 = vunpack.c.l.b16 %v4108
  %v4567 = vunpack.c.h.b16 %v4108
  %v4568 = vunpack.c.l.b16 %v4109
  %v4569 = vunpack.c.h.b16 %v4109
  %v4570 = vunpack.c.l.b16 %v4110
  %v4571 = vunpack.c.h.b16 %v4110
  %v4572 = vunpack.c.l.b16 %v4111
  %v4573 = vunpack.c.h.b16 %v4111
  %v4574 = vunpack.c.l.b16 %v4112
  %v4575 = vunpack.c.h.b16 %v4112
  %v4576 = vunpack.c.l.b16 %v4113
  %v4577 = vunpack.c.h.b16 %v4113
  %v4578 = vunpack.c.l.b16 %v4114
  %v4579 = vunpack.c.h.b16 %v4114
  %v4580 = vunpack.c.l.b16 %v4115
  %v4581 = vunpack.c.h.b16 %v4115
  %v4582 = vunpack.c.l.b16 %v4116
  %v4583 = vunpack.c.h.b16 %v4116
  %v4584 = vunpack.c.l.b16 %v4117
  %v4585 = vunpack.c.h.b16 %v4117
  %v4586 = vunpack.c.l.b16 %v4118
  %v4587 = vunpack.c.h.b16 %v4118
  %v4588 = vunpack.c.l.b16 %v4119
  %v4589 = vunpack.c.h.b16 %v4119
  %v4590 = vunpack.c.l.b16 %v4120
  %v4591 = vunpack.c.h.b16 %v4120
  %v4592 = vunpack.c.l.b16 %v4121
  %v4593 = vunpack.c.h.b16 %v4121
  %v4594 = vunpack.c.l.b16 %v4122
  %v4595 = vunpack.c.h.b16 %v4122
  %v4596 = vunpack.c.l.b16 %v4123
  %v4597 = vunpack.c.h.b16 %v4123
  %v4598 = vunpack.c.l.b16 %v4124
  %v4599 = vunpack.c.h.b16 %v4124
  %v4600 = vunpack.c.l.b16 %v4125
  %v4601 = vunpack.c.h.b16 %v4125
  %v4602 = vunpack.c.l.b16 %v4126
  %v4603 = vunpack.c.h.b16 %v4126
  %v4604 = vunpack.c.l.b16 %v4127
  %v4605 = vunpack.c.h.b16 %v4127
  %v4606 = vunpack.c.l.b16 %v4128
  %v4607 = vunpack.c.h.b16 %v4128
  %v4608 = vunpack.c.l.b16 %v4129
  %v4609 = vunpack.c.h.b16 %v4129
  %v4610 = vunpack.c.l.b16 %v4130
  %v4611 = vunpack.c.h.b16 %v4130
  %v4612 = vunpack.c.l.b16 %v4131
  %v4613 = vunpack.c.h.b16 %v4131
  %v4614 = vunpack.c.l.b16 %v4132
  %v4615 = vunpack.c.h.b16 %v4132
  %v4616 = vunpack.c.l.b16 %v4133
  %v4617 = vunpack.c.h.b16 %v4133
  %v4618 = vunpack.c.l.b16 %v4134
  %v4619 = vunpack.c.h.b16 %v4134
  %v4620 = vunpack.c.l.b16 %v4135
  %v4621 = vunpack.c.h.b16 %v4135
  %v4622 = vunpack.c.l.b16 %v4136
  %v4623 = vunpack.c.h.b16 %v4136
  %v4624 = vunpack.c.l.b16 %v4137
  %v4625 = vunpack.c.h.b16 %v4137
  %v4626 = vunpack.c.l.b16 %v4138
  %v4627 = vunpack.c.h.b16 %v4138
  %v4628 = vunpack.c.l.b16 %v4139
  %v4629 = vunpack.c.h.b16 %v4139
  %v4630 = vunpack.c.l.b16 %v4140
  %v4631 = vunpack.c.h.b16 %v4140
  %v4632 = vunpack.c.l.b16 %v4141
  %v4633 = vunpack.c.h.b16 %v4141
  %v4634 = vunpack.c.l.b16 %v4142
  %v4635 = vunpack.c.h.b16 %v4142
  %v4636 = vunpack.c.l.b16 %v4143
  %v4637 = vunpack.c.h.b16 %v4143
  %v4638 = vunpack.c.l.b16 %v4144
  %v4639 = vunpack.c.h.b16 %v4144
  %v4640 = vunpack.c.l.b16 %v4145
  %v4641 = vunpack.c.h.b16 %v4145
  %v4642 = vunpack.c.l.b16 %v4146
  %v4643 = vunpack.c.h.b16 %v4146
  %v4644 = vunpack.c.l.b16 %v4147
  %v4645 = vunpack.c.h.b16 %v4147
  %v4646 = vunpack.c.l.b16 %v4148
  %v4647 = vunpack.c.h.b16 %v4148
  %v4648 = vunpack.c.l.b16 %v4149
  %v4649 = vunpack.c.h.b16 %v4149
  %v4650 = vunpack.c.l.b16 %v4150
  %v4651 = vunpack.c.h.b16 %v4150
  %v4652 = vunpack.c.l.b16 %v4151
  %v4653 = vunpack.c.h.b16 %v4151
  %v4654 = vunpack.c.l.b16 %v4152
  %v4655 = vunpack.c.h.b16 %v4152
  %v4656 = vunpack.c.l.b16 %v4153
  %v4657 = vunpack.c.h.b16 %v4153
  %v4658 = vunpack.c.l.b16 %v4154
  %v4659 = vunpack.c.h.b16 %v4154
  %v4660 = vunpack.c.l.b16 %v4155
  %v4661 = vunpack.c.h.b16 %v4155
  %v4662 = vunpack.c.l.b16 %v4156
  %v4663 = vunpack.c.h.b16 %v4156
  %v4664 = vunpack.c.l.b16 %v4157
  %v4665 = vunpack.c.h.b16 %v4157
  %v4666 = vunpack.c.l.b16 %v4158
  %v4667 = vunpack.c.h.b16 %v4158
  %v4668 = vunpack.c.l.b16 %v4159
  %v4669 = vunpack.c.h.b16 %v4159
  %v4670 = vunpack.c.l.b16 %v4160
  %v4671 = vunpack.c.h.b16 %v4160
  %v4672 = vunpack.c.l.b16 %v4161
  %v4673 = vunpack.c.h.b16 %v4161
  %v4674 = vunpack.c.l.b16 %v4162
  %v4675 = vunpack.c.h.b16 %v4162
  %v4676 = vunpack.c.l.b16 %v4163
  %v4677 = vunpack.c.h.b16 %v4163
  %v4678 = vunpack.c.l.b16 %v4164
  %v4679 = vunpack.c.h.b16 %v4164
  %v4680 = vunpack.c.l.b16 %v4165
  %v4681 = vunpack.c.h.b16 %v4165
  %v4682 = vunpack.c.l.b16 %v4166
  %v4683 = vunpack.c.h.b16 %v4166
  %v4684 = vunpack.c.l.b16 %v4167
  %v4685 = vunpack.c.h.b16 %v4167
  %v4686 = vunpack.c.l.b16 %v4168
  %v4687 = vunpack.c.h.b16 %v4168
  %v4688 = vunpack.c.l.b16 %v4169
  %v4689 = vunpack.c.h.b16 %v4169
  %v4690 = vunpack.c.l.b16 %v4170
  %v4691 = vunpack.c.h.b16 %v4170
  %v4692 = vunpack.c.l.b16 %v4171
  %v4693 = vunpack.c.h.b16 %v4171
  %v4694 = vunpack.c.l.b16 %v4172
  %v4695 = vunpack.c.h.b16 %v4172
  %v4696 = vunpack.c.l.b16 %v4173
  %v4697 = vunpack.c.h.b16 %v4173
  %v4698 = vunpack.c.l.b16 %v4174
  %v4699 = vunpack.c.h.b16 %v4174
  %v4700 = vunpack.c.l.b16 %v4175
  %v4701 = vunpack.c.h.b16 %v4175
  %v4702 = vunpack.c.l.b16 %v4176
  %v4703 = vunpack.c.h.b16 %v4176
  %v4704 = vunpack.c.l.b16 %v4177
  %v4705 = vunpack.c.h.b16 %v4177
  %v4706 = vunpack.c.l.b16 %v4178
  %v4707 = vunpack.c.h.b16 %v4178
  %v4708 = vunpack.c.l.b16 %v4179
  %v4709 = vunpack.c.h.b16 %v4179
  %v4710 = vunpack.c.l.b16 %v4180
  %v4711 = vunpack.c.h.b16 %v4180
  %v4712 = vunpack.c.l.b16 %v4181
  %v4713 = vunpack.c.h.b16 %v4181
  %v4714 = vunpack.c.l.b16 %v4182
  %v4715 = vunpack.c.h.b16 %v4182
  %v4716 = vunpack.c.l.b16 %v4183
  %v4717 = vunpack.c.h.b16 %v4183
  %v4718 = vunpack.c.l.b16 %v4184
  %v4719 = vunpack.c.h.b16 %v4184
  %v4720 = vunpack.c.l.b16 %v4185
  %v4721 = vunpack.c.h.b16 %v4185
  %v4722 = vunpack.c.l.b16 %v4186
  %v4723 = vunpack.c.h.b16 %v4186
  %v4724 = vunpack.c.l.b16 %v4187
  %v4725 = vunpack.c.h.b16 %v4187
  %v4726 = vunpack.c.l.b16 %v4188
  %v4727 = vunpack.c.h.b16 %v4188
  %v4728 = vunpack.c.l.b16 %v4189
  %v4729 = vunpack.c.h.b16 %v4189
  %v4730 = vunpack.c.l.b16 %v4190
  %v4731 = vunpack.c.h.b16 %v4190
  %v4732 = vunpack.c.l.b16 %v4191
  %v4733 = vunpack.c.h.b16 %v4191
  %v4734 = vunpack.c.l.b16 %v4192
  %v4735 = vunpack.c.h.b16 %v4192
  %v4736 = vunpack.c.l.b16 %v4193
  %v4737 = vunpack.c.h.b16 %v4193
  %v4738 = vunpack.c.l.b16 %v4194
  %v4739 = vunpack.c.h.b16 %v4194
  %v4740 = vunpack.c.l.b16 %v4195
  %v4741 = vunpack.c.h.b16 %v4195
  %v4742 = vunpack.c.l.b16 %v4196
  %v4743 = vunpack.c.h.b16 %v4196
  %v4744 = vunpack.c.l.b16 %v4197
  %v4745 = vunpack.c.h.b16 %v4197
  %v4746 = vunpack.c.l.b16 %v4198
  %v4747 = vunpack.c.h.b16 %v4198
  %v4748 = vunpack.c.l.b16 %v4199
  %v4749 = vunpack.c.h.b16 %v4199
  %v4750 = vunpack.c.l.b16 %v4200
  %v4751 = vunpack.c.h.b16 %v4200
  %v4752 = vunpack.c.l.b16 %v4201
  %v4753 = vunpack.c.h.b16 %v4201
  %v4754 = vunpack.c.l.b16 %v4202
  %v4755 = vunpack.c.h.b16 %v4202
  %v4756 = vunpack.c.l.b16 %v4203
  %v4757 = vunpack.c.h.b16 %v4203
  %v4758 = vunpack.c.l.b16 %v4204
  %v4759 = vunpack.c.h.b16 %v4204
  %v4760 = vunpack.c.l.b16 %v4205
  %v4761 = vunpack.c.h.b16 %v4205
  %v4762 = vunpack.c.l.b16 %v4206
  %v4763 = vunpack.c.h.b16 %v4206
  %v4764 = vunpack.c.l.b16 %v4207
  %v4765 = vunpack.c.h.b16 %v4207
  %v4766 = vunpack.c.l.b16 %v4208
  %v4767 = vunpack.c.h.b16 %v4208
  %v4768 = vunpack.c.l.b16 %v4209
  %v4769 = vunpack.c.h.b16 %v4209
  %v4770 = vunpack.c.l.b16 %v4210
  %v4771 = vunpack.c.h.b16 %v4210
  %v4772 = vunpack.c.l.b16 %v4211
  %v4773 = vunpack.c.h.b16 %v4211
  %v4774 = vunpack.c.l.b16 %v4212
  %v4775 = vunpack.c.h.b16 %v4212
  %v4776 = vunpack.c.l.b16 %v4213
  %v4777 = vunpack.c.h.b16 %v4213
  %v4778 = vunpack.c.l.b16 %v4214
  %v4779 = vunpack.c.h.b16 %v4214
  %v4780 = vunpack.c.l.b16 %v4215
  %v4781 = vunpack.c.h.b16 %v4215
  %v4782 = vunpack.c.l.b16 %v4216
  %v4783 = vunpack.c.h.b16 %v4216
  %v4784 = vunpack.c.l.b16 %v4217
  %v4785 = vunpack.c.h.b16 %v4217
  %v4786 = vunpack.c.l.b16 %v4218
  %v4787 = vunpack.c.h.b16 %v4218
  %v4788 = vunpack.c.l.b16 %v4219
  %v4789 = vunpack.c.h.b16 %v4219
  %v4790 = vunpack.c.l.b16 %v4220
  %v4791 = vunpack.c.h.b16 %v4220
  %v4792 = vunpack.c.l.b16 %v4221
  %v4793 = vunpack.c.h.b16 %v4221
  %v4794 = vunpack.c.l.b16 %v4222
  %v4795 = vunpack.c.h.b16 %v4222
  %v4796 = vunpack.c.l.b16 %v4223
  %v4797 = vunpack.c.h.b16 %v4223
  %v4798 = vunpack.c.l.b16 %v4224
  %v4799 = vunpack.c.h.b16 %v4224
  %v4800 = vunpack.c.l.b16 %v4225
  %v4801 = vunpack.c.h.b16 %v4225
  %v4802 = vunpack.c.l.b16 %v4226
  %v4803 = vunpack.c.h.b16 %v4226
  %v4804 = vunpack.c.l.b16 %v4227
  %v4805 = vunpack.c.h.b16 %v4227
  %v4806 = vunpack.c.l.b16 %v4228
  %v4807 = vunpack.c.h.b16 %v4228
  %v4808 = vunpack.c.l.b16 %v4229
  %v4809 = vunpack.c.h.b16 %v4229
  %v4810 = vunpack.c.l.b16 %v4230
  %v4811 = vunpack.c.h.b16 %v4230
  %v4812 = vunpack.c.l.b16 %v4231
  %v4813 = vunpack.c.h.b16 %v4231
  %v4814 = vunpack.c.l.b16 %v4232
  %v4815 = vunpack.c.h.b16 %v4232
  %v4816 = vunpack.c.l.b16 %v4233
  %v4817 = vunpack.c.h.b16 %v4233
  %v4818 = vunpack.c.l.b16 %v4234
  %v4819 = vunpack.c.h.b16 %v4234
  %v4820 = vunpack.c.l.b16 %v4235
  %v4821 = vunpack.c.h.b16 %v4235
  %v4822 = vunpack.c.l.b16 %v4236
  %v4823 = vunpack.c.h.b16 %v4236
  %v4824 = vunpack.c.l.b16 %v4237
  %v4825 = vunpack.c.h.b16 %v4237
  %v4826 = vunpack.c.l.b16 %v4238
  %v4827 = vunpack.c.h.b16 %v4238
  %v4828 = vunpack.c.l.b16 %v4239
  %v4829 = vunpack.c.h.b16 %v4239
  %v4830 = vunpack.c.l.b16 %v4240
  %v4831 = vunpack.c.h.b16 %v4240
  %v4832 = vunpack.c.l.b16 %v4241
  %v4833 = vunpack.c.h.b16 %v4241
  %v4834 = vunpack.c.l.b16 %v4242
  %v4835 = vunpack.c.h.b16 %v4242
  %v4836 = vunpack.c.l.b16 %v4243
  %v4837 = vunpack.c.h.b16 %v4243
  %v4838 = vunpack.c.l.b16 %v4244
  %v4839 = vunpack.c.h.b16 %v4244
  %v4840 = vunpack.c.l.b16 %v4245
  %v4841 = vunpack.c.h.b16 %v4245
  %v4842 = vunpack.c.l.b16 %v4246
  %v4843 = vunpack.c.h.b16 %v4246
  %v4844 = vunpack.c.l.b16 %v4247
  %v4845 = vunpack.c.h.b16 %v4247
  %v4846 = vunpack.c.l.b16 %v4248
  %v4847 = vunpack.c.h.b16 %v4248
  %v4848 = vunpack.c.l.b16 %v4249
  %v4849 = vunpack.c.h.b16 %v4249
  %v4850 = vunpack.c.l.b16 %v4250
  %v4851 = vunpack.c.h.b16 %v4250
  %v4852 = vunpack.c.l.b16 %v4251
  %v4853 = vunpack.c.h.b16 %v4251
  %v4854 = vunpack.c.l.b16 %v4252
  %v4855 = vunpack.c.h.b16 %v4252
  %v4856 = vunpack.c.l.b16 %v4253
  %v4857 = vunpack.c.h.b16 %v4253
  %v4858 = vunpack.c.l.b16 %v4254
  %v4859 = vunpack.c.h.b16 %v4254
  %v4860 = vunpack.c.l.b16 %v4255
  %v4861 = vunpack.c.h.b16 %v4255
  %v4862 = vunpack.c.l.b16 %v4256
  %v4863 = vunpack.c.h.b16 %v4256
  %v4864 = vunpack.c.l.b16 %v4257
  %v4865 = vunpack.c.h.b16 %v4257
  %v4866 = vunpack.c.l.b16 %v4258
  %v4867 = vunpack.c.h.b16 %v4258
  %v4868 = vunpack.c.l.b16 %v4259
  %v4869 = vunpack.c.h.b16 %v4259
  %v4870 = vunpack.c.l.b16 %v4260
  %v4871 = vunpack.c.h.b16 %v4260
  %v4872 = vunpack.c.l.b16 %v4261
  %v4873 = vunpack.c.h.b16 %v4261
  %v4874 = vunpack.c.l.b16 %v4262
  %v4875 = vunpack.c.h.b16 %v4262
  %v4876 = vunpack.c.l.b16 %v4263
  %v4877 = vunpack.c.h.b16 %v4263
  %v4878 = vunpack.c.l.b16 %v4264
  %v4879 = vunpack.c.h.b16 %v4264
  %v4880 = vunpack.c.l.b16 %v4265
  %v4881 = vunpack.c.h.b16 %v4265
  %v4882 = vunpack.c.l.b16 %v4266
  %v4883 = vunpack.c.h.b16 %v4266
  %v4884 = vunpack.c.l.b16 %v4267
  %v4885 = vunpack.c.h.b16 %v4267
  %v4886 = vunpack.c.l.b16 %v4268
  %v4887 = vunpack.c.h.b16 %v4268
  %v4888 = vunpack.c.l.b16 %v4269
  %v4889 = vunpack.c.h.b16 %v4269
  %v4890 = vunpack.c.l.b16 %v4270
  %v4891 = vunpack.c.h.b16 %v4270
  %v4892 = vunpack.c.l.b16 %v4271
  %v4893 = vunpack.c.h.b16 %v4271
  %v4894 = vunpack.c.l.b16 %v4272
  %v4895 = vunpack.c.h.b16 %v4272
  %v4896 = vunpack.c.l.b16 %v4273
  %v4897 = vunpack.c.h.b16 %v4273
  %v4898 = vunpack.c.l.b16 %v4274
  %v4899 = vunpack.c.h.b16 %v4274
  %v4900 = vunpack.c.l.b16 %v4275
  %v4901 = vunpack.c.h.b16 %v4275
  %v4902 = vunpack.c.l.b16 %v4276
  %v4903 = vunpack.c.h.b16 %v4276
  %v4904 = vunpack.c.l.b16 %v4277
  %v4905 = vunpack.c.h.b16 %v4277
  %v4906 = vunpack.c.l.b16 %v4278
  %v4907 = vunpack.c.h.b16 %v4278
  %v4908 = vunpack.c.l.b16 %v4279
  %v4909 = vunpack.c.h.b16 %v4279
  %v4910 = vunpack.c.l.b16 %v4280
  %v4911 = vunpack.c.h.b16 %v4280
  %v4912 = vunpack.c.l.b16 %v4281
  %v4913 = vunpack.c.h.b16 %v4281
  %v4914 = vunpack.c.l.b16 %v4282
  %v4915 = vunpack.c.h.b16 %v4282
  %v4916 = vunpack.c.l.b16 %v4283
  %v4917 = vunpack.c.h.b16 %v4283
  %v4918 = vunpack.c.l.b16 %v4284
  %v4919 = vunpack.c.h.b16 %v4284
  %v4920 = vunpack.c.l.b16 %v4285
  %v4921 = vunpack.c.h.b16 %v4285
  %v4922 = vunpack.c.l.b16 %v4286
  %v4923 = vunpack.c.h.b16 %v4286
  %v4924 = vunpack.c.l.b16 %v4287
  %v4925 = vunpack.c.h.b16 %v4287
  %v4926 = vunpack.c.l.b16 %v4288
  %v4927 = vunpack.c.h.b16 %v4288
  %v4928 = vunpack.c.l.b16 %v4289
  %v4929 = vunpack.c.h.b16 %v4289
  %v4930 = vunpack.c.l.b16 %v4290
  %v4931 = vunpack.c.h.b16 %v4290
  %v4932 = vunpack.c.l.b16 %v4291
  %v4933 = vunpack.c.h.b16 %v4291
  %v4934 = vunpack.c.l.b16 %v4292
  %v4935 = vunpack.c.h.b16 %v4292
  %v4936 = vunpack.c.l.b16 %v4293
  %v4937 = vunpack.c.h.b16 %v4293
  %v4938 = vunpack.c.l.b16 %v4294
  %v4939 = vunpack.c.h.b16 %v4294
  %v4940 = vunpack.c.l.b16 %v4295
  %v4941 = vunpack.c.h.b16 %v4295
  %v4942 = vunpack.c.l.b16 %v4296
  %v4943 = vunpack.c.h.b16 %v4296
  %v4944 = vunpack.c.l.b16 %v4297
  %v4945 = vunpack.c.h.b16 %v4297
  %v4946 = vunpack.c.l.b16 %v4298
  %v4947 = vunpack.c.h.b16 %v4298
  %v4948 = vunpack.c.l.b16 %v4299
  %v4949 = vunpack.c.h.b16 %v4299
  %v4950 = vunpack.c.l.b16 %v4300
  %v4951 = vunpack.c.h.b16 %v4300
  %v4952 = vunpack.c.l.b16 %v4301
  %v4953 = vunpack.c.h.b16 %v4301
  %v4954 = vunpack.c.l.b16 %v4302
  %v4955 = vunpack.c.h.b16 %v4302
  %v4956 = vunpack.c.l.b16 %v4303
  %v4957 = vunpack.c.h.b16 %v4303
  %v4958 = vunpack.c.l.b16 %v4304
  %v4959 = vunpack.c.h.b16 %v4304
  %v4960 = vunpack.c.l.b16 %v4305
  %v4961 = vunpack.c.h.b16 %v4305
  %v4962 = vunpack.c.l.b16 %v4306
  %v4963 = vunpack.c.h.b16 %v4306
  %v4964 = vunpack.c.l.b16 %v4307
  %v4965 = vunpack.c.h.b16 %v4307
  %v4966 = vunpack.c.l.b16 %v4308
  %v4967 = vunpack.c.h.b16 %v4308
  %v4968 = vunpack.c.l.b16 %v4309
  %v4969 = vunpack.c.h.b16 %v4309
  %v4970 = vunpack.c.l.b16 %v4310
  %v4971 = vunpack.c.h.b16 %v4310
  %v4972 = vunpack.c.l.b16 %v4311
  %v4973 = vunpack.c.h.b16 %v4311
  %v4974 = vunpack.c.l.b16 %v4312
  %v4975 = vpack.c.b16 %v4534, %v4534
  %v4976 = vpack.c.b16 %v4535, %v4535
  %v4977 = vpack.c.b16 %v4536, %v4536
  %v4978 = vpack.c.b16 %v4537, %v4537
  %v4979 = vpack.c.b16 %v4538, %v4538
  %v4980 = vpack.c.b16 %v4539, %v4539
  %v4981 = vpack.c.b16 %v4540, %v4540
  %v4982 = vpack.c.b16 %v4541, %v4541
  %v4983 = vpack.c.b16 %v4542, %v4542
  %v4984 = vpack.c.b16 %v4543, %v4543
  %v4985 = vpack.c.b16 %v4544, %v4544
  %v4986 = vpack.c.b16 %v4545, %v4545
  %v4987 = vpack.c.b16 %v4546, %v4546
  %v4988 = vpack.c.b16 %v4547, %v4547
  %v4989 = vpack.c.b16 %v4548, %v4548
  %v4990 = vpack.c.b16 %v4549, %v4549
  %v4991 = vpack.c.b16 %v4550, %v4550
  %v4992 = vpack.c.b16 %v4551, %v4551
  %v4993 = vpack.c.b16 %v4552, %v4552
  %v4994 = vpack.c.b16 %v4553, %v4553
  %v4995 = vpack.c.b16 %v4554, %v4554
  %v4996 = vpack.c.b16 %v4555, %v4555
  %v4997 = vpack.c.b16 %v4556, %v4556
  %v4998 = vpack.c.b16 %v4557, %v4557
  %v4999 = vpack.c.b16 %v4558, %v4558
  %v5000 = vpack.c.b16 %v4559, %v4559
  %v5001 = vpack.c.b16 %v4560, %v4560
  %v5002 = vpack.c.b16 %v4561, %v4561
  %v5003 = vpack.c.b16 %v4562, %v4562
  %v5004 = vpack.c.b16 %v4563, %v4563
  %v5005 = vpack.c.b16 %v4564, %v4564
  %v5006 = vpack.c.b16 %v4565, %v4565
  %v5007 = vpack.c.b16 %v4566, %v4566
  %v5008 = vpack.c.b16 %v4567, %v4567
  %v5009 = vpack.c.b16 %v4568, %v4568
  %v5010 = vpack.c.b16 %v4569, %v4569
  %v5011 = vpack.c.b16 %v4570, %v4570
  %v5012 = vpack.c.b16 %v4571, %v4571
  %v5013 = vpack.c.b16 %v4572, %v4572
  %v5014 = vpack.c.b16 %v4573, %v4573
  %v5015 = vpack.c.b16 %v4574, %v4574
  %v5016 = vpack.c.b16 %v4575, %v4575
  %v5017 = vpack.c.b16 %v4576, %v4576
  %v5018 = vpack.c.b16 %v4577, %v4577
  %v5019 = vpack.c.b16 %v4578, %v4578
  %v5020 = vpack.c.b16 %v4579, %v4579
  %v5021 = vpack.c.b16 %v4580, %v4580
  %v5022 = vpack.c.b16 %v4581, %v4581
  %v5023 = vpack.c.b16 %v4582, %v4582
  %v5024 = vpack.c.b16 %v4583, %v4583
  %v5025 = vpack.c.b16 %v4584, %v4584
  %v5026 = vpack.c.b16 %v4585, %v4585
  %v5027 = vpack.c.b16 %v4586, %v4586
  %v5028 = vpack.c.b16 %v4587, %v4587
  %v5029 = vpack.c.b16 %v4588, %v4588
  %v5030 = vpack.c.b16 %v4589, %v4589
  %v5031 = vpack.c.b16 %v4590, %v4590
  %v5032 = vpack.c.b16 %v4591, %v4591
  %v5033 = vpack.c.b16 %v4592, %v4592
  %v5034 = vpack.c.b16 %v4593, %v4593
  %v5035 = vpack.c.b16 %v4594, %v4594
  %v5036 = vpack.c.b16 %v4595, %v4595
  %v5037 = vpack.c.b16 %v4596, %v4596
  %v5038 = vpack.c.b16 %v4597, %v4597
  %v5039 = vpack.c.b16 %v4598, %v4598
  %v5040 = vpack.c.b16 %v4599, %v4599
  %v5041 = vpack.c.b16 %v4600, %v4600
  %v5042 = vpack.c.b16 %v4601, %v4601
  %v5043 = vpack.c.b16 %v4602, %v4602
  %v5044 = vpack.c.b16 %v4603, %v4603
  %v5045 = vpack.c.b16 %v4604, %v4604
  %v5046 = vpack.c.b16 %v4605, %v4605
  %v5047 = vpack.c.b16 %v4606, %v4606
  %v5048 = vpack.c.b16 %v4607, %v4607
  %v5049 = vpack.c.b16 %v4608, %v4608
  %v5050 = vpack.c.b16 %v4609, %v4609
  %v5051 = vpack.c.b16 %v4610, %v4610
  %v5052 = vpack.c.b16 %v4611, %v4611
  %v5053 = vpack.c.b16 %v4612, %v4612
  %v5054 = vpack.c.b16 %v4613, %v4613
  %v5055 = vpack.c.b16 %v4614, %v4614
  %v5056 = vpack.c.b16 %v4615, %v4615
  %v5057 = vpack.c.b16 %v4616, %v4616
  %v5058 = vpack.c.b16 %v4617, %v4617
  %v5059 = vpack.c.b16 %v4618, %v4618
  %v5060 = vpack.c.b16 %v4619, %v4619
  %v5061 = vpack.c.b16 %v4620, %v4620
  %v5062 = vpack.c.b16 %v4621, %v4621
  %v5063 = vpack.c.b16 %v4622, %v4622
  %v5064 = vpack.c.b16 %v4623, %v4623
  %v5065 = vpack.c.b16 %v4624, %v4624
  %v5066 = vpack.c.b16 %v4625, %v4625
  %v5067 = vpack.c.b16 %v4626, %v4626
  %v5068 = vpack.c.b16 %v4627, %v4627
  %v5069 = vpack.c.b16 %v4628, %v4628
  %v5070 = vpack.c.b16 %v4629, %v4629
  %v5071 = vpack.c.b16 %v4630, %v4630
  %v5072 = vpack.c.b16 %v4631, %v4631
  %v5073 = vpack.c.b16 %v4632, %v4632
  %v5074 = vpack.c.b16 %v4633, %v4633
  %v5075 = vpack.c.b16 %v4634, %v4634
  %v5076 = vpack.c.b16 %v4635, %v4635
  %v5077 = vpack.c.b16 %v4636, %v4636
  %v5078 = vpack.c.b16 %v4637, %v4637
  %v5079 = vpack.c.b16 %v4638, %v4638
  %v5080 = vpack.c.b16 %v4639, %v4639
  %v5081 = vpack.c.b16 %v4640, %v4640
  %v5082 = vpack.c.b16 %v4641, %v4641
  %v5083 = vpack.c.b16 %v4642, %v4642
  %v5084 = vpack.c.b16 %v4643, %v4643
  %v5085 = vpack.c.b16 %v4644, %v4644
  %v5086 = vpack.c.b16 %v4645, %v4645
  %v5087 = vpack.c.b16 %v4646, %v4646
  %v5088 = vpack.c.b16 %v4647, %v4647
  %v5089 = vpack.c.b16 %v4648, %v4648
  %v5090 = vpack.c.b16 %v4649, %v4649
  %v5091 = vpack.c.b16 %v4650, %v4650
  %v5092 = vpack.c.b16 %v4651, %v4651
  %v5093 = vpack.c.b16 %v4652, %v4652
  %v5094 = vpack.c.b16 %v4653, %v4653
  %v5095 = vpack.c.b16 %v4654, %v4654
  %v5096 = vpack.c.b16 %v4655, %v4655
  %v5097 = vpack.c.b16 %v4656, %v4656
  %v5098 = vpack.c.b16 %v4657, %v4657
  %v5099 = vpack.c.b16 %v4658, %v4658
  %v5100 = vpack.c.b16 %v4659, %v4659
  %v5101 = vpack.c.b16 %v4660, %v4660
  %v5102 = vpack.c.b16 %v4661, %v4661
  %v5103 = vpack.c.b16 %v4662, %v4662
  %v5104 = vpack.c.b16 %v4663, %v4663
  %v5105 = vpack.c.b16 %v4664, %v4664
  %v5106 = vpack.c.b16 %v4665, %v4665
  %v5107 = vpack.c.b16 %v4666, %v4666
  %v5108 = vpack.c.b16 %v4667, %v4667
  %v5109 = vpack.c.b16 %v4668, %v4668
  %v5110 = vpack.c.b16 %v4669, %v4669
  %v5111 = vpack.c.b16 %v4670, %v4670
  %v5112 = vpack.c.b16 %v4671, %v4671
  %v5113 = vpack.c.b16 %v4672, %v4672
  %v5114 = vpack.c.b16 %v4673, %v4673
  %v5115 = vpack.c.b16 %v4674, %v4674
  %v5116 = vpack.c.b16 %v4675, %v4675
  %v5117 = vpack.c.b16 %v4676, %v4676
  %v5118 = vpack.c.b16 %v4677, %v4677
  %v5119 = vpack.c.b16 %v4678, %v4678
  %v5120 = vpack.c.b16 %v4679, %v4679
  %v5121 = vpack.c.b16 %v4680, %v4680
  %v5122 = vpack.c.b16 %v4681, %v4681
  %v5123 = vpack.c.b16 %v4682, %v4682
  %v5124 = vpack.c.b16 %v4683, %v4683
  %v5125 = vpack.c.b16 %v4684, %v4684
  %v5126 = vpack.c.b16 %v4685, %v4685
  %v5127 = vpack.c.b16 %v4686, %v4686
  %v5128 = vpack.c.b16 %v4687, %v4687
  %v5129 = vpack.c.b16 %v4688, %v4688
  %v5130 = vpack.c.b16 %v4689, %v4689
  %v5131 = vpack.c.b16 %v4690, %v4690
  %v5132 = vpack.c.b16 %v4691, %v4691
  %v5133 = vpack.c.b16 %v4692, %v4692
  %v5134 = vpack.c.b16 %v4693, %v4693
  %v5135 = vpack.c.b16 %v4694, %v4694
  %v5136 = vpack.c.b16 %v4695, %v4695
  %v5137 = vpack.c.b16 %v4696, %v4696
  %v5138 = vpack.c.b16 %v4697, %v4697
  %v5139 = vpack.c.b16 %v4698, %v4698
  %v5140 = vpack.c.b16 %v4699, %v4699
  %v5141 = vpack.c.b16 %v4700, %v4700
  %v5142 = vpack.c.b16 %v4701, %v4701
  %v5143 = vpack.c.b16 %v4702, %v4702
  %v5144 = vpack.c.b16 %v4703, %v4703
  %v5145 = vpack.c.b16 %v4704, %v4704
  %v5146 = vpack.c.b16 %v4705, %v4705
  %v5147 = vpack.c.b16 %v4706, %v4706
  %v5148 = vpack.c.b16 %v4707, %v4707
  %v5149 = vpack.c.b16 %v4708, %v4708
  %v5150 = vpack.c.b16 %v4709, %v4709
  %v5151 = vpack.c.b16 %v4710, %v4710
  %v5152 = vpack.c.b16 %v4711, %v4711
  %v5153 = vpack.c.b16 %v4712, %v4712
  %v5154 = vpack.c.b16 %v4713, %v4713
  %v5155 = vpack.c.b16 %v4714, %v4714
  %v5156 = vpack.c.b16 %v4715, %v4715
  %v5157 = vpack.c.b16 %v4716, %v4716
  %v5158 = vpack.c.b16 %v4717, %v4717
  %v5159 = vpack.c.b16 %v4718, %v4718
  %v5160 = vpack.c.b16 %v4719, %v4719
  %v5161 = vpack.c.b16 %v4720, %v4720
  %v5162 = vpack.c.b16 %v4721, %v4721
  %v5163 = vpack.c.b16 %v4722, %v4722
  %v5164 = vpack.c.b16 %v4723, %v4723
  %v5165 = vpack.c.b16 %v4724, %v4724
  %v5166 = vpack.c.b16 %v4725, %v4725
  %v5167 = vpack.c.b16 %v4726, %v4726
  %v5168 = vpack.c.b16 %v4727, %v4727
  %v5169 = vpack.c.b16 %v4728, %v4728
  %v5170 = vpack.c.b16 %v4729, %v4729
  %v5171 = vpack.c.b16 %v4730, %v4730
  %v5172 = vpack.c.b16 %v4731, %v4731
  %v5173 = vpack.c.b16 %v4732, %v4732
  %v5174 = vpack.c.b16 %v4733, %v4733
  %v5175 = vpack.c.b16 %v4734, %v4734
  %v5176 = vpack.c.b16 %v4735, %v4735
  %v5177 = vpack.c.b16 %v4736, %v4736
  %v5178 = vpack.c.b16 %v4737, %v4737
  %v5179 = vpack.c.b16 %v4738, %v4738
  %v5180 = vpack.c.b16 %v4739, %v4739
  %v5181 = vpack.c.b16 %v4740, %v4740
  %v5182 = vpack.c.b16 %v4741, %v4741
  %v5183 = vpack.c.b16 %v4742, %v4742
  %v5184 = vpack.c.b16 %v4743, %v4743
  %v5185 = vpack.c.b16 %v4744, %v4744
  %v5186 = vpack.c.b16 %v4745, %v4745
  %v5187 = vpack.c.b16 %v4746, %v4746
  %v5188 = vpack.c.b16 %v4747, %v4747
  %v5189 = vpack.c.b16 %v4748, %v4748
  %v5190 = vpack.c.b16 %v4749, %v4749
  %v5191 = vpack.c.b16 %v4750, %v4750
  %v5192 = vpack.c.b16 %v4751, %v4751
  %v5193 = vpack.c.b16 %v4752, %v4752
  %v5194 = vpack.c.b16 %v4753, %v4753
  %v5195 = vpack.c.b16 %v4754, %v4754
  %v5196 = vpack.c.b16 %v4755, %v4755
  %v5197 = vpack.c.b16 %v4756, %v4756
  %v5198 = vpack.c.b16 %v4757, %v4757
  %v5199 = vpack.c.b16 %v4758, %v4758
  %v5200 = vpack.c.b16 %v4759, %v4759
  %v5201 = vpack.c.b16 %v4760, %v4760
  %v5202 = vpack.c.b16 %v4761, %v4761
  %v5203 = vpack.c.b16 %v4762, %v4762
  %v5204 = vpack.c.b16 %v4763, %v4763
  %v5205 = vpack.c.b16 %v4764, %v4764
  %v5206 = vpack.c.b16 %v4765, %v4765
  %v5207 = vpack.c.b16 %v4766, %v4766
  %v5208 = vpack.c.b16 %v4767, %v4767
  %v5209 = vpack.c.b16 %v4768, %v4768
  %v5210 = vpack.c.b16 %v4769, %v4769
  %v5211 = vpack.c.b16 %v4770, %v4770
  %v5212 = vpack.c.b16 %v4771, %v4771
  %v5213 = vpack.c.b16 %v4772, %v4772
  %v5214 = vpack.c.b16 %v4773, %v4773
  %v5215 = vpack.c.b16 %v4774, %v4774
  %v5216 = vpack.c.b16 %v4775, %v4775
  %v5217 = vpack.c.b16 %v4776, %v4776
  %v5218 = vpack.c.b16 %v4777, %v4777
  %v5219 = vpack.c.b16 %v4778, %v4778
  %v5220 = vpack.c.b16 %v4779, %v4779
  %v5221 = vpack.c.b16 %v4780, %v4780
  %v5222 = vpack.c.b16 %v4781, %v4781
  %v5223 = vpack.c.b16 %v4782, %v4782
  %v5224 = vpack.c.b16 %v4783, %v4783
  %v5225 = vpack.c.b16 %v4784, %v4784
  %v5226 = vpack.c.b16 %v4785, %v4785
  %v5227 = vpack.c.b16 %v4786, %v4786
  %v5228 = vpack.c.b16 %v4787, %v4787
  %v5229 = vpack.c.b16 %v4788, %v4788
  %v5230 = vpack.c.b16 %v4789, %v4789
  %v5231 = vpack.c.b16 %v4790, %v4790
  %v5232 = vpack.c.b16 %v4791, %v4791
  %v5233 = vpack.c.b16 %v4792, %v4792
  %v5234 = vpack.c.b16 %v4793, %v4793
  %v5235 = vpack.c.b16 %v4794, %v4794
  %v5236 = vpack.c.b16 %v4795, %v4795
  %v5237 = vpack.c.b16 %v4796, %v4796
  %v5238 = vpack.c.b16 %v4797, %v4797
  %v5239 = vpack.c.b16 %v4798, %v4798
  %v5240 = vpack.c.b16 %v4799, %v4799
  %v5241 = vpack.c.b16 %v4800, %v4800
  %v5242 = vpack.c.b16 %v4801, %v4801
  %v5243 = vpack.c.b16 %v4802, %v4802
  %v5244 = vpack.c.b16 %v4803, %v4803
  %v5245 = vpack.c.b16 %v4804, %v4804
  %v5246 = vpack.c.b16 %v4805, %v4805
  %v5247 = vpack.c.b16 %v4806, %v4806
  %v5248 = vpack.c.b16 %v4807, %v4807
  %v5249 = vpack.c.b16 %v4808, %v4808
  %v5250 = vpack.c.b16 %v4809, %v4809
  %v5251 = vpack.c.b16 %v4810, %v4810
  %v5252 = vpack.c.b16 %v4811, %v4811
  %v5253 = vpack.c.b16 %v4812, %v4812
  %v5254 = vpack.c.b16 %v4813, %v4813
  %v5255 = vpack.c.b16 %v4814, %v4814
  %v5256 = vpack.c.b16 %v4815, %v4815
  %v5257 = vpack.c.b16 %v4816, %v4816
  %v5258 = vpack.c.b16 %v4817, %v4817
  %v5259 = vpack.c.b16 %v4818, %v4818
  %v5260 = vpack.c.b16 %v4819, %v4819
  %v5261 = vpack.c.b16 %v4820, %v4820
  %v5262 = vpack.c.b16 %v4821, %v4821
  %v5263 = vpack.c.b16 %v4822, %v4822
  %v5264 = vpack.c.b16 %v4823, %v4823
  %v5265 = vpack.c.b16 %v4824, %v4824
  %v5266 = vpack.c.b16 %v4825, %v4825
  %v5267 = vpack.c.b16 %v4826, %v4826
  %v5268 = vpack.c.b16 %v4827, %v4827
  %v5269 = vpack.c.b16 %v4828, %v4828
  %v5270 = vpack.c.b16 %v4829, %v4829
  %v5271 = vpack.c.b16 %v4830, %v4830
  %v5272 = vpack.c.b16 %v4831, %v4831
  %v5273 = vpack.c.b16 %v4832, %v4832
  %v5274 = vpack.c.b16 %v4833, %v4833
  %v5275 = vpack.c.b16 %v4834, %v4834
  %v5276 = vpack.c.b16 %v4835, %v4835
  %v5277 = vpack.c.b16 %v4836, %v4836
  %v5278 = vpack.c.b16 %v4837, %v4837
  %v5279 = vpack.c.b16 %v4838, %v4838
  %v5280 = vpack.c.b16 %v4839, %v4839
  %v5281 = vpack.c.b16 %v4840, %v4840
  %v5282 = vpack.c.b16 %v4841, %v4841
  %v5283 = vpack.c.b16 %v4842, %v4842
  %v5284 = vpack.c.b16 %v4843, %v4843
  %v5285 = vpack.c.b16 %v4844, %v4844
  %v5286 = vpack.c.b16 %v4845, %v4845
  %v5287 = vpack.c.b16 %v4846, %v4846
  %v5288 = vpack.c.b16 %v4847, %v4847
  %v5289 = vpack.c.b16 %v4848, %v4848
  %v5290 = vpack.c.b16 %v4849, %v4849
  %v5291 = vpack.c.b16 %v4850, %v4850
  %v5292 = vpack.c.b16 %v4851, %v4851
  %v5293 = vpack.c.b16 %v4852, %v4852
  %v5294 = vpack.c.b16 %v4853, %v4853
  %v5295 = vpack.c.b16 %v4854, %v4854
  %v5296 = vpack.c.b16 %v4855, %v4855
  %v5297 = vpack.c.b16 %v4856, %v4856
  %v5298 = vpack.c.b16 %v4857, %v4857
  %v5299 = vpack.c.b16 %v4858, %v4858
  %v5300 = vpack.c.b16 %v4859, %v4859
  %v5301 = vpack.c.b16 %v4860, %v4860
  %v5302 = vpack.c.b16 %v4861, %v4861
  %v5303 = vpack.c.b16 %v4862, %v4862
  %v5304 = vpack.c.b16 %v4863, %v4863
  %v5305 = vpack.c.b16 %v4864, %v4864
  %v5306 = vpack.c.b16 %v4865, %v4865
  %v5307 = vpack.c.b16 %v4866, %v4866
  %v5308 = vpack.c.b16 %v4867, %v4867
  %v5309 = vpack.c.b16 %v4868, %v4868
  %v5310 = vpack.c.b16 %v4869, %v4869
  %v5311 = vpack.c.b16 %v4870, %v4870
  %v5312 = vpack.c.b16 %v4871, %v4871
  %v5313 = vpack.c.b16 %v4872, %v4872
  %v5314 = vpack.c.b16 %v4873, %v4873
  %v5315 = vpack.c.b16 %v4874, %v4874
  %v5316 = vpack.c.b16 %v4875, %v4875
  %v5317 = vpack.c.b16 %v4876, %v4876
  %v5318 = vpack.c.b16 %v4877, %v4877
  %v5319 = vpack.c.b16 %v4878, %v4878
  %v5320 = vpack.c.b16 %v4879, %v4879
  %v5321 = vpack.c.b16 %v4880, %v4880
  %v5322 = vpack.c.b16 %v4881, %v4881
  %v5323 = vpack.c.b16 %v4882, %v4882
  %v5324 = vpack.c.b16 %v4883, %v4883
  %v5325 = vpack.c.b16 %v4884, %v4884
  %v5326 = vpack.c.b16 %v4885, %v4885
  %v5327 = vpack.c.b16 %v4886, %v4886
  %v5328 = vpack.c.b16 %v4887, %v4887
  %v5329 = vpack.c.b16 %v4888, %v4888
  %v5330 = vpack.c.b16 %v4889, %v4889
  %v5331 = vpack.c.b16 %v4890, %v4890
  %v5332 = vpack.c.b16 %v4891, %v4891
  %v5333 = vpack.c.b16 %v4892, %v4892
  %v5334 = vpack.c.b16 %v4893, %v4893
  %v5335 = vpack.c.b16 %v4894, %v4894
  %v5336 = vpack.c.b16 %v4895, %v4895
  %v5337 = vpack.c.b16 %v4896, %v4896
  %v5338 = vpack.c.b16 %v4897, %v4897
  %v5339 = vpack.c.b16 %v4898, %v4898
  %v5340 = vpack.c.b16 %v4899, %v4899
  %v5341 = vpack.c.b16 %v4900, %v4900
  %v5342 = vpack.c.b16 %v4901, %v4901
  %v5343 = vpack.c.b16 %v4902, %v4902
  %v5344 = vpack.c.b16 %v4903, %v4903
  %v5345 = vpack.c.b16 %v4904, %v4904
  %v5346 = vpack.c.b16 %v4905, %v4905
  %v5347 = vpack.c.b16 %v4906, %v4906
  %v5348 = vpack.c.b16 %v4907, %v4907
  %v5349 = vpack.c.b16 %v4908, %v4908
  %v5350 = vpack.c.b16 %v4909, %v4909
  %v5351 = vpack.c.b16 %v4910, %v4910
  %v5352 = vpack.c.b16 %v4911, %v4911
  %v5353 = vpack.c.b16 %v4912, %v4912
  %v5354 = vpack.c.b16 %v4913, %v4913
  %v5355 = vpack.c.b16 %v4914, %v4914
  %v5356 = vpack.c.b16 %v4915, %v4915
  %v5357 = vpack.c.b16 %v4916, %v4916
  %v5358 = vpack.c.b16 %v4917, %v4917
  %v5359 = vpack.c.b16 %v4918, %v4918
  %v5360 = vpack.c.b16 %v4919, %v4919
  %v5361 = vpack.c.b16 %v4920, %v4920
  %v5362 = vpack.c.b16 %v4921, %v4921
  %v5363 = vpack.c.b16 %v4922, %v4922
  %v5364 = vpack.c.b16 %v4923, %v4923
  %v5365 = vpack.c.b16 %v4924, %v4924
  %v5366 = vpack.c.b16 %v4925, %v4925
  %v5367 = vpack.c.b16 %v4926, %v4926
  %v5368 = vpack.c.b16 %v4927, %v4927
  %v5369 = vpack.c.b16 %v4928, %v4928
  %v5370 = vpack.c.b16 %v4929, %v4929
  %v5371 = vpack.c.b16 %v4930, %v4930
  %v5372 = vpack.c.b16 %v4931, %v4931
  %v5373 = vpack.c.b16 %v4932, %v4932
  %v5374 = vpack.c.b16 %v4933, %v4933
  %v5375 = vpack.c.b16 %v4934, %v4934
  %v5376 = vpack.c.b16 %v4935, %v4935
  %v5377 = vpack.c.b16 %v4936, %v4936
  %v5378 = vpack.c.b16 %v4937, %v4937
  %v5379 = vpack.c.b16 %v4938, %v4938
  %v5380 = vpack.c.b16 %v4939, %v4939
  %v5381 = vpack.c.b16 %v4940, %v4940
  %v5382 = vpack.c.b16 %v4941, %v4941
  %v5383 = vpack.c.b16 %v4942, %v4942
  %v5384 = vpack.c.b16 %v4943, %v4943
  %v5385 = vpack.c.b16 %v4944, %v4944
  %v5386 = vpack.c.b16 %v4945, %v4945
  %v5387 = vpack.c.b16 %v4946, %v4946
  %v5388 = vpack.c.b16 %v4947, %v4947
  %v5389 = vpack.c.b16 %v4948, %v4948
  %v5390 = vpack.c.b16 %v4949, %v4949
  %v5391 = vpack.c.b16 %v4950, %v4950
  %v5392 = vpack.c.b16 %v4951, %v4951
  %v5393 = vpack.c.b16 %v4952, %v4952
  %v5394 = vpack.c.b16 %v4953, %v4953
  %v5395 = vpack.c.b16 %v4954, %v4954
  %v5396 = vpack.c.b16 %v4955, %v4955
  %v5397 = vpack.c.b16 %v4956, %v4956
  %v5398 = vpack.c.b16 %v4957, %v4957
  %v5399 = vpack.c.b16 %v4958, %v4958
  %v5400 = vpack.c.b16 %v4959, %v4959
  %v5401 = vpack.c.b16 %v4960, %v4960
  %v5402 = vpack.c.b16 %v4961, %v4961
  %v5403 = vpack.c.b16 %v4962, %v4962
  %v5404 = vpack.c.b16 %v4963, %v4963
  %v5405 = vpack.c.b16 %v4964, %v4964
  %v5406 = vpack.c.b16 %v4965, %v4965
  %v5407 = vpack.c.b16 %v4966, %v4966
  %v5408 = vpack.c.b16 %v4967, %v4967
  %v5409 = vpack.c.b16 %v4968, %v4968
  %v5410 = vpack.c.b16 %v4969, %v4969
  %v5411 = vpack.c.b16 %v4970, %v4970
  %v5412 = vpack.c.b16 %v4971, %v4971
  %v5413 = vpack.c.b16 %v4972, %v4972
  %v5414 = vpack.c.b16 %v4973, %v4973
  %v5415 = vpack.c.b16 %v4974, %v4974
  %vm5857 = vcmask 257024
  %5858 = vst.msk [vmem:[%s3] sm:$0xf] %vm5857, %v4975
  %5859 = vst.msk [vmem:[%s3 + $0x4] sm:$0xf] %vm5857, %v4976
  %5860 = vst.msk [vmem:[%s3 + $0x8] sm:$0xf] %vm5857, %v4977
  %5861 = vst.msk [vmem:[%s3 + $0xc] sm:$0xf] %vm5857, %v4978
  %5862 = vst.msk [vmem:[%s3 + $0x10] sm:$0xf] %vm5857, %v4979
  %5863 = vst.msk [vmem:[%s3 + $0x14] sm:$0xf] %vm5857, %v4980
  %5864 = vst.msk [vmem:[%s3 + $0x18] sm:$0xf] %vm5857, %v4981
  %5865 = vst.msk [vmem:[%s3 + $0x1c] sm:$0xf] %vm5857, %v4982
  %5866 = vst.msk [vmem:[%s3 + $0x20] sm:$0xf] %vm5857, %v4983
  %5867 = vst.msk [vmem:[%s3 + $0x24] sm:$0xf] %vm5857, %v4984
  %5868 = vst.msk [vmem:[%s3 + $0x28] sm:$0xf] %vm5857, %v4985
  %5869 = vst.msk [vmem:[%s3 + $0x2c] sm:$0xf] %vm5857, %v4986
  %5870 = vst.msk [vmem:[%s3 + $0x30] sm:$0xf] %vm5857, %v4987
  %5871 = vst.msk [vmem:[%s3 + $0x34] sm:$0xf] %vm5857, %v4988
  %5872 = vst.msk [vmem:[%s3 + $0x38] sm:$0xf] %vm5857, %v4989
  %5873 = vst.msk [vmem:[%s3 + $0x3c] sm:$0xf] %vm5857, %v4990
  %5874 = vst.msk [vmem:[%s3 + $0x40] sm:$0xf] %vm5857, %v4991
  %5875 = vst.msk [vmem:[%s3 + $0x44] sm:$0xf] %vm5857, %v4992
  %5876 = vst.msk [vmem:[%s3 + $0x48] sm:$0xf] %vm5857, %v4993
  %5877 = vst.msk [vmem:[%s3 + $0x4c] sm:$0xf] %vm5857, %v4994
  %5878 = vst.msk [vmem:[%s3 + $0x50] sm:$0xf] %vm5857, %v4995
  %5879 = vst.msk [vmem:[%s3 + $0x54] sm:$0xf] %vm5857, %v4996
  %5880 = vst.msk [vmem:[%s3 + $0x58] sm:$0xf] %vm5857, %v4997
  %5881 = vst.msk [vmem:[%s3 + $0x5c] sm:$0xf] %vm5857, %v4998
  %5882 = vst.msk [vmem:[%s3 + $0x60] sm:$0xf] %vm5857, %v4999
  %5883 = vst.msk [vmem:[%s3 + $0x64] sm:$0xf] %vm5857, %v5000
  %5884 = vst.msk [vmem:[%s3 + $0x68] sm:$0xf] %vm5857, %v5001
  %5885 = vst.msk [vmem:[%s3 + $0x6c] sm:$0xf] %vm5857, %v5002
  %5886 = vst.msk [vmem:[%s3 + $0x70] sm:$0xf] %vm5857, %v5003
  %5887 = vst.msk [vmem:[%s3 + $0x74] sm:$0xf] %vm5857, %v5004
  %5888 = vst.msk [vmem:[%s3 + $0x78] sm:$0xf] %vm5857, %v5005
  %5889 = vst.msk [vmem:[%s3 + $0x7c] sm:$0xf] %vm5857, %v5006
  %5890 = vst.msk [vmem:[%s3 + $0x80] sm:$0xf] %vm5857, %v5007
  %5891 = vst.msk [vmem:[%s3 + $0x84] sm:$0xf] %vm5857, %v5008
  %5892 = vst.msk [vmem:[%s3 + $0x88] sm:$0xf] %vm5857, %v5009
  %5893 = vst.msk [vmem:[%s3 + $0x8c] sm:$0xf] %vm5857, %v5010
  %5894 = vst.msk [vmem:[%s3 + $0x90] sm:$0xf] %vm5857, %v5011
  %5895 = vst.msk [vmem:[%s3 + $0x94] sm:$0xf] %vm5857, %v5012
  %5896 = vst.msk [vmem:[%s3 + $0x98] sm:$0xf] %vm5857, %v5013
  %5897 = vst.msk [vmem:[%s3 + $0x9c] sm:$0xf] %vm5857, %v5014
  %5898 = vst.msk [vmem:[%s3 + $0xa0] sm:$0xf] %vm5857, %v5015
  %5899 = vst.msk [vmem:[%s3 + $0xa4] sm:$0xf] %vm5857, %v5016
  %5900 = vst.msk [vmem:[%s3 + $0xa8] sm:$0xf] %vm5857, %v5017
  %5901 = vst.msk [vmem:[%s3 + $0xac] sm:$0xf] %vm5857, %v5018
  %5902 = vst.msk [vmem:[%s3 + $0xb0] sm:$0xf] %vm5857, %v5019
  %5903 = vst.msk [vmem:[%s3 + $0xb4] sm:$0xf] %vm5857, %v5020
  %5904 = vst.msk [vmem:[%s3 + $0xb8] sm:$0xf] %vm5857, %v5021
  %5905 = vst.msk [vmem:[%s3 + $0xbc] sm:$0xf] %vm5857, %v5022
  %5906 = vst.msk [vmem:[%s3 + $0xc0] sm:$0xf] %vm5857, %v5023
  %5907 = vst.msk [vmem:[%s3 + $0xc4] sm:$0xf] %vm5857, %v5024
  %5908 = vst.msk [vmem:[%s3 + $0xc8] sm:$0xf] %vm5857, %v5025
  %5909 = vst.msk [vmem:[%s3 + $0xcc] sm:$0xf] %vm5857, %v5026
  %5910 = vst.msk [vmem:[%s3 + $0xd0] sm:$0xf] %vm5857, %v5027
  %5911 = vst.msk [vmem:[%s3 + $0xd4] sm:$0xf] %vm5857, %v5028
  %5912 = vst.msk [vmem:[%s3 + $0xd8] sm:$0xf] %vm5857, %v5029
  %5913 = vst.msk [vmem:[%s3 + $0xdc] sm:$0xf] %vm5857, %v5030
  %5914 = vst.msk [vmem:[%s3 + $0xe0] sm:$0xf] %vm5857, %v5031
  %5915 = vst.msk [vmem:[%s3 + $0xe4] sm:$0xf] %vm5857, %v5032
  %5916 = vst.msk [vmem:[%s3 + $0xe8] sm:$0xf] %vm5857, %v5033
  %5917 = vst.msk [vmem:[%s3 + $0xec] sm:$0xf] %vm5857, %v5034
  %5918 = vst.msk [vmem:[%s3 + $0xf0] sm:$0xf] %vm5857, %v5035
  %5919 = vst.msk [vmem:[%s3 + $0xf4] sm:$0xf] %vm5857, %v5036
  %5920 = vst.msk [vmem:[%s3 + $0xf8] sm:$0xf] %vm5857, %v5037
  %5921 = vst.msk [vmem:[%s3 + $0xfc] sm:$0xf] %vm5857, %v5038
  %5922 = vst.msk [vmem:[%s3 + $0x100] sm:$0xf] %vm5857, %v5039
  %5923 = vst.msk [vmem:[%s3 + $0x104] sm:$0xf] %vm5857, %v5040
  %5924 = vst.msk [vmem:[%s3 + $0x108] sm:$0xf] %vm5857, %v5041
  %5925 = vst.msk [vmem:[%s3 + $0x10c] sm:$0xf] %vm5857, %v5042
  %5926 = vst.msk [vmem:[%s3 + $0x110] sm:$0xf] %vm5857, %v5043
  %5927 = vst.msk [vmem:[%s3 + $0x114] sm:$0xf] %vm5857, %v5044
  %5928 = vst.msk [vmem:[%s3 + $0x118] sm:$0xf] %vm5857, %v5045
  %5929 = vst.msk [vmem:[%s3 + $0x11c] sm:$0xf] %vm5857, %v5046
  %5930 = vst.msk [vmem:[%s3 + $0x120] sm:$0xf] %vm5857, %v5047
  %5931 = vst.msk [vmem:[%s3 + $0x124] sm:$0xf] %vm5857, %v5048
  %5932 = vst.msk [vmem:[%s3 + $0x128] sm:$0xf] %vm5857, %v5049
  %5933 = vst.msk [vmem:[%s3 + $0x12c] sm:$0xf] %vm5857, %v5050
  %5934 = vst.msk [vmem:[%s3 + $0x130] sm:$0xf] %vm5857, %v5051
  %5935 = vst.msk [vmem:[%s3 + $0x134] sm:$0xf] %vm5857, %v5052
  %5936 = vst.msk [vmem:[%s3 + $0x138] sm:$0xf] %vm5857, %v5053
  %5937 = vst.msk [vmem:[%s3 + $0x13c] sm:$0xf] %vm5857, %v5054
  %5938 = vst.msk [vmem:[%s3 + $0x140] sm:$0xf] %vm5857, %v5055
  %5939 = vst.msk [vmem:[%s3 + $0x144] sm:$0xf] %vm5857, %v5056
  %5940 = vst.msk [vmem:[%s3 + $0x148] sm:$0xf] %vm5857, %v5057
  %5941 = vst.msk [vmem:[%s3 + $0x14c] sm:$0xf] %vm5857, %v5058
  %5942 = vst.msk [vmem:[%s3 + $0x150] sm:$0xf] %vm5857, %v5059
  %5943 = vst.msk [vmem:[%s3 + $0x154] sm:$0xf] %vm5857, %v5060
  %5944 = vst.msk [vmem:[%s3 + $0x158] sm:$0xf] %vm5857, %v5061
  %5945 = vst.msk [vmem:[%s3 + $0x15c] sm:$0xf] %vm5857, %v5062
  %5946 = vst.msk [vmem:[%s3 + $0x160] sm:$0xf] %vm5857, %v5063
  %5947 = vst.msk [vmem:[%s3 + $0x164] sm:$0xf] %vm5857, %v5064
  %5948 = vst.msk [vmem:[%s3 + $0x168] sm:$0xf] %vm5857, %v5065
  %5949 = vst.msk [vmem:[%s3 + $0x16c] sm:$0xf] %vm5857, %v5066
  %5950 = vst.msk [vmem:[%s3 + $0x170] sm:$0xf] %vm5857, %v5067
  %5951 = vst.msk [vmem:[%s3 + $0x174] sm:$0xf] %vm5857, %v5068
  %5952 = vst.msk [vmem:[%s3 + $0x178] sm:$0xf] %vm5857, %v5069
  %5953 = vst.msk [vmem:[%s3 + $0x17c] sm:$0xf] %vm5857, %v5070
  %5954 = vst.msk [vmem:[%s3 + $0x180] sm:$0xf] %vm5857, %v5071
  %5955 = vst.msk [vmem:[%s3 + $0x184] sm:$0xf] %vm5857, %v5072
  %5956 = vst.msk [vmem:[%s3 + $0x188] sm:$0xf] %vm5857, %v5073
  %5957 = vst.msk [vmem:[%s3 + $0x18c] sm:$0xf] %vm5857, %v5074
  %5958 = vst.msk [vmem:[%s3 + $0x190] sm:$0xf] %vm5857, %v5075
  %5959 = vst.msk [vmem:[%s3 + $0x194] sm:$0xf] %vm5857, %v5076
  %5960 = vst.msk [vmem:[%s3 + $0x198] sm:$0xf] %vm5857, %v5077
  %5961 = vst.msk [vmem:[%s3 + $0x19c] sm:$0xf] %vm5857, %v5078
  %5962 = vst.msk [vmem:[%s3 + $0x1a0] sm:$0xf] %vm5857, %v5079
  %5963 = vst.msk [vmem:[%s3 + $0x1a4] sm:$0xf] %vm5857, %v5080
  %5964 = vst.msk [vmem:[%s3 + $0x1a8] sm:$0xf] %vm5857, %v5081
  %5965 = vst.msk [vmem:[%s3 + $0x1ac] sm:$0xf] %vm5857, %v5082
  %5966 = vst.msk [vmem:[%s3 + $0x1b0] sm:$0xf] %vm5857, %v5083
  %5967 = vst.msk [vmem:[%s3 + $0x1b4] sm:$0xf] %vm5857, %v5084
  %5968 = vst.msk [vmem:[%s3 + $0x1b8] sm:$0xf] %vm5857, %v5085
  %5969 = vst.msk [vmem:[%s3 + $0x1bc] sm:$0xf] %vm5857, %v5086
  %5970 = vst.msk [vmem:[%s3 + $0x1c0] sm:$0xf] %vm5857, %v5087
  %5971 = vst.msk [vmem:[%s3 + $0x1c4] sm:$0xf] %vm5857, %v5088
  %5972 = vst.msk [vmem:[%s3 + $0x1c8] sm:$0xf] %vm5857, %v5089
  %5973 = vst.msk [vmem:[%s3 + $0x1cc] sm:$0xf] %vm5857, %v5090
  %5974 = vst.msk [vmem:[%s3 + $0x1d0] sm:$0xf] %vm5857, %v5091
  %5975 = vst.msk [vmem:[%s3 + $0x1d4] sm:$0xf] %vm5857, %v5092
  %5976 = vst.msk [vmem:[%s3 + $0x1d8] sm:$0xf] %vm5857, %v5093
  %5977 = vst.msk [vmem:[%s3 + $0x1dc] sm:$0xf] %vm5857, %v5094
  %5978 = vst.msk [vmem:[%s3 + $0x1e0] sm:$0xf] %vm5857, %v5095
  %5979 = vst.msk [vmem:[%s3 + $0x1e4] sm:$0xf] %vm5857, %v5096
  %5980 = vst.msk [vmem:[%s3 + $0x1e8] sm:$0xf] %vm5857, %v5097
  %5981 = vst.msk [vmem:[%s3 + $0x1ec] sm:$0xf] %vm5857, %v5098
  %5982 = vst.msk [vmem:[%s3 + $0x1f0] sm:$0xf] %vm5857, %v5099
  %5983 = vst.msk [vmem:[%s3 + $0x1f4] sm:$0xf] %vm5857, %v5100
  %5984 = vst.msk [vmem:[%s3 + $0x1f8] sm:$0xf] %vm5857, %v5101
  %5985 = vst.msk [vmem:[%s3 + $0x1fc] sm:$0xf] %vm5857, %v5102
  %5986 = vst.msk [vmem:[%s3 + $0x200] sm:$0xf] %vm5857, %v5103
  %5987 = vst.msk [vmem:[%s3 + $0x204] sm:$0xf] %vm5857, %v5104
  %5988 = vst.msk [vmem:[%s3 + $0x208] sm:$0xf] %vm5857, %v5105
  %5989 = vst.msk [vmem:[%s3 + $0x20c] sm:$0xf] %vm5857, %v5106
  %5990 = vst.msk [vmem:[%s3 + $0x210] sm:$0xf] %vm5857, %v5107
  %5991 = vst.msk [vmem:[%s3 + $0x214] sm:$0xf] %vm5857, %v5108
  %5992 = vst.msk [vmem:[%s3 + $0x218] sm:$0xf] %vm5857, %v5109
  %5993 = vst.msk [vmem:[%s3 + $0x21c] sm:$0xf] %vm5857, %v5110
  %5994 = vst.msk [vmem:[%s3 + $0x220] sm:$0xf] %vm5857, %v5111
  %5995 = vst.msk [vmem:[%s3 + $0x224] sm:$0xf] %vm5857, %v5112
  %5996 = vst.msk [vmem:[%s3 + $0x228] sm:$0xf] %vm5857, %v5113
  %5997 = vst.msk [vmem:[%s3 + $0x22c] sm:$0xf] %vm5857, %v5114
  %5998 = vst.msk [vmem:[%s3 + $0x230] sm:$0xf] %vm5857, %v5115
  %5999 = vst.msk [vmem:[%s3 + $0x234] sm:$0xf] %vm5857, %v5116
  %6000 = vst.msk [vmem:[%s3 + $0x238] sm:$0xf] %vm5857, %v5117
  %6001 = vst.msk [vmem:[%s3 + $0x23c] sm:$0xf] %vm5857, %v5118
  %6002 = vst.msk [vmem:[%s3 + $0x240] sm:$0xf] %vm5857, %v5119
  %6003 = vst.msk [vmem:[%s3 + $0x244] sm:$0xf] %vm5857, %v5120
  %6004 = vst.msk [vmem:[%s3 + $0x248] sm:$0xf] %vm5857, %v5121
  %6005 = vst.msk [vmem:[%s3 + $0x24c] sm:$0xf] %vm5857, %v5122
  %6006 = vst.msk [vmem:[%s3 + $0x250] sm:$0xf] %vm5857, %v5123
  %6007 = vst.msk [vmem:[%s3 + $0x254] sm:$0xf] %vm5857, %v5124
  %6008 = vst.msk [vmem:[%s3 + $0x258] sm:$0xf] %vm5857, %v5125
  %6009 = vst.msk [vmem:[%s3 + $0x25c] sm:$0xf] %vm5857, %v5126
  %6010 = vst.msk [vmem:[%s3 + $0x260] sm:$0xf] %vm5857, %v5127
  %6011 = vst.msk [vmem:[%s3 + $0x264] sm:$0xf] %vm5857, %v5128
  %6012 = vst.msk [vmem:[%s3 + $0x268] sm:$0xf] %vm5857, %v5129
  %6013 = vst.msk [vmem:[%s3 + $0x26c] sm:$0xf] %vm5857, %v5130
  %6014 = vst.msk [vmem:[%s3 + $0x270] sm:$0xf] %vm5857, %v5131
  %6015 = vst.msk [vmem:[%s3 + $0x274] sm:$0xf] %vm5857, %v5132
  %6016 = vst.msk [vmem:[%s3 + $0x278] sm:$0xf] %vm5857, %v5133
  %6017 = vst.msk [vmem:[%s3 + $0x27c] sm:$0xf] %vm5857, %v5134
  %6018 = vst.msk [vmem:[%s3 + $0x280] sm:$0xf] %vm5857, %v5135
  %6019 = vst.msk [vmem:[%s3 + $0x284] sm:$0xf] %vm5857, %v5136
  %6020 = vst.msk [vmem:[%s3 + $0x288] sm:$0xf] %vm5857, %v5137
  %6021 = vst.msk [vmem:[%s3 + $0x28c] sm:$0xf] %vm5857, %v5138
  %6022 = vst.msk [vmem:[%s3 + $0x290] sm:$0xf] %vm5857, %v5139
  %6023 = vst.msk [vmem:[%s3 + $0x294] sm:$0xf] %vm5857, %v5140
  %6024 = vst.msk [vmem:[%s3 + $0x298] sm:$0xf] %vm5857, %v5141
  %6025 = vst.msk [vmem:[%s3 + $0x29c] sm:$0xf] %vm5857, %v5142
  %6026 = vst.msk [vmem:[%s3 + $0x2a0] sm:$0xf] %vm5857, %v5143
  %6027 = vst.msk [vmem:[%s3 + $0x2a4] sm:$0xf] %vm5857, %v5144
  %6028 = vst.msk [vmem:[%s3 + $0x2a8] sm:$0xf] %vm5857, %v5145
  %6029 = vst.msk [vmem:[%s3 + $0x2ac] sm:$0xf] %vm5857, %v5146
  %6030 = vst.msk [vmem:[%s3 + $0x2b0] sm:$0xf] %vm5857, %v5147
  %6031 = vst.msk [vmem:[%s3 + $0x2b4] sm:$0xf] %vm5857, %v5148
  %6032 = vst.msk [vmem:[%s3 + $0x2b8] sm:$0xf] %vm5857, %v5149
  %6033 = vst.msk [vmem:[%s3 + $0x2bc] sm:$0xf] %vm5857, %v5150
  %6034 = vst.msk [vmem:[%s3 + $0x2c0] sm:$0xf] %vm5857, %v5151
  %6035 = vst.msk [vmem:[%s3 + $0x2c4] sm:$0xf] %vm5857, %v5152
  %6036 = vst.msk [vmem:[%s3 + $0x2c8] sm:$0xf] %vm5857, %v5153
  %6037 = vst.msk [vmem:[%s3 + $0x2cc] sm:$0xf] %vm5857, %v5154
  %6038 = vst.msk [vmem:[%s3 + $0x2d0] sm:$0xf] %vm5857, %v5155
  %6039 = vst.msk [vmem:[%s3 + $0x2d4] sm:$0xf] %vm5857, %v5156
  %6040 = vst.msk [vmem:[%s3 + $0x2d8] sm:$0xf] %vm5857, %v5157
  %6041 = vst.msk [vmem:[%s3 + $0x2dc] sm:$0xf] %vm5857, %v5158
  %6042 = vst.msk [vmem:[%s3 + $0x2e0] sm:$0xf] %vm5857, %v5159
  %6043 = vst.msk [vmem:[%s3 + $0x2e4] sm:$0xf] %vm5857, %v5160
  %6044 = vst.msk [vmem:[%s3 + $0x2e8] sm:$0xf] %vm5857, %v5161
  %6045 = vst.msk [vmem:[%s3 + $0x2ec] sm:$0xf] %vm5857, %v5162
  %6046 = vst.msk [vmem:[%s3 + $0x2f0] sm:$0xf] %vm5857, %v5163
  %6047 = vst.msk [vmem:[%s3 + $0x2f4] sm:$0xf] %vm5857, %v5164
  %6048 = vst.msk [vmem:[%s3 + $0x2f8] sm:$0xf] %vm5857, %v5165
  %6049 = vst.msk [vmem:[%s3 + $0x2fc] sm:$0xf] %vm5857, %v5166
  %6050 = vst.msk [vmem:[%s3 + $0x300] sm:$0xf] %vm5857, %v5167
  %6051 = vst.msk [vmem:[%s3 + $0x304] sm:$0xf] %vm5857, %v5168
  %6052 = vst.msk [vmem:[%s3 + $0x308] sm:$0xf] %vm5857, %v5169
  %6053 = vst.msk [vmem:[%s3 + $0x30c] sm:$0xf] %vm5857, %v5170
  %6054 = vst.msk [vmem:[%s3 + $0x310] sm:$0xf] %vm5857, %v5171
  %6055 = vst.msk [vmem:[%s3 + $0x314] sm:$0xf] %vm5857, %v5172
  %6056 = vst.msk [vmem:[%s3 + $0x318] sm:$0xf] %vm5857, %v5173
  %6057 = vst.msk [vmem:[%s3 + $0x31c] sm:$0xf] %vm5857, %v5174
  %6058 = vst.msk [vmem:[%s3 + $0x320] sm:$0xf] %vm5857, %v5175
  %6059 = vst.msk [vmem:[%s3 + $0x324] sm:$0xf] %vm5857, %v5176
  %6060 = vst.msk [vmem:[%s3 + $0x328] sm:$0xf] %vm5857, %v5177
  %6061 = vst.msk [vmem:[%s3 + $0x32c] sm:$0xf] %vm5857, %v5178
  %6062 = vst.msk [vmem:[%s3 + $0x330] sm:$0xf] %vm5857, %v5179
  %6063 = vst.msk [vmem:[%s3 + $0x334] sm:$0xf] %vm5857, %v5180
  %6064 = vst.msk [vmem:[%s3 + $0x338] sm:$0xf] %vm5857, %v5181
  %6065 = vst.msk [vmem:[%s3 + $0x33c] sm:$0xf] %vm5857, %v5182
  %6066 = vst.msk [vmem:[%s3 + $0x340] sm:$0xf] %vm5857, %v5183
  %6067 = vst.msk [vmem:[%s3 + $0x344] sm:$0xf] %vm5857, %v5184
  %6068 = vst.msk [vmem:[%s3 + $0x348] sm:$0xf] %vm5857, %v5185
  %6069 = vst.msk [vmem:[%s3 + $0x34c] sm:$0xf] %vm5857, %v5186
  %6070 = vst.msk [vmem:[%s3 + $0x350] sm:$0xf] %vm5857, %v5187
  %6071 = vst.msk [vmem:[%s3 + $0x354] sm:$0xf] %vm5857, %v5188
  %6072 = vst.msk [vmem:[%s3 + $0x358] sm:$0xf] %vm5857, %v5189
  %6073 = vst.msk [vmem:[%s3 + $0x35c] sm:$0xf] %vm5857, %v5190
  %6074 = vst.msk [vmem:[%s3 + $0x360] sm:$0xf] %vm5857, %v5191
  %6075 = vst.msk [vmem:[%s3 + $0x364] sm:$0xf] %vm5857, %v5192
  %6076 = vst.msk [vmem:[%s3 + $0x368] sm:$0xf] %vm5857, %v5193
  %6077 = vst.msk [vmem:[%s3 + $0x36c] sm:$0xf] %vm5857, %v5194
  %6078 = vst.msk [vmem:[%s3 + $0x370] sm:$0xf] %vm5857, %v5195
  %6079 = vst.msk [vmem:[%s3 + $0x374] sm:$0xf] %vm5857, %v5196
  %6080 = vst.msk [vmem:[%s3 + $0x378] sm:$0xf] %vm5857, %v5197
  %6081 = vst.msk [vmem:[%s3 + $0x37c] sm:$0xf] %vm5857, %v5198
  %6082 = vst.msk [vmem:[%s3 + $0x380] sm:$0xf] %vm5857, %v5199
  %6083 = vst.msk [vmem:[%s3 + $0x384] sm:$0xf] %vm5857, %v5200
  %6084 = vst.msk [vmem:[%s3 + $0x388] sm:$0xf] %vm5857, %v5201
  %6085 = vst.msk [vmem:[%s3 + $0x38c] sm:$0xf] %vm5857, %v5202
  %6086 = vst.msk [vmem:[%s3 + $0x390] sm:$0xf] %vm5857, %v5203
  %6087 = vst.msk [vmem:[%s3 + $0x394] sm:$0xf] %vm5857, %v5204
  %6088 = vst.msk [vmem:[%s3 + $0x398] sm:$0xf] %vm5857, %v5205
  %6089 = vst.msk [vmem:[%s3 + $0x39c] sm:$0xf] %vm5857, %v5206
  %6090 = vst.msk [vmem:[%s3 + $0x3a0] sm:$0xf] %vm5857, %v5207
  %6091 = vst.msk [vmem:[%s3 + $0x3a4] sm:$0xf] %vm5857, %v5208
  %6092 = vst.msk [vmem:[%s3 + $0x3a8] sm:$0xf] %vm5857, %v5209
  %6093 = vst.msk [vmem:[%s3 + $0x3ac] sm:$0xf] %vm5857, %v5210
  %6094 = vst.msk [vmem:[%s3 + $0x3b0] sm:$0xf] %vm5857, %v5211
  %6095 = vst.msk [vmem:[%s3 + $0x3b4] sm:$0xf] %vm5857, %v5212
  %6096 = vst.msk [vmem:[%s3 + $0x3b8] sm:$0xf] %vm5857, %v5213
  %6097 = vst.msk [vmem:[%s3 + $0x3bc] sm:$0xf] %vm5857, %v5214
  %6098 = vst.msk [vmem:[%s3 + $0x3c0] sm:$0xf] %vm5857, %v5215
  %6099 = vst.msk [vmem:[%s3 + $0x3c4] sm:$0xf] %vm5857, %v5216
  %6100 = vst.msk [vmem:[%s3 + $0x3c8] sm:$0xf] %vm5857, %v5217
  %6101 = vst.msk [vmem:[%s3 + $0x3cc] sm:$0xf] %vm5857, %v5218
  %6102 = vst.msk [vmem:[%s3 + $0x3d0] sm:$0xf] %vm5857, %v5219
  %6103 = vst.msk [vmem:[%s3 + $0x3d4] sm:$0xf] %vm5857, %v5220
  %6104 = vst.msk [vmem:[%s3 + $0x3d8] sm:$0xf] %vm5857, %v5221
  %6105 = vst.msk [vmem:[%s3 + $0x3dc] sm:$0xf] %vm5857, %v5222
  %6106 = vst.msk [vmem:[%s3 + $0x3e0] sm:$0xf] %vm5857, %v5223
  %6107 = vst.msk [vmem:[%s3 + $0x3e4] sm:$0xf] %vm5857, %v5224
  %6108 = vst.msk [vmem:[%s3 + $0x3e8] sm:$0xf] %vm5857, %v5225
  %6109 = vst.msk [vmem:[%s3 + $0x3ec] sm:$0xf] %vm5857, %v5226
  %6110 = vst.msk [vmem:[%s3 + $0x3f0] sm:$0xf] %vm5857, %v5227
  %6111 = vst.msk [vmem:[%s3 + $0x3f4] sm:$0xf] %vm5857, %v5228
  %6112 = vst.msk [vmem:[%s3 + $0x3f8] sm:$0xf] %vm5857, %v5229
  %6113 = vst.msk [vmem:[%s3 + $0x3fc] sm:$0xf] %vm5857, %v5230
  %6114 = vst.msk [vmem:[%s3 + $0x400] sm:$0xf] %vm5857, %v5231
  %6115 = vst.msk [vmem:[%s3 + $0x404] sm:$0xf] %vm5857, %v5232
  %6116 = vst.msk [vmem:[%s3 + $0x408] sm:$0xf] %vm5857, %v5233
  %6117 = vst.msk [vmem:[%s3 + $0x40c] sm:$0xf] %vm5857, %v5234
  %6118 = vst.msk [vmem:[%s3 + $0x410] sm:$0xf] %vm5857, %v5235
  %6119 = vst.msk [vmem:[%s3 + $0x414] sm:$0xf] %vm5857, %v5236
  %6120 = vst.msk [vmem:[%s3 + $0x418] sm:$0xf] %vm5857, %v5237
  %6121 = vst.msk [vmem:[%s3 + $0x41c] sm:$0xf] %vm5857, %v5238
  %6122 = vst.msk [vmem:[%s3 + $0x420] sm:$0xf] %vm5857, %v5239
  %6123 = vst.msk [vmem:[%s3 + $0x424] sm:$0xf] %vm5857, %v5240
  %6124 = vst.msk [vmem:[%s3 + $0x428] sm:$0xf] %vm5857, %v5241
  %6125 = vst.msk [vmem:[%s3 + $0x42c] sm:$0xf] %vm5857, %v5242
  %6126 = vst.msk [vmem:[%s3 + $0x430] sm:$0xf] %vm5857, %v5243
  %6127 = vst.msk [vmem:[%s3 + $0x434] sm:$0xf] %vm5857, %v5244
  %6128 = vst.msk [vmem:[%s3 + $0x438] sm:$0xf] %vm5857, %v5245
  %6129 = vst.msk [vmem:[%s3 + $0x43c] sm:$0xf] %vm5857, %v5246
  %6130 = vst.msk [vmem:[%s3 + $0x440] sm:$0xf] %vm5857, %v5247
  %6131 = vst.msk [vmem:[%s3 + $0x444] sm:$0xf] %vm5857, %v5248
  %6132 = vst.msk [vmem:[%s3 + $0x448] sm:$0xf] %vm5857, %v5249
  %6133 = vst.msk [vmem:[%s3 + $0x44c] sm:$0xf] %vm5857, %v5250
  %6134 = vst.msk [vmem:[%s3 + $0x450] sm:$0xf] %vm5857, %v5251
  %6135 = vst.msk [vmem:[%s3 + $0x454] sm:$0xf] %vm5857, %v5252
  %6136 = vst.msk [vmem:[%s3 + $0x458] sm:$0xf] %vm5857, %v5253
  %6137 = vst.msk [vmem:[%s3 + $0x45c] sm:$0xf] %vm5857, %v5254
  %6138 = vst.msk [vmem:[%s3 + $0x460] sm:$0xf] %vm5857, %v5255
  %6139 = vst.msk [vmem:[%s3 + $0x464] sm:$0xf] %vm5857, %v5256
  %6140 = vst.msk [vmem:[%s3 + $0x468] sm:$0xf] %vm5857, %v5257
  %6141 = vst.msk [vmem:[%s3 + $0x46c] sm:$0xf] %vm5857, %v5258
  %6142 = vst.msk [vmem:[%s3 + $0x470] sm:$0xf] %vm5857, %v5259
  %6143 = vst.msk [vmem:[%s3 + $0x474] sm:$0xf] %vm5857, %v5260
  %6144 = vst.msk [vmem:[%s3 + $0x478] sm:$0xf] %vm5857, %v5261
  %6145 = vst.msk [vmem:[%s3 + $0x47c] sm:$0xf] %vm5857, %v5262
  %6146 = vst.msk [vmem:[%s3 + $0x480] sm:$0xf] %vm5857, %v5263
  %6147 = vst.msk [vmem:[%s3 + $0x484] sm:$0xf] %vm5857, %v5264
  %6148 = vst.msk [vmem:[%s3 + $0x488] sm:$0xf] %vm5857, %v5265
  %6149 = vst.msk [vmem:[%s3 + $0x48c] sm:$0xf] %vm5857, %v5266
  %6150 = vst.msk [vmem:[%s3 + $0x490] sm:$0xf] %vm5857, %v5267
  %6151 = vst.msk [vmem:[%s3 + $0x494] sm:$0xf] %vm5857, %v5268
  %6152 = vst.msk [vmem:[%s3 + $0x498] sm:$0xf] %vm5857, %v5269
  %6153 = vst.msk [vmem:[%s3 + $0x49c] sm:$0xf] %vm5857, %v5270
  %6154 = vst.msk [vmem:[%s3 + $0x4a0] sm:$0xf] %vm5857, %v5271
  %6155 = vst.msk [vmem:[%s3 + $0x4a4] sm:$0xf] %vm5857, %v5272
  %6156 = vst.msk [vmem:[%s3 + $0x4a8] sm:$0xf] %vm5857, %v5273
  %6157 = vst.msk [vmem:[%s3 + $0x4ac] sm:$0xf] %vm5857, %v5274
  %6158 = vst.msk [vmem:[%s3 + $0x4b0] sm:$0xf] %vm5857, %v5275
  %6159 = vst.msk [vmem:[%s3 + $0x4b4] sm:$0xf] %vm5857, %v5276
  %6160 = vst.msk [vmem:[%s3 + $0x4b8] sm:$0xf] %vm5857, %v5277
  %6161 = vst.msk [vmem:[%s3 + $0x4bc] sm:$0xf] %vm5857, %v5278
  %6162 = vst.msk [vmem:[%s3 + $0x4c0] sm:$0xf] %vm5857, %v5279
  %6163 = vst.msk [vmem:[%s3 + $0x4c4] sm:$0xf] %vm5857, %v5280
  %6164 = vst.msk [vmem:[%s3 + $0x4c8] sm:$0xf] %vm5857, %v5281
  %6165 = vst.msk [vmem:[%s3 + $0x4cc] sm:$0xf] %vm5857, %v5282
  %6166 = vst.msk [vmem:[%s3 + $0x4d0] sm:$0xf] %vm5857, %v5283
  %6167 = vst.msk [vmem:[%s3 + $0x4d4] sm:$0xf] %vm5857, %v5284
  %6168 = vst.msk [vmem:[%s3 + $0x4d8] sm:$0xf] %vm5857, %v5285
  %6169 = vst.msk [vmem:[%s3 + $0x4dc] sm:$0xf] %vm5857, %v5286
  %6170 = vst.msk [vmem:[%s3 + $0x4e0] sm:$0xf] %vm5857, %v5287
  %6171 = vst.msk [vmem:[%s3 + $0x4e4] sm:$0xf] %vm5857, %v5288
  %6172 = vst.msk [vmem:[%s3 + $0x4e8] sm:$0xf] %vm5857, %v5289
  %6173 = vst.msk [vmem:[%s3 + $0x4ec] sm:$0xf] %vm5857, %v5290
  %6174 = vst.msk [vmem:[%s3 + $0x4f0] sm:$0xf] %vm5857, %v5291
  %6175 = vst.msk [vmem:[%s3 + $0x4f4] sm:$0xf] %vm5857, %v5292
  %6176 = vst.msk [vmem:[%s3 + $0x4f8] sm:$0xf] %vm5857, %v5293
  %6177 = vst.msk [vmem:[%s3 + $0x4fc] sm:$0xf] %vm5857, %v5294
  %6178 = vst.msk [vmem:[%s3 + $0x500] sm:$0xf] %vm5857, %v5295
  %6179 = vst.msk [vmem:[%s3 + $0x504] sm:$0xf] %vm5857, %v5296
  %6180 = vst.msk [vmem:[%s3 + $0x508] sm:$0xf] %vm5857, %v5297
  %6181 = vst.msk [vmem:[%s3 + $0x50c] sm:$0xf] %vm5857, %v5298
  %6182 = vst.msk [vmem:[%s3 + $0x510] sm:$0xf] %vm5857, %v5299
  %6183 = vst.msk [vmem:[%s3 + $0x514] sm:$0xf] %vm5857, %v5300
  %6184 = vst.msk [vmem:[%s3 + $0x518] sm:$0xf] %vm5857, %v5301
  %6185 = vst.msk [vmem:[%s3 + $0x51c] sm:$0xf] %vm5857, %v5302
  %6186 = vst.msk [vmem:[%s3 + $0x520] sm:$0xf] %vm5857, %v5303
  %6187 = vst.msk [vmem:[%s3 + $0x524] sm:$0xf] %vm5857, %v5304
  %6188 = vst.msk [vmem:[%s3 + $0x528] sm:$0xf] %vm5857, %v5305
  %6189 = vst.msk [vmem:[%s3 + $0x52c] sm:$0xf] %vm5857, %v5306
  %6190 = vst.msk [vmem:[%s3 + $0x530] sm:$0xf] %vm5857, %v5307
  %6191 = vst.msk [vmem:[%s3 + $0x534] sm:$0xf] %vm5857, %v5308
  %6192 = vst.msk [vmem:[%s3 + $0x538] sm:$0xf] %vm5857, %v5309
  %6193 = vst.msk [vmem:[%s3 + $0x53c] sm:$0xf] %vm5857, %v5310
  %6194 = vst.msk [vmem:[%s3 + $0x540] sm:$0xf] %vm5857, %v5311
  %6195 = vst.msk [vmem:[%s3 + $0x544] sm:$0xf] %vm5857, %v5312
  %6196 = vst.msk [vmem:[%s3 + $0x548] sm:$0xf] %vm5857, %v5313
  %6197 = vst.msk [vmem:[%s3 + $0x54c] sm:$0xf] %vm5857, %v5314
  %6198 = vst.msk [vmem:[%s3 + $0x550] sm:$0xf] %vm5857, %v5315
  %6199 = vst.msk [vmem:[%s3 + $0x554] sm:$0xf] %vm5857, %v5316
  %6200 = vst.msk [vmem:[%s3 + $0x558] sm:$0xf] %vm5857, %v5317
  %6201 = vst.msk [vmem:[%s3 + $0x55c] sm:$0xf] %vm5857, %v5318
  %6202 = vst.msk [vmem:[%s3 + $0x560] sm:$0xf] %vm5857, %v5319
  %6203 = vst.msk [vmem:[%s3 + $0x564] sm:$0xf] %vm5857, %v5320
  %6204 = vst.msk [vmem:[%s3 + $0x568] sm:$0xf] %vm5857, %v5321
  %6205 = vst.msk [vmem:[%s3 + $0x56c] sm:$0xf] %vm5857, %v5322
  %6206 = vst.msk [vmem:[%s3 + $0x570] sm:$0xf] %vm5857, %v5323
  %6207 = vst.msk [vmem:[%s3 + $0x574] sm:$0xf] %vm5857, %v5324
  %6208 = vst.msk [vmem:[%s3 + $0x578] sm:$0xf] %vm5857, %v5325
  %6209 = vst.msk [vmem:[%s3 + $0x57c] sm:$0xf] %vm5857, %v5326
  %6210 = vst.msk [vmem:[%s3 + $0x580] sm:$0xf] %vm5857, %v5327
  %6211 = vst.msk [vmem:[%s3 + $0x584] sm:$0xf] %vm5857, %v5328
  %6212 = vst.msk [vmem:[%s3 + $0x588] sm:$0xf] %vm5857, %v5329
  %6213 = vst.msk [vmem:[%s3 + $0x58c] sm:$0xf] %vm5857, %v5330
  %6214 = vst.msk [vmem:[%s3 + $0x590] sm:$0xf] %vm5857, %v5331
  %6215 = vst.msk [vmem:[%s3 + $0x594] sm:$0xf] %vm5857, %v5332
  %6216 = vst.msk [vmem:[%s3 + $0x598] sm:$0xf] %vm5857, %v5333
  %6217 = vst.msk [vmem:[%s3 + $0x59c] sm:$0xf] %vm5857, %v5334
  %6218 = vst.msk [vmem:[%s3 + $0x5a0] sm:$0xf] %vm5857, %v5335
  %6219 = vst.msk [vmem:[%s3 + $0x5a4] sm:$0xf] %vm5857, %v5336
  %6220 = vst.msk [vmem:[%s3 + $0x5a8] sm:$0xf] %vm5857, %v5337
  %6221 = vst.msk [vmem:[%s3 + $0x5ac] sm:$0xf] %vm5857, %v5338
  %6222 = vst.msk [vmem:[%s3 + $0x5b0] sm:$0xf] %vm5857, %v5339
  %6223 = vst.msk [vmem:[%s3 + $0x5b4] sm:$0xf] %vm5857, %v5340
  %6224 = vst.msk [vmem:[%s3 + $0x5b8] sm:$0xf] %vm5857, %v5341
  %6225 = vst.msk [vmem:[%s3 + $0x5bc] sm:$0xf] %vm5857, %v5342
  %6226 = vst.msk [vmem:[%s3 + $0x5c0] sm:$0xf] %vm5857, %v5343
  %6227 = vst.msk [vmem:[%s3 + $0x5c4] sm:$0xf] %vm5857, %v5344
  %6228 = vst.msk [vmem:[%s3 + $0x5c8] sm:$0xf] %vm5857, %v5345
  %6229 = vst.msk [vmem:[%s3 + $0x5cc] sm:$0xf] %vm5857, %v5346
  %6230 = vst.msk [vmem:[%s3 + $0x5d0] sm:$0xf] %vm5857, %v5347
  %6231 = vst.msk [vmem:[%s3 + $0x5d4] sm:$0xf] %vm5857, %v5348
  %6232 = vst.msk [vmem:[%s3 + $0x5d8] sm:$0xf] %vm5857, %v5349
  %6233 = vst.msk [vmem:[%s3 + $0x5dc] sm:$0xf] %vm5857, %v5350
  %6234 = vst.msk [vmem:[%s3 + $0x5e0] sm:$0xf] %vm5857, %v5351
  %6235 = vst.msk [vmem:[%s3 + $0x5e4] sm:$0xf] %vm5857, %v5352
  %6236 = vst.msk [vmem:[%s3 + $0x5e8] sm:$0xf] %vm5857, %v5353
  %6237 = vst.msk [vmem:[%s3 + $0x5ec] sm:$0xf] %vm5857, %v5354
  %6238 = vst.msk [vmem:[%s3 + $0x5f0] sm:$0xf] %vm5857, %v5355
  %6239 = vst.msk [vmem:[%s3 + $0x5f4] sm:$0xf] %vm5857, %v5356
  %6240 = vst.msk [vmem:[%s3 + $0x5f8] sm:$0xf] %vm5857, %v5357
  %6241 = vst.msk [vmem:[%s3 + $0x5fc] sm:$0xf] %vm5857, %v5358
  %6242 = vst.msk [vmem:[%s3 + $0x600] sm:$0xf] %vm5857, %v5359
  %6243 = vst.msk [vmem:[%s3 + $0x604] sm:$0xf] %vm5857, %v5360
  %6244 = vst.msk [vmem:[%s3 + $0x608] sm:$0xf] %vm5857, %v5361
  %6245 = vst.msk [vmem:[%s3 + $0x60c] sm:$0xf] %vm5857, %v5362
  %6246 = vst.msk [vmem:[%s3 + $0x610] sm:$0xf] %vm5857, %v5363
  %6247 = vst.msk [vmem:[%s3 + $0x614] sm:$0xf] %vm5857, %v5364
  %6248 = vst.msk [vmem:[%s3 + $0x618] sm:$0xf] %vm5857, %v5365
  %6249 = vst.msk [vmem:[%s3 + $0x61c] sm:$0xf] %vm5857, %v5366
  %6250 = vst.msk [vmem:[%s3 + $0x620] sm:$0xf] %vm5857, %v5367
  %6251 = vst.msk [vmem:[%s3 + $0x624] sm:$0xf] %vm5857, %v5368
  %6252 = vst.msk [vmem:[%s3 + $0x628] sm:$0xf] %vm5857, %v5369
  %6253 = vst.msk [vmem:[%s3 + $0x62c] sm:$0xf] %vm5857, %v5370
  %6254 = vst.msk [vmem:[%s3 + $0x630] sm:$0xf] %vm5857, %v5371
  %6255 = vst.msk [vmem:[%s3 + $0x634] sm:$0xf] %vm5857, %v5372
  %6256 = vst.msk [vmem:[%s3 + $0x638] sm:$0xf] %vm5857, %v5373
  %6257 = vst.msk [vmem:[%s3 + $0x63c] sm:$0xf] %vm5857, %v5374
  %6258 = vst.msk [vmem:[%s3 + $0x640] sm:$0xf] %vm5857, %v5375
  %6259 = vst.msk [vmem:[%s3 + $0x644] sm:$0xf] %vm5857, %v5376
  %6260 = vst.msk [vmem:[%s3 + $0x648] sm:$0xf] %vm5857, %v5377
  %6261 = vst.msk [vmem:[%s3 + $0x64c] sm:$0xf] %vm5857, %v5378
  %6262 = vst.msk [vmem:[%s3 + $0x650] sm:$0xf] %vm5857, %v5379
  %6263 = vst.msk [vmem:[%s3 + $0x654] sm:$0xf] %vm5857, %v5380
  %6264 = vst.msk [vmem:[%s3 + $0x658] sm:$0xf] %vm5857, %v5381
  %6265 = vst.msk [vmem:[%s3 + $0x65c] sm:$0xf] %vm5857, %v5382
  %6266 = vst.msk [vmem:[%s3 + $0x660] sm:$0xf] %vm5857, %v5383
  %6267 = vst.msk [vmem:[%s3 + $0x664] sm:$0xf] %vm5857, %v5384
  %6268 = vst.msk [vmem:[%s3 + $0x668] sm:$0xf] %vm5857, %v5385
  %6269 = vst.msk [vmem:[%s3 + $0x66c] sm:$0xf] %vm5857, %v5386
  %6270 = vst.msk [vmem:[%s3 + $0x670] sm:$0xf] %vm5857, %v5387
  %6271 = vst.msk [vmem:[%s3 + $0x674] sm:$0xf] %vm5857, %v5388
  %6272 = vst.msk [vmem:[%s3 + $0x678] sm:$0xf] %vm5857, %v5389
  %6273 = vst.msk [vmem:[%s3 + $0x67c] sm:$0xf] %vm5857, %v5390
  %6274 = vst.msk [vmem:[%s3 + $0x680] sm:$0xf] %vm5857, %v5391
  %6275 = vst.msk [vmem:[%s3 + $0x684] sm:$0xf] %vm5857, %v5392
  %6276 = vst.msk [vmem:[%s3 + $0x688] sm:$0xf] %vm5857, %v5393
  %6277 = vst.msk [vmem:[%s3 + $0x68c] sm:$0xf] %vm5857, %v5394
  %6278 = vst.msk [vmem:[%s3 + $0x690] sm:$0xf] %vm5857, %v5395
  %6279 = vst.msk [vmem:[%s3 + $0x694] sm:$0xf] %vm5857, %v5396
  %6280 = vst.msk [vmem:[%s3 + $0x698] sm:$0xf] %vm5857, %v5397
  %6281 = vst.msk [vmem:[%s3 + $0x69c] sm:$0xf] %vm5857, %v5398
  %6282 = vst.msk [vmem:[%s3 + $0x6a0] sm:$0xf] %vm5857, %v5399
  %6283 = vst.msk [vmem:[%s3 + $0x6a4] sm:$0xf] %vm5857, %v5400
  %6284 = vst.msk [vmem:[%s3 + $0x6a8] sm:$0xf] %vm5857, %v5401
  %6285 = vst.msk [vmem:[%s3 + $0x6ac] sm:$0xf] %vm5857, %v5402
  %6286 = vst.msk [vmem:[%s3 + $0x6b0] sm:$0xf] %vm5857, %v5403
  %6287 = vst.msk [vmem:[%s3 + $0x6b4] sm:$0xf] %vm5857, %v5404
  %6288 = vst.msk [vmem:[%s3 + $0x6b8] sm:$0xf] %vm5857, %v5405
  %6289 = vst.msk [vmem:[%s3 + $0x6bc] sm:$0xf] %vm5857, %v5406
  %6290 = vst.msk [vmem:[%s3 + $0x6c0] sm:$0xf] %vm5857, %v5407
  %6291 = vst.msk [vmem:[%s3 + $0x6c4] sm:$0xf] %vm5857, %v5408
  %6292 = vst.msk [vmem:[%s3 + $0x6c8] sm:$0xf] %vm5857, %v5409
  %6293 = vst.msk [vmem:[%s3 + $0x6cc] sm:$0xf] %vm5857, %v5410
  %6294 = vst.msk [vmem:[%s3 + $0x6d0] sm:$0xf] %vm5857, %v5411
  %6295 = vst.msk [vmem:[%s3 + $0x6d4] sm:$0xf] %vm5857, %v5412
  %6296 = vst.msk [vmem:[%s3 + $0x6d8] sm:$0xf] %vm5857, %v5413
  %6297 = vst.msk [vmem:[%s3 + $0x6dc] sm:$0xf] %vm5857, %v5414
  %6298 = vst.msk [vmem:[%s3 + $0x6e0] sm:$0xf] %vm5857, %v5415
  // Predicated region
  $region14: #{ppo_agent_forward.5} parent=0 // pred_check
    _
  $region15: #{ppo_agent_forward.5} parent=0 // pred_check_branch
    %6300 = sbr.rel (0) target = $region17
  $region16: #{ppo_agent_forward.5} parent=0 // pred_region
    _
  $region17: #{ppo_agent_forward.5} parent=0 // pred_fallthru
    _
  // Predicated region
  $region18: #{ppo_agent_forward.5} parent=0 // pred_check
    _
  $region19: #{ppo_agent_forward.5} parent=0 // pred_check_branch
    %6302 = sbr.rel (0) target = $region21
  $region20: #{ppo_agent_forward.5} parent=0 // pred_region
    _
  $region21: #{ppo_agent_forward.5} parent=0 // pred_fallthru
    _

// kernel: ppo_agent_forward.6
$region0: #{ppo_agent_forward.6}
  #allocation0 [shape = 'u32[]', space=smem, size = 0x4, offset = 0x4, fixed_abs, tag = 'smem constant byte address 0x4 - core index']
  #allocation1 [shape = 'u32[144,128]{1,0:T(1,128)}', space=vmem, size = 0x12000, scoped, tag = 'internal scratch']
  %s0 = inlined_call_operand.vmem [shape: bf16[882,288], index: 0, kind: input, shape index: {}]
  %s1 = inlined_call_operand.vmem [shape: bf16[288,32], index: 1, kind: input, shape index: {}]
  %s2 = inlined_call_operand.vmem [shape: f32[1,32], index: 2, kind: input, shape index: {}]
  %s3 = inlined_call_operand.vmem [shape: bf16[882,32], index: 3, kind: output, shape index: {}]
  %s4 = sld [smem:[#allocation0]]
  $region22: #{ppo_agent_forward.6} parent=0
    _
  %s6 = ssub.s32 1, %s4
  %s7 = scalar_select 0, %s6, %s4
  // Predicated region
  $region2: #{ppo_agent_forward.6} parent=0 // pred_check
    _
  $region3: #{ppo_agent_forward.6} parent=0 // pred_check_branch
    %9 = sbr.rel (0) target = $region5
  $region4: #{ppo_agent_forward.6} parent=0 // pred_region
    _
  $region5: #{ppo_agent_forward.6} parent=0 // pred_fallthru
    _
  // Predicated region
  $region6: #{ppo_agent_forward.6} parent=0 // pred_check
    _
  $region7: #{ppo_agent_forward.6} parent=0 // pred_check_branch
    %11 = sbr.rel (0) target = $region9
  $region8: #{ppo_agent_forward.6} parent=0 // pred_region
    _
  $region9: #{ppo_agent_forward.6} parent=0 // pred_fallthru
    _
  // Predicated region
  $region10: #{ppo_agent_forward.6} parent=0 // pred_check
    _
  $region11: #{ppo_agent_forward.6} parent=0 // pred_check_branch
    %13 = sbr.rel (0) target = $region13
  $region12: #{ppo_agent_forward.6} parent=0 // pred_region
    _
  $region13: #{ppo_agent_forward.6} parent=0 // pred_fallthru
    _
  %v15 = vld [vmem:[%s0] sm:$0xff]
  %v16 = vld [vmem:[%s0 + $0x8] sm:$0xf]
  %v17 = vld [vmem:[%s0 + $0xc] sm:$0xff]
  %v18 = vld [vmem:[%s0 + $0x14] sm:$0xf]
  %v19 = vld [vmem:[%s0 + $0x18] sm:$0xff]
  %v20 = vld [vmem:[%s0 + $0x20] sm:$0xf]
  %v21 = vld [vmem:[%s0 + $0x24] sm:$0xff]
  %v22 = vld [vmem:[%s0 + $0x2c] sm:$0xf]
  %v23 = vld [vmem:[%s0 + $0x30] sm:$0xff]
  %v24 = vld [vmem:[%s0 + $0x38] sm:$0xf]
  %v25 = vld [vmem:[%s0 + $0x3c] sm:$0xff]
  %v26 = vld [vmem:[%s0 + $0x44] sm:$0xf]
  %v27 = vld [vmem:[%s0 + $0x48] sm:$0xff]
  %v28 = vld [vmem:[%s0 + $0x50] sm:$0xf]
  %v29 = vld [vmem:[%s0 + $0x54] sm:$0xff]
  %v30 = vld [vmem:[%s0 + $0x5c] sm:$0xf]
  %v31 = vld [vmem:[%s0 + $0x60] sm:$0xff]
  %v32 = vld [vmem:[%s0 + $0x68] sm:$0xf]
  %v33 = vld [vmem:[%s0 + $0x6c] sm:$0xff]
  %v34 = vld [vmem:[%s0 + $0x74] sm:$0xf]
  %v35 = vld [vmem:[%s0 + $0x78] sm:$0xff]
  %v36 = vld [vmem:[%s0 + $0x80] sm:$0xf]
  %v37 = vld [vmem:[%s0 + $0x84] sm:$0xff]
  %v38 = vld [vmem:[%s0 + $0x8c] sm:$0xf]
  %v39 = vld [vmem:[%s0 + $0x90] sm:$0xff]
  %v40 = vld [vmem:[%s0 + $0x98] sm:$0xf]
  %v41 = vld [vmem:[%s0 + $0x9c] sm:$0xff]
  %v42 = vld [vmem:[%s0 + $0xa4] sm:$0xf]
  %v43 = vld [vmem:[%s0 + $0xa8] sm:$0xff]
  %v44 = vld [vmem:[%s0 + $0xb0] sm:$0xf]
  %v45 = vld [vmem:[%s0 + $0xb4] sm:$0xff]
  %v46 = vld [vmem:[%s0 + $0xbc] sm:$0xf]
  %v47 = vld [vmem:[%s0 + $0xc0] sm:$0xff]
  %v48 = vld [vmem:[%s0 + $0xc8] sm:$0xf]
  %v49 = vld [vmem:[%s0 + $0xcc] sm:$0xff]
  %v50 = vld [vmem:[%s0 + $0xd4] sm:$0xf]
  %v51 = vld [vmem:[%s0 + $0xd8] sm:$0xff]
  %v52 = vld [vmem:[%s0 + $0xe0] sm:$0xf]
  %v53 = vld [vmem:[%s0 + $0xe4] sm:$0xff]
  %v54 = vld [vmem:[%s0 + $0xec] sm:$0xf]
  %v55 = vld [vmem:[%s0 + $0xf0] sm:$0xff]
  %v56 = vld [vmem:[%s0 + $0xf8] sm:$0xf]
  %v57 = vld [vmem:[%s0 + $0xfc] sm:$0xff]
  %v58 = vld [vmem:[%s0 + $0x104] sm:$0xf]
  %v59 = vld [vmem:[%s0 + $0x108] sm:$0xff]
  %v60 = vld [vmem:[%s0 + $0x110] sm:$0xf]
  %v61 = vld [vmem:[%s0 + $0x114] sm:$0xff]
  %v62 = vld [vmem:[%s0 + $0x11c] sm:$0xf]
  %v63 = vld [vmem:[%s0 + $0x120] sm:$0xff]
  %v64 = vld [vmem:[%s0 + $0x128] sm:$0xf]
  %v65 = vld [vmem:[%s0 + $0x12c] sm:$0xff]
  %v66 = vld [vmem:[%s0 + $0x134] sm:$0xf]
  %v67 = vld [vmem:[%s0 + $0x138] sm:$0xff]
  %v68 = vld [vmem:[%s0 + $0x140] sm:$0xf]
  %v69 = vld [vmem:[%s0 + $0x144] sm:$0xff]
  %v70 = vld [vmem:[%s0 + $0x14c] sm:$0xf]
  %v71 = vld [vmem:[%s0 + $0x150] sm:$0xff]
  %v72 = vld [vmem:[%s0 + $0x158] sm:$0xf]
  %v73 = vld [vmem:[%s0 + $0x15c] sm:$0xff]
  %v74 = vld [vmem:[%s0 + $0x164] sm:$0xf]
  %v75 = vld [vmem:[%s0 + $0x168] sm:$0xff]
  %v76 = vld [vmem:[%s0 + $0x170] sm:$0xf]
  %v77 = vld [vmem:[%s0 + $0x174] sm:$0xff]
  %v78 = vld [vmem:[%s0 + $0x17c] sm:$0xf]
  %v79 = vld [vmem:[%s0 + $0x180] sm:$0xff]
  %v80 = vld [vmem:[%s0 + $0x188] sm:$0xf]
  %v81 = vld [vmem:[%s0 + $0x18c] sm:$0xff]
  %v82 = vld [vmem:[%s0 + $0x194] sm:$0xf]
  %v83 = vld [vmem:[%s0 + $0x198] sm:$0xff]
  %v84 = vld [vmem:[%s0 + $0x1a0] sm:$0xf]
  %v85 = vld [vmem:[%s0 + $0x1a4] sm:$0xff]
  %v86 = vld [vmem:[%s0 + $0x1ac] sm:$0xf]
  %v87 = vld [vmem:[%s0 + $0x1b0] sm:$0xff]
  %v88 = vld [vmem:[%s0 + $0x1b8] sm:$0xf]
  %v89 = vld [vmem:[%s0 + $0x1bc] sm:$0xff]
  %v90 = vld [vmem:[%s0 + $0x1c4] sm:$0xf]
  %v91 = vld [vmem:[%s0 + $0x1c8] sm:$0xff]
  %v92 = vld [vmem:[%s0 + $0x1d0] sm:$0xf]
  %v93 = vld [vmem:[%s0 + $0x1d4] sm:$0xff]
  %v94 = vld [vmem:[%s0 + $0x1dc] sm:$0xf]
  %v95 = vld [vmem:[%s0 + $0x1e0] sm:$0xff]
  %v96 = vld [vmem:[%s0 + $0x1e8] sm:$0xf]
  %v97 = vld [vmem:[%s0 + $0x1ec] sm:$0xff]
  %v98 = vld [vmem:[%s0 + $0x1f4] sm:$0xf]
  %v99 = vld [vmem:[%s0 + $0x1f8] sm:$0xff]
  %v100 = vld [vmem:[%s0 + $0x200] sm:$0xf]
  %v101 = vld [vmem:[%s0 + $0x204] sm:$0xff]
  %v102 = vld [vmem:[%s0 + $0x20c] sm:$0xf]
  %v103 = vld [vmem:[%s0 + $0x210] sm:$0xff]
  %v104 = vld [vmem:[%s0 + $0x218] sm:$0xf]
  %v105 = vld [vmem:[%s0 + $0x21c] sm:$0xff]
  %v106 = vld [vmem:[%s0 + $0x224] sm:$0xf]
  %v107 = vld [vmem:[%s0 + $0x228] sm:$0xff]
  %v108 = vld [vmem:[%s0 + $0x230] sm:$0xf]
  %v109 = vld [vmem:[%s0 + $0x234] sm:$0xff]
  %v110 = vld [vmem:[%s0 + $0x23c] sm:$0xf]
  %v111 = vld [vmem:[%s0 + $0x240] sm:$0xff]
  %v112 = vld [vmem:[%s0 + $0x248] sm:$0xf]
  %v113 = vld [vmem:[%s0 + $0x24c] sm:$0xff]
  %v114 = vld [vmem:[%s0 + $0x254] sm:$0xf]
  %v115 = vld [vmem:[%s0 + $0x258] sm:$0xff]
  %v116 = vld [vmem:[%s0 + $0x260] sm:$0xf]
  %v117 = vld [vmem:[%s0 + $0x264] sm:$0xff]
  %v118 = vld [vmem:[%s0 + $0x26c] sm:$0xf]
  %v119 = vld [vmem:[%s0 + $0x270] sm:$0xff]
  %v120 = vld [vmem:[%s0 + $0x278] sm:$0xf]
  %v121 = vld [vmem:[%s0 + $0x27c] sm:$0xff]
  %v122 = vld [vmem:[%s0 + $0x284] sm:$0xf]
  %v123 = vld [vmem:[%s0 + $0x288] sm:$0xff]
  %v124 = vld [vmem:[%s0 + $0x290] sm:$0xf]
  %v125 = vld [vmem:[%s0 + $0x294] sm:$0xff]
  %v126 = vld [vmem:[%s0 + $0x29c] sm:$0xf]
  %v127 = vld [vmem:[%s0 + $0x2a0] sm:$0xff]
  %v128 = vld [vmem:[%s0 + $0x2a8] sm:$0xf]
  %v129 = vld [vmem:[%s0 + $0x2ac] sm:$0xff]
  %v130 = vld [vmem:[%s0 + $0x2b4] sm:$0xf]
  %v131 = vld [vmem:[%s0 + $0x2b8] sm:$0xff]
  %v132 = vld [vmem:[%s0 + $0x2c0] sm:$0xf]
  %v133 = vld [vmem:[%s0 + $0x2c4] sm:$0xff]
  %v134 = vld [vmem:[%s0 + $0x2cc] sm:$0xf]
  %v135 = vld [vmem:[%s0 + $0x2d0] sm:$0xff]
  %v136 = vld [vmem:[%s0 + $0x2d8] sm:$0xf]
  %v137 = vld [vmem:[%s0 + $0x2dc] sm:$0xff]
  %v138 = vld [vmem:[%s0 + $0x2e4] sm:$0xf]
  %v139 = vld [vmem:[%s0 + $0x2e8] sm:$0xff]
  %v140 = vld [vmem:[%s0 + $0x2f0] sm:$0xf]
  %v141 = vld [vmem:[%s0 + $0x2f4] sm:$0xff]
  %v142 = vld [vmem:[%s0 + $0x2fc] sm:$0xf]
  %v143 = vld [vmem:[%s0 + $0x300] sm:$0xff]
  %v144 = vld [vmem:[%s0 + $0x308] sm:$0xf]
  %v145 = vld [vmem:[%s0 + $0x30c] sm:$0xff]
  %v146 = vld [vmem:[%s0 + $0x314] sm:$0xf]
  %v147 = vld [vmem:[%s0 + $0x318] sm:$0xff]
  %v148 = vld [vmem:[%s0 + $0x320] sm:$0xf]
  %v149 = vld [vmem:[%s0 + $0x324] sm:$0xff]
  %v150 = vld [vmem:[%s0 + $0x32c] sm:$0xf]
  %v151 = vld [vmem:[%s0 + $0x330] sm:$0xff]
  %v152 = vld [vmem:[%s0 + $0x338] sm:$0xf]
  %v153 = vld [vmem:[%s0 + $0x33c] sm:$0xff]
  %v154 = vld [vmem:[%s0 + $0x344] sm:$0xf]
  %v155 = vld [vmem:[%s0 + $0x348] sm:$0xff]
  %v156 = vld [vmem:[%s0 + $0x350] sm:$0xf]
  %v157 = vld [vmem:[%s0 + $0x354] sm:$0xff]
  %v158 = vld [vmem:[%s0 + $0x35c] sm:$0xf]
  %v159 = vld [vmem:[%s0 + $0x360] sm:$0xff]
  %v160 = vld [vmem:[%s0 + $0x368] sm:$0xf]
  %v161 = vld [vmem:[%s0 + $0x36c] sm:$0xff]
  %v162 = vld [vmem:[%s0 + $0x374] sm:$0xf]
  %v163 = vld [vmem:[%s0 + $0x378] sm:$0xff]
  %v164 = vld [vmem:[%s0 + $0x380] sm:$0xf]
  %v165 = vld [vmem:[%s0 + $0x384] sm:$0xff]
  %v166 = vld [vmem:[%s0 + $0x38c] sm:$0xf]
  %v167 = vld [vmem:[%s0 + $0x390] sm:$0xff]
  %v168 = vld [vmem:[%s0 + $0x398] sm:$0xf]
  %v169 = vld [vmem:[%s0 + $0x39c] sm:$0xff]
  %v170 = vld [vmem:[%s0 + $0x3a4] sm:$0xf]
  %v171 = vld [vmem:[%s0 + $0x3a8] sm:$0xff]
  %v172 = vld [vmem:[%s0 + $0x3b0] sm:$0xf]
  %v173 = vld [vmem:[%s0 + $0x3b4] sm:$0xff]
  %v174 = vld [vmem:[%s0 + $0x3bc] sm:$0xf]
  %v175 = vld [vmem:[%s0 + $0x3c0] sm:$0xff]
  %v176 = vld [vmem:[%s0 + $0x3c8] sm:$0xf]
  %v177 = vld [vmem:[%s0 + $0x3cc] sm:$0xff]
  %v178 = vld [vmem:[%s0 + $0x3d4] sm:$0xf]
  %v179 = vld [vmem:[%s0 + $0x3d8] sm:$0xff]
  %v180 = vld [vmem:[%s0 + $0x3e0] sm:$0xf]
  %v181 = vld [vmem:[%s0 + $0x3e4] sm:$0xff]
  %v182 = vld [vmem:[%s0 + $0x3ec] sm:$0xf]
  %v183 = vld [vmem:[%s0 + $0x3f0] sm:$0xff]
  %v184 = vld [vmem:[%s0 + $0x3f8] sm:$0xf]
  %v185 = vld [vmem:[%s0 + $0x3fc] sm:$0xff]
  %v186 = vld [vmem:[%s0 + $0x404] sm:$0xf]
  %v187 = vld [vmem:[%s0 + $0x408] sm:$0xff]
  %v188 = vld [vmem:[%s0 + $0x410] sm:$0xf]
  %v189 = vld [vmem:[%s0 + $0x414] sm:$0xff]
  %v190 = vld [vmem:[%s0 + $0x41c] sm:$0xf]
  %v191 = vld [vmem:[%s0 + $0x420] sm:$0xff]
  %v192 = vld [vmem:[%s0 + $0x428] sm:$0xf]
  %v193 = vld [vmem:[%s0 + $0x42c] sm:$0xff]
  %v194 = vld [vmem:[%s0 + $0x434] sm:$0xf]
  %v195 = vld [vmem:[%s0 + $0x438] sm:$0xff]
  %v196 = vld [vmem:[%s0 + $0x440] sm:$0xf]
  %v197 = vld [vmem:[%s0 + $0x444] sm:$0xff]
  %v198 = vld [vmem:[%s0 + $0x44c] sm:$0xf]
  %v199 = vld [vmem:[%s0 + $0x450] sm:$0xff]
  %v200 = vld [vmem:[%s0 + $0x458] sm:$0xf]
  %v201 = vld [vmem:[%s0 + $0x45c] sm:$0xff]
  %v202 = vld [vmem:[%s0 + $0x464] sm:$0xf]
  %v203 = vld [vmem:[%s0 + $0x468] sm:$0xff]
  %v204 = vld [vmem:[%s0 + $0x470] sm:$0xf]
  %v205 = vld [vmem:[%s0 + $0x474] sm:$0xff]
  %v206 = vld [vmem:[%s0 + $0x47c] sm:$0xf]
  %v207 = vld [vmem:[%s0 + $0x480] sm:$0xff]
  %v208 = vld [vmem:[%s0 + $0x488] sm:$0xf]
  %v209 = vld [vmem:[%s0 + $0x48c] sm:$0xff]
  %v210 = vld [vmem:[%s0 + $0x494] sm:$0xf]
  %v211 = vld [vmem:[%s0 + $0x498] sm:$0xff]
  %v212 = vld [vmem:[%s0 + $0x4a0] sm:$0xf]
  %v213 = vld [vmem:[%s0 + $0x4a4] sm:$0xff]
  %v214 = vld [vmem:[%s0 + $0x4ac] sm:$0xf]
  %v215 = vld [vmem:[%s0 + $0x4b0] sm:$0xff]
  %v216 = vld [vmem:[%s0 + $0x4b8] sm:$0xf]
  %v217 = vld [vmem:[%s0 + $0x4bc] sm:$0xff]
  %v218 = vld [vmem:[%s0 + $0x4c4] sm:$0xf]
  %v219 = vld [vmem:[%s0 + $0x4c8] sm:$0xff]
  %v220 = vld [vmem:[%s0 + $0x4d0] sm:$0xf]
  %v221 = vld [vmem:[%s0 + $0x4d4] sm:$0xff]
  %v222 = vld [vmem:[%s0 + $0x4dc] sm:$0xf]
  %v223 = vld [vmem:[%s0 + $0x4e0] sm:$0xff]
  %v224 = vld [vmem:[%s0 + $0x4e8] sm:$0xf]
  %v225 = vld [vmem:[%s0 + $0x4ec] sm:$0xff]
  %v226 = vld [vmem:[%s0 + $0x4f4] sm:$0xf]
  %v227 = vld [vmem:[%s0 + $0x4f8] sm:$0xff]
  %v228 = vld [vmem:[%s0 + $0x500] sm:$0xf]
  %v229 = vld [vmem:[%s0 + $0x504] sm:$0xff]
  %v230 = vld [vmem:[%s0 + $0x50c] sm:$0xf]
  %v231 = vld [vmem:[%s0 + $0x510] sm:$0xff]
  %v232 = vld [vmem:[%s0 + $0x518] sm:$0xf]
  %v233 = vld [vmem:[%s0 + $0x51c] sm:$0xff]
  %v234 = vld [vmem:[%s0 + $0x524] sm:$0xf]
  %v235 = vld [vmem:[%s0 + $0x528] sm:$0x11]
  %v236 = vld [vmem:[%s0 + $0x530] sm:$0x1]
  %v237 = vld [vmem:[%s1] sm:$0xf]
  %v238 = vld [vmem:[%s1 + $0x4] sm:$0xf]
  %v239 = vld [vmem:[%s1 + $0x8] sm:$0xf]
  %v240 = vld [vmem:[%s1 + $0xc] sm:$0xf]
  %v241 = vld [vmem:[%s1 + $0x10] sm:$0xf]
  %v242 = vld [vmem:[%s1 + $0x14] sm:$0xf]
  %v243 = vld [vmem:[%s1 + $0x18] sm:$0xf]
  %v244 = vld [vmem:[%s1 + $0x1c] sm:$0xf]
  %v245 = vld [vmem:[%s1 + $0x20] sm:$0xf]
  %v246 = vld [vmem:[%s1 + $0x24] sm:$0xf]
  %v247 = vld [vmem:[%s1 + $0x28] sm:$0xf]
  %v248 = vld [vmem:[%s1 + $0x2c] sm:$0xf]
  %v249 = vld [vmem:[%s1 + $0x30] sm:$0xf]
  %v250 = vld [vmem:[%s1 + $0x34] sm:$0xf]
  %v251 = vld [vmem:[%s1 + $0x38] sm:$0xf]
  %v252 = vld [vmem:[%s1 + $0x3c] sm:$0xf]
  %v253 = vld [vmem:[%s1 + $0x40] sm:$0xf]
  %v254 = vld [vmem:[%s1 + $0x44] sm:$0xf]
  %v255 = vld [vmem:[%s1 + $0x48] sm:$0xf]
  %v256 = vld [vmem:[%s1 + $0x4c] sm:$0xf]
  %v257 = vld [vmem:[%s1 + $0x50] sm:$0xf]
  %v258 = vld [vmem:[%s1 + $0x54] sm:$0xf]
  %v259 = vld [vmem:[%s1 + $0x58] sm:$0xf]
  %v260 = vld [vmem:[%s1 + $0x5c] sm:$0xf]
  %v261 = vld [vmem:[%s1 + $0x60] sm:$0xf]
  %v262 = vld [vmem:[%s1 + $0x64] sm:$0xf]
  %v263 = vld [vmem:[%s1 + $0x68] sm:$0xf]
  %v264 = vld [vmem:[%s1 + $0x6c] sm:$0xf]
  %v265 = vld [vmem:[%s1 + $0x70] sm:$0xf]
  %v266 = vld [vmem:[%s1 + $0x74] sm:$0xf]
  %v267 = vld [vmem:[%s1 + $0x78] sm:$0xf]
  %v268 = vld [vmem:[%s1 + $0x7c] sm:$0xf]
  %v269 = vld [vmem:[%s1 + $0x80] sm:$0xf]
  %v270 = vld [vmem:[%s1 + $0x84] sm:$0xf]
  %v271 = vld [vmem:[%s1 + $0x88] sm:$0xf]
  %v272 = vld [vmem:[%s1 + $0x8c] sm:$0xf]
  %v273 = vld [vmem:[%s2] sm:$0x1]
  %v275 = vlaneseq
  %v276 = vshrl.u32 %v275, 7
  %v277 = vsub.s32 0, %v276
  %v278 = vrot.slane %v273, %v277
  %v502 = vunpack.c.l.b16 %v15
  %v503 = vunpack.c.h.b16 %v15
  %v504 = vunpack.c.l.b16 %v16
  %v505 = vunpack.c.l.b16 %v17
  %v506 = vunpack.c.h.b16 %v17
  %v507 = vunpack.c.l.b16 %v18
  %v508 = vunpack.c.l.b16 %v19
  %v509 = vunpack.c.h.b16 %v19
  %v510 = vunpack.c.l.b16 %v20
  %v511 = vunpack.c.l.b16 %v21
  %v512 = vunpack.c.h.b16 %v21
  %v513 = vunpack.c.l.b16 %v22
  %v514 = vunpack.c.l.b16 %v23
  %v515 = vunpack.c.h.b16 %v23
  %v516 = vunpack.c.l.b16 %v24
  %v517 = vunpack.c.l.b16 %v25
  %v518 = vunpack.c.h.b16 %v25
  %v519 = vunpack.c.l.b16 %v26
  %v520 = vunpack.c.l.b16 %v27
  %v521 = vunpack.c.h.b16 %v27
  %v522 = vunpack.c.l.b16 %v28
  %v523 = vunpack.c.l.b16 %v29
  %v524 = vunpack.c.h.b16 %v29
  %v525 = vunpack.c.l.b16 %v30
  %v526 = vunpack.c.l.b16 %v31
  %v527 = vunpack.c.h.b16 %v31
  %v528 = vunpack.c.l.b16 %v32
  %v529 = vunpack.c.l.b16 %v33
  %v530 = vunpack.c.h.b16 %v33
  %v531 = vunpack.c.l.b16 %v34
  %v532 = vunpack.c.l.b16 %v35
  %v533 = vunpack.c.h.b16 %v35
  %v534 = vunpack.c.l.b16 %v36
  %v535 = vunpack.c.l.b16 %v37
  %v536 = vunpack.c.h.b16 %v37
  %v537 = vunpack.c.l.b16 %v38
  %v538 = vunpack.c.l.b16 %v39
  %v539 = vunpack.c.h.b16 %v39
  %v540 = vunpack.c.l.b16 %v40
  %v541 = vunpack.c.l.b16 %v41
  %v542 = vunpack.c.h.b16 %v41
  %v543 = vunpack.c.l.b16 %v42
  %v544 = vunpack.c.l.b16 %v43
  %v545 = vunpack.c.h.b16 %v43
  %v546 = vunpack.c.l.b16 %v44
  %v547 = vunpack.c.l.b16 %v45
  %v548 = vunpack.c.h.b16 %v45
  %v549 = vunpack.c.l.b16 %v46
  %v550 = vunpack.c.l.b16 %v47
  %v551 = vunpack.c.h.b16 %v47
  %v552 = vunpack.c.l.b16 %v48
  %v553 = vunpack.c.l.b16 %v49
  %v554 = vunpack.c.h.b16 %v49
  %v555 = vunpack.c.l.b16 %v50
  %v556 = vunpack.c.l.b16 %v51
  %v557 = vunpack.c.h.b16 %v51
  %v558 = vunpack.c.l.b16 %v52
  %v559 = vunpack.c.l.b16 %v53
  %v560 = vunpack.c.h.b16 %v53
  %v561 = vunpack.c.l.b16 %v54
  %v562 = vunpack.c.l.b16 %v55
  %v563 = vunpack.c.h.b16 %v55
  %v564 = vunpack.c.l.b16 %v56
  %v565 = vunpack.c.l.b16 %v57
  %v566 = vunpack.c.h.b16 %v57
  %v567 = vunpack.c.l.b16 %v58
  %v568 = vunpack.c.l.b16 %v59
  %v569 = vunpack.c.h.b16 %v59
  %v570 = vunpack.c.l.b16 %v60
  %v571 = vunpack.c.l.b16 %v61
  %v572 = vunpack.c.h.b16 %v61
  %v573 = vunpack.c.l.b16 %v62
  %v574 = vunpack.c.l.b16 %v63
  %v575 = vunpack.c.h.b16 %v63
  %v576 = vunpack.c.l.b16 %v64
  %v577 = vunpack.c.l.b16 %v65
  %v578 = vunpack.c.h.b16 %v65
  %v579 = vunpack.c.l.b16 %v66
  %v580 = vunpack.c.l.b16 %v67
  %v581 = vunpack.c.h.b16 %v67
  %v582 = vunpack.c.l.b16 %v68
  %v583 = vunpack.c.l.b16 %v69
  %v584 = vunpack.c.h.b16 %v69
  %v585 = vunpack.c.l.b16 %v70
  %v586 = vunpack.c.l.b16 %v71
  %v587 = vunpack.c.h.b16 %v71
  %v588 = vunpack.c.l.b16 %v72
  %v589 = vunpack.c.l.b16 %v73
  %v590 = vunpack.c.h.b16 %v73
  %v591 = vunpack.c.l.b16 %v74
  %v592 = vunpack.c.l.b16 %v75
  %v593 = vunpack.c.h.b16 %v75
  %v594 = vunpack.c.l.b16 %v76
  %v595 = vunpack.c.l.b16 %v77
  %v596 = vunpack.c.h.b16 %v77
  %v597 = vunpack.c.l.b16 %v78
  %v598 = vunpack.c.l.b16 %v79
  %v599 = vunpack.c.h.b16 %v79
  %v600 = vunpack.c.l.b16 %v80
  %v601 = vunpack.c.l.b16 %v81
  %v602 = vunpack.c.h.b16 %v81
  %v603 = vunpack.c.l.b16 %v82
  %v604 = vunpack.c.l.b16 %v83
  %v605 = vunpack.c.h.b16 %v83
  %v606 = vunpack.c.l.b16 %v84
  %v607 = vunpack.c.l.b16 %v85
  %v608 = vunpack.c.h.b16 %v85
  %v609 = vunpack.c.l.b16 %v86
  %v610 = vunpack.c.l.b16 %v87
  %v611 = vunpack.c.h.b16 %v87
  %v612 = vunpack.c.l.b16 %v88
  %v613 = vunpack.c.l.b16 %v89
  %v614 = vunpack.c.h.b16 %v89
  %v615 = vunpack.c.l.b16 %v90
  %v616 = vunpack.c.l.b16 %v91
  %v617 = vunpack.c.h.b16 %v91
  %v618 = vunpack.c.l.b16 %v92
  %v619 = vunpack.c.l.b16 %v93
  %v620 = vunpack.c.h.b16 %v93
  %v621 = vunpack.c.l.b16 %v94
  %v622 = vunpack.c.l.b16 %v95
  %v623 = vunpack.c.h.b16 %v95
  %v624 = vunpack.c.l.b16 %v96
  %v625 = vunpack.c.l.b16 %v97
  %v626 = vunpack.c.h.b16 %v97
  %v627 = vunpack.c.l.b16 %v98
  %v628 = vunpack.c.l.b16 %v99
  %v629 = vunpack.c.h.b16 %v99
  %v630 = vunpack.c.l.b16 %v100
  %v631 = vunpack.c.l.b16 %v101
  %v632 = vunpack.c.h.b16 %v101
  %v633 = vunpack.c.l.b16 %v102
  %v634 = vunpack.c.l.b16 %v103
  %v635 = vunpack.c.h.b16 %v103
  %v636 = vunpack.c.l.b16 %v104
  %v637 = vunpack.c.l.b16 %v105
  %v638 = vunpack.c.h.b16 %v105
  %v639 = vunpack.c.l.b16 %v106
  %v640 = vunpack.c.l.b16 %v107
  %v641 = vunpack.c.h.b16 %v107
  %v642 = vunpack.c.l.b16 %v108
  %v643 = vunpack.c.l.b16 %v109
  %v644 = vunpack.c.h.b16 %v109
  %v645 = vunpack.c.l.b16 %v110
  %v646 = vunpack.c.l.b16 %v111
  %v647 = vunpack.c.h.b16 %v111
  %v648 = vunpack.c.l.b16 %v112
  %v649 = vunpack.c.l.b16 %v113
  %v650 = vunpack.c.h.b16 %v113
  %v651 = vunpack.c.l.b16 %v114
  %v652 = vunpack.c.l.b16 %v115
  %v653 = vunpack.c.h.b16 %v115
  %v654 = vunpack.c.l.b16 %v116
  %v655 = vunpack.c.l.b16 %v117
  %v656 = vunpack.c.h.b16 %v117
  %v657 = vunpack.c.l.b16 %v118
  %v658 = vunpack.c.l.b16 %v119
  %v659 = vunpack.c.h.b16 %v119
  %v660 = vunpack.c.l.b16 %v120
  %v661 = vunpack.c.l.b16 %v121
  %v662 = vunpack.c.h.b16 %v121
  %v663 = vunpack.c.l.b16 %v122
  %v664 = vunpack.c.l.b16 %v123
  %v665 = vunpack.c.h.b16 %v123
  %v666 = vunpack.c.l.b16 %v124
  %v667 = vunpack.c.l.b16 %v125
  %v668 = vunpack.c.h.b16 %v125
  %v669 = vunpack.c.l.b16 %v126
  %v670 = vunpack.c.l.b16 %v127
  %v671 = vunpack.c.h.b16 %v127
  %v672 = vunpack.c.l.b16 %v128
  %v673 = vunpack.c.l.b16 %v129
  %v674 = vunpack.c.h.b16 %v129
  %v675 = vunpack.c.l.b16 %v130
  %v676 = vunpack.c.l.b16 %v131
  %v677 = vunpack.c.h.b16 %v131
  %v678 = vunpack.c.l.b16 %v132
  %v679 = vunpack.c.l.b16 %v133
  %v680 = vunpack.c.h.b16 %v133
  %v681 = vunpack.c.l.b16 %v134
  %v682 = vunpack.c.l.b16 %v135
  %v683 = vunpack.c.h.b16 %v135
  %v684 = vunpack.c.l.b16 %v136
  %v685 = vunpack.c.l.b16 %v137
  %v686 = vunpack.c.h.b16 %v137
  %v687 = vunpack.c.l.b16 %v138
  %v688 = vunpack.c.l.b16 %v139
  %v689 = vunpack.c.h.b16 %v139
  %v690 = vunpack.c.l.b16 %v140
  %v691 = vunpack.c.l.b16 %v141
  %v692 = vunpack.c.h.b16 %v141
  %v693 = vunpack.c.l.b16 %v142
  %v694 = vunpack.c.l.b16 %v143
  %v695 = vunpack.c.h.b16 %v143
  %v696 = vunpack.c.l.b16 %v144
  %v697 = vunpack.c.l.b16 %v145
  %v698 = vunpack.c.h.b16 %v145
  %v699 = vunpack.c.l.b16 %v146
  %v700 = vunpack.c.l.b16 %v147
  %v701 = vunpack.c.h.b16 %v147
  %v702 = vunpack.c.l.b16 %v148
  %v703 = vunpack.c.l.b16 %v149
  %v704 = vunpack.c.h.b16 %v149
  %v705 = vunpack.c.l.b16 %v150
  %v706 = vunpack.c.l.b16 %v151
  %v707 = vunpack.c.h.b16 %v151
  %v708 = vunpack.c.l.b16 %v152
  %v709 = vunpack.c.l.b16 %v153
  %v710 = vunpack.c.h.b16 %v153
  %v711 = vunpack.c.l.b16 %v154
  %v712 = vunpack.c.l.b16 %v155
  %v713 = vunpack.c.h.b16 %v155
  %v714 = vunpack.c.l.b16 %v156
  %v715 = vunpack.c.l.b16 %v157
  %v716 = vunpack.c.h.b16 %v157
  %v717 = vunpack.c.l.b16 %v158
  %v718 = vunpack.c.l.b16 %v159
  %v719 = vunpack.c.h.b16 %v159
  %v720 = vunpack.c.l.b16 %v160
  %v721 = vunpack.c.l.b16 %v161
  %v722 = vunpack.c.h.b16 %v161
  %v723 = vunpack.c.l.b16 %v162
  %v724 = vunpack.c.l.b16 %v163
  %v725 = vunpack.c.h.b16 %v163
  %v726 = vunpack.c.l.b16 %v164
  %v727 = vunpack.c.l.b16 %v165
  %v728 = vunpack.c.h.b16 %v165
  %v729 = vunpack.c.l.b16 %v166
  %v730 = vunpack.c.l.b16 %v167
  %v731 = vunpack.c.h.b16 %v167
  %v732 = vunpack.c.l.b16 %v168
  %v733 = vunpack.c.l.b16 %v169
  %v734 = vunpack.c.h.b16 %v169
  %v735 = vunpack.c.l.b16 %v170
  %v736 = vunpack.c.l.b16 %v171
  %v737 = vunpack.c.h.b16 %v171
  %v738 = vunpack.c.l.b16 %v172
  %v739 = vunpack.c.l.b16 %v173
  %v740 = vunpack.c.h.b16 %v173
  %v741 = vunpack.c.l.b16 %v174
  %v742 = vunpack.c.l.b16 %v175
  %v743 = vunpack.c.h.b16 %v175
  %v744 = vunpack.c.l.b16 %v176
  %v745 = vunpack.c.l.b16 %v177
  %v746 = vunpack.c.h.b16 %v177
  %v747 = vunpack.c.l.b16 %v178
  %v748 = vunpack.c.l.b16 %v179
  %v749 = vunpack.c.h.b16 %v179
  %v750 = vunpack.c.l.b16 %v180
  %v751 = vunpack.c.l.b16 %v181
  %v752 = vunpack.c.h.b16 %v181
  %v753 = vunpack.c.l.b16 %v182
  %v754 = vunpack.c.l.b16 %v183
  %v755 = vunpack.c.h.b16 %v183
  %v756 = vunpack.c.l.b16 %v184
  %v757 = vunpack.c.l.b16 %v185
  %v758 = vunpack.c.h.b16 %v185
  %v759 = vunpack.c.l.b16 %v186
  %v760 = vunpack.c.l.b16 %v187
  %v761 = vunpack.c.h.b16 %v187
  %v762 = vunpack.c.l.b16 %v188
  %v763 = vunpack.c.l.b16 %v189
  %v764 = vunpack.c.h.b16 %v189
  %v765 = vunpack.c.l.b16 %v190
  %v766 = vunpack.c.l.b16 %v191
  %v767 = vunpack.c.h.b16 %v191
  %v768 = vunpack.c.l.b16 %v192
  %v769 = vunpack.c.l.b16 %v193
  %v770 = vunpack.c.h.b16 %v193
  %v771 = vunpack.c.l.b16 %v194
  %v772 = vunpack.c.l.b16 %v195
  %v773 = vunpack.c.h.b16 %v195
  %v774 = vunpack.c.l.b16 %v196
  %v775 = vunpack.c.l.b16 %v197
  %v776 = vunpack.c.h.b16 %v197
  %v777 = vunpack.c.l.b16 %v198
  %v778 = vunpack.c.l.b16 %v199
  %v779 = vunpack.c.h.b16 %v199
  %v780 = vunpack.c.l.b16 %v200
  %v781 = vunpack.c.l.b16 %v201
  %v782 = vunpack.c.h.b16 %v201
  %v783 = vunpack.c.l.b16 %v202
  %v784 = vunpack.c.l.b16 %v203
  %v785 = vunpack.c.h.b16 %v203
  %v786 = vunpack.c.l.b16 %v204
  %v787 = vunpack.c.l.b16 %v205
  %v788 = vunpack.c.h.b16 %v205
  %v789 = vunpack.c.l.b16 %v206
  %v790 = vunpack.c.l.b16 %v207
  %v791 = vunpack.c.h.b16 %v207
  %v792 = vunpack.c.l.b16 %v208
  %v793 = vunpack.c.l.b16 %v209
  %v794 = vunpack.c.h.b16 %v209
  %v795 = vunpack.c.l.b16 %v210
  %v796 = vunpack.c.l.b16 %v211
  %v797 = vunpack.c.h.b16 %v211
  %v798 = vunpack.c.l.b16 %v212
  %v799 = vunpack.c.l.b16 %v213
  %v800 = vunpack.c.h.b16 %v213
  %v801 = vunpack.c.l.b16 %v214
  %v802 = vunpack.c.l.b16 %v215
  %v803 = vunpack.c.h.b16 %v215
  %v804 = vunpack.c.l.b16 %v216
  %v805 = vunpack.c.l.b16 %v217
  %v806 = vunpack.c.h.b16 %v217
  %v807 = vunpack.c.l.b16 %v218
  %v808 = vunpack.c.l.b16 %v219
  %v809 = vunpack.c.h.b16 %v219
  %v810 = vunpack.c.l.b16 %v220
  %v811 = vunpack.c.l.b16 %v221
  %v812 = vunpack.c.h.b16 %v221
  %v813 = vunpack.c.l.b16 %v222
  %v814 = vunpack.c.l.b16 %v223
  %v815 = vunpack.c.h.b16 %v223
  %v816 = vunpack.c.l.b16 %v224
  %v817 = vunpack.c.l.b16 %v225
  %v818 = vunpack.c.h.b16 %v225
  %v819 = vunpack.c.l.b16 %v226
  %v820 = vunpack.c.l.b16 %v227
  %v821 = vunpack.c.h.b16 %v227
  %v822 = vunpack.c.l.b16 %v228
  %v823 = vunpack.c.l.b16 %v229
  %v824 = vunpack.c.h.b16 %v229
  %v825 = vunpack.c.l.b16 %v230
  %v826 = vunpack.c.l.b16 %v231
  %v827 = vunpack.c.h.b16 %v231
  %v828 = vunpack.c.l.b16 %v232
  %v829 = vunpack.c.l.b16 %v233
  %v830 = vunpack.c.h.b16 %v233
  %v831 = vunpack.c.l.b16 %v234
  %v832 = vunpack.c.l.b16 %v235
  %v833 = vunpack.c.h.b16 %v235
  %v834 = vunpack.c.l.b16 %v236
  %v835 = vpack.c.b16 %v505, %v502
  %v836 = vpack.c.b16 %v506, %v503
  %v837 = vpack.c.b16 %v507, %v504
  %v838 = vpack.c.b16 %v511, %v508
  %v839 = vpack.c.b16 %v512, %v509
  %v840 = vpack.c.b16 %v513, %v510
  %v841 = vpack.c.b16 %v517, %v514
  %v842 = vpack.c.b16 %v518, %v515
  %v843 = vpack.c.b16 %v519, %v516
  %v844 = vpack.c.b16 %v523, %v520
  %v845 = vpack.c.b16 %v524, %v521
  %v846 = vpack.c.b16 %v525, %v522
  %v847 = vpack.c.b16 %v529, %v526
  %v848 = vpack.c.b16 %v530, %v527
  %v849 = vpack.c.b16 %v531, %v528
  %v850 = vpack.c.b16 %v535, %v532
  %v851 = vpack.c.b16 %v536, %v533
  %v852 = vpack.c.b16 %v537, %v534
  %v853 = vpack.c.b16 %v541, %v538
  %v854 = vpack.c.b16 %v542, %v539
  %v855 = vpack.c.b16 %v543, %v540
  %v856 = vpack.c.b16 %v547, %v544
  %v857 = vpack.c.b16 %v548, %v545
  %v858 = vpack.c.b16 %v549, %v546
  %v859 = vpack.c.b16 %v553, %v550
  %v860 = vpack.c.b16 %v554, %v551
  %v861 = vpack.c.b16 %v555, %v552
  %v862 = vpack.c.b16 %v559, %v556
  %v863 = vpack.c.b16 %v560, %v557
  %v864 = vpack.c.b16 %v561, %v558
  %v865 = vpack.c.b16 %v565, %v562
  %v866 = vpack.c.b16 %v566, %v563
  %v867 = vpack.c.b16 %v567, %v564
  %v868 = vpack.c.b16 %v571, %v568
  %v869 = vpack.c.b16 %v572, %v569
  %v870 = vpack.c.b16 %v573, %v570
  %v871 = vpack.c.b16 %v577, %v574
  %v872 = vpack.c.b16 %v578, %v575
  %v873 = vpack.c.b16 %v579, %v576
  %v874 = vpack.c.b16 %v583, %v580
  %v875 = vpack.c.b16 %v584, %v581
  %v876 = vpack.c.b16 %v585, %v582
  %v877 = vpack.c.b16 %v589, %v586
  %v878 = vpack.c.b16 %v590, %v587
  %v879 = vpack.c.b16 %v591, %v588
  %v880 = vpack.c.b16 %v595, %v592
  %v881 = vpack.c.b16 %v596, %v593
  %v882 = vpack.c.b16 %v597, %v594
  %v883 = vpack.c.b16 %v601, %v598
  %v884 = vpack.c.b16 %v602, %v599
  %v885 = vpack.c.b16 %v603, %v600
  %v886 = vpack.c.b16 %v607, %v604
  %v887 = vpack.c.b16 %v608, %v605
  %v888 = vpack.c.b16 %v609, %v606
  %v889 = vpack.c.b16 %v613, %v610
  %v890 = vpack.c.b16 %v614, %v611
  %v891 = vpack.c.b16 %v615, %v612
  %v892 = vpack.c.b16 %v619, %v616
  %v893 = vpack.c.b16 %v620, %v617
  %v894 = vpack.c.b16 %v621, %v618
  %v895 = vpack.c.b16 %v625, %v622
  %v896 = vpack.c.b16 %v626, %v623
  %v897 = vpack.c.b16 %v627, %v624
  %v898 = vpack.c.b16 %v631, %v628
  %v899 = vpack.c.b16 %v632, %v629
  %v900 = vpack.c.b16 %v633, %v630
  %v901 = vpack.c.b16 %v637, %v634
  %v902 = vpack.c.b16 %v638, %v635
  %v903 = vpack.c.b16 %v639, %v636
  %v904 = vpack.c.b16 %v643, %v640
  %v905 = vpack.c.b16 %v644, %v641
  %v906 = vpack.c.b16 %v645, %v642
  %v907 = vpack.c.b16 %v649, %v646
  %v908 = vpack.c.b16 %v650, %v647
  %v909 = vpack.c.b16 %v651, %v648
  %v910 = vpack.c.b16 %v655, %v652
  %v911 = vpack.c.b16 %v656, %v653
  %v912 = vpack.c.b16 %v657, %v654
  %v913 = vpack.c.b16 %v661, %v658
  %v914 = vpack.c.b16 %v662, %v659
  %v915 = vpack.c.b16 %v663, %v660
  %v916 = vpack.c.b16 %v667, %v664
  %v917 = vpack.c.b16 %v668, %v665
  %v918 = vpack.c.b16 %v669, %v666
  %v919 = vpack.c.b16 %v673, %v670
  %v920 = vpack.c.b16 %v674, %v671
  %v921 = vpack.c.b16 %v675, %v672
  %v922 = vpack.c.b16 %v679, %v676
  %v923 = vpack.c.b16 %v680, %v677
  %v924 = vpack.c.b16 %v681, %v678
  %v925 = vpack.c.b16 %v685, %v682
  %v926 = vpack.c.b16 %v686, %v683
  %v927 = vpack.c.b16 %v687, %v684
  %v928 = vpack.c.b16 %v691, %v688
  %v929 = vpack.c.b16 %v692, %v689
  %v930 = vpack.c.b16 %v693, %v690
  %v931 = vpack.c.b16 %v697, %v694
  %v932 = vpack.c.b16 %v698, %v695
  %v933 = vpack.c.b16 %v699, %v696
  %v934 = vpack.c.b16 %v703, %v700
  %v935 = vpack.c.b16 %v704, %v701
  %v936 = vpack.c.b16 %v705, %v702
  %v937 = vpack.c.b16 %v709, %v706
  %v938 = vpack.c.b16 %v710, %v707
  %v939 = vpack.c.b16 %v711, %v708
  %v940 = vpack.c.b16 %v715, %v712
  %v941 = vpack.c.b16 %v716, %v713
  %v942 = vpack.c.b16 %v717, %v714
  %v943 = vpack.c.b16 %v721, %v718
  %v944 = vpack.c.b16 %v722, %v719
  %v945 = vpack.c.b16 %v723, %v720
  %v946 = vpack.c.b16 %v727, %v724
  %v947 = vpack.c.b16 %v728, %v725
  %v948 = vpack.c.b16 %v729, %v726
  %v949 = vpack.c.b16 %v733, %v730
  %v950 = vpack.c.b16 %v734, %v731
  %v951 = vpack.c.b16 %v735, %v732
  %v952 = vpack.c.b16 %v739, %v736
  %v953 = vpack.c.b16 %v740, %v737
  %v954 = vpack.c.b16 %v741, %v738
  %v955 = vpack.c.b16 %v745, %v742
  %v956 = vpack.c.b16 %v746, %v743
  %v957 = vpack.c.b16 %v747, %v744
  %v958 = vpack.c.b16 %v751, %v748
  %v959 = vpack.c.b16 %v752, %v749
  %v960 = vpack.c.b16 %v753, %v750
  %v961 = vpack.c.b16 %v757, %v754
  %v962 = vpack.c.b16 %v758, %v755
  %v963 = vpack.c.b16 %v759, %v756
  %v964 = vpack.c.b16 %v763, %v760
  %v965 = vpack.c.b16 %v764, %v761
  %v966 = vpack.c.b16 %v765, %v762
  %v967 = vpack.c.b16 %v769, %v766
  %v968 = vpack.c.b16 %v770, %v767
  %v969 = vpack.c.b16 %v771, %v768
  %v970 = vpack.c.b16 %v775, %v772
  %v971 = vpack.c.b16 %v776, %v773
  %v972 = vpack.c.b16 %v777, %v774
  %v973 = vpack.c.b16 %v781, %v778
  %v974 = vpack.c.b16 %v782, %v779
  %v975 = vpack.c.b16 %v783, %v780
  %v976 = vpack.c.b16 %v787, %v784
  %v977 = vpack.c.b16 %v788, %v785
  %v978 = vpack.c.b16 %v789, %v786
  %v979 = vpack.c.b16 %v793, %v790
  %v980 = vpack.c.b16 %v794, %v791
  %v981 = vpack.c.b16 %v795, %v792
  %v982 = vpack.c.b16 %v799, %v796
  %v983 = vpack.c.b16 %v800, %v797
  %v984 = vpack.c.b16 %v801, %v798
  %v985 = vpack.c.b16 %v805, %v802
  %v986 = vpack.c.b16 %v806, %v803
  %v987 = vpack.c.b16 %v807, %v804
  %v988 = vpack.c.b16 %v811, %v808
  %v989 = vpack.c.b16 %v812, %v809
  %v990 = vpack.c.b16 %v813, %v810
  %v991 = vpack.c.b16 %v817, %v814
  %v992 = vpack.c.b16 %v818, %v815
  %v993 = vpack.c.b16 %v819, %v816
  %v994 = vpack.c.b16 %v823, %v820
  %v995 = vpack.c.b16 %v824, %v821
  %v996 = vpack.c.b16 %v825, %v822
  %v997 = vpack.c.b16 %v829, %v826
  %v998 = vpack.c.b16 %v830, %v827
  %v999 = vpack.c.b16 %v831, %v828
  %v1000 = vpack.c.b16 %v832, %v832
  %v1001 = vpack.c.b16 %v833, %v833
  %v1002 = vpack.c.b16 %v834, %v834
  %v1151 = vunpack.c.l.b16 %v237
  %v1152 = vunpack.c.l.b16 %v238
  %v1153 = vunpack.c.l.b16 %v239
  %v1154 = vunpack.c.l.b16 %v240
  %v1155 = vunpack.c.l.b16 %v241
  %v1156 = vunpack.c.l.b16 %v242
  %v1157 = vunpack.c.l.b16 %v243
  %v1158 = vunpack.c.l.b16 %v244
  %v1159 = vunpack.c.l.b16 %v245
  %v1160 = vunpack.c.l.b16 %v246
  %v1161 = vunpack.c.l.b16 %v247
  %v1162 = vunpack.c.l.b16 %v248
  %v1163 = vunpack.c.l.b16 %v249
  %v1164 = vunpack.c.l.b16 %v250
  %v1165 = vunpack.c.l.b16 %v251
  %v1166 = vunpack.c.l.b16 %v252
  %v1167 = vunpack.c.l.b16 %v253
  %v1168 = vunpack.c.l.b16 %v254
  %v1169 = vunpack.c.l.b16 %v255
  %v1170 = vunpack.c.l.b16 %v256
  %v1171 = vunpack.c.l.b16 %v257
  %v1172 = vunpack.c.l.b16 %v258
  %v1173 = vunpack.c.l.b16 %v259
  %v1174 = vunpack.c.l.b16 %v260
  %v1175 = vunpack.c.l.b16 %v261
  %v1176 = vunpack.c.l.b16 %v262
  %v1177 = vunpack.c.l.b16 %v263
  %v1178 = vunpack.c.l.b16 %v264
  %v1179 = vunpack.c.l.b16 %v265
  %v1180 = vunpack.c.l.b16 %v266
  %v1181 = vunpack.c.l.b16 %v267
  %v1182 = vunpack.c.l.b16 %v268
  %v1183 = vunpack.c.l.b16 %v269
  %v1184 = vunpack.c.l.b16 %v270
  %v1185 = vunpack.c.l.b16 %v271
  %v1186 = vunpack.c.l.b16 %v272
  %v1187 = vpack.c.b16 %v1152, %v1151
  %v1188 = vpack.c.b16 %v1154, %v1153
  %v1189 = vpack.c.b16 %v1156, %v1155
  %v1190 = vpack.c.b16 %v1158, %v1157
  %v1191 = vpack.c.b16 %v1160, %v1159
  %v1192 = vpack.c.b16 %v1162, %v1161
  %v1193 = vpack.c.b16 %v1164, %v1163
  %v1194 = vpack.c.b16 %v1166, %v1165
  %v1195 = vpack.c.b16 %v1168, %v1167
  %v1196 = vpack.c.b16 %v1170, %v1169
  %v1197 = vpack.c.b16 %v1172, %v1171
  %v1198 = vpack.c.b16 %v1174, %v1173
  %v1199 = vpack.c.b16 %v1176, %v1175
  %v1200 = vpack.c.b16 %v1178, %v1177
  %v1201 = vpack.c.b16 %v1180, %v1179
  %v1202 = vpack.c.b16 %v1182, %v1181
  %v1203 = vpack.c.b16 %v1184, %v1183
  %v1204 = vpack.c.b16 %v1186, %v1185
  %vm1223 = vcmask 261120
  %v1225 = vsel %vm1223, %v837, 0
  %v1228 = vsel %vm1223, %v840, 0
  %v1231 = vsel %vm1223, %v843, 0
  %v1234 = vsel %vm1223, %v846, 0
  %v1237 = vsel %vm1223, %v849, 0
  %v1240 = vsel %vm1223, %v852, 0
  %v1243 = vsel %vm1223, %v855, 0
  %v1246 = vsel %vm1223, %v858, 0
  %v1249 = vsel %vm1223, %v861, 0
  %v1252 = vsel %vm1223, %v864, 0
  %v1255 = vsel %vm1223, %v867, 0
  %v1258 = vsel %vm1223, %v870, 0
  %v1261 = vsel %vm1223, %v873, 0
  %v1264 = vsel %vm1223, %v876, 0
  %v1267 = vsel %vm1223, %v879, 0
  %v1270 = vsel %vm1223, %v882, 0
  %v1273 = vsel %vm1223, %v885, 0
  %v1276 = vsel %vm1223, %v888, 0
  %v1279 = vsel %vm1223, %v891, 0
  %v1282 = vsel %vm1223, %v894, 0
  %v1285 = vsel %vm1223, %v897, 0
  %v1288 = vsel %vm1223, %v900, 0
  %v1291 = vsel %vm1223, %v903, 0
  %v1294 = vsel %vm1223, %v906, 0
  %v1297 = vsel %vm1223, %v909, 0
  %v1300 = vsel %vm1223, %v912, 0
  %v1303 = vsel %vm1223, %v915, 0
  %v1306 = vsel %vm1223, %v918, 0
  %v1309 = vsel %vm1223, %v921, 0
  %v1312 = vsel %vm1223, %v924, 0
  %v1315 = vsel %vm1223, %v927, 0
  %v1318 = vsel %vm1223, %v930, 0
  %v1321 = vsel %vm1223, %v933, 0
  %v1324 = vsel %vm1223, %v936, 0
  %v1327 = vsel %vm1223, %v939, 0
  %v1330 = vsel %vm1223, %v942, 0
  %v1333 = vsel %vm1223, %v945, 0
  %v1336 = vsel %vm1223, %v948, 0
  %v1339 = vsel %vm1223, %v951, 0
  %v1342 = vsel %vm1223, %v954, 0
  %v1345 = vsel %vm1223, %v957, 0
  %v1348 = vsel %vm1223, %v960, 0
  %v1351 = vsel %vm1223, %v963, 0
  %v1354 = vsel %vm1223, %v966, 0
  %v1357 = vsel %vm1223, %v969, 0
  %v1360 = vsel %vm1223, %v972, 0
  %v1363 = vsel %vm1223, %v975, 0
  %v1366 = vsel %vm1223, %v978, 0
  %v1369 = vsel %vm1223, %v981, 0
  %v1372 = vsel %vm1223, %v984, 0
  %v1375 = vsel %vm1223, %v987, 0
  %v1378 = vsel %vm1223, %v990, 0
  %v1381 = vsel %vm1223, %v993, 0
  %v1384 = vsel %vm1223, %v996, 0
  %v1387 = vsel %vm1223, %v999, 0
  %v1390 = vsel %vm1223, %v1002, 0
  %1392 = vmatprep.subr.bf16.mxu0 0
  %1393 = vmatpush1.bf16.msra.mxu0 %v1187
  %1394 = vmatprep.subr.bf16.mxu0 0
  %1395 = vmatpush1.bf16.msra.mxu0 %v1188
  %1396 = vmatprep.subr.bf16.mxu0 0
  %1397 = vmatpush1.bf16.msra.mxu0 %v1189
  %1398 = vmatprep.subr.bf16.mxu0 0
  %1399 = vmatpush1.bf16.msra.mxu0 %v1190
  %1400 = vmatprep.subr.bf16.mxu0 0
  %1401 = vmatpush1.bf16.msra.mxu0 %v1191
  %1402 = vmatprep.subr.bf16.mxu0 0
  %1403 = vmatpush1.bf16.msra.mxu0 %v1192
  %1404 = vmatprep.subr.bf16.mxu0 0
  %1405 = vmatpush1.bf16.msra.mxu0 %v1193
  %1406 = vmatprep.subr.bf16.mxu0 0
  %1407 = vmatpush1.bf16.msra.mxu0 %v1194
  %1408 = vmatprep.subr.bf16.mxu0 0
  %1409 = vmatpush1.bf16.msra.mxu0 %v1195
  %1410 = vmatprep.subr.bf16.mxu0 0
  %1411 = vmatpush1.bf16.msra.mxu0 %v1196
  %1412 = vmatprep.subr.bf16.mxu0 0
  %1413 = vmatpush1.bf16.msra.mxu0 %v1197
  %1414 = vmatprep.subr.bf16.mxu0 0
  %1415 = vmatpush1.bf16.msra.mxu0 %v1198
  %1416 = vmatprep.subr.bf16.mxu0 0
  %1417 = vmatpush1.bf16.msra.mxu0 %v1199
  %1418 = vmatprep.subr.bf16.mxu0 0
  %1419 = vmatpush1.bf16.msra.mxu0 %v1200
  %1420 = vmatprep.subr.bf16.mxu0 0
  %1421 = vmatpush1.bf16.msra.mxu0 %v1201
  %1422 = vmatprep.subr.bf16.mxu0 0
  %1423 = vmatpush1.bf16.msra.mxu0 %v1202
  %1424 = vmatprep.mubr.bf16.mxu0 %v836
  %1425 = vmatmul.mubr.bf16.gmra.mrb[0].mxu0 %v835
  %v1426 = vpop.f32.mrb[0].mxu0
  %v1427 = vadd.f32 %v278, %v1426
  %v1428 = vpop.f32.mrb[0].mxu0
  %v1429 = vpop.f32.mrb[0].mxu0
  %v1430 = vadd.f32 %v278, %v1429
  %v1431 = vpop.f32.mrb[0].mxu0
  %1432 = vmatprep.mubr.bf16.mxu0 %v839
  %1433 = vmatmul.mubr.bf16.gmra.mrb[0].mxu0 %v838
  %v1434 = vpop.f32.mrb[0].mxu0
  %v1435 = vadd.f32 %v278, %v1434
  %v1436 = vpop.f32.mrb[0].mxu0
  %v1437 = vpop.f32.mrb[0].mxu0
  %v1438 = vadd.f32 %v278, %v1437
  %v1439 = vpop.f32.mrb[0].mxu0
  %1440 = vmatprep.mubr.bf16.mxu0 %v842
  %1441 = vmatmul.mubr.bf16.gmra.mrb[0].mxu0 %v841
  %v1442 = vpop.f32.mrb[0].mxu0
  %v1443 = vadd.f32 %v278, %v1442
  %v1444 = vpop.f32.mrb[0].mxu0
  %v1445 = vpop.f32.mrb[0].mxu0
  %v1446 = vadd.f32 %v278, %v1445
  %v1447 = vpop.f32.mrb[0].mxu0
  %1448 = vmatprep.mubr.bf16.mxu0 %v845
  %1449 = vmatmul.mubr.bf16.gmra.mrb[0].mxu0 %v844
  %v1450 = vpop.f32.mrb[0].mxu0
  %v1451 = vadd.f32 %v278, %v1450
  %v1452 = vpop.f32.mrb[0].mxu0
  %v1453 = vpop.f32.mrb[0].mxu0
  %v1454 = vadd.f32 %v278, %v1453
  %v1455 = vpop.f32.mrb[0].mxu0
  %1456 = vmatprep.mubr.bf16.mxu0 %v848
  %1457 = vmatmul.mubr.bf16.gmra.mrb[0].mxu0 %v847
  %v1458 = vpop.f32.mrb[0].mxu0
  %v1459 = vadd.f32 %v278, %v1458
  %v1460 = vpop.f32.mrb[0].mxu0
  %v1461 = vpop.f32.mrb[0].mxu0
  %v1462 = vadd.f32 %v278, %v1461
  %v1463 = vpop.f32.mrb[0].mxu0
  %1464 = vmatprep.mubr.bf16.mxu0 %v851
  %1465 = vmatmul.mubr.bf16.gmra.mrb[0].mxu0 %v850
  %v1466 = vpop.f32.mrb[0].mxu0
  %v1467 = vadd.f32 %v278, %v1466
  %v1468 = vpop.f32.mrb[0].mxu0
  %v1469 = vpop.f32.mrb[0].mxu0
  %v1470 = vadd.f32 %v278, %v1469
  %v1471 = vpop.f32.mrb[0].mxu0
  %1472 = vmatprep.mubr.bf16.mxu0 %v854
  %1473 = vmatmul.mubr.bf16.gmra.mrb[0].mxu0 %v853
  %v1474 = vpop.f32.mrb[0].mxu0
  %v1475 = vadd.f32 %v278, %v1474
  %v1476 = vpop.f32.mrb[0].mxu0
  %v1477 = vpop.f32.mrb[0].mxu0
  %v1478 = vadd.f32 %v278, %v1477
  %v1479 = vpop.f32.mrb[0].mxu0
  %1480 = vmatprep.mubr.bf16.mxu0 %v857
  %1481 = vmatmul.mubr.bf16.gmra.mrb[0].mxu0 %v856
  %v1482 = vpop.f32.mrb[0].mxu0
  %v1483 = vadd.f32 %v278, %v1482
  %v1484 = vpop.f32.mrb[0].mxu0
  %v1485 = vpop.f32.mrb[0].mxu0
  %v1486 = vadd.f32 %v278, %v1485
  %v1487 = vpop.f32.mrb[0].mxu0
  %1488 = vmatprep.mubr.bf16.mxu0 %v860
  %1489 = vmatmul.mubr.bf16.gmra.mrb[0].mxu0 %v859
  %v1490 = vpop.f32.mrb[0].mxu0
  %v1491 = vadd.f32 %v278, %v1490
  %v1492 = vpop.f32.mrb[0].mxu0
  %v1493 = vpop.f32.mrb[0].mxu0
  %v1494 = vadd.f32 %v278, %v1493
  %v1495 = vpop.f32.mrb[0].mxu0
  %1496 = vmatprep.mubr.bf16.mxu0 %v863
  %1497 = vmatmul.mubr.bf16.gmra.mrb[0].mxu0 %v862
  %v1498 = vpop.f32.mrb[0].mxu0
  %v1499 = vadd.f32 %v278, %v1498
  %v1500 = vpop.f32.mrb[0].mxu0
  %v1501 = vpop.f32.mrb[0].mxu0
  %v1502 = vadd.f32 %v278, %v1501
  %v1503 = vpop.f32.mrb[0].mxu0
  %1504 = vmatprep.mubr.bf16.mxu0 %v866
  %1505 = vmatmul.mubr.bf16.gmra.mrb[0].mxu0 %v865
  %v1506 = vpop.f32.mrb[0].mxu0
  %v1507 = vadd.f32 %v278, %v1506
  %v1508 = vpop.f32.mrb[0].mxu0
  %v1509 = vpop.f32.mrb[0].mxu0
  %v1510 = vadd.f32 %v278, %v1509
  %v1511 = vpop.f32.mrb[0].mxu0
  %1512 = vmatprep.mubr.bf16.mxu0 %v869
  %1513 = vmatmul.mubr.bf16.gmra.mrb[0].mxu0 %v868
  %v1514 = vpop.f32.mrb[0].mxu0
  %v1515 = vadd.f32 %v278, %v1514
  %v1516 = vpop.f32.mrb[0].mxu0
  %v1517 = vpop.f32.mrb[0].mxu0
  %v1518 = vadd.f32 %v278, %v1517
  %v1519 = vpop.f32.mrb[0].mxu0
  %1520 = vmatprep.mubr.bf16.mxu0 %v872
  %1521 = vmatmul.mubr.bf16.gmra.mrb[0].mxu0 %v871
  %v1522 = vpop.f32.mrb[0].mxu0
  %v1523 = vadd.f32 %v278, %v1522
  %v1524 = vpop.f32.mrb[0].mxu0
  %v1525 = vpop.f32.mrb[0].mxu0
  %v1526 = vadd.f32 %v278, %v1525
  %v1527 = vpop.f32.mrb[0].mxu0
  %1528 = vmatprep.mubr.bf16.mxu0 %v875
  %1529 = vmatmul.mubr.bf16.gmra.mrb[0].mxu0 %v874
  %v1530 = vpop.f32.mrb[0].mxu0
  %v1531 = vadd.f32 %v278, %v1530
  %v1532 = vpop.f32.mrb[0].mxu0
  %v1533 = vpop.f32.mrb[0].mxu0
  %v1534 = vadd.f32 %v278, %v1533
  %v1535 = vpop.f32.mrb[0].mxu0
  %1536 = vmatprep.mubr.bf16.mxu0 %v878
  %1537 = vmatmul.mubr.bf16.gmra.mrb[0].mxu0 %v877
  %v1538 = vpop.f32.mrb[0].mxu0
  %v1539 = vadd.f32 %v278, %v1538
  %v1540 = vpop.f32.mrb[0].mxu0
  %v1541 = vpop.f32.mrb[0].mxu0
  %v1542 = vadd.f32 %v278, %v1541
  %v1543 = vpop.f32.mrb[0].mxu0
  %1544 = vmatprep.mubr.bf16.mxu0 %v881
  %1545 = vmatmul.mubr.bf16.gmra.mrb[0].mxu0 %v880
  %v1546 = vpop.f32.mrb[0].mxu0
  %v1547 = vadd.f32 %v278, %v1546
  %v1548 = vpop.f32.mrb[0].mxu0
  %v1549 = vpop.f32.mrb[0].mxu0
  %v1550 = vadd.f32 %v278, %v1549
  %v1551 = vpop.f32.mrb[0].mxu0
  %1552 = vmatprep.mubr.bf16.mxu0 %v884
  %1553 = vmatmul.mubr.bf16.gmra.mrb[0].mxu0 %v883
  %v1554 = vpop.f32.mrb[0].mxu0
  %v1555 = vadd.f32 %v278, %v1554
  %v1556 = vpop.f32.mrb[0].mxu0
  %v1557 = vpop.f32.mrb[0].mxu0
  %v1558 = vadd.f32 %v278, %v1557
  %v1559 = vpop.f32.mrb[0].mxu0
  %1560 = vmatprep.mubr.bf16.mxu0 %v887
  %1561 = vmatmul.mubr.bf16.gmra.mrb[0].mxu0 %v886
  %v1562 = vpop.f32.mrb[0].mxu0
  %v1563 = vadd.f32 %v278, %v1562
  %v1564 = vpop.f32.mrb[0].mxu0
  %v1565 = vpop.f32.mrb[0].mxu0
  %v1566 = vadd.f32 %v278, %v1565
  %v1567 = vpop.f32.mrb[0].mxu0
  %1568 = vmatprep.mubr.bf16.mxu0 %v890
  %1569 = vmatmul.mubr.bf16.gmra.mrb[0].mxu0 %v889
  %v1570 = vpop.f32.mrb[0].mxu0
  %v1571 = vadd.f32 %v278, %v1570
  %v1572 = vpop.f32.mrb[0].mxu0
  %v1573 = vpop.f32.mrb[0].mxu0
  %v1574 = vadd.f32 %v278, %v1573
  %v1575 = vpop.f32.mrb[0].mxu0
  %1576 = vmatprep.mubr.bf16.mxu0 %v893
  %1577 = vmatmul.mubr.bf16.gmra.mrb[0].mxu0 %v892
  %v1578 = vpop.f32.mrb[0].mxu0
  %v1579 = vadd.f32 %v278, %v1578
  %v1580 = vpop.f32.mrb[0].mxu0
  %v1581 = vpop.f32.mrb[0].mxu0
  %v1582 = vadd.f32 %v278, %v1581
  %v1583 = vpop.f32.mrb[0].mxu0
  %1584 = vmatprep.mubr.bf16.mxu0 %v896
  %1585 = vmatmul.mubr.bf16.gmra.mrb[0].mxu0 %v895
  %v1586 = vpop.f32.mrb[0].mxu0
  %v1587 = vadd.f32 %v278, %v1586
  %v1588 = vpop.f32.mrb[0].mxu0
  %v1589 = vpop.f32.mrb[0].mxu0
  %v1590 = vadd.f32 %v278, %v1589
  %v1591 = vpop.f32.mrb[0].mxu0
  %1592 = vmatprep.mubr.bf16.mxu0 %v899
  %1593 = vmatmul.mubr.bf16.gmra.mrb[0].mxu0 %v898
  %v1594 = vpop.f32.mrb[0].mxu0
  %v1595 = vadd.f32 %v278, %v1594
  %v1596 = vpop.f32.mrb[0].mxu0
  %v1597 = vpop.f32.mrb[0].mxu0
  %v1598 = vadd.f32 %v278, %v1597
  %v1599 = vpop.f32.mrb[0].mxu0
  %1600 = vmatprep.mubr.bf16.mxu0 %v902
  %1601 = vmatmul.mubr.bf16.gmra.mrb[0].mxu0 %v901
  %v1602 = vpop.f32.mrb[0].mxu0
  %v1603 = vadd.f32 %v278, %v1602
  %v1604 = vpop.f32.mrb[0].mxu0
  %v1605 = vpop.f32.mrb[0].mxu0
  %v1606 = vadd.f32 %v278, %v1605
  %v1607 = vpop.f32.mrb[0].mxu0
  %1608 = vmatprep.mubr.bf16.mxu0 %v905
  %1609 = vmatmul.mubr.bf16.gmra.mrb[0].mxu0 %v904
  %v1610 = vpop.f32.mrb[0].mxu0
  %v1611 = vadd.f32 %v278, %v1610
  %v1612 = vpop.f32.mrb[0].mxu0
  %v1613 = vpop.f32.mrb[0].mxu0
  %v1614 = vadd.f32 %v278, %v1613
  %v1615 = vpop.f32.mrb[0].mxu0
  %1616 = vmatprep.mubr.bf16.mxu0 %v908
  %1617 = vmatmul.mubr.bf16.gmra.mrb[0].mxu0 %v907
  %v1618 = vpop.f32.mrb[0].mxu0
  %v1619 = vadd.f32 %v278, %v1618
  %v1620 = vpop.f32.mrb[0].mxu0
  %v1621 = vpop.f32.mrb[0].mxu0
  %v1622 = vadd.f32 %v278, %v1621
  %v1623 = vpop.f32.mrb[0].mxu0
  %1624 = vmatprep.mubr.bf16.mxu0 %v911
  %1625 = vmatmul.mubr.bf16.gmra.mrb[0].mxu0 %v910
  %v1626 = vpop.f32.mrb[0].mxu0
  %v1627 = vadd.f32 %v278, %v1626
  %v1628 = vpop.f32.mrb[0].mxu0
  %v1629 = vpop.f32.mrb[0].mxu0
  %v1630 = vadd.f32 %v278, %v1629
  %v1631 = vpop.f32.mrb[0].mxu0
  %1632 = vmatprep.mubr.bf16.mxu0 %v914
  %1633 = vmatmul.mubr.bf16.gmra.mrb[0].mxu0 %v913
  %v1634 = vpop.f32.mrb[0].mxu0
  %v1635 = vadd.f32 %v278, %v1634
  %v1636 = vpop.f32.mrb[0].mxu0
  %v1637 = vpop.f32.mrb[0].mxu0
  %v1638 = vadd.f32 %v278, %v1637
  %v1639 = vpop.f32.mrb[0].mxu0
  %1640 = vmatprep.mubr.bf16.mxu0 %v917
  %1641 = vmatmul.mubr.bf16.gmra.mrb[0].mxu0 %v916
  %v1642 = vpop.f32.mrb[0].mxu0
  %v1643 = vadd.f32 %v278, %v1642
  %v1644 = vpop.f32.mrb[0].mxu0
  %v1645 = vpop.f32.mrb[0].mxu0
  %v1646 = vadd.f32 %v278, %v1645
  %v1647 = vpop.f32.mrb[0].mxu0
  %1648 = vmatprep.mubr.bf16.mxu0 %v920
  %1649 = vmatmul.mubr.bf16.gmra.mrb[0].mxu0 %v919
  %v1650 = vpop.f32.mrb[0].mxu0
  %v1651 = vadd.f32 %v278, %v1650
  %v1652 = vpop.f32.mrb[0].mxu0
  %v1653 = vpop.f32.mrb[0].mxu0
  %v1654 = vadd.f32 %v278, %v1653
  %v1655 = vpop.f32.mrb[0].mxu0
  %1656 = vmatprep.mubr.bf16.mxu0 %v923
  %1657 = vmatmul.mubr.bf16.gmra.mrb[0].mxu0 %v922
  %v1658 = vpop.f32.mrb[0].mxu0
  %v1659 = vadd.f32 %v278, %v1658
  %v1660 = vpop.f32.mrb[0].mxu0
  %v1661 = vpop.f32.mrb[0].mxu0
  %v1662 = vadd.f32 %v278, %v1661
  %v1663 = vpop.f32.mrb[0].mxu0
  %1664 = vmatprep.mubr.bf16.mxu0 %v926
  %1665 = vmatmul.mubr.bf16.gmra.mrb[0].mxu0 %v925
  %v1666 = vpop.f32.mrb[0].mxu0
  %v1667 = vadd.f32 %v278, %v1666
  %v1668 = vpop.f32.mrb[0].mxu0
  %v1669 = vpop.f32.mrb[0].mxu0
  %v1670 = vadd.f32 %v278, %v1669
  %v1671 = vpop.f32.mrb[0].mxu0
  %1672 = vmatprep.mubr.bf16.mxu0 %v929
  %1673 = vmatmul.mubr.bf16.gmra.mrb[0].mxu0 %v928
  %v1674 = vpop.f32.mrb[0].mxu0
  %v1675 = vadd.f32 %v278, %v1674
  %v1676 = vpop.f32.mrb[0].mxu0
  %v1677 = vpop.f32.mrb[0].mxu0
  %v1678 = vadd.f32 %v278, %v1677
  %v1679 = vpop.f32.mrb[0].mxu0
  %1680 = vmatprep.mubr.bf16.mxu0 %v932
  %1681 = vmatmul.mubr.bf16.gmra.mrb[0].mxu0 %v931
  %v1682 = vpop.f32.mrb[0].mxu0
  %v1683 = vadd.f32 %v278, %v1682
  %v1684 = vpop.f32.mrb[0].mxu0
  %v1685 = vpop.f32.mrb[0].mxu0
  %v1686 = vadd.f32 %v278, %v1685
  %v1687 = vpop.f32.mrb[0].mxu0
  %1688 = vmatprep.mubr.bf16.mxu0 %v935
  %1689 = vmatmul.mubr.bf16.gmra.mrb[0].mxu0 %v934
  %v1690 = vpop.f32.mrb[0].mxu0
  %v1691 = vadd.f32 %v278, %v1690
  %v1692 = vpop.f32.mrb[0].mxu0
  %v1693 = vpop.f32.mrb[0].mxu0
  %v1694 = vadd.f32 %v278, %v1693
  %v1695 = vpop.f32.mrb[0].mxu0
  %1696 = vmatprep.mubr.bf16.mxu0 %v938
  %1697 = vmatmul.mubr.bf16.gmra.mrb[0].mxu0 %v937
  %v1698 = vpop.f32.mrb[0].mxu0
  %v1699 = vadd.f32 %v278, %v1698
  %v1700 = vpop.f32.mrb[0].mxu0
  %v1701 = vpop.f32.mrb[0].mxu0
  %v1702 = vadd.f32 %v278, %v1701
  %v1703 = vpop.f32.mrb[0].mxu0
  %1704 = vmatprep.mubr.bf16.mxu0 %v941
  %1705 = vmatmul.mubr.bf16.gmra.mrb[0].mxu0 %v940
  %v1706 = vpop.f32.mrb[0].mxu0
  %v1707 = vadd.f32 %v278, %v1706
  %v1708 = vpop.f32.mrb[0].mxu0
  %v1709 = vpop.f32.mrb[0].mxu0
  %v1710 = vadd.f32 %v278, %v1709
  %v1711 = vpop.f32.mrb[0].mxu0
  %1712 = vmatprep.mubr.bf16.mxu0 %v944
  %1713 = vmatmul.mubr.bf16.gmra.mrb[0].mxu0 %v943
  %v1714 = vpop.f32.mrb[0].mxu0
  %v1715 = vadd.f32 %v278, %v1714
  %v1716 = vpop.f32.mrb[0].mxu0
  %v1717 = vpop.f32.mrb[0].mxu0
  %v1718 = vadd.f32 %v278, %v1717
  %v1719 = vpop.f32.mrb[0].mxu0
  %1720 = vmatprep.mubr.bf16.mxu0 %v947
  %1721 = vmatmul.mubr.bf16.gmra.mrb[0].mxu0 %v946
  %v1722 = vpop.f32.mrb[0].mxu0
  %v1723 = vadd.f32 %v278, %v1722
  %v1724 = vpop.f32.mrb[0].mxu0
  %v1725 = vpop.f32.mrb[0].mxu0
  %v1726 = vadd.f32 %v278, %v1725
  %v1727 = vpop.f32.mrb[0].mxu0
  %1728 = vmatprep.mubr.bf16.mxu0 %v950
  %1729 = vmatmul.mubr.bf16.gmra.mrb[0].mxu0 %v949
  %v1730 = vpop.f32.mrb[0].mxu0
  %v1731 = vadd.f32 %v278, %v1730
  %v1732 = vpop.f32.mrb[0].mxu0
  %v1733 = vpop.f32.mrb[0].mxu0
  %v1734 = vadd.f32 %v278, %v1733
  %v1735 = vpop.f32.mrb[0].mxu0
  %1736 = vmatprep.mubr.bf16.mxu0 %v953
  %1737 = vmatmul.mubr.bf16.gmra.mrb[0].mxu0 %v952
  %v1738 = vpop.f32.mrb[0].mxu0
  %v1739 = vadd.f32 %v278, %v1738
  %v1740 = vpop.f32.mrb[0].mxu0
  %v1741 = vpop.f32.mrb[0].mxu0
  %v1742 = vadd.f32 %v278, %v1741
  %v1743 = vpop.f32.mrb[0].mxu0
  %1744 = vmatprep.mubr.bf16.mxu0 %v956
  %1745 = vmatmul.mubr.bf16.gmra.mrb[0].mxu0 %v955
  %v1746 = vpop.f32.mrb[0].mxu0
  %v1747 = vadd.f32 %v278, %v1746
  %v1748 = vpop.f32.mrb[0].mxu0
  %v1749 = vpop.f32.mrb[0].mxu0
  %v1750 = vadd.f32 %v278, %v1749
  %v1751 = vpop.f32.mrb[0].mxu0
  %1752 = vmatprep.mubr.bf16.mxu0 %v959
  %1753 = vmatmul.mubr.bf16.gmra.mrb[0].mxu0 %v958
  %v1754 = vpop.f32.mrb[0].mxu0
  %v1755 = vadd.f32 %v278, %v1754
  %v1756 = vpop.f32.mrb[0].mxu0
  %v1757 = vpop.f32.mrb[0].mxu0
  %v1758 = vadd.f32 %v278, %v1757
  %v1759 = vpop.f32.mrb[0].mxu0
  %1760 = vmatprep.mubr.bf16.mxu0 %v962
  %1761 = vmatmul.mubr.bf16.gmra.mrb[0].mxu0 %v961
  %v1762 = vpop.f32.mrb[0].mxu0
  %v1763 = vadd.f32 %v278, %v1762
  %v1764 = vpop.f32.mrb[0].mxu0
  %v1765 = vpop.f32.mrb[0].mxu0
  %v1766 = vadd.f32 %v278, %v1765
  %v1767 = vpop.f32.mrb[0].mxu0
  %1768 = vmatprep.mubr.bf16.mxu0 %v965
  %1769 = vmatmul.mubr.bf16.gmra.mrb[0].mxu0 %v964
  %v1770 = vpop.f32.mrb[0].mxu0
  %v1771 = vadd.f32 %v278, %v1770
  %v1772 = vpop.f32.mrb[0].mxu0
  %v1773 = vpop.f32.mrb[0].mxu0
  %v1774 = vadd.f32 %v278, %v1773
  %v1775 = vpop.f32.mrb[0].mxu0
  %1776 = vmatprep.mubr.bf16.mxu0 %v968
  %1777 = vmatmul.mubr.bf16.gmra.mrb[0].mxu0 %v967
  %v1778 = vpop.f32.mrb[0].mxu0
  %v1779 = vadd.f32 %v278, %v1778
  %v1780 = vpop.f32.mrb[0].mxu0
  %v1781 = vpop.f32.mrb[0].mxu0
  %v1782 = vadd.f32 %v278, %v1781
  %v1783 = vpop.f32.mrb[0].mxu0
  %1784 = vmatprep.mubr.bf16.mxu0 %v971
  %1785 = vmatmul.mubr.bf16.gmra.mrb[0].mxu0 %v970
  %v1786 = vpop.f32.mrb[0].mxu0
  %v1787 = vadd.f32 %v278, %v1786
  %v1788 = vpop.f32.mrb[0].mxu0
  %v1789 = vpop.f32.mrb[0].mxu0
  %v1790 = vadd.f32 %v278, %v1789
  %v1791 = vpop.f32.mrb[0].mxu0
  %1792 = vmatprep.mubr.bf16.mxu0 %v974
  %1793 = vmatmul.mubr.bf16.gmra.mrb[0].mxu0 %v973
  %v1794 = vpop.f32.mrb[0].mxu0
  %v1795 = vadd.f32 %v278, %v1794
  %v1796 = vpop.f32.mrb[0].mxu0
  %v1797 = vpop.f32.mrb[0].mxu0
  %v1798 = vadd.f32 %v278, %v1797
  %v1799 = vpop.f32.mrb[0].mxu0
  %1800 = vmatprep.mubr.bf16.mxu0 %v977
  %1801 = vmatmul.mubr.bf16.gmra.mrb[0].mxu0 %v976
  %v1802 = vpop.f32.mrb[0].mxu0
  %v1803 = vadd.f32 %v278, %v1802
  %v1804 = vpop.f32.mrb[0].mxu0
  %v1805 = vpop.f32.mrb[0].mxu0
  %v1806 = vadd.f32 %v278, %v1805
  %v1807 = vpop.f32.mrb[0].mxu0
  %1808 = vmatprep.mubr.bf16.mxu0 %v980
  %1809 = vmatmul.mubr.bf16.gmra.mrb[0].mxu0 %v979
  %v1810 = vpop.f32.mrb[0].mxu0
  %v1811 = vadd.f32 %v278, %v1810
  %v1812 = vpop.f32.mrb[0].mxu0
  %v1813 = vpop.f32.mrb[0].mxu0
  %v1814 = vadd.f32 %v278, %v1813
  %v1815 = vpop.f32.mrb[0].mxu0
  %1816 = vmatprep.mubr.bf16.mxu0 %v983
  %1817 = vmatmul.mubr.bf16.gmra.mrb[0].mxu0 %v982
  %v1818 = vpop.f32.mrb[0].mxu0
  %v1819 = vadd.f32 %v278, %v1818
  %v1820 = vpop.f32.mrb[0].mxu0
  %v1821 = vpop.f32.mrb[0].mxu0
  %v1822 = vadd.f32 %v278, %v1821
  %v1823 = vpop.f32.mrb[0].mxu0
  %1824 = vmatprep.mubr.bf16.mxu0 %v986
  %1825 = vmatmul.mubr.bf16.gmra.mrb[0].mxu0 %v985
  %v1826 = vpop.f32.mrb[0].mxu0
  %v1827 = vadd.f32 %v278, %v1826
  %v1828 = vpop.f32.mrb[0].mxu0
  %v1829 = vpop.f32.mrb[0].mxu0
  %v1830 = vadd.f32 %v278, %v1829
  %v1831 = vpop.f32.mrb[0].mxu0
  %1832 = vmatprep.mubr.bf16.mxu0 %v989
  %1833 = vmatmul.mubr.bf16.gmra.mrb[0].mxu0 %v988
  %v1834 = vpop.f32.mrb[0].mxu0
  %v1835 = vadd.f32 %v278, %v1834
  %v1836 = vpop.f32.mrb[0].mxu0
  %v1837 = vpop.f32.mrb[0].mxu0
  %v1838 = vadd.f32 %v278, %v1837
  %v1839 = vpop.f32.mrb[0].mxu0
  %1840 = vmatprep.mubr.bf16.mxu0 %v992
  %1841 = vmatmul.mubr.bf16.gmra.mrb[0].mxu0 %v991
  %v1842 = vpop.f32.mrb[0].mxu0
  %v1843 = vadd.f32 %v278, %v1842
  %v1844 = vpop.f32.mrb[0].mxu0
  %v1845 = vpop.f32.mrb[0].mxu0
  %v1846 = vadd.f32 %v278, %v1845
  %v1847 = vpop.f32.mrb[0].mxu0
  %1848 = vmatprep.mubr.bf16.mxu0 %v995
  %1849 = vmatmul.mubr.bf16.gmra.mrb[0].mxu0 %v994
  %v1850 = vpop.f32.mrb[0].mxu0
  %v1851 = vadd.f32 %v278, %v1850
  %v1852 = vpop.f32.mrb[0].mxu0
  %v1853 = vpop.f32.mrb[0].mxu0
  %v1854 = vadd.f32 %v278, %v1853
  %v1855 = vpop.f32.mrb[0].mxu0
  %1856 = vmatprep.mubr.bf16.mxu0 %v998
  %1857 = vmatmul.mubr.bf16.gmra.mrb[0].mxu0 %v997
  %v1858 = vpop.f32.mrb[0].mxu0
  %v1859 = vadd.f32 %v278, %v1858
  %v1860 = vpop.f32.mrb[0].mxu0
  %v1861 = vpop.f32.mrb[0].mxu0
  %v1862 = vadd.f32 %v278, %v1861
  %v1863 = vpop.f32.mrb[0].mxu0
  %1864 = vmatprep.mubr.bf16.mxu0 %v1001
  %1865 = vmatmul.mubr.bf16.gmra.mrb[0].mxu0 %v1000
  %v1866 = vpop.f32.mrb[0].mxu0
  %v1867 = vadd.f32 %v278, %v1866
  %v1868 = vpop.f32.mrb[0].mxu0
  %v1869 = vpop.f32.mrb[0].mxu0
  %v1870 = vpop.f32.mrb[0].mxu0
  %1871 = vdwg.mxu0
  %1872 = vmatprep.subr.bf16.mxu0 0
  %1873 = vmatpush1.bf16.msra.mxu0 %v1203
  %1874 = vmatprep.subr.bf16.mxu0 0
  %1875 = vmatpush1.bf16.msra.mxu0 %v1204
  %1876 = vmatprep.subr.bf16.mxu0 0
  %1877 = vmatpush1.bf16.msra.mxu0 0
  %1878 = vmatprep.subr.bf16.mxu0 0
  %1879 = vmatpush1.bf16.msra.mxu0 0
  %1880 = vmatprep.subr.bf16.mxu0 0
  %1881 = vmatpush1.bf16.msra.mxu0 0
  %1882 = vmatprep.subr.bf16.mxu0 0
  %1883 = vmatpush1.bf16.msra.mxu0 0
  %1884 = vmatprep.subr.bf16.mxu0 0
  %1885 = vmatpush1.bf16.msra.mxu0 0
  %1886 = vmatprep.subr.bf16.mxu0 0
  %1887 = vmatpush1.bf16.msra.mxu0 0
  %1888 = vmatprep.subr.bf16.mxu0 0
  %1889 = vmatpush1.bf16.msra.mxu0 0
  %1890 = vmatprep.subr.bf16.mxu0 0
  %1891 = vmatpush1.bf16.msra.mxu0 0
  %1892 = vmatprep.subr.bf16.mxu0 0
  %1893 = vmatpush1.bf16.msra.mxu0 0
  %1894 = vmatprep.subr.bf16.mxu0 0
  %1895 = vmatpush1.bf16.msra.mxu0 0
  %1896 = vmatprep.subr.bf16.mxu0 0
  %1897 = vmatpush1.bf16.msra.mxu0 0
  %1898 = vmatprep.subr.bf16.mxu0 0
  %1899 = vmatpush1.bf16.msra.mxu0 0
  %1900 = vmatprep.subr.bf16.mxu0 0
  %1901 = vmatpush1.bf16.msra.mxu0 0
  %1902 = vmatprep.subr.bf16.mxu0 0
  %1903 = vmatpush1.bf16.msra.mxu0 0
  %1904 = vmatprep.mubr.bf16.mxu0 0
  %1905 = vmatmul.mubr.bf16.gmra.mrb[0].mxu0 %v1225
  %v1906 = vpop.f32.mrb[0].mxu0
  %v1907 = vadd.f32 %v1427, %v1906
  %v1908 = vpop.f32.mrb[0].mxu0
  %v1909 = vpop.f32.mrb[0].mxu0
  %v1910 = vadd.f32 %v1430, %v1909
  %v1911 = vpop.f32.mrb[0].mxu0
  %1912 = vmatprep.mubr.bf16.mxu0 0
  %1913 = vmatmul.mubr.bf16.gmra.mrb[0].mxu0 %v1228
  %v1914 = vpop.f32.mrb[0].mxu0
  %v1915 = vadd.f32 %v1435, %v1914
  %v1916 = vpop.f32.mrb[0].mxu0
  %v1917 = vpop.f32.mrb[0].mxu0
  %v1918 = vadd.f32 %v1438, %v1917
  %v1919 = vpop.f32.mrb[0].mxu0
  %1920 = vmatprep.mubr.bf16.mxu0 0
  %1921 = vmatmul.mubr.bf16.gmra.mrb[0].mxu0 %v1231
  %v1922 = vpop.f32.mrb[0].mxu0
  %v1923 = vadd.f32 %v1443, %v1922
  %v1924 = vpop.f32.mrb[0].mxu0
  %v1925 = vpop.f32.mrb[0].mxu0
  %v1926 = vadd.f32 %v1446, %v1925
  %v1927 = vpop.f32.mrb[0].mxu0
  %1928 = vmatprep.mubr.bf16.mxu0 0
  %1929 = vmatmul.mubr.bf16.gmra.mrb[0].mxu0 %v1234
  %v1930 = vpop.f32.mrb[0].mxu0
  %v1931 = vadd.f32 %v1451, %v1930
  %v1932 = vpop.f32.mrb[0].mxu0
  %v1933 = vpop.f32.mrb[0].mxu0
  %v1934 = vadd.f32 %v1454, %v1933
  %v1935 = vpop.f32.mrb[0].mxu0
  %1936 = vmatprep.mubr.bf16.mxu0 0
  %1937 = vmatmul.mubr.bf16.gmra.mrb[0].mxu0 %v1237
  %v1938 = vpop.f32.mrb[0].mxu0
  %v1939 = vadd.f32 %v1459, %v1938
  %v1940 = vpop.f32.mrb[0].mxu0
  %v1941 = vpop.f32.mrb[0].mxu0
  %v1942 = vadd.f32 %v1462, %v1941
  %v1943 = vpop.f32.mrb[0].mxu0
  %1944 = vmatprep.mubr.bf16.mxu0 0
  %1945 = vmatmul.mubr.bf16.gmra.mrb[0].mxu0 %v1240
  %v1946 = vpop.f32.mrb[0].mxu0
  %v1947 = vadd.f32 %v1467, %v1946
  %v1948 = vpop.f32.mrb[0].mxu0
  %v1949 = vpop.f32.mrb[0].mxu0
  %v1950 = vadd.f32 %v1470, %v1949
  %v1951 = vpop.f32.mrb[0].mxu0
  %1952 = vmatprep.mubr.bf16.mxu0 0
  %1953 = vmatmul.mubr.bf16.gmra.mrb[0].mxu0 %v1243
  %v1954 = vpop.f32.mrb[0].mxu0
  %v1955 = vadd.f32 %v1475, %v1954
  %v1956 = vpop.f32.mrb[0].mxu0
  %v1957 = vpop.f32.mrb[0].mxu0
  %v1958 = vadd.f32 %v1478, %v1957
  %v1959 = vpop.f32.mrb[0].mxu0
  %1960 = vmatprep.mubr.bf16.mxu0 0
  %1961 = vmatmul.mubr.bf16.gmra.mrb[0].mxu0 %v1246
  %v1962 = vpop.f32.mrb[0].mxu0
  %v1963 = vadd.f32 %v1483, %v1962
  %v1964 = vpop.f32.mrb[0].mxu0
  %v1965 = vpop.f32.mrb[0].mxu0
  %v1966 = vadd.f32 %v1486, %v1965
  %v1967 = vpop.f32.mrb[0].mxu0
  %1968 = vmatprep.mubr.bf16.mxu0 0
  %1969 = vmatmul.mubr.bf16.gmra.mrb[0].mxu0 %v1249
  %v1970 = vpop.f32.mrb[0].mxu0
  %v1971 = vadd.f32 %v1491, %v1970
  %v1972 = vpop.f32.mrb[0].mxu0
  %v1973 = vpop.f32.mrb[0].mxu0
  %v1974 = vadd.f32 %v1494, %v1973
  %v1975 = vpop.f32.mrb[0].mxu0
  %1976 = vmatprep.mubr.bf16.mxu0 0
  %1977 = vmatmul.mubr.bf16.gmra.mrb[0].mxu0 %v1252
  %v1978 = vpop.f32.mrb[0].mxu0
  %v1979 = vadd.f32 %v1499, %v1978
  %v1980 = vpop.f32.mrb[0].mxu0
  %v1981 = vpop.f32.mrb[0].mxu0
  %v1982 = vadd.f32 %v1502, %v1981
  %v1983 = vpop.f32.mrb[0].mxu0
  %1984 = vmatprep.mubr.bf16.mxu0 0
  %1985 = vmatmul.mubr.bf16.gmra.mrb[0].mxu0 %v1255
  %v1986 = vpop.f32.mrb[0].mxu0
  %v1987 = vadd.f32 %v1507, %v1986
  %v1988 = vpop.f32.mrb[0].mxu0
  %v1989 = vpop.f32.mrb[0].mxu0
  %v1990 = vadd.f32 %v1510, %v1989
  %v1991 = vpop.f32.mrb[0].mxu0
  %1992 = vmatprep.mubr.bf16.mxu0 0
  %1993 = vmatmul.mubr.bf16.gmra.mrb[0].mxu0 %v1258
  %v1994 = vpop.f32.mrb[0].mxu0
  %v1995 = vadd.f32 %v1515, %v1994
  %v1996 = vpop.f32.mrb[0].mxu0
  %v1997 = vpop.f32.mrb[0].mxu0
  %v1998 = vadd.f32 %v1518, %v1997
  %v1999 = vpop.f32.mrb[0].mxu0
  %2000 = vmatprep.mubr.bf16.mxu0 0
  %2001 = vmatmul.mubr.bf16.gmra.mrb[0].mxu0 %v1261
  %v2002 = vpop.f32.mrb[0].mxu0
  %v2003 = vadd.f32 %v1523, %v2002
  %v2004 = vpop.f32.mrb[0].mxu0
  %v2005 = vpop.f32.mrb[0].mxu0
  %v2006 = vadd.f32 %v1526, %v2005
  %v2007 = vpop.f32.mrb[0].mxu0
  %2008 = vmatprep.mubr.bf16.mxu0 0
  %2009 = vmatmul.mubr.bf16.gmra.mrb[0].mxu0 %v1264
  %v2010 = vpop.f32.mrb[0].mxu0
  %v2011 = vadd.f32 %v1531, %v2010
  %v2012 = vpop.f32.mrb[0].mxu0
  %v2013 = vpop.f32.mrb[0].mxu0
  %v2014 = vadd.f32 %v1534, %v2013
  %v2015 = vpop.f32.mrb[0].mxu0
  %2016 = vmatprep.mubr.bf16.mxu0 0
  %2017 = vmatmul.mubr.bf16.gmra.mrb[0].mxu0 %v1267
  %v2018 = vpop.f32.mrb[0].mxu0
  %v2019 = vadd.f32 %v1539, %v2018
  %v2020 = vpop.f32.mrb[0].mxu0
  %v2021 = vpop.f32.mrb[0].mxu0
  %v2022 = vadd.f32 %v1542, %v2021
  %v2023 = vpop.f32.mrb[0].mxu0
  %2024 = vmatprep.mubr.bf16.mxu0 0
  %2025 = vmatmul.mubr.bf16.gmra.mrb[0].mxu0 %v1270
  %v2026 = vpop.f32.mrb[0].mxu0
  %v2027 = vadd.f32 %v1547, %v2026
  %v2028 = vpop.f32.mrb[0].mxu0
  %v2029 = vpop.f32.mrb[0].mxu0
  %v2030 = vadd.f32 %v1550, %v2029
  %v2031 = vpop.f32.mrb[0].mxu0
  %2032 = vmatprep.mubr.bf16.mxu0 0
  %2033 = vmatmul.mubr.bf16.gmra.mrb[0].mxu0 %v1273
  %v2034 = vpop.f32.mrb[0].mxu0
  %v2035 = vadd.f32 %v1555, %v2034
  %v2036 = vpop.f32.mrb[0].mxu0
  %v2037 = vpop.f32.mrb[0].mxu0
  %v2038 = vadd.f32 %v1558, %v2037
  %v2039 = vpop.f32.mrb[0].mxu0
  %2040 = vmatprep.mubr.bf16.mxu0 0
  %2041 = vmatmul.mubr.bf16.gmra.mrb[0].mxu0 %v1276
  %v2042 = vpop.f32.mrb[0].mxu0
  %v2043 = vadd.f32 %v1563, %v2042
  %v2044 = vpop.f32.mrb[0].mxu0
  %v2045 = vpop.f32.mrb[0].mxu0
  %v2046 = vadd.f32 %v1566, %v2045
  %v2047 = vpop.f32.mrb[0].mxu0
  %2048 = vmatprep.mubr.bf16.mxu0 0
  %2049 = vmatmul.mubr.bf16.gmra.mrb[0].mxu0 %v1279
  %v2050 = vpop.f32.mrb[0].mxu0
  %v2051 = vadd.f32 %v1571, %v2050
  %v2052 = vpop.f32.mrb[0].mxu0
  %v2053 = vpop.f32.mrb[0].mxu0
  %v2054 = vadd.f32 %v1574, %v2053
  %v2055 = vpop.f32.mrb[0].mxu0
  %2056 = vmatprep.mubr.bf16.mxu0 0
  %2057 = vmatmul.mubr.bf16.gmra.mrb[0].mxu0 %v1282
  %v2058 = vpop.f32.mrb[0].mxu0
  %v2059 = vadd.f32 %v1579, %v2058
  %v2060 = vpop.f32.mrb[0].mxu0
  %v2061 = vpop.f32.mrb[0].mxu0
  %v2062 = vadd.f32 %v1582, %v2061
  %v2063 = vpop.f32.mrb[0].mxu0
  %2064 = vmatprep.mubr.bf16.mxu0 0
  %2065 = vmatmul.mubr.bf16.gmra.mrb[0].mxu0 %v1285
  %v2066 = vpop.f32.mrb[0].mxu0
  %v2067 = vadd.f32 %v1587, %v2066
  %v2068 = vpop.f32.mrb[0].mxu0
  %v2069 = vpop.f32.mrb[0].mxu0
  %v2070 = vadd.f32 %v1590, %v2069
  %v2071 = vpop.f32.mrb[0].mxu0
  %2072 = vmatprep.mubr.bf16.mxu0 0
  %2073 = vmatmul.mubr.bf16.gmra.mrb[0].mxu0 %v1288
  %v2074 = vpop.f32.mrb[0].mxu0
  %v2075 = vadd.f32 %v1595, %v2074
  %v2076 = vpop.f32.mrb[0].mxu0
  %v2077 = vpop.f32.mrb[0].mxu0
  %v2078 = vadd.f32 %v1598, %v2077
  %v2079 = vpop.f32.mrb[0].mxu0
  %2080 = vmatprep.mubr.bf16.mxu0 0
  %2081 = vmatmul.mubr.bf16.gmra.mrb[0].mxu0 %v1291
  %v2082 = vpop.f32.mrb[0].mxu0
  %v2083 = vadd.f32 %v1603, %v2082
  %v2084 = vpop.f32.mrb[0].mxu0
  %v2085 = vpop.f32.mrb[0].mxu0
  %v2086 = vadd.f32 %v1606, %v2085
  %v2087 = vpop.f32.mrb[0].mxu0
  %2088 = vmatprep.mubr.bf16.mxu0 0
  %2089 = vmatmul.mubr.bf16.gmra.mrb[0].mxu0 %v1294
  %v2090 = vpop.f32.mrb[0].mxu0
  %v2091 = vadd.f32 %v1611, %v2090
  %v2092 = vpop.f32.mrb[0].mxu0
  %v2093 = vpop.f32.mrb[0].mxu0
  %v2094 = vadd.f32 %v1614, %v2093
  %v2095 = vpop.f32.mrb[0].mxu0
  %2096 = vmatprep.mubr.bf16.mxu0 0
  %2097 = vmatmul.mubr.bf16.gmra.mrb[0].mxu0 %v1297
  %v2098 = vpop.f32.mrb[0].mxu0
  %v2099 = vadd.f32 %v1619, %v2098
  %v2100 = vpop.f32.mrb[0].mxu0
  %v2101 = vpop.f32.mrb[0].mxu0
  %v2102 = vadd.f32 %v1622, %v2101
  %v2103 = vpop.f32.mrb[0].mxu0
  %2104 = vmatprep.mubr.bf16.mxu0 0
  %2105 = vmatmul.mubr.bf16.gmra.mrb[0].mxu0 %v1300
  %v2106 = vpop.f32.mrb[0].mxu0
  %v2107 = vadd.f32 %v1627, %v2106
  %v2108 = vpop.f32.mrb[0].mxu0
  %v2109 = vpop.f32.mrb[0].mxu0
  %v2110 = vadd.f32 %v1630, %v2109
  %v2111 = vpop.f32.mrb[0].mxu0
  %2112 = vmatprep.mubr.bf16.mxu0 0
  %2113 = vmatmul.mubr.bf16.gmra.mrb[0].mxu0 %v1303
  %v2114 = vpop.f32.mrb[0].mxu0
  %v2115 = vadd.f32 %v1635, %v2114
  %v2116 = vpop.f32.mrb[0].mxu0
  %v2117 = vpop.f32.mrb[0].mxu0
  %v2118 = vadd.f32 %v1638, %v2117
  %v2119 = vpop.f32.mrb[0].mxu0
  %2120 = vmatprep.mubr.bf16.mxu0 0
  %2121 = vmatmul.mubr.bf16.gmra.mrb[0].mxu0 %v1306
  %v2122 = vpop.f32.mrb[0].mxu0
  %v2123 = vadd.f32 %v1643, %v2122
  %v2124 = vpop.f32.mrb[0].mxu0
  %v2125 = vpop.f32.mrb[0].mxu0
  %v2126 = vadd.f32 %v1646, %v2125
  %v2127 = vpop.f32.mrb[0].mxu0
  %2128 = vmatprep.mubr.bf16.mxu0 0
  %2129 = vmatmul.mubr.bf16.gmra.mrb[0].mxu0 %v1309
  %v2130 = vpop.f32.mrb[0].mxu0
  %v2131 = vadd.f32 %v1651, %v2130
  %v2132 = vpop.f32.mrb[0].mxu0
  %v2133 = vpop.f32.mrb[0].mxu0
  %v2134 = vadd.f32 %v1654, %v2133
  %v2135 = vpop.f32.mrb[0].mxu0
  %2136 = vmatprep.mubr.bf16.mxu0 0
  %2137 = vmatmul.mubr.bf16.gmra.mrb[0].mxu0 %v1312
  %v2138 = vpop.f32.mrb[0].mxu0
  %v2139 = vadd.f32 %v1659, %v2138
  %v2140 = vpop.f32.mrb[0].mxu0
  %v2141 = vpop.f32.mrb[0].mxu0
  %v2142 = vadd.f32 %v1662, %v2141
  %v2143 = vpop.f32.mrb[0].mxu0
  %2144 = vmatprep.mubr.bf16.mxu0 0
  %2145 = vmatmul.mubr.bf16.gmra.mrb[0].mxu0 %v1315
  %v2146 = vpop.f32.mrb[0].mxu0
  %v2147 = vadd.f32 %v1667, %v2146
  %v2148 = vpop.f32.mrb[0].mxu0
  %v2149 = vpop.f32.mrb[0].mxu0
  %v2150 = vadd.f32 %v1670, %v2149
  %v2151 = vpop.f32.mrb[0].mxu0
  %2152 = vmatprep.mubr.bf16.mxu0 0
  %2153 = vmatmul.mubr.bf16.gmra.mrb[0].mxu0 %v1318
  %v2154 = vpop.f32.mrb[0].mxu0
  %v2155 = vadd.f32 %v1675, %v2154
  %v2156 = vpop.f32.mrb[0].mxu0
  %v2157 = vpop.f32.mrb[0].mxu0
  %v2158 = vadd.f32 %v1678, %v2157
  %v2159 = vpop.f32.mrb[0].mxu0
  %2160 = vmatprep.mubr.bf16.mxu0 0
  %2161 = vmatmul.mubr.bf16.gmra.mrb[0].mxu0 %v1321
  %v2162 = vpop.f32.mrb[0].mxu0
  %v2163 = vadd.f32 %v1683, %v2162
  %v2164 = vpop.f32.mrb[0].mxu0
  %v2165 = vpop.f32.mrb[0].mxu0
  %v2166 = vadd.f32 %v1686, %v2165
  %v2167 = vpop.f32.mrb[0].mxu0
  %2168 = vmatprep.mubr.bf16.mxu0 0
  %2169 = vmatmul.mubr.bf16.gmra.mrb[0].mxu0 %v1324
  %v2170 = vpop.f32.mrb[0].mxu0
  %v2171 = vadd.f32 %v1691, %v2170
  %v2172 = vpop.f32.mrb[0].mxu0
  %v2173 = vpop.f32.mrb[0].mxu0
  %v2174 = vadd.f32 %v1694, %v2173
  %v2175 = vpop.f32.mrb[0].mxu0
  %2176 = vmatprep.mubr.bf16.mxu0 0
  %2177 = vmatmul.mubr.bf16.gmra.mrb[0].mxu0 %v1327
  %v2178 = vpop.f32.mrb[0].mxu0
  %v2179 = vadd.f32 %v1699, %v2178
  %v2180 = vpop.f32.mrb[0].mxu0
  %v2181 = vpop.f32.mrb[0].mxu0
  %v2182 = vadd.f32 %v1702, %v2181
  %v2183 = vpop.f32.mrb[0].mxu0
  %2184 = vmatprep.mubr.bf16.mxu0 0
  %2185 = vmatmul.mubr.bf16.gmra.mrb[0].mxu0 %v1330
  %v2186 = vpop.f32.mrb[0].mxu0
  %v2187 = vadd.f32 %v1707, %v2186
  %v2188 = vpop.f32.mrb[0].mxu0
  %v2189 = vpop.f32.mrb[0].mxu0
  %v2190 = vadd.f32 %v1710, %v2189
  %v2191 = vpop.f32.mrb[0].mxu0
  %2192 = vmatprep.mubr.bf16.mxu0 0
  %2193 = vmatmul.mubr.bf16.gmra.mrb[0].mxu0 %v1333
  %v2194 = vpop.f32.mrb[0].mxu0
  %v2195 = vadd.f32 %v1715, %v2194
  %v2196 = vpop.f32.mrb[0].mxu0
  %v2197 = vpop.f32.mrb[0].mxu0
  %v2198 = vadd.f32 %v1718, %v2197
  %v2199 = vpop.f32.mrb[0].mxu0
  %2200 = vmatprep.mubr.bf16.mxu0 0
  %2201 = vmatmul.mubr.bf16.gmra.mrb[0].mxu0 %v1336
  %v2202 = vpop.f32.mrb[0].mxu0
  %v2203 = vadd.f32 %v1723, %v2202
  %v2204 = vpop.f32.mrb[0].mxu0
  %v2205 = vpop.f32.mrb[0].mxu0
  %v2206 = vadd.f32 %v1726, %v2205
  %v2207 = vpop.f32.mrb[0].mxu0
  %2208 = vmatprep.mubr.bf16.mxu0 0
  %2209 = vmatmul.mubr.bf16.gmra.mrb[0].mxu0 %v1339
  %v2210 = vpop.f32.mrb[0].mxu0
  %v2211 = vadd.f32 %v1731, %v2210
  %v2212 = vpop.f32.mrb[0].mxu0
  %v2213 = vpop.f32.mrb[0].mxu0
  %v2214 = vadd.f32 %v1734, %v2213
  %v2215 = vpop.f32.mrb[0].mxu0
  %2216 = vmatprep.mubr.bf16.mxu0 0
  %2217 = vmatmul.mubr.bf16.gmra.mrb[0].mxu0 %v1342
  %v2218 = vpop.f32.mrb[0].mxu0
  %v2219 = vadd.f32 %v1739, %v2218
  %v2220 = vpop.f32.mrb[0].mxu0
  %v2221 = vpop.f32.mrb[0].mxu0
  %v2222 = vadd.f32 %v1742, %v2221
  %v2223 = vpop.f32.mrb[0].mxu0
  %2224 = vmatprep.mubr.bf16.mxu0 0
  %2225 = vmatmul.mubr.bf16.gmra.mrb[0].mxu0 %v1345
  %v2226 = vpop.f32.mrb[0].mxu0
  %v2227 = vadd.f32 %v1747, %v2226
  %v2228 = vpop.f32.mrb[0].mxu0
  %v2229 = vpop.f32.mrb[0].mxu0
  %v2230 = vadd.f32 %v1750, %v2229
  %v2231 = vpop.f32.mrb[0].mxu0
  %2232 = vmatprep.mubr.bf16.mxu0 0
  %2233 = vmatmul.mubr.bf16.gmra.mrb[0].mxu0 %v1348
  %v2234 = vpop.f32.mrb[0].mxu0
  %v2235 = vadd.f32 %v1755, %v2234
  %v2236 = vpop.f32.mrb[0].mxu0
  %v2237 = vpop.f32.mrb[0].mxu0
  %v2238 = vadd.f32 %v1758, %v2237
  %v2239 = vpop.f32.mrb[0].mxu0
  %2240 = vmatprep.mubr.bf16.mxu0 0
  %2241 = vmatmul.mubr.bf16.gmra.mrb[0].mxu0 %v1351
  %v2242 = vpop.f32.mrb[0].mxu0
  %v2243 = vadd.f32 %v1763, %v2242
  %v2244 = vpop.f32.mrb[0].mxu0
  %v2245 = vpop.f32.mrb[0].mxu0
  %v2246 = vadd.f32 %v1766, %v2245
  %v2247 = vpop.f32.mrb[0].mxu0
  %2248 = vmatprep.mubr.bf16.mxu0 0
  %2249 = vmatmul.mubr.bf16.gmra.mrb[0].mxu0 %v1354
  %v2250 = vpop.f32.mrb[0].mxu0
  %v2251 = vadd.f32 %v1771, %v2250
  %v2252 = vpop.f32.mrb[0].mxu0
  %v2253 = vpop.f32.mrb[0].mxu0
  %v2254 = vadd.f32 %v1774, %v2253
  %v2255 = vpop.f32.mrb[0].mxu0
  %2256 = vmatprep.mubr.bf16.mxu0 0
  %2257 = vmatmul.mubr.bf16.gmra.mrb[0].mxu0 %v1357
  %v2258 = vpop.f32.mrb[0].mxu0
  %v2259 = vadd.f32 %v1779, %v2258
  %v2260 = vpop.f32.mrb[0].mxu0
  %v2261 = vpop.f32.mrb[0].mxu0
  %v2262 = vadd.f32 %v1782, %v2261
  %v2263 = vpop.f32.mrb[0].mxu0
  %2264 = vmatprep.mubr.bf16.mxu0 0
  %2265 = vmatmul.mubr.bf16.gmra.mrb[0].mxu0 %v1360
  %v2266 = vpop.f32.mrb[0].mxu0
  %v2267 = vadd.f32 %v1787, %v2266
  %v2268 = vpop.f32.mrb[0].mxu0
  %v2269 = vpop.f32.mrb[0].mxu0
  %v2270 = vadd.f32 %v1790, %v2269
  %v2271 = vpop.f32.mrb[0].mxu0
  %2272 = vmatprep.mubr.bf16.mxu0 0
  %2273 = vmatmul.mubr.bf16.gmra.mrb[0].mxu0 %v1363
  %v2274 = vpop.f32.mrb[0].mxu0
  %v2275 = vadd.f32 %v1795, %v2274
  %v2276 = vpop.f32.mrb[0].mxu0
  %v2277 = vpop.f32.mrb[0].mxu0
  %v2278 = vadd.f32 %v1798, %v2277
  %v2279 = vpop.f32.mrb[0].mxu0
  %2280 = vmatprep.mubr.bf16.mxu0 0
  %2281 = vmatmul.mubr.bf16.gmra.mrb[0].mxu0 %v1366
  %v2282 = vpop.f32.mrb[0].mxu0
  %v2283 = vadd.f32 %v1803, %v2282
  %v2284 = vpop.f32.mrb[0].mxu0
  %v2285 = vpop.f32.mrb[0].mxu0
  %v2286 = vadd.f32 %v1806, %v2285
  %v2287 = vpop.f32.mrb[0].mxu0
  %2288 = vmatprep.mubr.bf16.mxu0 0
  %2289 = vmatmul.mubr.bf16.gmra.mrb[0].mxu0 %v1369
  %v2290 = vpop.f32.mrb[0].mxu0
  %v2291 = vadd.f32 %v1811, %v2290
  %v2292 = vpop.f32.mrb[0].mxu0
  %v2293 = vpop.f32.mrb[0].mxu0
  %v2294 = vadd.f32 %v1814, %v2293
  %v2295 = vpop.f32.mrb[0].mxu0
  %2296 = vmatprep.mubr.bf16.mxu0 0
  %2297 = vmatmul.mubr.bf16.gmra.mrb[0].mxu0 %v1372
  %v2298 = vpop.f32.mrb[0].mxu0
  %v2299 = vadd.f32 %v1819, %v2298
  %v2300 = vpop.f32.mrb[0].mxu0
  %v2301 = vpop.f32.mrb[0].mxu0
  %v2302 = vadd.f32 %v1822, %v2301
  %v2303 = vpop.f32.mrb[0].mxu0
  %2304 = vmatprep.mubr.bf16.mxu0 0
  %2305 = vmatmul.mubr.bf16.gmra.mrb[0].mxu0 %v1375
  %v2306 = vpop.f32.mrb[0].mxu0
  %v2307 = vadd.f32 %v1827, %v2306
  %v2308 = vpop.f32.mrb[0].mxu0
  %v2309 = vpop.f32.mrb[0].mxu0
  %v2310 = vadd.f32 %v1830, %v2309
  %v2311 = vpop.f32.mrb[0].mxu0
  %2312 = vmatprep.mubr.bf16.mxu0 0
  %2313 = vmatmul.mubr.bf16.gmra.mrb[0].mxu0 %v1378
  %v2314 = vpop.f32.mrb[0].mxu0
  %v2315 = vadd.f32 %v1835, %v2314
  %v2316 = vpop.f32.mrb[0].mxu0
  %v2317 = vpop.f32.mrb[0].mxu0
  %v2318 = vadd.f32 %v1838, %v2317
  %v2319 = vpop.f32.mrb[0].mxu0
  %2320 = vmatprep.mubr.bf16.mxu0 0
  %2321 = vmatmul.mubr.bf16.gmra.mrb[0].mxu0 %v1381
  %v2322 = vpop.f32.mrb[0].mxu0
  %v2323 = vadd.f32 %v1843, %v2322
  %v2324 = vpop.f32.mrb[0].mxu0
  %v2325 = vpop.f32.mrb[0].mxu0
  %v2326 = vadd.f32 %v1846, %v2325
  %v2327 = vpop.f32.mrb[0].mxu0
  %2328 = vmatprep.mubr.bf16.mxu0 0
  %2329 = vmatmul.mubr.bf16.gmra.mrb[0].mxu0 %v1384
  %v2330 = vpop.f32.mrb[0].mxu0
  %v2331 = vadd.f32 %v1851, %v2330
  %v2332 = vpop.f32.mrb[0].mxu0
  %v2333 = vpop.f32.mrb[0].mxu0
  %v2334 = vadd.f32 %v1854, %v2333
  %v2335 = vpop.f32.mrb[0].mxu0
  %2336 = vmatprep.mubr.bf16.mxu0 0
  %2337 = vmatmul.mubr.bf16.gmra.mrb[0].mxu0 %v1387
  %v2338 = vpop.f32.mrb[0].mxu0
  %v2339 = vadd.f32 %v1859, %v2338
  %v2340 = vpop.f32.mrb[0].mxu0
  %v2341 = vpop.f32.mrb[0].mxu0
  %v2342 = vadd.f32 %v1862, %v2341
  %v2343 = vpop.f32.mrb[0].mxu0
  %2344 = vmatprep.mubr.bf16.mxu0 0
  %2345 = vmatmul.mubr.bf16.gmra.mrb[0].mxu0 %v1390
  %v2346 = vpop.f32.mrb[0].mxu0
  %v2347 = vadd.f32 %v1867, %v2346
  %v2348 = vpop.f32.mrb[0].mxu0
  %v2349 = vpop.f32.mrb[0].mxu0
  %v2350 = vpop.f32.mrb[0].mxu0
  %2351 = vdwg.mxu0
  %v2352 = vmax.f32 %v1907, 0.0
  %v2353 = vmax.f32 %v1910, 0.0
  %v2354 = vmax.f32 %v1915, 0.0
  %v2355 = vmax.f32 %v1918, 0.0
  %v2356 = vmax.f32 %v1923, 0.0
  %v2357 = vmax.f32 %v1926, 0.0
  %v2358 = vmax.f32 %v1931, 0.0
  %v2359 = vmax.f32 %v1934, 0.0
  %v2360 = vmax.f32 %v1939, 0.0
  %v2361 = vmax.f32 %v1942, 0.0
  %v2362 = vmax.f32 %v1947, 0.0
  %v2363 = vmax.f32 %v1950, 0.0
  %v2364 = vmax.f32 %v1955, 0.0
  %v2365 = vmax.f32 %v1958, 0.0
  %v2366 = vmax.f32 %v1963, 0.0
  %v2367 = vmax.f32 %v1966, 0.0
  %v2368 = vmax.f32 %v1971, 0.0
  %v2369 = vmax.f32 %v1974, 0.0
  %v2370 = vmax.f32 %v1979, 0.0
  %v2371 = vmax.f32 %v1982, 0.0
  %v2372 = vmax.f32 %v1987, 0.0
  %v2373 = vmax.f32 %v1990, 0.0
  %v2374 = vmax.f32 %v1995, 0.0
  %v2375 = vmax.f32 %v1998, 0.0
  %v2376 = vmax.f32 %v2003, 0.0
  %v2377 = vmax.f32 %v2006, 0.0
  %v2378 = vmax.f32 %v2011, 0.0
  %v2379 = vmax.f32 %v2014, 0.0
  %v2380 = vmax.f32 %v2019, 0.0
  %v2381 = vmax.f32 %v2022, 0.0
  %v2382 = vmax.f32 %v2027, 0.0
  %v2383 = vmax.f32 %v2030, 0.0
  %v2384 = vmax.f32 %v2035, 0.0
  %v2385 = vmax.f32 %v2038, 0.0
  %v2386 = vmax.f32 %v2043, 0.0
  %v2387 = vmax.f32 %v2046, 0.0
  %v2388 = vmax.f32 %v2051, 0.0
  %v2389 = vmax.f32 %v2054, 0.0
  %v2390 = vmax.f32 %v2059, 0.0
  %v2391 = vmax.f32 %v2062, 0.0
  %v2392 = vmax.f32 %v2067, 0.0
  %v2393 = vmax.f32 %v2070, 0.0
  %v2394 = vmax.f32 %v2075, 0.0
  %v2395 = vmax.f32 %v2078, 0.0
  %v2396 = vmax.f32 %v2083, 0.0
  %v2397 = vmax.f32 %v2086, 0.0
  %v2398 = vmax.f32 %v2091, 0.0
  %v2399 = vmax.f32 %v2094, 0.0
  %v2400 = vmax.f32 %v2099, 0.0
  %v2401 = vmax.f32 %v2102, 0.0
  %v2402 = vmax.f32 %v2107, 0.0
  %v2403 = vmax.f32 %v2110, 0.0
  %v2404 = vmax.f32 %v2115, 0.0
  %v2405 = vmax.f32 %v2118, 0.0
  %v2406 = vmax.f32 %v2123, 0.0
  %v2407 = vmax.f32 %v2126, 0.0
  %v2408 = vmax.f32 %v2131, 0.0
  %v2409 = vmax.f32 %v2134, 0.0
  %v2410 = vmax.f32 %v2139, 0.0
  %v2411 = vmax.f32 %v2142, 0.0
  %v2412 = vmax.f32 %v2147, 0.0
  %v2413 = vmax.f32 %v2150, 0.0
  %v2414 = vmax.f32 %v2155, 0.0
  %v2415 = vmax.f32 %v2158, 0.0
  %v2416 = vmax.f32 %v2163, 0.0
  %v2417 = vmax.f32 %v2166, 0.0
  %v2418 = vmax.f32 %v2171, 0.0
  %v2419 = vmax.f32 %v2174, 0.0
  %v2420 = vmax.f32 %v2179, 0.0
  %v2421 = vmax.f32 %v2182, 0.0
  %v2422 = vmax.f32 %v2187, 0.0
  %v2423 = vmax.f32 %v2190, 0.0
  %v2424 = vmax.f32 %v2195, 0.0
  %v2425 = vmax.f32 %v2198, 0.0
  %v2426 = vmax.f32 %v2203, 0.0
  %v2427 = vmax.f32 %v2206, 0.0
  %v2428 = vmax.f32 %v2211, 0.0
  %v2429 = vmax.f32 %v2214, 0.0
  %v2430 = vmax.f32 %v2219, 0.0
  %v2431 = vmax.f32 %v2222, 0.0
  %v2432 = vmax.f32 %v2227, 0.0
  %v2433 = vmax.f32 %v2230, 0.0
  %v2434 = vmax.f32 %v2235, 0.0
  %v2435 = vmax.f32 %v2238, 0.0
  %v2436 = vmax.f32 %v2243, 0.0
  %v2437 = vmax.f32 %v2246, 0.0
  %v2438 = vmax.f32 %v2251, 0.0
  %v2439 = vmax.f32 %v2254, 0.0
  %v2440 = vmax.f32 %v2259, 0.0
  %v2441 = vmax.f32 %v2262, 0.0
  %v2442 = vmax.f32 %v2267, 0.0
  %v2443 = vmax.f32 %v2270, 0.0
  %v2444 = vmax.f32 %v2275, 0.0
  %v2445 = vmax.f32 %v2278, 0.0
  %v2446 = vmax.f32 %v2283, 0.0
  %v2447 = vmax.f32 %v2286, 0.0
  %v2448 = vmax.f32 %v2291, 0.0
  %v2449 = vmax.f32 %v2294, 0.0
  %v2450 = vmax.f32 %v2299, 0.0
  %v2451 = vmax.f32 %v2302, 0.0
  %v2452 = vmax.f32 %v2307, 0.0
  %v2453 = vmax.f32 %v2310, 0.0
  %v2454 = vmax.f32 %v2315, 0.0
  %v2455 = vmax.f32 %v2318, 0.0
  %v2456 = vmax.f32 %v2323, 0.0
  %v2457 = vmax.f32 %v2326, 0.0
  %v2458 = vmax.f32 %v2331, 0.0
  %v2459 = vmax.f32 %v2334, 0.0
  %v2460 = vmax.f32 %v2339, 0.0
  %v2461 = vmax.f32 %v2342, 0.0
  %v2462 = vmax.f32 %v2347, 0.0
  %v2463 = vpack.c.bf16 %v2353, %v2352
  %v2464 = vpack.c.bf16 %v2355, %v2354
  %v2465 = vpack.c.bf16 %v2357, %v2356
  %v2466 = vpack.c.bf16 %v2359, %v2358
  %v2467 = vpack.c.bf16 %v2361, %v2360
  %v2468 = vpack.c.bf16 %v2363, %v2362
  %v2469 = vpack.c.bf16 %v2365, %v2364
  %v2470 = vpack.c.bf16 %v2367, %v2366
  %v2471 = vpack.c.bf16 %v2369, %v2368
  %v2472 = vpack.c.bf16 %v2371, %v2370
  %v2473 = vpack.c.bf16 %v2373, %v2372
  %v2474 = vpack.c.bf16 %v2375, %v2374
  %v2475 = vpack.c.bf16 %v2377, %v2376
  %v2476 = vpack.c.bf16 %v2379, %v2378
  %v2477 = vpack.c.bf16 %v2381, %v2380
  %v2478 = vpack.c.bf16 %v2383, %v2382
  %v2479 = vpack.c.bf16 %v2385, %v2384
  %v2480 = vpack.c.bf16 %v2387, %v2386
  %v2481 = vpack.c.bf16 %v2389, %v2388
  %v2482 = vpack.c.bf16 %v2391, %v2390
  %v2483 = vpack.c.bf16 %v2393, %v2392
  %v2484 = vpack.c.bf16 %v2395, %v2394
  %v2485 = vpack.c.bf16 %v2397, %v2396
  %v2486 = vpack.c.bf16 %v2399, %v2398
  %v2487 = vpack.c.bf16 %v2401, %v2400
  %v2488 = vpack.c.bf16 %v2403, %v2402
  %v2489 = vpack.c.bf16 %v2405, %v2404
  %v2490 = vpack.c.bf16 %v2407, %v2406
  %v2491 = vpack.c.bf16 %v2409, %v2408
  %v2492 = vpack.c.bf16 %v2411, %v2410
  %v2493 = vpack.c.bf16 %v2413, %v2412
  %v2494 = vpack.c.bf16 %v2415, %v2414
  %v2495 = vpack.c.bf16 %v2417, %v2416
  %v2496 = vpack.c.bf16 %v2419, %v2418
  %v2497 = vpack.c.bf16 %v2421, %v2420
  %v2498 = vpack.c.bf16 %v2423, %v2422
  %v2499 = vpack.c.bf16 %v2425, %v2424
  %v2500 = vpack.c.bf16 %v2427, %v2426
  %v2501 = vpack.c.bf16 %v2429, %v2428
  %v2502 = vpack.c.bf16 %v2431, %v2430
  %v2503 = vpack.c.bf16 %v2433, %v2432
  %v2504 = vpack.c.bf16 %v2435, %v2434
  %v2505 = vpack.c.bf16 %v2437, %v2436
  %v2506 = vpack.c.bf16 %v2439, %v2438
  %v2507 = vpack.c.bf16 %v2441, %v2440
  %v2508 = vpack.c.bf16 %v2443, %v2442
  %v2509 = vpack.c.bf16 %v2445, %v2444
  %v2510 = vpack.c.bf16 %v2447, %v2446
  %v2511 = vpack.c.bf16 %v2449, %v2448
  %v2512 = vpack.c.bf16 %v2451, %v2450
  %v2513 = vpack.c.bf16 %v2453, %v2452
  %v2514 = vpack.c.bf16 %v2455, %v2454
  %v2515 = vpack.c.bf16 %v2457, %v2456
  %v2516 = vpack.c.bf16 %v2459, %v2458
  %v2517 = vpack.c.bf16 %v2461, %v2460
  %v2518 = vpack.c.bf16 %v2462, %v2462
  %v2575 = vunpack.c.l.b16 %v2463
  %v2576 = vunpack.c.h.b16 %v2463
  %v2577 = vunpack.c.l.b16 %v2464
  %v2578 = vunpack.c.h.b16 %v2464
  %v2579 = vunpack.c.l.b16 %v2465
  %v2580 = vunpack.c.h.b16 %v2465
  %v2581 = vunpack.c.l.b16 %v2466
  %v2582 = vunpack.c.h.b16 %v2466
  %v2583 = vunpack.c.l.b16 %v2467
  %v2584 = vunpack.c.h.b16 %v2467
  %v2585 = vunpack.c.l.b16 %v2468
  %v2586 = vunpack.c.h.b16 %v2468
  %v2587 = vunpack.c.l.b16 %v2469
  %v2588 = vunpack.c.h.b16 %v2469
  %v2589 = vunpack.c.l.b16 %v2470
  %v2590 = vunpack.c.h.b16 %v2470
  %v2591 = vunpack.c.l.b16 %v2471
  %v2592 = vunpack.c.h.b16 %v2471
  %v2593 = vunpack.c.l.b16 %v2472
  %v2594 = vunpack.c.h.b16 %v2472
  %v2595 = vunpack.c.l.b16 %v2473
  %v2596 = vunpack.c.h.b16 %v2473
  %v2597 = vunpack.c.l.b16 %v2474
  %v2598 = vunpack.c.h.b16 %v2474
  %v2599 = vunpack.c.l.b16 %v2475
  %v2600 = vunpack.c.h.b16 %v2475
  %v2601 = vunpack.c.l.b16 %v2476
  %v2602 = vunpack.c.h.b16 %v2476
  %v2603 = vunpack.c.l.b16 %v2477
  %v2604 = vunpack.c.h.b16 %v2477
  %v2605 = vunpack.c.l.b16 %v2478
  %v2606 = vunpack.c.h.b16 %v2478
  %v2607 = vunpack.c.l.b16 %v2479
  %v2608 = vunpack.c.h.b16 %v2479
  %v2609 = vunpack.c.l.b16 %v2480
  %v2610 = vunpack.c.h.b16 %v2480
  %v2611 = vunpack.c.l.b16 %v2481
  %v2612 = vunpack.c.h.b16 %v2481
  %v2613 = vunpack.c.l.b16 %v2482
  %v2614 = vunpack.c.h.b16 %v2482
  %v2615 = vunpack.c.l.b16 %v2483
  %v2616 = vunpack.c.h.b16 %v2483
  %v2617 = vunpack.c.l.b16 %v2484
  %v2618 = vunpack.c.h.b16 %v2484
  %v2619 = vunpack.c.l.b16 %v2485
  %v2620 = vunpack.c.h.b16 %v2485
  %v2621 = vunpack.c.l.b16 %v2486
  %v2622 = vunpack.c.h.b16 %v2486
  %v2623 = vunpack.c.l.b16 %v2487
  %v2624 = vunpack.c.h.b16 %v2487
  %v2625 = vunpack.c.l.b16 %v2488
  %v2626 = vunpack.c.h.b16 %v2488
  %v2627 = vunpack.c.l.b16 %v2489
  %v2628 = vunpack.c.h.b16 %v2489
  %v2629 = vunpack.c.l.b16 %v2490
  %v2630 = vunpack.c.h.b16 %v2490
  %v2631 = vunpack.c.l.b16 %v2491
  %v2632 = vunpack.c.h.b16 %v2491
  %v2633 = vunpack.c.l.b16 %v2492
  %v2634 = vunpack.c.h.b16 %v2492
  %v2635 = vunpack.c.l.b16 %v2493
  %v2636 = vunpack.c.h.b16 %v2493
  %v2637 = vunpack.c.l.b16 %v2494
  %v2638 = vunpack.c.h.b16 %v2494
  %v2639 = vunpack.c.l.b16 %v2495
  %v2640 = vunpack.c.h.b16 %v2495
  %v2641 = vunpack.c.l.b16 %v2496
  %v2642 = vunpack.c.h.b16 %v2496
  %v2643 = vunpack.c.l.b16 %v2497
  %v2644 = vunpack.c.h.b16 %v2497
  %v2645 = vunpack.c.l.b16 %v2498
  %v2646 = vunpack.c.h.b16 %v2498
  %v2647 = vunpack.c.l.b16 %v2499
  %v2648 = vunpack.c.h.b16 %v2499
  %v2649 = vunpack.c.l.b16 %v2500
  %v2650 = vunpack.c.h.b16 %v2500
  %v2651 = vunpack.c.l.b16 %v2501
  %v2652 = vunpack.c.h.b16 %v2501
  %v2653 = vunpack.c.l.b16 %v2502
  %v2654 = vunpack.c.h.b16 %v2502
  %v2655 = vunpack.c.l.b16 %v2503
  %v2656 = vunpack.c.h.b16 %v2503
  %v2657 = vunpack.c.l.b16 %v2504
  %v2658 = vunpack.c.h.b16 %v2504
  %v2659 = vunpack.c.l.b16 %v2505
  %v2660 = vunpack.c.h.b16 %v2505
  %v2661 = vunpack.c.l.b16 %v2506
  %v2662 = vunpack.c.h.b16 %v2506
  %v2663 = vunpack.c.l.b16 %v2507
  %v2664 = vunpack.c.h.b16 %v2507
  %v2665 = vunpack.c.l.b16 %v2508
  %v2666 = vunpack.c.h.b16 %v2508
  %v2667 = vunpack.c.l.b16 %v2509
  %v2668 = vunpack.c.h.b16 %v2509
  %v2669 = vunpack.c.l.b16 %v2510
  %v2670 = vunpack.c.h.b16 %v2510
  %v2671 = vunpack.c.l.b16 %v2511
  %v2672 = vunpack.c.h.b16 %v2511
  %v2673 = vunpack.c.l.b16 %v2512
  %v2674 = vunpack.c.h.b16 %v2512
  %v2675 = vunpack.c.l.b16 %v2513
  %v2676 = vunpack.c.h.b16 %v2513
  %v2677 = vunpack.c.l.b16 %v2514
  %v2678 = vunpack.c.h.b16 %v2514
  %v2679 = vunpack.c.l.b16 %v2515
  %v2680 = vunpack.c.h.b16 %v2515
  %v2681 = vunpack.c.l.b16 %v2516
  %v2682 = vunpack.c.h.b16 %v2516
  %v2683 = vunpack.c.l.b16 %v2517
  %v2684 = vunpack.c.h.b16 %v2517
  %v2685 = vunpack.c.l.b16 %v2518
  %v2686 = vpack.c.b16 %v2575, %v2575
  %v2687 = vpack.c.b16 %v2576, %v2576
  %v2688 = vpack.c.b16 %v2577, %v2577
  %v2689 = vpack.c.b16 %v2578, %v2578
  %v2690 = vpack.c.b16 %v2579, %v2579
  %v2691 = vpack.c.b16 %v2580, %v2580
  %v2692 = vpack.c.b16 %v2581, %v2581
  %v2693 = vpack.c.b16 %v2582, %v2582
  %v2694 = vpack.c.b16 %v2583, %v2583
  %v2695 = vpack.c.b16 %v2584, %v2584
  %v2696 = vpack.c.b16 %v2585, %v2585
  %v2697 = vpack.c.b16 %v2586, %v2586
  %v2698 = vpack.c.b16 %v2587, %v2587
  %v2699 = vpack.c.b16 %v2588, %v2588
  %v2700 = vpack.c.b16 %v2589, %v2589
  %v2701 = vpack.c.b16 %v2590, %v2590
  %v2702 = vpack.c.b16 %v2591, %v2591
  %v2703 = vpack.c.b16 %v2592, %v2592
  %v2704 = vpack.c.b16 %v2593, %v2593
  %v2705 = vpack.c.b16 %v2594, %v2594
  %v2706 = vpack.c.b16 %v2595, %v2595
  %v2707 = vpack.c.b16 %v2596, %v2596
  %v2708 = vpack.c.b16 %v2597, %v2597
  %v2709 = vpack.c.b16 %v2598, %v2598
  %v2710 = vpack.c.b16 %v2599, %v2599
  %v2711 = vpack.c.b16 %v2600, %v2600
  %v2712 = vpack.c.b16 %v2601, %v2601
  %v2713 = vpack.c.b16 %v2602, %v2602
  %v2714 = vpack.c.b16 %v2603, %v2603
  %v2715 = vpack.c.b16 %v2604, %v2604
  %v2716 = vpack.c.b16 %v2605, %v2605
  %v2717 = vpack.c.b16 %v2606, %v2606
  %v2718 = vpack.c.b16 %v2607, %v2607
  %v2719 = vpack.c.b16 %v2608, %v2608
  %v2720 = vpack.c.b16 %v2609, %v2609
  %v2721 = vpack.c.b16 %v2610, %v2610
  %v2722 = vpack.c.b16 %v2611, %v2611
  %v2723 = vpack.c.b16 %v2612, %v2612
  %v2724 = vpack.c.b16 %v2613, %v2613
  %v2725 = vpack.c.b16 %v2614, %v2614
  %v2726 = vpack.c.b16 %v2615, %v2615
  %v2727 = vpack.c.b16 %v2616, %v2616
  %v2728 = vpack.c.b16 %v2617, %v2617
  %v2729 = vpack.c.b16 %v2618, %v2618
  %v2730 = vpack.c.b16 %v2619, %v2619
  %v2731 = vpack.c.b16 %v2620, %v2620
  %v2732 = vpack.c.b16 %v2621, %v2621
  %v2733 = vpack.c.b16 %v2622, %v2622
  %v2734 = vpack.c.b16 %v2623, %v2623
  %v2735 = vpack.c.b16 %v2624, %v2624
  %v2736 = vpack.c.b16 %v2625, %v2625
  %v2737 = vpack.c.b16 %v2626, %v2626
  %v2738 = vpack.c.b16 %v2627, %v2627
  %v2739 = vpack.c.b16 %v2628, %v2628
  %v2740 = vpack.c.b16 %v2629, %v2629
  %v2741 = vpack.c.b16 %v2630, %v2630
  %v2742 = vpack.c.b16 %v2631, %v2631
  %v2743 = vpack.c.b16 %v2632, %v2632
  %v2744 = vpack.c.b16 %v2633, %v2633
  %v2745 = vpack.c.b16 %v2634, %v2634
  %v2746 = vpack.c.b16 %v2635, %v2635
  %v2747 = vpack.c.b16 %v2636, %v2636
  %v2748 = vpack.c.b16 %v2637, %v2637
  %v2749 = vpack.c.b16 %v2638, %v2638
  %v2750 = vpack.c.b16 %v2639, %v2639
  %v2751 = vpack.c.b16 %v2640, %v2640
  %v2752 = vpack.c.b16 %v2641, %v2641
  %v2753 = vpack.c.b16 %v2642, %v2642
  %v2754 = vpack.c.b16 %v2643, %v2643
  %v2755 = vpack.c.b16 %v2644, %v2644
  %v2756 = vpack.c.b16 %v2645, %v2645
  %v2757 = vpack.c.b16 %v2646, %v2646
  %v2758 = vpack.c.b16 %v2647, %v2647
  %v2759 = vpack.c.b16 %v2648, %v2648
  %v2760 = vpack.c.b16 %v2649, %v2649
  %v2761 = vpack.c.b16 %v2650, %v2650
  %v2762 = vpack.c.b16 %v2651, %v2651
  %v2763 = vpack.c.b16 %v2652, %v2652
  %v2764 = vpack.c.b16 %v2653, %v2653
  %v2765 = vpack.c.b16 %v2654, %v2654
  %v2766 = vpack.c.b16 %v2655, %v2655
  %v2767 = vpack.c.b16 %v2656, %v2656
  %v2768 = vpack.c.b16 %v2657, %v2657
  %v2769 = vpack.c.b16 %v2658, %v2658
  %v2770 = vpack.c.b16 %v2659, %v2659
  %v2771 = vpack.c.b16 %v2660, %v2660
  %v2772 = vpack.c.b16 %v2661, %v2661
  %v2773 = vpack.c.b16 %v2662, %v2662
  %v2774 = vpack.c.b16 %v2663, %v2663
  %v2775 = vpack.c.b16 %v2664, %v2664
  %v2776 = vpack.c.b16 %v2665, %v2665
  %v2777 = vpack.c.b16 %v2666, %v2666
  %v2778 = vpack.c.b16 %v2667, %v2667
  %v2779 = vpack.c.b16 %v2668, %v2668
  %v2780 = vpack.c.b16 %v2669, %v2669
  %v2781 = vpack.c.b16 %v2670, %v2670
  %v2782 = vpack.c.b16 %v2671, %v2671
  %v2783 = vpack.c.b16 %v2672, %v2672
  %v2784 = vpack.c.b16 %v2673, %v2673
  %v2785 = vpack.c.b16 %v2674, %v2674
  %v2786 = vpack.c.b16 %v2675, %v2675
  %v2787 = vpack.c.b16 %v2676, %v2676
  %v2788 = vpack.c.b16 %v2677, %v2677
  %v2789 = vpack.c.b16 %v2678, %v2678
  %v2790 = vpack.c.b16 %v2679, %v2679
  %v2791 = vpack.c.b16 %v2680, %v2680
  %v2792 = vpack.c.b16 %v2681, %v2681
  %v2793 = vpack.c.b16 %v2682, %v2682
  %v2794 = vpack.c.b16 %v2683, %v2683
  %v2795 = vpack.c.b16 %v2684, %v2684
  %v2796 = vpack.c.b16 %v2685, %v2685
  %vm2908 = vcmask 257024
  %2909 = vst.msk [vmem:[%s3] sm:$0xf] %vm2908, %v2686
  %2910 = vst.msk [vmem:[%s3 + $0x4] sm:$0xf] %vm2908, %v2687
  %2911 = vst.msk [vmem:[%s3 + $0x8] sm:$0xf] %vm2908, %v2688
  %2912 = vst.msk [vmem:[%s3 + $0xc] sm:$0xf] %vm2908, %v2689
  %2913 = vst.msk [vmem:[%s3 + $0x10] sm:$0xf] %vm2908, %v2690
  %2914 = vst.msk [vmem:[%s3 + $0x14] sm:$0xf] %vm2908, %v2691
  %2915 = vst.msk [vmem:[%s3 + $0x18] sm:$0xf] %vm2908, %v2692
  %2916 = vst.msk [vmem:[%s3 + $0x1c] sm:$0xf] %vm2908, %v2693
  %2917 = vst.msk [vmem:[%s3 + $0x20] sm:$0xf] %vm2908, %v2694
  %2918 = vst.msk [vmem:[%s3 + $0x24] sm:$0xf] %vm2908, %v2695
  %2919 = vst.msk [vmem:[%s3 + $0x28] sm:$0xf] %vm2908, %v2696
  %2920 = vst.msk [vmem:[%s3 + $0x2c] sm:$0xf] %vm2908, %v2697
  %2921 = vst.msk [vmem:[%s3 + $0x30] sm:$0xf] %vm2908, %v2698
  %2922 = vst.msk [vmem:[%s3 + $0x34] sm:$0xf] %vm2908, %v2699
  %2923 = vst.msk [vmem:[%s3 + $0x38] sm:$0xf] %vm2908, %v2700
  %2924 = vst.msk [vmem:[%s3 + $0x3c] sm:$0xf] %vm2908, %v2701
  %2925 = vst.msk [vmem:[%s3 + $0x40] sm:$0xf] %vm2908, %v2702
  %2926 = vst.msk [vmem:[%s3 + $0x44] sm:$0xf] %vm2908, %v2703
  %2927 = vst.msk [vmem:[%s3 + $0x48] sm:$0xf] %vm2908, %v2704
  %2928 = vst.msk [vmem:[%s3 + $0x4c] sm:$0xf] %vm2908, %v2705
  %2929 = vst.msk [vmem:[%s3 + $0x50] sm:$0xf] %vm2908, %v2706
  %2930 = vst.msk [vmem:[%s3 + $0x54] sm:$0xf] %vm2908, %v2707
  %2931 = vst.msk [vmem:[%s3 + $0x58] sm:$0xf] %vm2908, %v2708
  %2932 = vst.msk [vmem:[%s3 + $0x5c] sm:$0xf] %vm2908, %v2709
  %2933 = vst.msk [vmem:[%s3 + $0x60] sm:$0xf] %vm2908, %v2710
  %2934 = vst.msk [vmem:[%s3 + $0x64] sm:$0xf] %vm2908, %v2711
  %2935 = vst.msk [vmem:[%s3 + $0x68] sm:$0xf] %vm2908, %v2712
  %2936 = vst.msk [vmem:[%s3 + $0x6c] sm:$0xf] %vm2908, %v2713
  %2937 = vst.msk [vmem:[%s3 + $0x70] sm:$0xf] %vm2908, %v2714
  %2938 = vst.msk [vmem:[%s3 + $0x74] sm:$0xf] %vm2908, %v2715
  %2939 = vst.msk [vmem:[%s3 + $0x78] sm:$0xf] %vm2908, %v2716
  %2940 = vst.msk [vmem:[%s3 + $0x7c] sm:$0xf] %vm2908, %v2717
  %2941 = vst.msk [vmem:[%s3 + $0x80] sm:$0xf] %vm2908, %v2718
  %2942 = vst.msk [vmem:[%s3 + $0x84] sm:$0xf] %vm2908, %v2719
  %2943 = vst.msk [vmem:[%s3 + $0x88] sm:$0xf] %vm2908, %v2720
  %2944 = vst.msk [vmem:[%s3 + $0x8c] sm:$0xf] %vm2908, %v2721
  %2945 = vst.msk [vmem:[%s3 + $0x90] sm:$0xf] %vm2908, %v2722
  %2946 = vst.msk [vmem:[%s3 + $0x94] sm:$0xf] %vm2908, %v2723
  %2947 = vst.msk [vmem:[%s3 + $0x98] sm:$0xf] %vm2908, %v2724
  %2948 = vst.msk [vmem:[%s3 + $0x9c] sm:$0xf] %vm2908, %v2725
  %2949 = vst.msk [vmem:[%s3 + $0xa0] sm:$0xf] %vm2908, %v2726
  %2950 = vst.msk [vmem:[%s3 + $0xa4] sm:$0xf] %vm2908, %v2727
  %2951 = vst.msk [vmem:[%s3 + $0xa8] sm:$0xf] %vm2908, %v2728
  %2952 = vst.msk [vmem:[%s3 + $0xac] sm:$0xf] %vm2908, %v2729
  %2953 = vst.msk [vmem:[%s3 + $0xb0] sm:$0xf] %vm2908, %v2730
  %2954 = vst.msk [vmem:[%s3 + $0xb4] sm:$0xf] %vm2908, %v2731
  %2955 = vst.msk [vmem:[%s3 + $0xb8] sm:$0xf] %vm2908, %v2732
  %2956 = vst.msk [vmem:[%s3 + $0xbc] sm:$0xf] %vm2908, %v2733
  %2957 = vst.msk [vmem:[%s3 + $0xc0] sm:$0xf] %vm2908, %v2734
  %2958 = vst.msk [vmem:[%s3 + $0xc4] sm:$0xf] %vm2908, %v2735
  %2959 = vst.msk [vmem:[%s3 + $0xc8] sm:$0xf] %vm2908, %v2736
  %2960 = vst.msk [vmem:[%s3 + $0xcc] sm:$0xf] %vm2908, %v2737
  %2961 = vst.msk [vmem:[%s3 + $0xd0] sm:$0xf] %vm2908, %v2738
  %2962 = vst.msk [vmem:[%s3 + $0xd4] sm:$0xf] %vm2908, %v2739
  %2963 = vst.msk [vmem:[%s3 + $0xd8] sm:$0xf] %vm2908, %v2740
  %2964 = vst.msk [vmem:[%s3 + $0xdc] sm:$0xf] %vm2908, %v2741
  %2965 = vst.msk [vmem:[%s3 + $0xe0] sm:$0xf] %vm2908, %v2742
  %2966 = vst.msk [vmem:[%s3 + $0xe4] sm:$0xf] %vm2908, %v2743
  %2967 = vst.msk [vmem:[%s3 + $0xe8] sm:$0xf] %vm2908, %v2744
  %2968 = vst.msk [vmem:[%s3 + $0xec] sm:$0xf] %vm2908, %v2745
  %2969 = vst.msk [vmem:[%s3 + $0xf0] sm:$0xf] %vm2908, %v2746
  %2970 = vst.msk [vmem:[%s3 + $0xf4] sm:$0xf] %vm2908, %v2747
  %2971 = vst.msk [vmem:[%s3 + $0xf8] sm:$0xf] %vm2908, %v2748
  %2972 = vst.msk [vmem:[%s3 + $0xfc] sm:$0xf] %vm2908, %v2749
  %2973 = vst.msk [vmem:[%s3 + $0x100] sm:$0xf] %vm2908, %v2750
  %2974 = vst.msk [vmem:[%s3 + $0x104] sm:$0xf] %vm2908, %v2751
  %2975 = vst.msk [vmem:[%s3 + $0x108] sm:$0xf] %vm2908, %v2752
  %2976 = vst.msk [vmem:[%s3 + $0x10c] sm:$0xf] %vm2908, %v2753
  %2977 = vst.msk [vmem:[%s3 + $0x110] sm:$0xf] %vm2908, %v2754
  %2978 = vst.msk [vmem:[%s3 + $0x114] sm:$0xf] %vm2908, %v2755
  %2979 = vst.msk [vmem:[%s3 + $0x118] sm:$0xf] %vm2908, %v2756
  %2980 = vst.msk [vmem:[%s3 + $0x11c] sm:$0xf] %vm2908, %v2757
  %2981 = vst.msk [vmem:[%s3 + $0x120] sm:$0xf] %vm2908, %v2758
  %2982 = vst.msk [vmem:[%s3 + $0x124] sm:$0xf] %vm2908, %v2759
  %2983 = vst.msk [vmem:[%s3 + $0x128] sm:$0xf] %vm2908, %v2760
  %2984 = vst.msk [vmem:[%s3 + $0x12c] sm:$0xf] %vm2908, %v2761
  %2985 = vst.msk [vmem:[%s3 + $0x130] sm:$0xf] %vm2908, %v2762
  %2986 = vst.msk [vmem:[%s3 + $0x134] sm:$0xf] %vm2908, %v2763
  %2987 = vst.msk [vmem:[%s3 + $0x138] sm:$0xf] %vm2908, %v2764
  %2988 = vst.msk [vmem:[%s3 + $0x13c] sm:$0xf] %vm2908, %v2765
  %2989 = vst.msk [vmem:[%s3 + $0x140] sm:$0xf] %vm2908, %v2766
  %2990 = vst.msk [vmem:[%s3 + $0x144] sm:$0xf] %vm2908, %v2767
  %2991 = vst.msk [vmem:[%s3 + $0x148] sm:$0xf] %vm2908, %v2768
  %2992 = vst.msk [vmem:[%s3 + $0x14c] sm:$0xf] %vm2908, %v2769
  %2993 = vst.msk [vmem:[%s3 + $0x150] sm:$0xf] %vm2908, %v2770
  %2994 = vst.msk [vmem:[%s3 + $0x154] sm:$0xf] %vm2908, %v2771
  %2995 = vst.msk [vmem:[%s3 + $0x158] sm:$0xf] %vm2908, %v2772
  %2996 = vst.msk [vmem:[%s3 + $0x15c] sm:$0xf] %vm2908, %v2773
  %2997 = vst.msk [vmem:[%s3 + $0x160] sm:$0xf] %vm2908, %v2774
  %2998 = vst.msk [vmem:[%s3 + $0x164] sm:$0xf] %vm2908, %v2775
  %2999 = vst.msk [vmem:[%s3 + $0x168] sm:$0xf] %vm2908, %v2776
  %3000 = vst.msk [vmem:[%s3 + $0x16c] sm:$0xf] %vm2908, %v2777
  %3001 = vst.msk [vmem:[%s3 + $0x170] sm:$0xf] %vm2908, %v2778
  %3002 = vst.msk [vmem:[%s3 + $0x174] sm:$0xf] %vm2908, %v2779
  %3003 = vst.msk [vmem:[%s3 + $0x178] sm:$0xf] %vm2908, %v2780
  %3004 = vst.msk [vmem:[%s3 + $0x17c] sm:$0xf] %vm2908, %v2781
  %3005 = vst.msk [vmem:[%s3 + $0x180] sm:$0xf] %vm2908, %v2782
  %3006 = vst.msk [vmem:[%s3 + $0x184] sm:$0xf] %vm2908, %v2783
  %3007 = vst.msk [vmem:[%s3 + $0x188] sm:$0xf] %vm2908, %v2784
  %3008 = vst.msk [vmem:[%s3 + $0x18c] sm:$0xf] %vm2908, %v2785
  %3009 = vst.msk [vmem:[%s3 + $0x190] sm:$0xf] %vm2908, %v2786
  %3010 = vst.msk [vmem:[%s3 + $0x194] sm:$0xf] %vm2908, %v2787
  %3011 = vst.msk [vmem:[%s3 + $0x198] sm:$0xf] %vm2908, %v2788
  %3012 = vst.msk [vmem:[%s3 + $0x19c] sm:$0xf] %vm2908, %v2789
  %3013 = vst.msk [vmem:[%s3 + $0x1a0] sm:$0xf] %vm2908, %v2790
  %3014 = vst.msk [vmem:[%s3 + $0x1a4] sm:$0xf] %vm2908, %v2791
  %3015 = vst.msk [vmem:[%s3 + $0x1a8] sm:$0xf] %vm2908, %v2792
  %3016 = vst.msk [vmem:[%s3 + $0x1ac] sm:$0xf] %vm2908, %v2793
  %3017 = vst.msk [vmem:[%s3 + $0x1b0] sm:$0xf] %vm2908, %v2794
  %3018 = vst.msk [vmem:[%s3 + $0x1b4] sm:$0xf] %vm2908, %v2795
  %vm3019 = vcmask 253952
  %3020 = vst.msk [vmem:[%s3 + $0x1b8] sm:$0x1] %vm3019, %v2796
  // Predicated region
  $region14: #{ppo_agent_forward.6} parent=0 // pred_check
    _
  $region15: #{ppo_agent_forward.6} parent=0 // pred_check_branch
    %3022 = sbr.rel (0) target = $region17
  $region16: #{ppo_agent_forward.6} parent=0 // pred_region
    _
  $region17: #{ppo_agent_forward.6} parent=0 // pred_fallthru
    _
  // Predicated region
  $region18: #{ppo_agent_forward.6} parent=0 // pred_check
    _
  $region19: #{ppo_agent_forward.6} parent=0 // pred_check_branch
    %3024 = sbr.rel (0) target = $region21
  $region20: #{ppo_agent_forward.6} parent=0 // pred_region
    _
  $region21: #{ppo_agent_forward.6} parent=0 // pred_fallthru
    _

// kernel: ppo_agent_forward.7
$region0: #{ppo_agent_forward.7}
  #allocation0 [shape = 'u32[]', space=smem, size = 0x4, offset = 0x4, fixed_abs, tag = 'smem constant byte address 0x4 - core index']
  #allocation1 [shape = 'u32[144,128]{1,0:T(1,128)}', space=vmem, size = 0x12000, scoped, tag = 'internal scratch']
  %s0 = inlined_call_operand.vmem [shape: bf16[242,288], index: 0, kind: input, shape index: {}]
  %s1 = inlined_call_operand.vmem [shape: bf16[288,32], index: 1, kind: input, shape index: {}]
  %s2 = inlined_call_operand.vmem [shape: f32[1,32], index: 2, kind: input, shape index: {}]
  %s3 = inlined_call_operand.vmem [shape: bf16[242,32], index: 3, kind: output, shape index: {}]
  %s4 = sld [smem:[#allocation0]]
  $region22: #{ppo_agent_forward.7} parent=0
    _
  %s6 = ssub.s32 1, %s4
  %s7 = scalar_select 0, %s6, %s4
  // Predicated region
  $region2: #{ppo_agent_forward.7} parent=0 // pred_check
    _
  $region3: #{ppo_agent_forward.7} parent=0 // pred_check_branch
    %9 = sbr.rel (0) target = $region5
  $region4: #{ppo_agent_forward.7} parent=0 // pred_region
    _
  $region5: #{ppo_agent_forward.7} parent=0 // pred_fallthru
    _
  // Predicated region
  $region6: #{ppo_agent_forward.7} parent=0 // pred_check
    _
  $region7: #{ppo_agent_forward.7} parent=0 // pred_check_branch
    %11 = sbr.rel (0) target = $region9
  $region8: #{ppo_agent_forward.7} parent=0 // pred_region
    _
  $region9: #{ppo_agent_forward.7} parent=0 // pred_fallthru
    _
  // Predicated region
  $region10: #{ppo_agent_forward.7} parent=0 // pred_check
    _
  $region11: #{ppo_agent_forward.7} parent=0 // pred_check_branch
    %13 = sbr.rel (0) target = $region13
  $region12: #{ppo_agent_forward.7} parent=0 // pred_region
    _
  $region13: #{ppo_agent_forward.7} parent=0 // pred_fallthru
    _
  %v15 = vld [vmem:[%s0] sm:$0xff]
  %v16 = vld [vmem:[%s0 + $0x8] sm:$0xf]
  %v17 = vld [vmem:[%s0 + $0xc] sm:$0xff]
  %v18 = vld [vmem:[%s0 + $0x14] sm:$0xf]
  %v19 = vld [vmem:[%s0 + $0x18] sm:$0xff]
  %v20 = vld [vmem:[%s0 + $0x20] sm:$0xf]
  %v21 = vld [vmem:[%s0 + $0x24] sm:$0xff]
  %v22 = vld [vmem:[%s0 + $0x2c] sm:$0xf]
  %v23 = vld [vmem:[%s0 + $0x30] sm:$0xff]
  %v24 = vld [vmem:[%s0 + $0x38] sm:$0xf]
  %v25 = vld [vmem:[%s0 + $0x3c] sm:$0xff]
  %v26 = vld [vmem:[%s0 + $0x44] sm:$0xf]
  %v27 = vld [vmem:[%s0 + $0x48] sm:$0xff]
  %v28 = vld [vmem:[%s0 + $0x50] sm:$0xf]
  %v29 = vld [vmem:[%s0 + $0x54] sm:$0xff]
  %v30 = vld [vmem:[%s0 + $0x5c] sm:$0xf]
  %v31 = vld [vmem:[%s0 + $0x60] sm:$0xff]
  %v32 = vld [vmem:[%s0 + $0x68] sm:$0xf]
  %v33 = vld [vmem:[%s0 + $0x6c] sm:$0xff]
  %v34 = vld [vmem:[%s0 + $0x74] sm:$0xf]
  %v35 = vld [vmem:[%s0 + $0x78] sm:$0xff]
  %v36 = vld [vmem:[%s0 + $0x80] sm:$0xf]
  %v37 = vld [vmem:[%s0 + $0x84] sm:$0xff]
  %v38 = vld [vmem:[%s0 + $0x8c] sm:$0xf]
  %v39 = vld [vmem:[%s0 + $0x90] sm:$0xff]
  %v40 = vld [vmem:[%s0 + $0x98] sm:$0xf]
  %v41 = vld [vmem:[%s0 + $0x9c] sm:$0xff]
  %v42 = vld [vmem:[%s0 + $0xa4] sm:$0xf]
  %v43 = vld [vmem:[%s0 + $0xa8] sm:$0xff]
  %v44 = vld [vmem:[%s0 + $0xb0] sm:$0xf]
  %v45 = vld [vmem:[%s0 + $0xb4] sm:$0xff]
  %v46 = vld [vmem:[%s0 + $0xbc] sm:$0xf]
  %v47 = vld [vmem:[%s0 + $0xc0] sm:$0xff]
  %v48 = vld [vmem:[%s0 + $0xc8] sm:$0xf]
  %v49 = vld [vmem:[%s0 + $0xcc] sm:$0xff]
  %v50 = vld [vmem:[%s0 + $0xd4] sm:$0xf]
  %v51 = vld [vmem:[%s0 + $0xd8] sm:$0xff]
  %v52 = vld [vmem:[%s0 + $0xe0] sm:$0xf]
  %v53 = vld [vmem:[%s0 + $0xe4] sm:$0xff]
  %v54 = vld [vmem:[%s0 + $0xec] sm:$0xf]
  %v55 = vld [vmem:[%s0 + $0xf0] sm:$0xff]
  %v56 = vld [vmem:[%s0 + $0xf8] sm:$0xf]
  %v57 = vld [vmem:[%s0 + $0xfc] sm:$0xff]
  %v58 = vld [vmem:[%s0 + $0x104] sm:$0xf]
  %v59 = vld [vmem:[%s0 + $0x108] sm:$0xff]
  %v60 = vld [vmem:[%s0 + $0x110] sm:$0xf]
  %v61 = vld [vmem:[%s0 + $0x114] sm:$0xff]
  %v62 = vld [vmem:[%s0 + $0x11c] sm:$0xf]
  %v63 = vld [vmem:[%s0 + $0x120] sm:$0xff]
  %v64 = vld [vmem:[%s0 + $0x128] sm:$0xf]
  %v65 = vld [vmem:[%s0 + $0x12c] sm:$0xff]
  %v66 = vld [vmem:[%s0 + $0x134] sm:$0xf]
  %v67 = vld [vmem:[%s0 + $0x138] sm:$0xff]
  %v68 = vld [vmem:[%s0 + $0x140] sm:$0xf]
  %v69 = vld [vmem:[%s0 + $0x144] sm:$0xff]
  %v70 = vld [vmem:[%s0 + $0x14c] sm:$0xf]
  %v71 = vld [vmem:[%s0 + $0x150] sm:$0xff]
  %v72 = vld [vmem:[%s0 + $0x158] sm:$0xf]
  %v73 = vld [vmem:[%s0 + $0x15c] sm:$0xff]
  %v74 = vld [vmem:[%s0 + $0x164] sm:$0xf]
  %v75 = vld [vmem:[%s0 + $0x168] sm:$0x11]
  %v76 = vld [vmem:[%s0 + $0x170] sm:$0x1]
  %v77 = vld [vmem:[%s1] sm:$0xf]
  %v78 = vld [vmem:[%s1 + $0x4] sm:$0xf]
  %v79 = vld [vmem:[%s1 + $0x8] sm:$0xf]
  %v80 = vld [vmem:[%s1 + $0xc] sm:$0xf]
  %v81 = vld [vmem:[%s1 + $0x10] sm:$0xf]
  %v82 = vld [vmem:[%s1 + $0x14] sm:$0xf]
  %v83 = vld [vmem:[%s1 + $0x18] sm:$0xf]
  %v84 = vld [vmem:[%s1 + $0x1c] sm:$0xf]
  %v85 = vld [vmem:[%s1 + $0x20] sm:$0xf]
  %v86 = vld [vmem:[%s1 + $0x24] sm:$0xf]
  %v87 = vld [vmem:[%s1 + $0x28] sm:$0xf]
  %v88 = vld [vmem:[%s1 + $0x2c] sm:$0xf]
  %v89 = vld [vmem:[%s1 + $0x30] sm:$0xf]
  %v90 = vld [vmem:[%s1 + $0x34] sm:$0xf]
  %v91 = vld [vmem:[%s1 + $0x38] sm:$0xf]
  %v92 = vld [vmem:[%s1 + $0x3c] sm:$0xf]
  %v93 = vld [vmem:[%s1 + $0x40] sm:$0xf]
  %v94 = vld [vmem:[%s1 + $0x44] sm:$0xf]
  %v95 = vld [vmem:[%s1 + $0x48] sm:$0xf]
  %v96 = vld [vmem:[%s1 + $0x4c] sm:$0xf]
  %v97 = vld [vmem:[%s1 + $0x50] sm:$0xf]
  %v98 = vld [vmem:[%s1 + $0x54] sm:$0xf]
  %v99 = vld [vmem:[%s1 + $0x58] sm:$0xf]
  %v100 = vld [vmem:[%s1 + $0x5c] sm:$0xf]
  %v101 = vld [vmem:[%s1 + $0x60] sm:$0xf]
  %v102 = vld [vmem:[%s1 + $0x64] sm:$0xf]
  %v103 = vld [vmem:[%s1 + $0x68] sm:$0xf]
  %v104 = vld [vmem:[%s1 + $0x6c] sm:$0xf]
  %v105 = vld [vmem:[%s1 + $0x70] sm:$0xf]
  %v106 = vld [vmem:[%s1 + $0x74] sm:$0xf]
  %v107 = vld [vmem:[%s1 + $0x78] sm:$0xf]
  %v108 = vld [vmem:[%s1 + $0x7c] sm:$0xf]
  %v109 = vld [vmem:[%s1 + $0x80] sm:$0xf]
  %v110 = vld [vmem:[%s1 + $0x84] sm:$0xf]
  %v111 = vld [vmem:[%s1 + $0x88] sm:$0xf]
  %v112 = vld [vmem:[%s1 + $0x8c] sm:$0xf]
  %v113 = vld [vmem:[%s2] sm:$0x1]
  %v115 = vlaneseq
  %v116 = vshrl.u32 %v115, 7
  %v117 = vsub.s32 0, %v116
  %v118 = vrot.slane %v113, %v117
  %v182 = vunpack.c.l.b16 %v15
  %v183 = vunpack.c.h.b16 %v15
  %v184 = vunpack.c.l.b16 %v16
  %v185 = vunpack.c.l.b16 %v17
  %v186 = vunpack.c.h.b16 %v17
  %v187 = vunpack.c.l.b16 %v18
  %v188 = vunpack.c.l.b16 %v19
  %v189 = vunpack.c.h.b16 %v19
  %v190 = vunpack.c.l.b16 %v20
  %v191 = vunpack.c.l.b16 %v21
  %v192 = vunpack.c.h.b16 %v21
  %v193 = vunpack.c.l.b16 %v22
  %v194 = vunpack.c.l.b16 %v23
  %v195 = vunpack.c.h.b16 %v23
  %v196 = vunpack.c.l.b16 %v24
  %v197 = vunpack.c.l.b16 %v25
  %v198 = vunpack.c.h.b16 %v25
  %v199 = vunpack.c.l.b16 %v26
  %v200 = vunpack.c.l.b16 %v27
  %v201 = vunpack.c.h.b16 %v27
  %v202 = vunpack.c.l.b16 %v28
  %v203 = vunpack.c.l.b16 %v29
  %v204 = vunpack.c.h.b16 %v29
  %v205 = vunpack.c.l.b16 %v30
  %v206 = vunpack.c.l.b16 %v31
  %v207 = vunpack.c.h.b16 %v31
  %v208 = vunpack.c.l.b16 %v32
  %v209 = vunpack.c.l.b16 %v33
  %v210 = vunpack.c.h.b16 %v33
  %v211 = vunpack.c.l.b16 %v34
  %v212 = vunpack.c.l.b16 %v35
  %v213 = vunpack.c.h.b16 %v35
  %v214 = vunpack.c.l.b16 %v36
  %v215 = vunpack.c.l.b16 %v37
  %v216 = vunpack.c.h.b16 %v37
  %v217 = vunpack.c.l.b16 %v38
  %v218 = vunpack.c.l.b16 %v39
  %v219 = vunpack.c.h.b16 %v39
  %v220 = vunpack.c.l.b16 %v40
  %v221 = vunpack.c.l.b16 %v41
  %v222 = vunpack.c.h.b16 %v41
  %v223 = vunpack.c.l.b16 %v42
  %v224 = vunpack.c.l.b16 %v43
  %v225 = vunpack.c.h.b16 %v43
  %v226 = vunpack.c.l.b16 %v44
  %v227 = vunpack.c.l.b16 %v45
  %v228 = vunpack.c.h.b16 %v45
  %v229 = vunpack.c.l.b16 %v46
  %v230 = vunpack.c.l.b16 %v47
  %v231 = vunpack.c.h.b16 %v47
  %v232 = vunpack.c.l.b16 %v48
  %v233 = vunpack.c.l.b16 %v49
  %v234 = vunpack.c.h.b16 %v49
  %v235 = vunpack.c.l.b16 %v50
  %v236 = vunpack.c.l.b16 %v51
  %v237 = vunpack.c.h.b16 %v51
  %v238 = vunpack.c.l.b16 %v52
  %v239 = vunpack.c.l.b16 %v53
  %v240 = vunpack.c.h.b16 %v53
  %v241 = vunpack.c.l.b16 %v54
  %v242 = vunpack.c.l.b16 %v55
  %v243 = vunpack.c.h.b16 %v55
  %v244 = vunpack.c.l.b16 %v56
  %v245 = vunpack.c.l.b16 %v57
  %v246 = vunpack.c.h.b16 %v57
  %v247 = vunpack.c.l.b16 %v58
  %v248 = vunpack.c.l.b16 %v59
  %v249 = vunpack.c.h.b16 %v59
  %v250 = vunpack.c.l.b16 %v60
  %v251 = vunpack.c.l.b16 %v61
  %v252 = vunpack.c.h.b16 %v61
  %v253 = vunpack.c.l.b16 %v62
  %v254 = vunpack.c.l.b16 %v63
  %v255 = vunpack.c.h.b16 %v63
  %v256 = vunpack.c.l.b16 %v64
  %v257 = vunpack.c.l.b16 %v65
  %v258 = vunpack.c.h.b16 %v65
  %v259 = vunpack.c.l.b16 %v66
  %v260 = vunpack.c.l.b16 %v67
  %v261 = vunpack.c.h.b16 %v67
  %v262 = vunpack.c.l.b16 %v68
  %v263 = vunpack.c.l.b16 %v69
  %v264 = vunpack.c.h.b16 %v69
  %v265 = vunpack.c.l.b16 %v70
  %v266 = vunpack.c.l.b16 %v71
  %v267 = vunpack.c.h.b16 %v71
  %v268 = vunpack.c.l.b16 %v72
  %v269 = vunpack.c.l.b16 %v73
  %v270 = vunpack.c.h.b16 %v73
  %v271 = vunpack.c.l.b16 %v74
  %v272 = vunpack.c.l.b16 %v75
  %v273 = vunpack.c.h.b16 %v75
  %v274 = vunpack.c.l.b16 %v76
  %v275 = vpack.c.b16 %v185, %v182
  %v276 = vpack.c.b16 %v186, %v183
  %v277 = vpack.c.b16 %v187, %v184
  %v278 = vpack.c.b16 %v191, %v188
  %v279 = vpack.c.b16 %v192, %v189
  %v280 = vpack.c.b16 %v193, %v190
  %v281 = vpack.c.b16 %v197, %v194
  %v282 = vpack.c.b16 %v198, %v195
  %v283 = vpack.c.b16 %v199, %v196
  %v284 = vpack.c.b16 %v203, %v200
  %v285 = vpack.c.b16 %v204, %v201
  %v286 = vpack.c.b16 %v205, %v202
  %v287 = vpack.c.b16 %v209, %v206
  %v288 = vpack.c.b16 %v210, %v207
  %v289 = vpack.c.b16 %v211, %v208
  %v290 = vpack.c.b16 %v215, %v212
  %v291 = vpack.c.b16 %v216, %v213
  %v292 = vpack.c.b16 %v217, %v214
  %v293 = vpack.c.b16 %v221, %v218
  %v294 = vpack.c.b16 %v222, %v219
  %v295 = vpack.c.b16 %v223, %v220
  %v296 = vpack.c.b16 %v227, %v224
  %v297 = vpack.c.b16 %v228, %v225
  %v298 = vpack.c.b16 %v229, %v226
  %v299 = vpack.c.b16 %v233, %v230
  %v300 = vpack.c.b16 %v234, %v231
  %v301 = vpack.c.b16 %v235, %v232
  %v302 = vpack.c.b16 %v239, %v236
  %v303 = vpack.c.b16 %v240, %v237
  %v304 = vpack.c.b16 %v241, %v238
  %v305 = vpack.c.b16 %v245, %v242
  %v306 = vpack.c.b16 %v246, %v243
  %v307 = vpack.c.b16 %v247, %v244
  %v308 = vpack.c.b16 %v251, %v248
  %v309 = vpack.c.b16 %v252, %v249
  %v310 = vpack.c.b16 %v253, %v250
  %v311 = vpack.c.b16 %v257, %v254
  %v312 = vpack.c.b16 %v258, %v255
  %v313 = vpack.c.b16 %v259, %v256
  %v314 = vpack.c.b16 %v263, %v260
  %v315 = vpack.c.b16 %v264, %v261
  %v316 = vpack.c.b16 %v265, %v262
  %v317 = vpack.c.b16 %v269, %v266
  %v318 = vpack.c.b16 %v270, %v267
  %v319 = vpack.c.b16 %v271, %v268
  %v320 = vpack.c.b16 %v272, %v272
  %v321 = vpack.c.b16 %v273, %v273
  %v322 = vpack.c.b16 %v274, %v274
  %v391 = vunpack.c.l.b16 %v77
  %v392 = vunpack.c.l.b16 %v78
  %v393 = vunpack.c.l.b16 %v79
  %v394 = vunpack.c.l.b16 %v80
  %v395 = vunpack.c.l.b16 %v81
  %v396 = vunpack.c.l.b16 %v82
  %v397 = vunpack.c.l.b16 %v83
  %v398 = vunpack.c.l.b16 %v84
  %v399 = vunpack.c.l.b16 %v85
  %v400 = vunpack.c.l.b16 %v86
  %v401 = vunpack.c.l.b16 %v87
  %v402 = vunpack.c.l.b16 %v88
  %v403 = vunpack.c.l.b16 %v89
  %v404 = vunpack.c.l.b16 %v90
  %v405 = vunpack.c.l.b16 %v91
  %v406 = vunpack.c.l.b16 %v92
  %v407 = vunpack.c.l.b16 %v93
  %v408 = vunpack.c.l.b16 %v94
  %v409 = vunpack.c.l.b16 %v95
  %v410 = vunpack.c.l.b16 %v96
  %v411 = vunpack.c.l.b16 %v97
  %v412 = vunpack.c.l.b16 %v98
  %v413 = vunpack.c.l.b16 %v99
  %v414 = vunpack.c.l.b16 %v100
  %v415 = vunpack.c.l.b16 %v101
  %v416 = vunpack.c.l.b16 %v102
  %v417 = vunpack.c.l.b16 %v103
  %v418 = vunpack.c.l.b16 %v104
  %v419 = vunpack.c.l.b16 %v105
  %v420 = vunpack.c.l.b16 %v106
  %v421 = vunpack.c.l.b16 %v107
  %v422 = vunpack.c.l.b16 %v108
  %v423 = vunpack.c.l.b16 %v109
  %v424 = vunpack.c.l.b16 %v110
  %v425 = vunpack.c.l.b16 %v111
  %v426 = vunpack.c.l.b16 %v112
  %v427 = vpack.c.b16 %v392, %v391
  %v428 = vpack.c.b16 %v394, %v393
  %v429 = vpack.c.b16 %v396, %v395
  %v430 = vpack.c.b16 %v398, %v397
  %v431 = vpack.c.b16 %v400, %v399
  %v432 = vpack.c.b16 %v402, %v401
  %v433 = vpack.c.b16 %v404, %v403
  %v434 = vpack.c.b16 %v406, %v405
  %v435 = vpack.c.b16 %v408, %v407
  %v436 = vpack.c.b16 %v410, %v409
  %v437 = vpack.c.b16 %v412, %v411
  %v438 = vpack.c.b16 %v414, %v413
  %v439 = vpack.c.b16 %v416, %v415
  %v440 = vpack.c.b16 %v418, %v417
  %v441 = vpack.c.b16 %v420, %v419
  %v442 = vpack.c.b16 %v422, %v421
  %v443 = vpack.c.b16 %v424, %v423
  %v444 = vpack.c.b16 %v426, %v425
  %vm463 = vcmask 261120
  %v465 = vsel %vm463, %v277, 0
  %v468 = vsel %vm463, %v280, 0
  %v471 = vsel %vm463, %v283, 0
  %v474 = vsel %vm463, %v286, 0
  %v477 = vsel %vm463, %v289, 0
  %v480 = vsel %vm463, %v292, 0
  %v483 = vsel %vm463, %v295, 0
  %v486 = vsel %vm463, %v298, 0
  %v489 = vsel %vm463, %v301, 0
  %v492 = vsel %vm463, %v304, 0
  %v495 = vsel %vm463, %v307, 0
  %v498 = vsel %vm463, %v310, 0
  %v501 = vsel %vm463, %v313, 0
  %v504 = vsel %vm463, %v316, 0
  %v507 = vsel %vm463, %v319, 0
  %v510 = vsel %vm463, %v322, 0
  %512 = vmatprep.subr.bf16.mxu0 0
  %513 = vmatpush1.bf16.msra.mxu0 %v427
  %514 = vmatprep.subr.bf16.mxu0 0
  %515 = vmatpush1.bf16.msra.mxu0 %v428
  %516 = vmatprep.subr.bf16.mxu0 0
  %517 = vmatpush1.bf16.msra.mxu0 %v429
  %518 = vmatprep.subr.bf16.mxu0 0
  %519 = vmatpush1.bf16.msra.mxu0 %v430
  %520 = vmatprep.subr.bf16.mxu0 0
  %521 = vmatpush1.bf16.msra.mxu0 %v431
  %522 = vmatprep.subr.bf16.mxu0 0
  %523 = vmatpush1.bf16.msra.mxu0 %v432
  %524 = vmatprep.subr.bf16.mxu0 0
  %525 = vmatpush1.bf16.msra.mxu0 %v433
  %526 = vmatprep.subr.bf16.mxu0 0
  %527 = vmatpush1.bf16.msra.mxu0 %v434
  %528 = vmatprep.subr.bf16.mxu0 0
  %529 = vmatpush1.bf16.msra.mxu0 %v435
  %530 = vmatprep.subr.bf16.mxu0 0
  %531 = vmatpush1.bf16.msra.mxu0 %v436
  %532 = vmatprep.subr.bf16.mxu0 0
  %533 = vmatpush1.bf16.msra.mxu0 %v437
  %534 = vmatprep.subr.bf16.mxu0 0
  %535 = vmatpush1.bf16.msra.mxu0 %v438
  %536 = vmatprep.subr.bf16.mxu0 0
  %537 = vmatpush1.bf16.msra.mxu0 %v439
  %538 = vmatprep.subr.bf16.mxu0 0
  %539 = vmatpush1.bf16.msra.mxu0 %v440
  %540 = vmatprep.subr.bf16.mxu0 0
  %541 = vmatpush1.bf16.msra.mxu0 %v441
  %542 = vmatprep.subr.bf16.mxu0 0
  %543 = vmatpush1.bf16.msra.mxu0 %v442
  %544 = vmatprep.mubr.bf16.mxu0 %v276
  %545 = vmatmul.mubr.bf16.gmra.mrb[0].mxu0 %v275
  %v546 = vpop.f32.mrb[0].mxu0
  %v547 = vadd.f32 %v118, %v546
  %v548 = vpop.f32.mrb[0].mxu0
  %v549 = vpop.f32.mrb[0].mxu0
  %v550 = vadd.f32 %v118, %v549
  %v551 = vpop.f32.mrb[0].mxu0
  %552 = vmatprep.mubr.bf16.mxu0 %v279
  %553 = vmatmul.mubr.bf16.gmra.mrb[0].mxu0 %v278
  %v554 = vpop.f32.mrb[0].mxu0
  %v555 = vadd.f32 %v118, %v554
  %v556 = vpop.f32.mrb[0].mxu0
  %v557 = vpop.f32.mrb[0].mxu0
  %v558 = vadd.f32 %v118, %v557
  %v559 = vpop.f32.mrb[0].mxu0
  %560 = vmatprep.mubr.bf16.mxu0 %v282
  %561 = vmatmul.mubr.bf16.gmra.mrb[0].mxu0 %v281
  %v562 = vpop.f32.mrb[0].mxu0
  %v563 = vadd.f32 %v118, %v562
  %v564 = vpop.f32.mrb[0].mxu0
  %v565 = vpop.f32.mrb[0].mxu0
  %v566 = vadd.f32 %v118, %v565
  %v567 = vpop.f32.mrb[0].mxu0
  %568 = vmatprep.mubr.bf16.mxu0 %v285
  %569 = vmatmul.mubr.bf16.gmra.mrb[0].mxu0 %v284
  %v570 = vpop.f32.mrb[0].mxu0
  %v571 = vadd.f32 %v118, %v570
  %v572 = vpop.f32.mrb[0].mxu0
  %v573 = vpop.f32.mrb[0].mxu0
  %v574 = vadd.f32 %v118, %v573
  %v575 = vpop.f32.mrb[0].mxu0
  %576 = vmatprep.mubr.bf16.mxu0 %v288
  %577 = vmatmul.mubr.bf16.gmra.mrb[0].mxu0 %v287
  %v578 = vpop.f32.mrb[0].mxu0
  %v579 = vadd.f32 %v118, %v578
  %v580 = vpop.f32.mrb[0].mxu0
  %v581 = vpop.f32.mrb[0].mxu0
  %v582 = vadd.f32 %v118, %v581
  %v583 = vpop.f32.mrb[0].mxu0
  %584 = vmatprep.mubr.bf16.mxu0 %v291
  %585 = vmatmul.mubr.bf16.gmra.mrb[0].mxu0 %v290
  %v586 = vpop.f32.mrb[0].mxu0
  %v587 = vadd.f32 %v118, %v586
  %v588 = vpop.f32.mrb[0].mxu0
  %v589 = vpop.f32.mrb[0].mxu0
  %v590 = vadd.f32 %v118, %v589
  %v591 = vpop.f32.mrb[0].mxu0
  %592 = vmatprep.mubr.bf16.mxu0 %v294
  %593 = vmatmul.mubr.bf16.gmra.mrb[0].mxu0 %v293
  %v594 = vpop.f32.mrb[0].mxu0
  %v595 = vadd.f32 %v118, %v594
  %v596 = vpop.f32.mrb[0].mxu0
  %v597 = vpop.f32.mrb[0].mxu0
  %v598 = vadd.f32 %v118, %v597
  %v599 = vpop.f32.mrb[0].mxu0
  %600 = vmatprep.mubr.bf16.mxu0 %v297
  %601 = vmatmul.mubr.bf16.gmra.mrb[0].mxu0 %v296
  %v602 = vpop.f32.mrb[0].mxu0
  %v603 = vadd.f32 %v118, %v602
  %v604 = vpop.f32.mrb[0].mxu0
  %v605 = vpop.f32.mrb[0].mxu0
  %v606 = vadd.f32 %v118, %v605
  %v607 = vpop.f32.mrb[0].mxu0
  %608 = vmatprep.mubr.bf16.mxu0 %v300
  %609 = vmatmul.mubr.bf16.gmra.mrb[0].mxu0 %v299
  %v610 = vpop.f32.mrb[0].mxu0
  %v611 = vadd.f32 %v118, %v610
  %v612 = vpop.f32.mrb[0].mxu0
  %v613 = vpop.f32.mrb[0].mxu0
  %v614 = vadd.f32 %v118, %v613
  %v615 = vpop.f32.mrb[0].mxu0
  %616 = vmatprep.mubr.bf16.mxu0 %v303
  %617 = vmatmul.mubr.bf16.gmra.mrb[0].mxu0 %v302
  %v618 = vpop.f32.mrb[0].mxu0
  %v619 = vadd.f32 %v118, %v618
  %v620 = vpop.f32.mrb[0].mxu0
  %v621 = vpop.f32.mrb[0].mxu0
  %v622 = vadd.f32 %v118, %v621
  %v623 = vpop.f32.mrb[0].mxu0
  %624 = vmatprep.mubr.bf16.mxu0 %v306
  %625 = vmatmul.mubr.bf16.gmra.mrb[0].mxu0 %v305
  %v626 = vpop.f32.mrb[0].mxu0
  %v627 = vadd.f32 %v118, %v626
  %v628 = vpop.f32.mrb[0].mxu0
  %v629 = vpop.f32.mrb[0].mxu0
  %v630 = vadd.f32 %v118, %v629
  %v631 = vpop.f32.mrb[0].mxu0
  %632 = vmatprep.mubr.bf16.mxu0 %v309
  %633 = vmatmul.mubr.bf16.gmra.mrb[0].mxu0 %v308
  %v634 = vpop.f32.mrb[0].mxu0
  %v635 = vadd.f32 %v118, %v634
  %v636 = vpop.f32.mrb[0].mxu0
  %v637 = vpop.f32.mrb[0].mxu0
  %v638 = vadd.f32 %v118, %v637
  %v639 = vpop.f32.mrb[0].mxu0
  %640 = vmatprep.mubr.bf16.mxu0 %v312
  %641 = vmatmul.mubr.bf16.gmra.mrb[0].mxu0 %v311
  %v642 = vpop.f32.mrb[0].mxu0
  %v643 = vadd.f32 %v118, %v642
  %v644 = vpop.f32.mrb[0].mxu0
  %v645 = vpop.f32.mrb[0].mxu0
  %v646 = vadd.f32 %v118, %v645
  %v647 = vpop.f32.mrb[0].mxu0
  %648 = vmatprep.mubr.bf16.mxu0 %v315
  %649 = vmatmul.mubr.bf16.gmra.mrb[0].mxu0 %v314
  %v650 = vpop.f32.mrb[0].mxu0
  %v651 = vadd.f32 %v118, %v650
  %v652 = vpop.f32.mrb[0].mxu0
  %v653 = vpop.f32.mrb[0].mxu0
  %v654 = vadd.f32 %v118, %v653
  %v655 = vpop.f32.mrb[0].mxu0
  %656 = vmatprep.mubr.bf16.mxu0 %v318
  %657 = vmatmul.mubr.bf16.gmra.mrb[0].mxu0 %v317
  %v658 = vpop.f32.mrb[0].mxu0
  %v659 = vadd.f32 %v118, %v658
  %v660 = vpop.f32.mrb[0].mxu0
  %v661 = vpop.f32.mrb[0].mxu0
  %v662 = vadd.f32 %v118, %v661
  %v663 = vpop.f32.mrb[0].mxu0
  %664 = vmatprep.mubr.bf16.mxu0 %v321
  %665 = vmatmul.mubr.bf16.gmra.mrb[0].mxu0 %v320
  %v666 = vpop.f32.mrb[0].mxu0
  %v667 = vadd.f32 %v118, %v666
  %v668 = vpop.f32.mrb[0].mxu0
  %v669 = vpop.f32.mrb[0].mxu0
  %v670 = vpop.f32.mrb[0].mxu0
  %671 = vdwg.mxu0
  %672 = vmatprep.subr.bf16.mxu0 0
  %673 = vmatpush1.bf16.msra.mxu0 %v443
  %674 = vmatprep.subr.bf16.mxu0 0
  %675 = vmatpush1.bf16.msra.mxu0 %v444
  %676 = vmatprep.subr.bf16.mxu0 0
  %677 = vmatpush1.bf16.msra.mxu0 0
  %678 = vmatprep.subr.bf16.mxu0 0
  %679 = vmatpush1.bf16.msra.mxu0 0
  %680 = vmatprep.subr.bf16.mxu0 0
  %681 = vmatpush1.bf16.msra.mxu0 0
  %682 = vmatprep.subr.bf16.mxu0 0
  %683 = vmatpush1.bf16.msra.mxu0 0
  %684 = vmatprep.subr.bf16.mxu0 0
  %685 = vmatpush1.bf16.msra.mxu0 0
  %686 = vmatprep.subr.bf16.mxu0 0
  %687 = vmatpush1.bf16.msra.mxu0 0
  %688 = vmatprep.subr.bf16.mxu0 0
  %689 = vmatpush1.bf16.msra.mxu0 0
  %690 = vmatprep.subr.bf16.mxu0 0
  %691 = vmatpush1.bf16.msra.mxu0 0
  %692 = vmatprep.subr.bf16.mxu0 0
  %693 = vmatpush1.bf16.msra.mxu0 0
  %694 = vmatprep.subr.bf16.mxu0 0
  %695 = vmatpush1.bf16.msra.mxu0 0
  %696 = vmatprep.subr.bf16.mxu0 0
  %697 = vmatpush1.bf16.msra.mxu0 0
  %698 = vmatprep.subr.bf16.mxu0 0
  %699 = vmatpush1.bf16.msra.mxu0 0
  %700 = vmatprep.subr.bf16.mxu0 0
  %701 = vmatpush1.bf16.msra.mxu0 0
  %702 = vmatprep.subr.bf16.mxu0 0
  %703 = vmatpush1.bf16.msra.mxu0 0
  %704 = vmatprep.mubr.bf16.mxu0 0
  %705 = vmatmul.mubr.bf16.gmra.mrb[0].mxu0 %v465
  %v706 = vpop.f32.mrb[0].mxu0
  %v707 = vadd.f32 %v547, %v706
  %v708 = vpop.f32.mrb[0].mxu0
  %v709 = vpop.f32.mrb[0].mxu0
  %v710 = vadd.f32 %v550, %v709
  %v711 = vpop.f32.mrb[0].mxu0
  %712 = vmatprep.mubr.bf16.mxu0 0
  %713 = vmatmul.mubr.bf16.gmra.mrb[0].mxu0 %v468
  %v714 = vpop.f32.mrb[0].mxu0
  %v715 = vadd.f32 %v555, %v714
  %v716 = vpop.f32.mrb[0].mxu0
  %v717 = vpop.f32.mrb[0].mxu0
  %v718 = vadd.f32 %v558, %v717
  %v719 = vpop.f32.mrb[0].mxu0
  %720 = vmatprep.mubr.bf16.mxu0 0
  %721 = vmatmul.mubr.bf16.gmra.mrb[0].mxu0 %v471
  %v722 = vpop.f32.mrb[0].mxu0
  %v723 = vadd.f32 %v563, %v722
  %v724 = vpop.f32.mrb[0].mxu0
  %v725 = vpop.f32.mrb[0].mxu0
  %v726 = vadd.f32 %v566, %v725
  %v727 = vpop.f32.mrb[0].mxu0
  %728 = vmatprep.mubr.bf16.mxu0 0
  %729 = vmatmul.mubr.bf16.gmra.mrb[0].mxu0 %v474
  %v730 = vpop.f32.mrb[0].mxu0
  %v731 = vadd.f32 %v571, %v730
  %v732 = vpop.f32.mrb[0].mxu0
  %v733 = vpop.f32.mrb[0].mxu0
  %v734 = vadd.f32 %v574, %v733
  %v735 = vpop.f32.mrb[0].mxu0
  %736 = vmatprep.mubr.bf16.mxu0 0
  %737 = vmatmul.mubr.bf16.gmra.mrb[0].mxu0 %v477
  %v738 = vpop.f32.mrb[0].mxu0
  %v739 = vadd.f32 %v579, %v738
  %v740 = vpop.f32.mrb[0].mxu0
  %v741 = vpop.f32.mrb[0].mxu0
  %v742 = vadd.f32 %v582, %v741
  %v743 = vpop.f32.mrb[0].mxu0
  %744 = vmatprep.mubr.bf16.mxu0 0
  %745 = vmatmul.mubr.bf16.gmra.mrb[0].mxu0 %v480
  %v746 = vpop.f32.mrb[0].mxu0
  %v747 = vadd.f32 %v587, %v746
  %v748 = vpop.f32.mrb[0].mxu0
  %v749 = vpop.f32.mrb[0].mxu0
  %v750 = vadd.f32 %v590, %v749
  %v751 = vpop.f32.mrb[0].mxu0
  %752 = vmatprep.mubr.bf16.mxu0 0
  %753 = vmatmul.mubr.bf16.gmra.mrb[0].mxu0 %v483
  %v754 = vpop.f32.mrb[0].mxu0
  %v755 = vadd.f32 %v595, %v754
  %v756 = vpop.f32.mrb[0].mxu0
  %v757 = vpop.f32.mrb[0].mxu0
  %v758 = vadd.f32 %v598, %v757
  %v759 = vpop.f32.mrb[0].mxu0
  %760 = vmatprep.mubr.bf16.mxu0 0
  %761 = vmatmul.mubr.bf16.gmra.mrb[0].mxu0 %v486
  %v762 = vpop.f32.mrb[0].mxu0
  %v763 = vadd.f32 %v603, %v762
  %v764 = vpop.f32.mrb[0].mxu0
  %v765 = vpop.f32.mrb[0].mxu0
  %v766 = vadd.f32 %v606, %v765
  %v767 = vpop.f32.mrb[0].mxu0
  %768 = vmatprep.mubr.bf16.mxu0 0
  %769 = vmatmul.mubr.bf16.gmra.mrb[0].mxu0 %v489
  %v770 = vpop.f32.mrb[0].mxu0
  %v771 = vadd.f32 %v611, %v770
  %v772 = vpop.f32.mrb[0].mxu0
  %v773 = vpop.f32.mrb[0].mxu0
  %v774 = vadd.f32 %v614, %v773
  %v775 = vpop.f32.mrb[0].mxu0
  %776 = vmatprep.mubr.bf16.mxu0 0
  %777 = vmatmul.mubr.bf16.gmra.mrb[0].mxu0 %v492
  %v778 = vpop.f32.mrb[0].mxu0
  %v779 = vadd.f32 %v619, %v778
  %v780 = vpop.f32.mrb[0].mxu0
  %v781 = vpop.f32.mrb[0].mxu0
  %v782 = vadd.f32 %v622, %v781
  %v783 = vpop.f32.mrb[0].mxu0
  %784 = vmatprep.mubr.bf16.mxu0 0
  %785 = vmatmul.mubr.bf16.gmra.mrb[0].mxu0 %v495
  %v786 = vpop.f32.mrb[0].mxu0
  %v787 = vadd.f32 %v627, %v786
  %v788 = vpop.f32.mrb[0].mxu0
  %v789 = vpop.f32.mrb[0].mxu0
  %v790 = vadd.f32 %v630, %v789
  %v791 = vpop.f32.mrb[0].mxu0
  %792 = vmatprep.mubr.bf16.mxu0 0
  %793 = vmatmul.mubr.bf16.gmra.mrb[0].mxu0 %v498
  %v794 = vpop.f32.mrb[0].mxu0
  %v795 = vadd.f32 %v635, %v794
  %v796 = vpop.f32.mrb[0].mxu0
  %v797 = vpop.f32.mrb[0].mxu0
  %v798 = vadd.f32 %v638, %v797
  %v799 = vpop.f32.mrb[0].mxu0
  %800 = vmatprep.mubr.bf16.mxu0 0
  %801 = vmatmul.mubr.bf16.gmra.mrb[0].mxu0 %v501
  %v802 = vpop.f32.mrb[0].mxu0
  %v803 = vadd.f32 %v643, %v802
  %v804 = vpop.f32.mrb[0].mxu0
  %v805 = vpop.f32.mrb[0].mxu0
  %v806 = vadd.f32 %v646, %v805
  %v807 = vpop.f32.mrb[0].mxu0
  %808 = vmatprep.mubr.bf16.mxu0 0
  %809 = vmatmul.mubr.bf16.gmra.mrb[0].mxu0 %v504
  %v810 = vpop.f32.mrb[0].mxu0
  %v811 = vadd.f32 %v651, %v810
  %v812 = vpop.f32.mrb[0].mxu0
  %v813 = vpop.f32.mrb[0].mxu0
  %v814 = vadd.f32 %v654, %v813
  %v815 = vpop.f32.mrb[0].mxu0
  %816 = vmatprep.mubr.bf16.mxu0 0
  %817 = vmatmul.mubr.bf16.gmra.mrb[0].mxu0 %v507
  %v818 = vpop.f32.mrb[0].mxu0
  %v819 = vadd.f32 %v659, %v818
  %v820 = vpop.f32.mrb[0].mxu0
  %v821 = vpop.f32.mrb[0].mxu0
  %v822 = vadd.f32 %v662, %v821
  %v823 = vpop.f32.mrb[0].mxu0
  %824 = vmatprep.mubr.bf16.mxu0 0
  %825 = vmatmul.mubr.bf16.gmra.mrb[0].mxu0 %v510
  %v826 = vpop.f32.mrb[0].mxu0
  %v827 = vadd.f32 %v667, %v826
  %v828 = vpop.f32.mrb[0].mxu0
  %v829 = vpop.f32.mrb[0].mxu0
  %v830 = vpop.f32.mrb[0].mxu0
  %831 = vdwg.mxu0
  %v832 = vmax.f32 %v707, 0.0
  %v833 = vmax.f32 %v710, 0.0
  %v834 = vmax.f32 %v715, 0.0
  %v835 = vmax.f32 %v718, 0.0
  %v836 = vmax.f32 %v723, 0.0
  %v837 = vmax.f32 %v726, 0.0
  %v838 = vmax.f32 %v731, 0.0
  %v839 = vmax.f32 %v734, 0.0
  %v840 = vmax.f32 %v739, 0.0
  %v841 = vmax.f32 %v742, 0.0
  %v842 = vmax.f32 %v747, 0.0
  %v843 = vmax.f32 %v750, 0.0
  %v844 = vmax.f32 %v755, 0.0
  %v845 = vmax.f32 %v758, 0.0
  %v846 = vmax.f32 %v763, 0.0
  %v847 = vmax.f32 %v766, 0.0
  %v848 = vmax.f32 %v771, 0.0
  %v849 = vmax.f32 %v774, 0.0
  %v850 = vmax.f32 %v779, 0.0
  %v851 = vmax.f32 %v782, 0.0
  %v852 = vmax.f32 %v787, 0.0
  %v853 = vmax.f32 %v790, 0.0
  %v854 = vmax.f32 %v795, 0.0
  %v855 = vmax.f32 %v798, 0.0
  %v856 = vmax.f32 %v803, 0.0
  %v857 = vmax.f32 %v806, 0.0
  %v858 = vmax.f32 %v811, 0.0
  %v859 = vmax.f32 %v814, 0.0
  %v860 = vmax.f32 %v819, 0.0
  %v861 = vmax.f32 %v822, 0.0
  %v862 = vmax.f32 %v827, 0.0
  %v863 = vpack.c.bf16 %v833, %v832
  %v864 = vpack.c.bf16 %v835, %v834
  %v865 = vpack.c.bf16 %v837, %v836
  %v866 = vpack.c.bf16 %v839, %v838
  %v867 = vpack.c.bf16 %v841, %v840
  %v868 = vpack.c.bf16 %v843, %v842
  %v869 = vpack.c.bf16 %v845, %v844
  %v870 = vpack.c.bf16 %v847, %v846
  %v871 = vpack.c.bf16 %v849, %v848
  %v872 = vpack.c.bf16 %v851, %v850
  %v873 = vpack.c.bf16 %v853, %v852
  %v874 = vpack.c.bf16 %v855, %v854
  %v875 = vpack.c.bf16 %v857, %v856
  %v876 = vpack.c.bf16 %v859, %v858
  %v877 = vpack.c.bf16 %v861, %v860
  %v878 = vpack.c.bf16 %v862, %v862
  %v895 = vunpack.c.l.b16 %v863
  %v896 = vunpack.c.h.b16 %v863
  %v897 = vunpack.c.l.b16 %v864
  %v898 = vunpack.c.h.b16 %v864
  %v899 = vunpack.c.l.b16 %v865
  %v900 = vunpack.c.h.b16 %v865
  %v901 = vunpack.c.l.b16 %v866
  %v902 = vunpack.c.h.b16 %v866
  %v903 = vunpack.c.l.b16 %v867
  %v904 = vunpack.c.h.b16 %v867
  %v905 = vunpack.c.l.b16 %v868
  %v906 = vunpack.c.h.b16 %v868
  %v907 = vunpack.c.l.b16 %v869
  %v908 = vunpack.c.h.b16 %v869
  %v909 = vunpack.c.l.b16 %v870
  %v910 = vunpack.c.h.b16 %v870
  %v911 = vunpack.c.l.b16 %v871
  %v912 = vunpack.c.h.b16 %v871
  %v913 = vunpack.c.l.b16 %v872
  %v914 = vunpack.c.h.b16 %v872
  %v915 = vunpack.c.l.b16 %v873
  %v916 = vunpack.c.h.b16 %v873
  %v917 = vunpack.c.l.b16 %v874
  %v918 = vunpack.c.h.b16 %v874
  %v919 = vunpack.c.l.b16 %v875
  %v920 = vunpack.c.h.b16 %v875
  %v921 = vunpack.c.l.b16 %v876
  %v922 = vunpack.c.h.b16 %v876
  %v923 = vunpack.c.l.b16 %v877
  %v924 = vunpack.c.h.b16 %v877
  %v925 = vunpack.c.l.b16 %v878
  %v926 = vpack.c.b16 %v895, %v895
  %v927 = vpack.c.b16 %v896, %v896
  %v928 = vpack.c.b16 %v897, %v897
  %v929 = vpack.c.b16 %v898, %v898
  %v930 = vpack.c.b16 %v899, %v899
  %v931 = vpack.c.b16 %v900, %v900
  %v932 = vpack.c.b16 %v901, %v901
  %v933 = vpack.c.b16 %v902, %v902
  %v934 = vpack.c.b16 %v903, %v903
  %v935 = vpack.c.b16 %v904, %v904
  %v936 = vpack.c.b16 %v905, %v905
  %v937 = vpack.c.b16 %v906, %v906
  %v938 = vpack.c.b16 %v907, %v907
  %v939 = vpack.c.b16 %v908, %v908
  %v940 = vpack.c.b16 %v909, %v909
  %v941 = vpack.c.b16 %v910, %v910
  %v942 = vpack.c.b16 %v911, %v911
  %v943 = vpack.c.b16 %v912, %v912
  %v944 = vpack.c.b16 %v913, %v913
  %v945 = vpack.c.b16 %v914, %v914
  %v946 = vpack.c.b16 %v915, %v915
  %v947 = vpack.c.b16 %v916, %v916
  %v948 = vpack.c.b16 %v917, %v917
  %v949 = vpack.c.b16 %v918, %v918
  %v950 = vpack.c.b16 %v919, %v919
  %v951 = vpack.c.b16 %v920, %v920
  %v952 = vpack.c.b16 %v921, %v921
  %v953 = vpack.c.b16 %v922, %v922
  %v954 = vpack.c.b16 %v923, %v923
  %v955 = vpack.c.b16 %v924, %v924
  %v956 = vpack.c.b16 %v925, %v925
  %vm988 = vcmask 257024
  %989 = vst.msk [vmem:[%s3] sm:$0xf] %vm988, %v926
  %990 = vst.msk [vmem:[%s3 + $0x4] sm:$0xf] %vm988, %v927
  %991 = vst.msk [vmem:[%s3 + $0x8] sm:$0xf] %vm988, %v928
  %992 = vst.msk [vmem:[%s3 + $0xc] sm:$0xf] %vm988, %v929
  %993 = vst.msk [vmem:[%s3 + $0x10] sm:$0xf] %vm988, %v930
  %994 = vst.msk [vmem:[%s3 + $0x14] sm:$0xf] %vm988, %v931
  %995 = vst.msk [vmem:[%s3 + $0x18] sm:$0xf] %vm988, %v932
  %996 = vst.msk [vmem:[%s3 + $0x1c] sm:$0xf] %vm988, %v933
  %997 = vst.msk [vmem:[%s3 + $0x20] sm:$0xf] %vm988, %v934
  %998 = vst.msk [vmem:[%s3 + $0x24] sm:$0xf] %vm988, %v935
  %999 = vst.msk [vmem:[%s3 + $0x28] sm:$0xf] %vm988, %v936
  %1000 = vst.msk [vmem:[%s3 + $0x2c] sm:$0xf] %vm988, %v937
  %1001 = vst.msk [vmem:[%s3 + $0x30] sm:$0xf] %vm988, %v938
  %1002 = vst.msk [vmem:[%s3 + $0x34] sm:$0xf] %vm988, %v939
  %1003 = vst.msk [vmem:[%s3 + $0x38] sm:$0xf] %vm988, %v940
  %1004 = vst.msk [vmem:[%s3 + $0x3c] sm:$0xf] %vm988, %v941
  %1005 = vst.msk [vmem:[%s3 + $0x40] sm:$0xf] %vm988, %v942
  %1006 = vst.msk [vmem:[%s3 + $0x44] sm:$0xf] %vm988, %v943
  %1007 = vst.msk [vmem:[%s3 + $0x48] sm:$0xf] %vm988, %v944
  %1008 = vst.msk [vmem:[%s3 + $0x4c] sm:$0xf] %vm988, %v945
  %1009 = vst.msk [vmem:[%s3 + $0x50] sm:$0xf] %vm988, %v946
  %1010 = vst.msk [vmem:[%s3 + $0x54] sm:$0xf] %vm988, %v947
  %1011 = vst.msk [vmem:[%s3 + $0x58] sm:$0xf] %vm988, %v948
  %1012 = vst.msk [vmem:[%s3 + $0x5c] sm:$0xf] %vm988, %v949
  %1013 = vst.msk [vmem:[%s3 + $0x60] sm:$0xf] %vm988, %v950
  %1014 = vst.msk [vmem:[%s3 + $0x64] sm:$0xf] %vm988, %v951
  %1015 = vst.msk [vmem:[%s3 + $0x68] sm:$0xf] %vm988, %v952
  %1016 = vst.msk [vmem:[%s3 + $0x6c] sm:$0xf] %vm988, %v953
  %1017 = vst.msk [vmem:[%s3 + $0x70] sm:$0xf] %vm988, %v954
  %1018 = vst.msk [vmem:[%s3 + $0x74] sm:$0xf] %vm988, %v955
  %vm1019 = vcmask 253952
  %1020 = vst.msk [vmem:[%s3 + $0x78] sm:$0x1] %vm1019, %v956
  // Predicated region
  $region14: #{ppo_agent_forward.7} parent=0 // pred_check
    _
  $region15: #{ppo_agent_forward.7} parent=0 // pred_check_branch
    %1022 = sbr.rel (0) target = $region17
  $region16: #{ppo_agent_forward.7} parent=0 // pred_region
    _
  $region17: #{ppo_agent_forward.7} parent=0 // pred_fallthru
    _
  // Predicated region
  $region18: #{ppo_agent_forward.7} parent=0 // pred_check
    _
  $region19: #{ppo_agent_forward.7} parent=0 // pred_check_branch
    %1024 = sbr.rel (0) target = $region21
  $region20: #{ppo_agent_forward.7} parent=0 // pred_region
    _
  $region21: #{ppo_agent_forward.7} parent=0 // pred_fallthru
    _

// kernel: ppo_agent_forward.8
$region0: #{ppo_agent_forward.8}
  #allocation0 [shape = 'u32[]', space=smem, size = 0x4, offset = 0x4, fixed_abs, tag = 'smem constant byte address 0x4 - core index']
  #allocation1 [shape = 'u32[144,128]{1,0:T(1,128)}', space=vmem, size = 0x12000, scoped, tag = 'internal scratch']
  %s0 = inlined_call_operand.vmem [shape: bf16[72,288], index: 0, kind: input, shape index: {}]
  %s1 = inlined_call_operand.vmem [shape: bf16[288,32], index: 1, kind: input, shape index: {}]
  %s2 = inlined_call_operand.vmem [shape: f32[1,32], index: 2, kind: input, shape index: {}]
  %s3 = inlined_call_operand.vmem [shape: bf16[72,32], index: 3, kind: output, shape index: {}]
  %s4 = sld [smem:[#allocation0]]
  $region22: #{ppo_agent_forward.8} parent=0
    _
  %s6 = ssub.s32 1, %s4
  %s7 = scalar_select 0, %s6, %s4
  // Predicated region
  $region2: #{ppo_agent_forward.8} parent=0 // pred_check
    _
  $region3: #{ppo_agent_forward.8} parent=0 // pred_check_branch
    %9 = sbr.rel (0) target = $region5
  $region4: #{ppo_agent_forward.8} parent=0 // pred_region
    _
  $region5: #{ppo_agent_forward.8} parent=0 // pred_fallthru
    _
  // Predicated region
  $region6: #{ppo_agent_forward.8} parent=0 // pred_check
    _
  $region7: #{ppo_agent_forward.8} parent=0 // pred_check_branch
    %11 = sbr.rel (0) target = $region9
  $region8: #{ppo_agent_forward.8} parent=0 // pred_region
    _
  $region9: #{ppo_agent_forward.8} parent=0 // pred_fallthru
    _
  // Predicated region
  $region10: #{ppo_agent_forward.8} parent=0 // pred_check
    _
  $region11: #{ppo_agent_forward.8} parent=0 // pred_check_branch
    %13 = sbr.rel (0) target = $region13
  $region12: #{ppo_agent_forward.8} parent=0 // pred_region
    _
  $region13: #{ppo_agent_forward.8} parent=0 // pred_fallthru
    _
  %v15 = vld [vmem:[%s0] sm:$0xff]
  %v16 = vld [vmem:[%s0 + $0x8] sm:$0xf]
  %v17 = vld [vmem:[%s0 + $0xc] sm:$0xff]
  %v18 = vld [vmem:[%s0 + $0x14] sm:$0xf]
  %v19 = vld [vmem:[%s0 + $0x18] sm:$0xff]
  %v20 = vld [vmem:[%s0 + $0x20] sm:$0xf]
  %v21 = vld [vmem:[%s0 + $0x24] sm:$0xff]
  %v22 = vld [vmem:[%s0 + $0x2c] sm:$0xf]
  %v23 = vld [vmem:[%s0 + $0x30] sm:$0xff]
  %v24 = vld [vmem:[%s0 + $0x38] sm:$0xf]
  %v25 = vld [vmem:[%s0 + $0x3c] sm:$0xff]
  %v26 = vld [vmem:[%s0 + $0x44] sm:$0xf]
  %v27 = vld [vmem:[%s0 + $0x48] sm:$0xff]
  %v28 = vld [vmem:[%s0 + $0x50] sm:$0xf]
  %v29 = vld [vmem:[%s0 + $0x54] sm:$0xff]
  %v30 = vld [vmem:[%s0 + $0x5c] sm:$0xf]
  %v31 = vld [vmem:[%s0 + $0x60] sm:$0xff]
  %v32 = vld [vmem:[%s0 + $0x68] sm:$0xf]
  %v33 = vld [vmem:[%s1] sm:$0xf]
  %v34 = vld [vmem:[%s1 + $0x4] sm:$0xf]
  %v35 = vld [vmem:[%s1 + $0x8] sm:$0xf]
  %v36 = vld [vmem:[%s1 + $0xc] sm:$0xf]
  %v37 = vld [vmem:[%s1 + $0x10] sm:$0xf]
  %v38 = vld [vmem:[%s1 + $0x14] sm:$0xf]
  %v39 = vld [vmem:[%s1 + $0x18] sm:$0xf]
  %v40 = vld [vmem:[%s1 + $0x1c] sm:$0xf]
  %v41 = vld [vmem:[%s1 + $0x20] sm:$0xf]
  %v42 = vld [vmem:[%s1 + $0x24] sm:$0xf]
  %v43 = vld [vmem:[%s1 + $0x28] sm:$0xf]
  %v44 = vld [vmem:[%s1 + $0x2c] sm:$0xf]
  %v45 = vld [vmem:[%s1 + $0x30] sm:$0xf]
  %v46 = vld [vmem:[%s1 + $0x34] sm:$0xf]
  %v47 = vld [vmem:[%s1 + $0x38] sm:$0xf]
  %v48 = vld [vmem:[%s1 + $0x3c] sm:$0xf]
  %v49 = vld [vmem:[%s1 + $0x40] sm:$0xf]
  %v50 = vld [vmem:[%s1 + $0x44] sm:$0xf]
  %v51 = vld [vmem:[%s1 + $0x48] sm:$0xf]
  %v52 = vld [vmem:[%s1 + $0x4c] sm:$0xf]
  %v53 = vld [vmem:[%s1 + $0x50] sm:$0xf]
  %v54 = vld [vmem:[%s1 + $0x54] sm:$0xf]
  %v55 = vld [vmem:[%s1 + $0x58] sm:$0xf]
  %v56 = vld [vmem:[%s1 + $0x5c] sm:$0xf]
  %v57 = vld [vmem:[%s1 + $0x60] sm:$0xf]
  %v58 = vld [vmem:[%s1 + $0x64] sm:$0xf]
  %v59 = vld [vmem:[%s1 + $0x68] sm:$0xf]
  %v60 = vld [vmem:[%s1 + $0x6c] sm:$0xf]
  %v61 = vld [vmem:[%s1 + $0x70] sm:$0xf]
  %v62 = vld [vmem:[%s1 + $0x74] sm:$0xf]
  %v63 = vld [vmem:[%s1 + $0x78] sm:$0xf]
  %v64 = vld [vmem:[%s1 + $0x7c] sm:$0xf]
  %v65 = vld [vmem:[%s1 + $0x80] sm:$0xf]
  %v66 = vld [vmem:[%s1 + $0x84] sm:$0xf]
  %v67 = vld [vmem:[%s1 + $0x88] sm:$0xf]
  %v68 = vld [vmem:[%s1 + $0x8c] sm:$0xf]
  %v69 = vld [vmem:[%s2] sm:$0x1]
  %v71 = vlaneseq
  %v72 = vshrl.u32 %v71, 7
  %v73 = vsub.s32 0, %v72
  %v74 = vrot.slane %v69, %v73
  %v94 = vunpack.c.l.b16 %v15
  %v95 = vunpack.c.h.b16 %v15
  %v96 = vunpack.c.l.b16 %v16
  %v97 = vunpack.c.l.b16 %v17
  %v98 = vunpack.c.h.b16 %v17
  %v99 = vunpack.c.l.b16 %v18
  %v100 = vunpack.c.l.b16 %v19
  %v101 = vunpack.c.h.b16 %v19
  %v102 = vunpack.c.l.b16 %v20
  %v103 = vunpack.c.l.b16 %v21
  %v104 = vunpack.c.h.b16 %v21
  %v105 = vunpack.c.l.b16 %v22
  %v106 = vunpack.c.l.b16 %v23
  %v107 = vunpack.c.h.b16 %v23
  %v108 = vunpack.c.l.b16 %v24
  %v109 = vunpack.c.l.b16 %v25
  %v110 = vunpack.c.h.b16 %v25
  %v111 = vunpack.c.l.b16 %v26
  %v112 = vunpack.c.l.b16 %v27
  %v113 = vunpack.c.h.b16 %v27
  %v114 = vunpack.c.l.b16 %v28
  %v115 = vunpack.c.l.b16 %v29
  %v116 = vunpack.c.h.b16 %v29
  %v117 = vunpack.c.l.b16 %v30
  %v118 = vunpack.c.l.b16 %v31
  %v119 = vunpack.c.h.b16 %v31
  %v120 = vunpack.c.l.b16 %v32
  %v121 = vpack.c.b16 %v97, %v94
  %v122 = vpack.c.b16 %v98, %v95
  %v123 = vpack.c.b16 %v99, %v96
  %v124 = vpack.c.b16 %v103, %v100
  %v125 = vpack.c.b16 %v104, %v101
  %v126 = vpack.c.b16 %v105, %v102
  %v127 = vpack.c.b16 %v109, %v106
  %v128 = vpack.c.b16 %v110, %v107
  %v129 = vpack.c.b16 %v111, %v108
  %v130 = vpack.c.b16 %v115, %v112
  %v131 = vpack.c.b16 %v116, %v113
  %v132 = vpack.c.b16 %v117, %v114
  %v133 = vpack.c.b16 %v118, %v118
  %v134 = vpack.c.b16 %v119, %v119
  %v135 = vpack.c.b16 %v120, %v120
  %v182 = vunpack.c.l.b16 %v33
  %v183 = vunpack.c.l.b16 %v34
  %v184 = vunpack.c.l.b16 %v35
  %v185 = vunpack.c.l.b16 %v36
  %v186 = vunpack.c.l.b16 %v37
  %v187 = vunpack.c.l.b16 %v38
  %v188 = vunpack.c.l.b16 %v39
  %v189 = vunpack.c.l.b16 %v40
  %v190 = vunpack.c.l.b16 %v41
  %v191 = vunpack.c.l.b16 %v42
  %v192 = vunpack.c.l.b16 %v43
  %v193 = vunpack.c.l.b16 %v44
  %v194 = vunpack.c.l.b16 %v45
  %v195 = vunpack.c.l.b16 %v46
  %v196 = vunpack.c.l.b16 %v47
  %v197 = vunpack.c.l.b16 %v48
  %v198 = vunpack.c.l.b16 %v49
  %v199 = vunpack.c.l.b16 %v50
  %v200 = vunpack.c.l.b16 %v51
  %v201 = vunpack.c.l.b16 %v52
  %v202 = vunpack.c.l.b16 %v53
  %v203 = vunpack.c.l.b16 %v54
  %v204 = vunpack.c.l.b16 %v55
  %v205 = vunpack.c.l.b16 %v56
  %v206 = vunpack.c.l.b16 %v57
  %v207 = vunpack.c.l.b16 %v58
  %v208 = vunpack.c.l.b16 %v59
  %v209 = vunpack.c.l.b16 %v60
  %v210 = vunpack.c.l.b16 %v61
  %v211 = vunpack.c.l.b16 %v62
  %v212 = vunpack.c.l.b16 %v63
  %v213 = vunpack.c.l.b16 %v64
  %v214 = vunpack.c.l.b16 %v65
  %v215 = vunpack.c.l.b16 %v66
  %v216 = vunpack.c.l.b16 %v67
  %v217 = vunpack.c.l.b16 %v68
  %v218 = vpack.c.b16 %v183, %v182
  %v219 = vpack.c.b16 %v185, %v184
  %v220 = vpack.c.b16 %v187, %v186
  %v221 = vpack.c.b16 %v189, %v188
  %v222 = vpack.c.b16 %v191, %v190
  %v223 = vpack.c.b16 %v193, %v192
  %v224 = vpack.c.b16 %v195, %v194
  %v225 = vpack.c.b16 %v197, %v196
  %v226 = vpack.c.b16 %v199, %v198
  %v227 = vpack.c.b16 %v201, %v200
  %v228 = vpack.c.b16 %v203, %v202
  %v229 = vpack.c.b16 %v205, %v204
  %v230 = vpack.c.b16 %v207, %v206
  %v231 = vpack.c.b16 %v209, %v208
  %v232 = vpack.c.b16 %v211, %v210
  %v233 = vpack.c.b16 %v213, %v212
  %v234 = vpack.c.b16 %v215, %v214
  %v235 = vpack.c.b16 %v217, %v216
  %vm254 = vcmask 261120
  %v256 = vsel %vm254, %v123, 0
  %v259 = vsel %vm254, %v126, 0
  %v262 = vsel %vm254, %v129, 0
  %v265 = vsel %vm254, %v132, 0
  %v268 = vsel %vm254, %v135, 0
  %270 = vmatprep.subr.bf16.mxu0 0
  %271 = vmatpush1.bf16.msra.mxu0 %v218
  %272 = vmatprep.subr.bf16.mxu0 0
  %273 = vmatpush1.bf16.msra.mxu0 %v219
  %274 = vmatprep.subr.bf16.mxu0 0
  %275 = vmatpush1.bf16.msra.mxu0 %v220
  %276 = vmatprep.subr.bf16.mxu0 0
  %277 = vmatpush1.bf16.msra.mxu0 %v221
  %278 = vmatprep.subr.bf16.mxu0 0
  %279 = vmatpush1.bf16.msra.mxu0 %v222
  %280 = vmatprep.subr.bf16.mxu0 0
  %281 = vmatpush1.bf16.msra.mxu0 %v223
  %282 = vmatprep.subr.bf16.mxu0 0
  %283 = vmatpush1.bf16.msra.mxu0 %v224
  %284 = vmatprep.subr.bf16.mxu0 0
  %285 = vmatpush1.bf16.msra.mxu0 %v225
  %286 = vmatprep.subr.bf16.mxu0 0
  %287 = vmatpush1.bf16.msra.mxu0 %v226
  %288 = vmatprep.subr.bf16.mxu0 0
  %289 = vmatpush1.bf16.msra.mxu0 %v227
  %290 = vmatprep.subr.bf16.mxu0 0
  %291 = vmatpush1.bf16.msra.mxu0 %v228
  %292 = vmatprep.subr.bf16.mxu0 0
  %293 = vmatpush1.bf16.msra.mxu0 %v229
  %294 = vmatprep.subr.bf16.mxu0 0
  %295 = vmatpush1.bf16.msra.mxu0 %v230
  %296 = vmatprep.subr.bf16.mxu0 0
  %297 = vmatpush1.bf16.msra.mxu0 %v231
  %298 = vmatprep.subr.bf16.mxu0 0
  %299 = vmatpush1.bf16.msra.mxu0 %v232
  %300 = vmatprep.subr.bf16.mxu0 0
  %301 = vmatpush1.bf16.msra.mxu0 %v233
  %302 = vmatprep.mubr.bf16.mxu0 %v122
  %303 = vmatmul.mubr.bf16.gmra.mrb[0].mxu0 %v121
  %v304 = vpop.f32.mrb[0].mxu0
  %v305 = vadd.f32 %v74, %v304
  %v306 = vpop.f32.mrb[0].mxu0
  %v307 = vpop.f32.mrb[0].mxu0
  %v308 = vadd.f32 %v74, %v307
  %v309 = vpop.f32.mrb[0].mxu0
  %310 = vmatprep.mubr.bf16.mxu0 %v125
  %311 = vmatmul.mubr.bf16.gmra.mrb[0].mxu0 %v124
  %v312 = vpop.f32.mrb[0].mxu0
  %v313 = vadd.f32 %v74, %v312
  %v314 = vpop.f32.mrb[0].mxu0
  %v315 = vpop.f32.mrb[0].mxu0
  %v316 = vadd.f32 %v74, %v315
  %v317 = vpop.f32.mrb[0].mxu0
  %318 = vmatprep.mubr.bf16.mxu0 %v128
  %319 = vmatmul.mubr.bf16.gmra.mrb[0].mxu0 %v127
  %v320 = vpop.f32.mrb[0].mxu0
  %v321 = vadd.f32 %v74, %v320
  %v322 = vpop.f32.mrb[0].mxu0
  %v323 = vpop.f32.mrb[0].mxu0
  %v324 = vadd.f32 %v74, %v323
  %v325 = vpop.f32.mrb[0].mxu0
  %326 = vmatprep.mubr.bf16.mxu0 %v131
  %327 = vmatmul.mubr.bf16.gmra.mrb[0].mxu0 %v130
  %v328 = vpop.f32.mrb[0].mxu0
  %v329 = vadd.f32 %v74, %v328
  %v330 = vpop.f32.mrb[0].mxu0
  %v331 = vpop.f32.mrb[0].mxu0
  %v332 = vadd.f32 %v74, %v331
  %v333 = vpop.f32.mrb[0].mxu0
  %334 = vmatprep.mubr.bf16.mxu0 %v134
  %335 = vmatmul.mubr.bf16.gmra.mrb[0].mxu0 %v133
  %v336 = vpop.f32.mrb[0].mxu0
  %v337 = vadd.f32 %v74, %v336
  %v338 = vpop.f32.mrb[0].mxu0
  %v339 = vpop.f32.mrb[0].mxu0
  %v340 = vpop.f32.mrb[0].mxu0
  %341 = vdwg.mxu0
  %342 = vmatprep.subr.bf16.mxu0 0
  %343 = vmatpush1.bf16.msra.mxu0 %v234
  %344 = vmatprep.subr.bf16.mxu0 0
  %345 = vmatpush1.bf16.msra.mxu0 %v235
  %346 = vmatprep.subr.bf16.mxu0 0
  %347 = vmatpush1.bf16.msra.mxu0 0
  %348 = vmatprep.subr.bf16.mxu0 0
  %349 = vmatpush1.bf16.msra.mxu0 0
  %350 = vmatprep.subr.bf16.mxu0 0
  %351 = vmatpush1.bf16.msra.mxu0 0
  %352 = vmatprep.subr.bf16.mxu0 0
  %353 = vmatpush1.bf16.msra.mxu0 0
  %354 = vmatprep.subr.bf16.mxu0 0
  %355 = vmatpush1.bf16.msra.mxu0 0
  %356 = vmatprep.subr.bf16.mxu0 0
  %357 = vmatpush1.bf16.msra.mxu0 0
  %358 = vmatprep.subr.bf16.mxu0 0
  %359 = vmatpush1.bf16.msra.mxu0 0
  %360 = vmatprep.subr.bf16.mxu0 0
  %361 = vmatpush1.bf16.msra.mxu0 0
  %362 = vmatprep.subr.bf16.mxu0 0
  %363 = vmatpush1.bf16.msra.mxu0 0
  %364 = vmatprep.subr.bf16.mxu0 0
  %365 = vmatpush1.bf16.msra.mxu0 0
  %366 = vmatprep.subr.bf16.mxu0 0
  %367 = vmatpush1.bf16.msra.mxu0 0
  %368 = vmatprep.subr.bf16.mxu0 0
  %369 = vmatpush1.bf16.msra.mxu0 0
  %370 = vmatprep.subr.bf16.mxu0 0
  %371 = vmatpush1.bf16.msra.mxu0 0
  %372 = vmatprep.subr.bf16.mxu0 0
  %373 = vmatpush1.bf16.msra.mxu0 0
  %374 = vmatprep.mubr.bf16.mxu0 0
  %375 = vmatmul.mubr.bf16.gmra.mrb[0].mxu0 %v256
  %v376 = vpop.f32.mrb[0].mxu0
  %v377 = vadd.f32 %v305, %v376
  %v378 = vpop.f32.mrb[0].mxu0
  %v379 = vpop.f32.mrb[0].mxu0
  %v380 = vadd.f32 %v308, %v379
  %v381 = vpop.f32.mrb[0].mxu0
  %382 = vmatprep.mubr.bf16.mxu0 0
  %383 = vmatmul.mubr.bf16.gmra.mrb[0].mxu0 %v259
  %v384 = vpop.f32.mrb[0].mxu0
  %v385 = vadd.f32 %v313, %v384
  %v386 = vpop.f32.mrb[0].mxu0
  %v387 = vpop.f32.mrb[0].mxu0
  %v388 = vadd.f32 %v316, %v387
  %v389 = vpop.f32.mrb[0].mxu0
  %390 = vmatprep.mubr.bf16.mxu0 0
  %391 = vmatmul.mubr.bf16.gmra.mrb[0].mxu0 %v262
  %v392 = vpop.f32.mrb[0].mxu0
  %v393 = vadd.f32 %v321, %v392
  %v394 = vpop.f32.mrb[0].mxu0
  %v395 = vpop.f32.mrb[0].mxu0
  %v396 = vadd.f32 %v324, %v395
  %v397 = vpop.f32.mrb[0].mxu0
  %398 = vmatprep.mubr.bf16.mxu0 0
  %399 = vmatmul.mubr.bf16.gmra.mrb[0].mxu0 %v265
  %v400 = vpop.f32.mrb[0].mxu0
  %v401 = vadd.f32 %v329, %v400
  %v402 = vpop.f32.mrb[0].mxu0
  %v403 = vpop.f32.mrb[0].mxu0
  %v404 = vadd.f32 %v332, %v403
  %v405 = vpop.f32.mrb[0].mxu0
  %406 = vmatprep.mubr.bf16.mxu0 0
  %407 = vmatmul.mubr.bf16.gmra.mrb[0].mxu0 %v268
  %v408 = vpop.f32.mrb[0].mxu0
  %v409 = vadd.f32 %v337, %v408
  %v410 = vpop.f32.mrb[0].mxu0
  %v411 = vpop.f32.mrb[0].mxu0
  %v412 = vpop.f32.mrb[0].mxu0
  %413 = vdwg.mxu0
  %v414 = vmax.f32 %v377, 0.0
  %v415 = vmax.f32 %v380, 0.0
  %v416 = vmax.f32 %v385, 0.0
  %v417 = vmax.f32 %v388, 0.0
  %v418 = vmax.f32 %v393, 0.0
  %v419 = vmax.f32 %v396, 0.0
  %v420 = vmax.f32 %v401, 0.0
  %v421 = vmax.f32 %v404, 0.0
  %v422 = vmax.f32 %v409, 0.0
  %v423 = vpack.c.bf16 %v415, %v414
  %v424 = vpack.c.bf16 %v417, %v416
  %v425 = vpack.c.bf16 %v419, %v418
  %v426 = vpack.c.bf16 %v421, %v420
  %v427 = vpack.c.bf16 %v422, %v422
  %v433 = vunpack.c.l.b16 %v423
  %v434 = vunpack.c.h.b16 %v423
  %v435 = vunpack.c.l.b16 %v424
  %v436 = vunpack.c.h.b16 %v424
  %v437 = vunpack.c.l.b16 %v425
  %v438 = vunpack.c.h.b16 %v425
  %v439 = vunpack.c.l.b16 %v426
  %v440 = vunpack.c.h.b16 %v426
  %v441 = vunpack.c.l.b16 %v427
  %v442 = vpack.c.b16 %v433, %v433
  %v443 = vpack.c.b16 %v434, %v434
  %v444 = vpack.c.b16 %v435, %v435
  %v445 = vpack.c.b16 %v436, %v436
  %v446 = vpack.c.b16 %v437, %v437
  %v447 = vpack.c.b16 %v438, %v438
  %v448 = vpack.c.b16 %v439, %v439
  %v449 = vpack.c.b16 %v440, %v440
  %v450 = vpack.c.b16 %v441, %v441
  %vm460 = vcmask 257024
  %461 = vst.msk [vmem:[%s3] sm:$0xf] %vm460, %v442
  %462 = vst.msk [vmem:[%s3 + $0x4] sm:$0xf] %vm460, %v443
  %463 = vst.msk [vmem:[%s3 + $0x8] sm:$0xf] %vm460, %v444
  %464 = vst.msk [vmem:[%s3 + $0xc] sm:$0xf] %vm460, %v445
  %465 = vst.msk [vmem:[%s3 + $0x10] sm:$0xf] %vm460, %v446
  %466 = vst.msk [vmem:[%s3 + $0x14] sm:$0xf] %vm460, %v447
  %467 = vst.msk [vmem:[%s3 + $0x18] sm:$0xf] %vm460, %v448
  %468 = vst.msk [vmem:[%s3 + $0x1c] sm:$0xf] %vm460, %v449
  %469 = vst.msk [vmem:[%s3 + $0x20] sm:$0xf] %vm460, %v450
  // Predicated region
  $region14: #{ppo_agent_forward.8} parent=0 // pred_check
    _
  $region15: #{ppo_agent_forward.8} parent=0 // pred_check_branch
    %471 = sbr.rel (0) target = $region17
  $region16: #{ppo_agent_forward.8} parent=0 // pred_region
    _
  $region17: #{ppo_agent_forward.8} parent=0 // pred_fallthru
    _
  // Predicated region
  $region18: #{ppo_agent_forward.8} parent=0 // pred_check
    _
  $region19: #{ppo_agent_forward.8} parent=0 // pred_check_branch
    %473 = sbr.rel (0) target = $region21
  $region20: #{ppo_agent_forward.8} parent=0 // pred_region
    _
  $region21: #{ppo_agent_forward.8} parent=0 // pred_fallthru
    _

// kernel: ppo_agent_forward.9
$region0: #{ppo_agent_forward.9}
  #allocation0 [shape = 'u32[]', space=smem, size = 0x4, offset = 0x4, fixed_abs, tag = 'smem constant byte address 0x4 - core index']
  #allocation1 [shape = 'u32[144,128]{1,0:T(1,128)}', space=vmem, size = 0x12000, scoped, tag = 'internal scratch']
  %s0 = inlined_call_operand.vmem [shape: bf16[8,1152], index: 0, kind: input, shape index: {}]
  %s1 = inlined_call_operand.vmem [shape: bf16[1152,512], index: 1, kind: input, shape index: {}]
  %s2 = inlined_call_operand.vmem [shape: f32[1,512], index: 2, kind: input, shape index: {}]
  %s3 = inlined_call_operand.vmem [shape: bf16[512,128], index: 3, kind: input, shape index: {}]
  %s4 = inlined_call_operand.vmem [shape: f32[1,128], index: 4, kind: input, shape index: {}]
  %s5 = inlined_call_operand.vmem [shape: f32[8,128], index: 5, kind: output, shape index: {}]
  %s6 = sld [smem:[#allocation0]]
  $region30: #{ppo_agent_forward.9} parent=0
    _
  %s8 = ssub.s32 1, %s6
  %s9 = scalar_select 0, %s8, %s6
  // Predicated region
  $region2: #{ppo_agent_forward.9} parent=0 // pred_check
    _
  $region3: #{ppo_agent_forward.9} parent=0 // pred_check_branch
    %11 = sbr.rel (0) target = $region5
  $region4: #{ppo_agent_forward.9} parent=0 // pred_region
    _
  $region5: #{ppo_agent_forward.9} parent=0 // pred_fallthru
    _
  // Predicated region
  $region6: #{ppo_agent_forward.9} parent=0 // pred_check
    _
  $region7: #{ppo_agent_forward.9} parent=0 // pred_check_branch
    %13 = sbr.rel (0) target = $region9
  $region8: #{ppo_agent_forward.9} parent=0 // pred_region
    _
  $region9: #{ppo_agent_forward.9} parent=0 // pred_fallthru
    _
  // Predicated region
  $region10: #{ppo_agent_forward.9} parent=0 // pred_check
    _
  $region11: #{ppo_agent_forward.9} parent=0 // pred_check_branch
    %15 = sbr.rel (0) target = $region13
  $region12: #{ppo_agent_forward.9} parent=0 // pred_region
    _
  $region13: #{ppo_agent_forward.9} parent=0 // pred_fallthru
    _
  // Predicated region
  $region14: #{ppo_agent_forward.9} parent=0 // pred_check
    _
  $region15: #{ppo_agent_forward.9} parent=0 // pred_check_branch
    %17 = sbr.rel (0) target = $region17
  $region16: #{ppo_agent_forward.9} parent=0 // pred_region
    _
  $region17: #{ppo_agent_forward.9} parent=0 // pred_fallthru
    _
  // Predicated region
  $region18: #{ppo_agent_forward.9} parent=0 // pred_check
    _
  $region19: #{ppo_agent_forward.9} parent=0 // pred_check_branch
    %19 = sbr.rel (0) target = $region21
  $region20: #{ppo_agent_forward.9} parent=0 // pred_region
    _
  $region21: #{ppo_agent_forward.9} parent=0 // pred_fallthru
    _
  %v21 = vld [vmem:[%s0] sm:$0xff]
  %v22 = vld [vmem:[%s0 + $0x8] sm:$0xff]
  %v23 = vld [vmem:[%s0 + $0x10] sm:$0xff]
  %v24 = vld [vmem:[%s0 + $0x18] sm:$0xff]
  %v25 = vld [vmem:[%s0 + $0x20] sm:$0xf]
  %v26 = vld [vmem:[%s1] sm:$0xff]
  %v27 = vld [vmem:[%s1 + $0x8] sm:$0xff]
  %v28 = vld [vmem:[%s1 + $0x10] sm:$0xff]
  %v29 = vld [vmem:[%s1 + $0x18] sm:$0xff]
  %v30 = vld [vmem:[%s1 + $0x20] sm:$0xff]
  %v31 = vld [vmem:[%s1 + $0x28] sm:$0xff]
  %v32 = vld [vmem:[%s1 + $0x30] sm:$0xff]
  %v33 = vld [vmem:[%s1 + $0x38] sm:$0xff]
  %v34 = vld [vmem:[%s1 + $0x40] sm:$0xff]
  %v35 = vld [vmem:[%s1 + $0x48] sm:$0xff]
  %v36 = vld [vmem:[%s1 + $0x50] sm:$0xff]
  %v37 = vld [vmem:[%s1 + $0x58] sm:$0xff]
  %v38 = vld [vmem:[%s1 + $0x60] sm:$0xff]
  %v39 = vld [vmem:[%s1 + $0x68] sm:$0xff]
  %v40 = vld [vmem:[%s1 + $0x70] sm:$0xff]
  %v41 = vld [vmem:[%s1 + $0x78] sm:$0xff]
  %v42 = vld [vmem:[%s1 + $0x80] sm:$0xff]
  %v43 = vld [vmem:[%s1 + $0x88] sm:$0xff]
  %v44 = vld [vmem:[%s1 + $0x90] sm:$0xff]
  %v45 = vld [vmem:[%s1 + $0x98] sm:$0xff]
  %v46 = vld [vmem:[%s1 + $0xa0] sm:$0xff]
  %v47 = vld [vmem:[%s1 + $0xa8] sm:$0xff]
  %v48 = vld [vmem:[%s1 + $0xb0] sm:$0xff]
  %v49 = vld [vmem:[%s1 + $0xb8] sm:$0xff]
  %v50 = vld [vmem:[%s1 + $0xc0] sm:$0xff]
  %v51 = vld [vmem:[%s1 + $0xc8] sm:$0xff]
  %v52 = vld [vmem:[%s1 + $0xd0] sm:$0xff]
  %v53 = vld [vmem:[%s1 + $0xd8] sm:$0xff]
  %v54 = vld [vmem:[%s1 + $0xe0] sm:$0xff]
  %v55 = vld [vmem:[%s1 + $0xe8] sm:$0xff]
  %v56 = vld [vmem:[%s1 + $0xf0] sm:$0xff]
  %v57 = vld [vmem:[%s1 + $0xf8] sm:$0xff]
  %v58 = vld [vmem:[%s1 + $0x100] sm:$0xff]
  %v59 = vld [vmem:[%s1 + $0x108] sm:$0xff]
  %v60 = vld [vmem:[%s1 + $0x110] sm:$0xff]
  %v61 = vld [vmem:[%s1 + $0x118] sm:$0xff]
  %v62 = vld [vmem:[%s1 + $0x120] sm:$0xff]
  %v63 = vld [vmem:[%s1 + $0x128] sm:$0xff]
  %v64 = vld [vmem:[%s1 + $0x130] sm:$0xff]
  %v65 = vld [vmem:[%s1 + $0x138] sm:$0xff]
  %v66 = vld [vmem:[%s1 + $0x140] sm:$0xff]
  %v67 = vld [vmem:[%s1 + $0x148] sm:$0xff]
  %v68 = vld [vmem:[%s1 + $0x150] sm:$0xff]
  %v69 = vld [vmem:[%s1 + $0x158] sm:$0xff]
  %v70 = vld [vmem:[%s1 + $0x160] sm:$0xff]
  %v71 = vld [vmem:[%s1 + $0x168] sm:$0xff]
  %v72 = vld [vmem:[%s1 + $0x170] sm:$0xff]
  %v73 = vld [vmem:[%s1 + $0x178] sm:$0xff]
  %v74 = vld [vmem:[%s1 + $0x180] sm:$0xff]
  %v75 = vld [vmem:[%s1 + $0x188] sm:$0xff]
  %v76 = vld [vmem:[%s1 + $0x190] sm:$0xff]
  %v77 = vld [vmem:[%s1 + $0x198] sm:$0xff]
  %v78 = vld [vmem:[%s1 + $0x1a0] sm:$0xff]
  %v79 = vld [vmem:[%s1 + $0x1a8] sm:$0xff]
  %v80 = vld [vmem:[%s1 + $0x1b0] sm:$0xff]
  %v81 = vld [vmem:[%s1 + $0x1b8] sm:$0xff]
  %v82 = vld [vmem:[%s1 + $0x1c0] sm:$0xff]
  %v83 = vld [vmem:[%s1 + $0x1c8] sm:$0xff]
  %v84 = vld [vmem:[%s1 + $0x1d0] sm:$0xff]
  %v85 = vld [vmem:[%s1 + $0x1d8] sm:$0xff]
  %v86 = vld [vmem:[%s1 + $0x1e0] sm:$0xff]
  %v87 = vld [vmem:[%s1 + $0x1e8] sm:$0xff]
  %v88 = vld [vmem:[%s1 + $0x1f0] sm:$0xff]
  %v89 = vld [vmem:[%s1 + $0x1f8] sm:$0xff]
  %v90 = vld [vmem:[%s1 + $0x200] sm:$0xff]
  %v91 = vld [vmem:[%s1 + $0x208] sm:$0xff]
  %v92 = vld [vmem:[%s1 + $0x210] sm:$0xff]
  %v93 = vld [vmem:[%s1 + $0x218] sm:$0xff]
  %v94 = vld [vmem:[%s1 + $0x220] sm:$0xff]
  %v95 = vld [vmem:[%s1 + $0x228] sm:$0xff]
  %v96 = vld [vmem:[%s1 + $0x230] sm:$0xff]
  %v97 = vld [vmem:[%s1 + $0x238] sm:$0xff]
  %v98 = vld [vmem:[%s1 + $0x240] sm:$0xff]
  %v99 = vld [vmem:[%s1 + $0x248] sm:$0xff]
  %v100 = vld [vmem:[%s1 + $0x250] sm:$0xff]
  %v101 = vld [vmem:[%s1 + $0x258] sm:$0xff]
  %v102 = vld [vmem:[%s1 + $0x260] sm:$0xff]
  %v103 = vld [vmem:[%s1 + $0x268] sm:$0xff]
  %v104 = vld [vmem:[%s1 + $0x270] sm:$0xff]
  %v105 = vld [vmem:[%s1 + $0x278] sm:$0xff]
  %v106 = vld [vmem:[%s1 + $0x280] sm:$0xff]
  %v107 = vld [vmem:[%s1 + $0x288] sm:$0xff]
  %v108 = vld [vmem:[%s1 + $0x290] sm:$0xff]
  %v109 = vld [vmem:[%s1 + $0x298] sm:$0xff]
  %v110 = vld [vmem:[%s1 + $0x2a0] sm:$0xff]
  %v111 = vld [vmem:[%s1 + $0x2a8] sm:$0xff]
  %v112 = vld [vmem:[%s1 + $0x2b0] sm:$0xff]
  %v113 = vld [vmem:[%s1 + $0x2b8] sm:$0xff]
  %v114 = vld [vmem:[%s1 + $0x2c0] sm:$0xff]
  %v115 = vld [vmem:[%s1 + $0x2c8] sm:$0xff]
  %v116 = vld [vmem:[%s1 + $0x2d0] sm:$0xff]
  %v117 = vld [vmem:[%s1 + $0x2d8] sm:$0xff]
  %v118 = vld [vmem:[%s1 + $0x2e0] sm:$0xff]
  %v119 = vld [vmem:[%s1 + $0x2e8] sm:$0xff]
  %v120 = vld [vmem:[%s1 + $0x2f0] sm:$0xff]
  %v121 = vld [vmem:[%s1 + $0x2f8] sm:$0xff]
  %v122 = vld [vmem:[%s1 + $0x300] sm:$0xff]
  %v123 = vld [vmem:[%s1 + $0x308] sm:$0xff]
  %v124 = vld [vmem:[%s1 + $0x310] sm:$0xff]
  %v125 = vld [vmem:[%s1 + $0x318] sm:$0xff]
  %v126 = vld [vmem:[%s1 + $0x320] sm:$0xff]
  %v127 = vld [vmem:[%s1 + $0x328] sm:$0xff]
  %v128 = vld [vmem:[%s1 + $0x330] sm:$0xff]
  %v129 = vld [vmem:[%s1 + $0x338] sm:$0xff]
  %v130 = vld [vmem:[%s1 + $0x340] sm:$0xff]
  %v131 = vld [vmem:[%s1 + $0x348] sm:$0xff]
  %v132 = vld [vmem:[%s1 + $0x350] sm:$0xff]
  %v133 = vld [vmem:[%s1 + $0x358] sm:$0xff]
  %v134 = vld [vmem:[%s1 + $0x360] sm:$0xff]
  %v135 = vld [vmem:[%s1 + $0x368] sm:$0xff]
  %v136 = vld [vmem:[%s1 + $0x370] sm:$0xff]
  %v137 = vld [vmem:[%s1 + $0x378] sm:$0xff]
  %v138 = vld [vmem:[%s1 + $0x380] sm:$0xff]
  %v139 = vld [vmem:[%s1 + $0x388] sm:$0xff]
  %v140 = vld [vmem:[%s1 + $0x390] sm:$0xff]
  %v141 = vld [vmem:[%s1 + $0x398] sm:$0xff]
  %v142 = vld [vmem:[%s1 + $0x3a0] sm:$0xff]
  %v143 = vld [vmem:[%s1 + $0x3a8] sm:$0xff]
  %v144 = vld [vmem:[%s1 + $0x3b0] sm:$0xff]
  %v145 = vld [vmem:[%s1 + $0x3b8] sm:$0xff]
  %v146 = vld [vmem:[%s1 + $0x3c0] sm:$0xff]
  %v147 = vld [vmem:[%s1 + $0x3c8] sm:$0xff]
  %v148 = vld [vmem:[%s1 + $0x3d0] sm:$0xff]
  %v149 = vld [vmem:[%s1 + $0x3d8] sm:$0xff]
  %v150 = vld [vmem:[%s1 + $0x3e0] sm:$0xff]
  %v151 = vld [vmem:[%s1 + $0x3e8] sm:$0xff]
  %v152 = vld [vmem:[%s1 + $0x3f0] sm:$0xff]
  %v153 = vld [vmem:[%s1 + $0x3f8] sm:$0xff]
  %v154 = vld [vmem:[%s1 + $0x400] sm:$0xff]
  %v155 = vld [vmem:[%s1 + $0x408] sm:$0xff]
  %v156 = vld [vmem:[%s1 + $0x410] sm:$0xff]
  %v157 = vld [vmem:[%s1 + $0x418] sm:$0xff]
  %v158 = vld [vmem:[%s1 + $0x420] sm:$0xff]
  %v159 = vld [vmem:[%s1 + $0x428] sm:$0xff]
  %v160 = vld [vmem:[%s1 + $0x430] sm:$0xff]
  %v161 = vld [vmem:[%s1 + $0x438] sm:$0xff]
  %v162 = vld [vmem:[%s1 + $0x440] sm:$0xff]
  %v163 = vld [vmem:[%s1 + $0x448] sm:$0xff]
  %v164 = vld [vmem:[%s1 + $0x450] sm:$0xff]
  %v165 = vld [vmem:[%s1 + $0x458] sm:$0xff]
  %v166 = vld [vmem:[%s1 + $0x460] sm:$0xff]
  %v167 = vld [vmem:[%s1 + $0x468] sm:$0xff]
  %v168 = vld [vmem:[%s1 + $0x470] sm:$0xff]
  %v169 = vld [vmem:[%s1 + $0x478] sm:$0xff]
  %v170 = vld [vmem:[%s1 + $0x480] sm:$0xff]
  %v171 = vld [vmem:[%s1 + $0x488] sm:$0xff]
  %v172 = vld [vmem:[%s1 + $0x490] sm:$0xff]
  %v173 = vld [vmem:[%s1 + $0x498] sm:$0xff]
  %v174 = vld [vmem:[%s1 + $0x4a0] sm:$0xff]
  %v175 = vld [vmem:[%s1 + $0x4a8] sm:$0xff]
  %v176 = vld [vmem:[%s1 + $0x4b0] sm:$0xff]
  %v177 = vld [vmem:[%s1 + $0x4b8] sm:$0xff]
  %v178 = vld [vmem:[%s1 + $0x4c0] sm:$0xff]
  %v179 = vld [vmem:[%s1 + $0x4c8] sm:$0xff]
  %v180 = vld [vmem:[%s1 + $0x4d0] sm:$0xff]
  %v181 = vld [vmem:[%s1 + $0x4d8] sm:$0xff]
  %v182 = vld [vmem:[%s1 + $0x4e0] sm:$0xff]
  %v183 = vld [vmem:[%s1 + $0x4e8] sm:$0xff]
  %v184 = vld [vmem:[%s1 + $0x4f0] sm:$0xff]
  %v185 = vld [vmem:[%s1 + $0x4f8] sm:$0xff]
  %v186 = vld [vmem:[%s1 + $0x500] sm:$0xff]
  %v187 = vld [vmem:[%s1 + $0x508] sm:$0xff]
  %v188 = vld [vmem:[%s1 + $0x510] sm:$0xff]
  %v189 = vld [vmem:[%s1 + $0x518] sm:$0xff]
  %v190 = vld [vmem:[%s1 + $0x520] sm:$0xff]
  %v191 = vld [vmem:[%s1 + $0x528] sm:$0xff]
  %v192 = vld [vmem:[%s1 + $0x530] sm:$0xff]
  %v193 = vld [vmem:[%s1 + $0x538] sm:$0xff]
  %v194 = vld [vmem:[%s1 + $0x540] sm:$0xff]
  %v195 = vld [vmem:[%s1 + $0x548] sm:$0xff]
  %v196 = vld [vmem:[%s1 + $0x550] sm:$0xff]
  %v197 = vld [vmem:[%s1 + $0x558] sm:$0xff]
  %v198 = vld [vmem:[%s1 + $0x560] sm:$0xff]
  %v199 = vld [vmem:[%s1 + $0x568] sm:$0xff]
  %v200 = vld [vmem:[%s1 + $0x570] sm:$0xff]
  %v201 = vld [vmem:[%s1 + $0x578] sm:$0xff]
  %v202 = vld [vmem:[%s1 + $0x580] sm:$0xff]
  %v203 = vld [vmem:[%s1 + $0x588] sm:$0xff]
  %v204 = vld [vmem:[%s1 + $0x590] sm:$0xff]
  %v205 = vld [vmem:[%s1 + $0x598] sm:$0xff]
  %v206 = vld [vmem:[%s1 + $0x5a0] sm:$0xff]
  %v207 = vld [vmem:[%s1 + $0x5a8] sm:$0xff]
  %v208 = vld [vmem:[%s1 + $0x5b0] sm:$0xff]
  %v209 = vld [vmem:[%s1 + $0x5b8] sm:$0xff]
  %v210 = vld [vmem:[%s1 + $0x5c0] sm:$0xff]
  %v211 = vld [vmem:[%s1 + $0x5c8] sm:$0xff]
  %v212 = vld [vmem:[%s1 + $0x5d0] sm:$0xff]
  %v213 = vld [vmem:[%s1 + $0x5d8] sm:$0xff]
  %v214 = vld [vmem:[%s1 + $0x5e0] sm:$0xff]
  %v215 = vld [vmem:[%s1 + $0x5e8] sm:$0xff]
  %v216 = vld [vmem:[%s1 + $0x5f0] sm:$0xff]
  %v217 = vld [vmem:[%s1 + $0x5f8] sm:$0xff]
  %v218 = vld [vmem:[%s1 + $0x600] sm:$0xff]
  %v219 = vld [vmem:[%s1 + $0x608] sm:$0xff]
  %v220 = vld [vmem:[%s1 + $0x610] sm:$0xff]
  %v221 = vld [vmem:[%s1 + $0x618] sm:$0xff]
  %v222 = vld [vmem:[%s1 + $0x620] sm:$0xff]
  %v223 = vld [vmem:[%s1 + $0x628] sm:$0xff]
  %v224 = vld [vmem:[%s1 + $0x630] sm:$0xff]
  %v225 = vld [vmem:[%s1 + $0x638] sm:$0xff]
  %v226 = vld [vmem:[%s1 + $0x640] sm:$0xff]
  %v227 = vld [vmem:[%s1 + $0x648] sm:$0xff]
  %v228 = vld [vmem:[%s1 + $0x650] sm:$0xff]
  %v229 = vld [vmem:[%s1 + $0x658] sm:$0xff]
  %v230 = vld [vmem:[%s1 + $0x660] sm:$0xff]
  %v231 = vld [vmem:[%s1 + $0x668] sm:$0xff]
  %v232 = vld [vmem:[%s1 + $0x670] sm:$0xff]
  %v233 = vld [vmem:[%s1 + $0x678] sm:$0xff]
  %v234 = vld [vmem:[%s1 + $0x680] sm:$0xff]
  %v235 = vld [vmem:[%s1 + $0x688] sm:$0xff]
  %v236 = vld [vmem:[%s1 + $0x690] sm:$0xff]
  %v237 = vld [vmem:[%s1 + $0x698] sm:$0xff]
  %v238 = vld [vmem:[%s1 + $0x6a0] sm:$0xff]
  %v239 = vld [vmem:[%s1 + $0x6a8] sm:$0xff]
  %v240 = vld [vmem:[%s1 + $0x6b0] sm:$0xff]
  %v241 = vld [vmem:[%s1 + $0x6b8] sm:$0xff]
  %v242 = vld [vmem:[%s1 + $0x6c0] sm:$0xff]
  %v243 = vld [vmem:[%s1 + $0x6c8] sm:$0xff]
  %v244 = vld [vmem:[%s1 + $0x6d0] sm:$0xff]
  %v245 = vld [vmem:[%s1 + $0x6d8] sm:$0xff]
  %v246 = vld [vmem:[%s1 + $0x6e0] sm:$0xff]
  %v247 = vld [vmem:[%s1 + $0x6e8] sm:$0xff]
  %v248 = vld [vmem:[%s1 + $0x6f0] sm:$0xff]
  %v249 = vld [vmem:[%s1 + $0x6f8] sm:$0xff]
  %v250 = vld [vmem:[%s1 + $0x700] sm:$0xff]
  %v251 = vld [vmem:[%s1 + $0x708] sm:$0xff]
  %v252 = vld [vmem:[%s1 + $0x710] sm:$0xff]
  %v253 = vld [vmem:[%s1 + $0x718] sm:$0xff]
  %v254 = vld [vmem:[%s1 + $0x720] sm:$0xff]
  %v255 = vld [vmem:[%s1 + $0x728] sm:$0xff]
  %v256 = vld [vmem:[%s1 + $0x730] sm:$0xff]
  %v257 = vld [vmem:[%s1 + $0x738] sm:$0xff]
  %v258 = vld [vmem:[%s1 + $0x740] sm:$0xff]
  %v259 = vld [vmem:[%s1 + $0x748] sm:$0xff]
  %v260 = vld [vmem:[%s1 + $0x750] sm:$0xff]
  %v261 = vld [vmem:[%s1 + $0x758] sm:$0xff]
  %v262 = vld [vmem:[%s1 + $0x760] sm:$0xff]
  %v263 = vld [vmem:[%s1 + $0x768] sm:$0xff]
  %v264 = vld [vmem:[%s1 + $0x770] sm:$0xff]
  %v265 = vld [vmem:[%s1 + $0x778] sm:$0xff]
  %v266 = vld [vmem:[%s1 + $0x780] sm:$0xff]
  %v267 = vld [vmem:[%s1 + $0x788] sm:$0xff]
  %v268 = vld [vmem:[%s1 + $0x790] sm:$0xff]
  %v269 = vld [vmem:[%s1 + $0x798] sm:$0xff]
  %v270 = vld [vmem:[%s1 + $0x7a0] sm:$0xff]
  %v271 = vld [vmem:[%s1 + $0x7a8] sm:$0xff]
  %v272 = vld [vmem:[%s1 + $0x7b0] sm:$0xff]
  %v273 = vld [vmem:[%s1 + $0x7b8] sm:$0xff]
  %v274 = vld [vmem:[%s1 + $0x7c0] sm:$0xff]
  %v275 = vld [vmem:[%s1 + $0x7c8] sm:$0xff]
  %v276 = vld [vmem:[%s1 + $0x7d0] sm:$0xff]
  %v277 = vld [vmem:[%s1 + $0x7d8] sm:$0xff]
  %v278 = vld [vmem:[%s1 + $0x7e0] sm:$0xff]
  %v279 = vld [vmem:[%s1 + $0x7e8] sm:$0xff]
  %v280 = vld [vmem:[%s1 + $0x7f0] sm:$0xff]
  %v281 = vld [vmem:[%s1 + $0x7f8] sm:$0xff]
  %v282 = vld [vmem:[%s1 + $0x800] sm:$0xff]
  %v283 = vld [vmem:[%s1 + $0x808] sm:$0xff]
  %v284 = vld [vmem:[%s1 + $0x810] sm:$0xff]
  %v285 = vld [vmem:[%s1 + $0x818] sm:$0xff]
  %v286 = vld [vmem:[%s1 + $0x820] sm:$0xff]
  %v287 = vld [vmem:[%s1 + $0x828] sm:$0xff]
  %v288 = vld [vmem:[%s1 + $0x830] sm:$0xff]
  %v289 = vld [vmem:[%s1 + $0x838] sm:$0xff]
  %v290 = vld [vmem:[%s1 + $0x840] sm:$0xff]
  %v291 = vld [vmem:[%s1 + $0x848] sm:$0xff]
  %v292 = vld [vmem:[%s1 + $0x850] sm:$0xff]
  %v293 = vld [vmem:[%s1 + $0x858] sm:$0xff]
  %v294 = vld [vmem:[%s1 + $0x860] sm:$0xff]
  %v295 = vld [vmem:[%s1 + $0x868] sm:$0xff]
  %v296 = vld [vmem:[%s1 + $0x870] sm:$0xff]
  %v297 = vld [vmem:[%s1 + $0x878] sm:$0xff]
  %v298 = vld [vmem:[%s1 + $0x880] sm:$0xff]
  %v299 = vld [vmem:[%s1 + $0x888] sm:$0xff]
  %v300 = vld [vmem:[%s1 + $0x890] sm:$0xff]
  %v301 = vld [vmem:[%s1 + $0x898] sm:$0xff]
  %v302 = vld [vmem:[%s1 + $0x8a0] sm:$0xff]
  %v303 = vld [vmem:[%s1 + $0x8a8] sm:$0xff]
  %v304 = vld [vmem:[%s1 + $0x8b0] sm:$0xff]
  %v305 = vld [vmem:[%s1 + $0x8b8] sm:$0xff]
  %v306 = vld [vmem:[%s1 + $0x8c0] sm:$0xff]
  %v307 = vld [vmem:[%s1 + $0x8c8] sm:$0xff]
  %v308 = vld [vmem:[%s1 + $0x8d0] sm:$0xff]
  %v309 = vld [vmem:[%s1 + $0x8d8] sm:$0xff]
  %v310 = vld [vmem:[%s1 + $0x8e0] sm:$0xff]
  %v311 = vld [vmem:[%s1 + $0x8e8] sm:$0xff]
  %v312 = vld [vmem:[%s1 + $0x8f0] sm:$0xff]
  %v313 = vld [vmem:[%s1 + $0x8f8] sm:$0xff]
  %v314 = vld [vmem:[%s2] sm:$0xf]
  %v316 = vlaneseq
  %v317 = vshrl.u32 %v316, 7
  %v318 = vsub.s32 0, %v317
  %v319 = vrot.slane %v314, %v318
  %v320 = vlaneseq
  %v321 = vshrl.u32 %v320, 7
  %v322 = vsub.s32 1, %v321
  %v323 = vrot.slane %v314, %v322
  %v324 = vlaneseq
  %v325 = vshrl.u32 %v324, 7
  %v326 = vsub.s32 2, %v325
  %v327 = vrot.slane %v314, %v326
  %v328 = vlaneseq
  %v329 = vshrl.u32 %v328, 7
  %v330 = vsub.s32 3, %v329
  %v331 = vrot.slane %v314, %v330
  %v341 = vunpack.c.l.b16 %v21
  %v342 = vunpack.c.h.b16 %v21
  %v343 = vunpack.c.l.b16 %v22
  %v344 = vunpack.c.h.b16 %v22
  %v345 = vunpack.c.l.b16 %v23
  %v346 = vunpack.c.h.b16 %v23
  %v347 = vunpack.c.l.b16 %v24
  %v348 = vunpack.c.h.b16 %v24
  %v349 = vunpack.c.l.b16 %v25
  %v350 = vpack.c.b16 %v341, %v341
  %v351 = vpack.c.b16 %v342, %v342
  %v352 = vpack.c.b16 %v343, %v343
  %v353 = vpack.c.b16 %v344, %v344
  %v354 = vpack.c.b16 %v345, %v345
  %v355 = vpack.c.b16 %v346, %v346
  %v356 = vpack.c.b16 %v347, %v347
  %v357 = vpack.c.b16 %v348, %v348
  %v358 = vpack.c.b16 %v349, %v349
  %v656 = vunpack.c.l.b16 %v26
  %v657 = vunpack.c.h.b16 %v26
  %v658 = vunpack.c.l.b16 %v27
  %v659 = vunpack.c.h.b16 %v27
  %v660 = vunpack.c.l.b16 %v28
  %v661 = vunpack.c.h.b16 %v28
  %v662 = vunpack.c.l.b16 %v29
  %v663 = vunpack.c.h.b16 %v29
  %v664 = vunpack.c.l.b16 %v30
  %v665 = vunpack.c.h.b16 %v30
  %v666 = vunpack.c.l.b16 %v31
  %v667 = vunpack.c.h.b16 %v31
  %v668 = vunpack.c.l.b16 %v32
  %v669 = vunpack.c.h.b16 %v32
  %v670 = vunpack.c.l.b16 %v33
  %v671 = vunpack.c.h.b16 %v33
  %v672 = vunpack.c.l.b16 %v34
  %v673 = vunpack.c.h.b16 %v34
  %v674 = vunpack.c.l.b16 %v35
  %v675 = vunpack.c.h.b16 %v35
  %v676 = vunpack.c.l.b16 %v36
  %v677 = vunpack.c.h.b16 %v36
  %v678 = vunpack.c.l.b16 %v37
  %v679 = vunpack.c.h.b16 %v37
  %v680 = vunpack.c.l.b16 %v38
  %v681 = vunpack.c.h.b16 %v38
  %v682 = vunpack.c.l.b16 %v39
  %v683 = vunpack.c.h.b16 %v39
  %v684 = vunpack.c.l.b16 %v40
  %v685 = vunpack.c.h.b16 %v40
  %v686 = vunpack.c.l.b16 %v41
  %v687 = vunpack.c.h.b16 %v41
  %v688 = vunpack.c.l.b16 %v42
  %v689 = vunpack.c.h.b16 %v42
  %v690 = vunpack.c.l.b16 %v43
  %v691 = vunpack.c.h.b16 %v43
  %v692 = vunpack.c.l.b16 %v44
  %v693 = vunpack.c.h.b16 %v44
  %v694 = vunpack.c.l.b16 %v45
  %v695 = vunpack.c.h.b16 %v45
  %v696 = vunpack.c.l.b16 %v46
  %v697 = vunpack.c.h.b16 %v46
  %v698 = vunpack.c.l.b16 %v47
  %v699 = vunpack.c.h.b16 %v47
  %v700 = vunpack.c.l.b16 %v48
  %v701 = vunpack.c.h.b16 %v48
  %v702 = vunpack.c.l.b16 %v49
  %v703 = vunpack.c.h.b16 %v49
  %v704 = vunpack.c.l.b16 %v50
  %v705 = vunpack.c.h.b16 %v50
  %v706 = vunpack.c.l.b16 %v51
  %v707 = vunpack.c.h.b16 %v51
  %v708 = vunpack.c.l.b16 %v52
  %v709 = vunpack.c.h.b16 %v52
  %v710 = vunpack.c.l.b16 %v53
  %v711 = vunpack.c.h.b16 %v53
  %v712 = vunpack.c.l.b16 %v54
  %v713 = vunpack.c.h.b16 %v54
  %v714 = vunpack.c.l.b16 %v55
  %v715 = vunpack.c.h.b16 %v55
  %v716 = vunpack.c.l.b16 %v56
  %v717 = vunpack.c.h.b16 %v56
  %v718 = vunpack.c.l.b16 %v57
  %v719 = vunpack.c.h.b16 %v57
  %v720 = vunpack.c.l.b16 %v58
  %v721 = vunpack.c.h.b16 %v58
  %v722 = vunpack.c.l.b16 %v59
  %v723 = vunpack.c.h.b16 %v59
  %v724 = vunpack.c.l.b16 %v60
  %v725 = vunpack.c.h.b16 %v60
  %v726 = vunpack.c.l.b16 %v61
  %v727 = vunpack.c.h.b16 %v61
  %v728 = vunpack.c.l.b16 %v62
  %v729 = vunpack.c.h.b16 %v62
  %v730 = vunpack.c.l.b16 %v63
  %v731 = vunpack.c.h.b16 %v63
  %v732 = vunpack.c.l.b16 %v64
  %v733 = vunpack.c.h.b16 %v64
  %v734 = vunpack.c.l.b16 %v65
  %v735 = vunpack.c.h.b16 %v65
  %v736 = vunpack.c.l.b16 %v66
  %v737 = vunpack.c.h.b16 %v66
  %v738 = vunpack.c.l.b16 %v67
  %v739 = vunpack.c.h.b16 %v67
  %v740 = vunpack.c.l.b16 %v68
  %v741 = vunpack.c.h.b16 %v68
  %v742 = vunpack.c.l.b16 %v69
  %v743 = vunpack.c.h.b16 %v69
  %v744 = vunpack.c.l.b16 %v70
  %v745 = vunpack.c.h.b16 %v70
  %v746 = vunpack.c.l.b16 %v71
  %v747 = vunpack.c.h.b16 %v71
  %v748 = vunpack.c.l.b16 %v72
  %v749 = vunpack.c.h.b16 %v72
  %v750 = vunpack.c.l.b16 %v73
  %v751 = vunpack.c.h.b16 %v73
  %v752 = vunpack.c.l.b16 %v74
  %v753 = vunpack.c.h.b16 %v74
  %v754 = vunpack.c.l.b16 %v75
  %v755 = vunpack.c.h.b16 %v75
  %v756 = vunpack.c.l.b16 %v76
  %v757 = vunpack.c.h.b16 %v76
  %v758 = vunpack.c.l.b16 %v77
  %v759 = vunpack.c.h.b16 %v77
  %v760 = vunpack.c.l.b16 %v78
  %v761 = vunpack.c.h.b16 %v78
  %v762 = vunpack.c.l.b16 %v79
  %v763 = vunpack.c.h.b16 %v79
  %v764 = vunpack.c.l.b16 %v80
  %v765 = vunpack.c.h.b16 %v80
  %v766 = vunpack.c.l.b16 %v81
  %v767 = vunpack.c.h.b16 %v81
  %v768 = vunpack.c.l.b16 %v82
  %v769 = vunpack.c.h.b16 %v82
  %v770 = vunpack.c.l.b16 %v83
  %v771 = vunpack.c.h.b16 %v83
  %v772 = vunpack.c.l.b16 %v84
  %v773 = vunpack.c.h.b16 %v84
  %v774 = vunpack.c.l.b16 %v85
  %v775 = vunpack.c.h.b16 %v85
  %v776 = vunpack.c.l.b16 %v86
  %v777 = vunpack.c.h.b16 %v86
  %v778 = vunpack.c.l.b16 %v87
  %v779 = vunpack.c.h.b16 %v87
  %v780 = vunpack.c.l.b16 %v88
  %v781 = vunpack.c.h.b16 %v88
  %v782 = vunpack.c.l.b16 %v89
  %v783 = vunpack.c.h.b16 %v89
  %v784 = vunpack.c.l.b16 %v90
  %v785 = vunpack.c.h.b16 %v90
  %v786 = vunpack.c.l.b16 %v91
  %v787 = vunpack.c.h.b16 %v91
  %v788 = vunpack.c.l.b16 %v92
  %v789 = vunpack.c.h.b16 %v92
  %v790 = vunpack.c.l.b16 %v93
  %v791 = vunpack.c.h.b16 %v93
  %v792 = vunpack.c.l.b16 %v94
  %v793 = vunpack.c.h.b16 %v94
  %v794 = vunpack.c.l.b16 %v95
  %v795 = vunpack.c.h.b16 %v95
  %v796 = vunpack.c.l.b16 %v96
  %v797 = vunpack.c.h.b16 %v96
  %v798 = vunpack.c.l.b16 %v97
  %v799 = vunpack.c.h.b16 %v97
  %v800 = vunpack.c.l.b16 %v98
  %v801 = vunpack.c.h.b16 %v98
  %v802 = vunpack.c.l.b16 %v99
  %v803 = vunpack.c.h.b16 %v99
  %v804 = vunpack.c.l.b16 %v100
  %v805 = vunpack.c.h.b16 %v100
  %v806 = vunpack.c.l.b16 %v101
  %v807 = vunpack.c.h.b16 %v101
  %v808 = vunpack.c.l.b16 %v102
  %v809 = vunpack.c.h.b16 %v102
  %v810 = vunpack.c.l.b16 %v103
  %v811 = vunpack.c.h.b16 %v103
  %v812 = vunpack.c.l.b16 %v104
  %v813 = vunpack.c.h.b16 %v104
  %v814 = vunpack.c.l.b16 %v105
  %v815 = vunpack.c.h.b16 %v105
  %v816 = vunpack.c.l.b16 %v106
  %v817 = vunpack.c.h.b16 %v106
  %v818 = vunpack.c.l.b16 %v107
  %v819 = vunpack.c.h.b16 %v107
  %v820 = vunpack.c.l.b16 %v108
  %v821 = vunpack.c.h.b16 %v108
  %v822 = vunpack.c.l.b16 %v109
  %v823 = vunpack.c.h.b16 %v109
  %v824 = vunpack.c.l.b16 %v110
  %v825 = vunpack.c.h.b16 %v110
  %v826 = vunpack.c.l.b16 %v111
  %v827 = vunpack.c.h.b16 %v111
  %v828 = vunpack.c.l.b16 %v112
  %v829 = vunpack.c.h.b16 %v112
  %v830 = vunpack.c.l.b16 %v113
  %v831 = vunpack.c.h.b16 %v113
  %v832 = vunpack.c.l.b16 %v114
  %v833 = vunpack.c.h.b16 %v114
  %v834 = vunpack.c.l.b16 %v115
  %v835 = vunpack.c.h.b16 %v115
  %v836 = vunpack.c.l.b16 %v116
  %v837 = vunpack.c.h.b16 %v116
  %v838 = vunpack.c.l.b16 %v117
  %v839 = vunpack.c.h.b16 %v117
  %v840 = vunpack.c.l.b16 %v118
  %v841 = vunpack.c.h.b16 %v118
  %v842 = vunpack.c.l.b16 %v119
  %v843 = vunpack.c.h.b16 %v119
  %v844 = vunpack.c.l.b16 %v120
  %v845 = vunpack.c.h.b16 %v120
  %v846 = vunpack.c.l.b16 %v121
  %v847 = vunpack.c.h.b16 %v121
  %v848 = vunpack.c.l.b16 %v122
  %v849 = vunpack.c.h.b16 %v122
  %v850 = vunpack.c.l.b16 %v123
  %v851 = vunpack.c.h.b16 %v123
  %v852 = vunpack.c.l.b16 %v124
  %v853 = vunpack.c.h.b16 %v124
  %v854 = vunpack.c.l.b16 %v125
  %v855 = vunpack.c.h.b16 %v125
  %v856 = vunpack.c.l.b16 %v126
  %v857 = vunpack.c.h.b16 %v126
  %v858 = vunpack.c.l.b16 %v127
  %v859 = vunpack.c.h.b16 %v127
  %v860 = vunpack.c.l.b16 %v128
  %v861 = vunpack.c.h.b16 %v128
  %v862 = vunpack.c.l.b16 %v129
  %v863 = vunpack.c.h.b16 %v129
  %v864 = vunpack.c.l.b16 %v130
  %v865 = vunpack.c.h.b16 %v130
  %v866 = vunpack.c.l.b16 %v131
  %v867 = vunpack.c.h.b16 %v131
  %v868 = vunpack.c.l.b16 %v132
  %v869 = vunpack.c.h.b16 %v132
  %v870 = vunpack.c.l.b16 %v133
  %v871 = vunpack.c.h.b16 %v133
  %v872 = vunpack.c.l.b16 %v134
  %v873 = vunpack.c.h.b16 %v134
  %v874 = vunpack.c.l.b16 %v135
  %v875 = vunpack.c.h.b16 %v135
  %v876 = vunpack.c.l.b16 %v136
  %v877 = vunpack.c.h.b16 %v136
  %v878 = vunpack.c.l.b16 %v137
  %v879 = vunpack.c.h.b16 %v137
  %v880 = vunpack.c.l.b16 %v138
  %v881 = vunpack.c.h.b16 %v138
  %v882 = vunpack.c.l.b16 %v139
  %v883 = vunpack.c.h.b16 %v139
  %v884 = vunpack.c.l.b16 %v140
  %v885 = vunpack.c.h.b16 %v140
  %v886 = vunpack.c.l.b16 %v141
  %v887 = vunpack.c.h.b16 %v141
  %v888 = vunpack.c.l.b16 %v142
  %v889 = vunpack.c.h.b16 %v142
  %v890 = vunpack.c.l.b16 %v143
  %v891 = vunpack.c.h.b16 %v143
  %v892 = vunpack.c.l.b16 %v144
  %v893 = vunpack.c.h.b16 %v144
  %v894 = vunpack.c.l.b16 %v145
  %v895 = vunpack.c.h.b16 %v145
  %v896 = vunpack.c.l.b16 %v146
  %v897 = vunpack.c.h.b16 %v146
  %v898 = vunpack.c.l.b16 %v147
  %v899 = vunpack.c.h.b16 %v147
  %v900 = vunpack.c.l.b16 %v148
  %v901 = vunpack.c.h.b16 %v148
  %v902 = vunpack.c.l.b16 %v149
  %v903 = vunpack.c.h.b16 %v149
  %v904 = vunpack.c.l.b16 %v150
  %v905 = vunpack.c.h.b16 %v150
  %v906 = vunpack.c.l.b16 %v151
  %v907 = vunpack.c.h.b16 %v151
  %v908 = vunpack.c.l.b16 %v152
  %v909 = vunpack.c.h.b16 %v152
  %v910 = vunpack.c.l.b16 %v153
  %v911 = vunpack.c.h.b16 %v153
  %v912 = vunpack.c.l.b16 %v154
  %v913 = vunpack.c.h.b16 %v154
  %v914 = vunpack.c.l.b16 %v155
  %v915 = vunpack.c.h.b16 %v155
  %v916 = vunpack.c.l.b16 %v156
  %v917 = vunpack.c.h.b16 %v156
  %v918 = vunpack.c.l.b16 %v157
  %v919 = vunpack.c.h.b16 %v157
  %v920 = vunpack.c.l.b16 %v158
  %v921 = vunpack.c.h.b16 %v158
  %v922 = vunpack.c.l.b16 %v159
  %v923 = vunpack.c.h.b16 %v159
  %v924 = vunpack.c.l.b16 %v160
  %v925 = vunpack.c.h.b16 %v160
  %v926 = vunpack.c.l.b16 %v161
  %v927 = vunpack.c.h.b16 %v161
  %v928 = vunpack.c.l.b16 %v162
  %v929 = vunpack.c.h.b16 %v162
  %v930 = vunpack.c.l.b16 %v163
  %v931 = vunpack.c.h.b16 %v163
  %v932 = vunpack.c.l.b16 %v164
  %v933 = vunpack.c.h.b16 %v164
  %v934 = vunpack.c.l.b16 %v165
  %v935 = vunpack.c.h.b16 %v165
  %v936 = vunpack.c.l.b16 %v166
  %v937 = vunpack.c.h.b16 %v166
  %v938 = vunpack.c.l.b16 %v167
  %v939 = vunpack.c.h.b16 %v167
  %v940 = vunpack.c.l.b16 %v168
  %v941 = vunpack.c.h.b16 %v168
  %v942 = vunpack.c.l.b16 %v169
  %v943 = vunpack.c.h.b16 %v169
  %v944 = vunpack.c.l.b16 %v170
  %v945 = vunpack.c.h.b16 %v170
  %v946 = vunpack.c.l.b16 %v171
  %v947 = vunpack.c.h.b16 %v171
  %v948 = vunpack.c.l.b16 %v172
  %v949 = vunpack.c.h.b16 %v172
  %v950 = vunpack.c.l.b16 %v173
  %v951 = vunpack.c.h.b16 %v173
  %v952 = vunpack.c.l.b16 %v174
  %v953 = vunpack.c.h.b16 %v174
  %v954 = vunpack.c.l.b16 %v175
  %v955 = vunpack.c.h.b16 %v175
  %v956 = vunpack.c.l.b16 %v176
  %v957 = vunpack.c.h.b16 %v176
  %v958 = vunpack.c.l.b16 %v177
  %v959 = vunpack.c.h.b16 %v177
  %v960 = vunpack.c.l.b16 %v178
  %v961 = vunpack.c.h.b16 %v178
  %v962 = vunpack.c.l.b16 %v179
  %v963 = vunpack.c.h.b16 %v179
  %v964 = vunpack.c.l.b16 %v180
  %v965 = vunpack.c.h.b16 %v180
  %v966 = vunpack.c.l.b16 %v181
  %v967 = vunpack.c.h.b16 %v181
  %v968 = vunpack.c.l.b16 %v182
  %v969 = vunpack.c.h.b16 %v182
  %v970 = vunpack.c.l.b16 %v183
  %v971 = vunpack.c.h.b16 %v183
  %v972 = vunpack.c.l.b16 %v184
  %v973 = vunpack.c.h.b16 %v184
  %v974 = vunpack.c.l.b16 %v185
  %v975 = vunpack.c.h.b16 %v185
  %v976 = vunpack.c.l.b16 %v186
  %v977 = vunpack.c.h.b16 %v186
  %v978 = vunpack.c.l.b16 %v187
  %v979 = vunpack.c.h.b16 %v187
  %v980 = vunpack.c.l.b16 %v188
  %v981 = vunpack.c.h.b16 %v188
  %v982 = vunpack.c.l.b16 %v189
  %v983 = vunpack.c.h.b16 %v189
  %v984 = vunpack.c.l.b16 %v190
  %v985 = vunpack.c.h.b16 %v190
  %v986 = vunpack.c.l.b16 %v191
  %v987 = vunpack.c.h.b16 %v191
  %v988 = vunpack.c.l.b16 %v192
  %v989 = vunpack.c.h.b16 %v192
  %v990 = vunpack.c.l.b16 %v193
  %v991 = vunpack.c.h.b16 %v193
  %v992 = vunpack.c.l.b16 %v194
  %v993 = vunpack.c.h.b16 %v194
  %v994 = vunpack.c.l.b16 %v195
  %v995 = vunpack.c.h.b16 %v195
  %v996 = vunpack.c.l.b16 %v196
  %v997 = vunpack.c.h.b16 %v196
  %v998 = vunpack.c.l.b16 %v197
  %v999 = vunpack.c.h.b16 %v197
  %v1000 = vunpack.c.l.b16 %v198
  %v1001 = vunpack.c.h.b16 %v198
  %v1002 = vunpack.c.l.b16 %v199
  %v1003 = vunpack.c.h.b16 %v199
  %v1004 = vunpack.c.l.b16 %v200
  %v1005 = vunpack.c.h.b16 %v200
  %v1006 = vunpack.c.l.b16 %v201
  %v1007 = vunpack.c.h.b16 %v201
  %v1008 = vunpack.c.l.b16 %v202
  %v1009 = vunpack.c.h.b16 %v202
  %v1010 = vunpack.c.l.b16 %v203
  %v1011 = vunpack.c.h.b16 %v203
  %v1012 = vunpack.c.l.b16 %v204
  %v1013 = vunpack.c.h.b16 %v204
  %v1014 = vunpack.c.l.b16 %v205
  %v1015 = vunpack.c.h.b16 %v205
  %v1016 = vunpack.c.l.b16 %v206
  %v1017 = vunpack.c.h.b16 %v206
  %v1018 = vunpack.c.l.b16 %v207
  %v1019 = vunpack.c.h.b16 %v207
  %v1020 = vunpack.c.l.b16 %v208
  %v1021 = vunpack.c.h.b16 %v208
  %v1022 = vunpack.c.l.b16 %v209
  %v1023 = vunpack.c.h.b16 %v209
  %v1024 = vunpack.c.l.b16 %v210
  %v1025 = vunpack.c.h.b16 %v210
  %v1026 = vunpack.c.l.b16 %v211
  %v1027 = vunpack.c.h.b16 %v211
  %v1028 = vunpack.c.l.b16 %v212
  %v1029 = vunpack.c.h.b16 %v212
  %v1030 = vunpack.c.l.b16 %v213
  %v1031 = vunpack.c.h.b16 %v213
  %v1032 = vunpack.c.l.b16 %v214
  %v1033 = vunpack.c.h.b16 %v214
  %v1034 = vunpack.c.l.b16 %v215
  %v1035 = vunpack.c.h.b16 %v215
  %v1036 = vunpack.c.l.b16 %v216
  %v1037 = vunpack.c.h.b16 %v216
  %v1038 = vunpack.c.l.b16 %v217
  %v1039 = vunpack.c.h.b16 %v217
  %v1040 = vunpack.c.l.b16 %v218
  %v1041 = vunpack.c.h.b16 %v218
  %v1042 = vunpack.c.l.b16 %v219
  %v1043 = vunpack.c.h.b16 %v219
  %v1044 = vunpack.c.l.b16 %v220
  %v1045 = vunpack.c.h.b16 %v220
  %v1046 = vunpack.c.l.b16 %v221
  %v1047 = vunpack.c.h.b16 %v221
  %v1048 = vunpack.c.l.b16 %v222
  %v1049 = vunpack.c.h.b16 %v222
  %v1050 = vunpack.c.l.b16 %v223
  %v1051 = vunpack.c.h.b16 %v223
  %v1052 = vunpack.c.l.b16 %v224
  %v1053 = vunpack.c.h.b16 %v224
  %v1054 = vunpack.c.l.b16 %v225
  %v1055 = vunpack.c.h.b16 %v225
  %v1056 = vunpack.c.l.b16 %v226
  %v1057 = vunpack.c.h.b16 %v226
  %v1058 = vunpack.c.l.b16 %v227
  %v1059 = vunpack.c.h.b16 %v227
  %v1060 = vunpack.c.l.b16 %v228
  %v1061 = vunpack.c.h.b16 %v228
  %v1062 = vunpack.c.l.b16 %v229
  %v1063 = vunpack.c.h.b16 %v229
  %v1064 = vunpack.c.l.b16 %v230
  %v1065 = vunpack.c.h.b16 %v230
  %v1066 = vunpack.c.l.b16 %v231
  %v1067 = vunpack.c.h.b16 %v231
  %v1068 = vunpack.c.l.b16 %v232
  %v1069 = vunpack.c.h.b16 %v232
  %v1070 = vunpack.c.l.b16 %v233
  %v1071 = vunpack.c.h.b16 %v233
  %v1072 = vunpack.c.l.b16 %v234
  %v1073 = vunpack.c.h.b16 %v234
  %v1074 = vunpack.c.l.b16 %v235
  %v1075 = vunpack.c.h.b16 %v235
  %v1076 = vunpack.c.l.b16 %v236
  %v1077 = vunpack.c.h.b16 %v236
  %v1078 = vunpack.c.l.b16 %v237
  %v1079 = vunpack.c.h.b16 %v237
  %v1080 = vunpack.c.l.b16 %v238
  %v1081 = vunpack.c.h.b16 %v238
  %v1082 = vunpack.c.l.b16 %v239
  %v1083 = vunpack.c.h.b16 %v239
  %v1084 = vunpack.c.l.b16 %v240
  %v1085 = vunpack.c.h.b16 %v240
  %v1086 = vunpack.c.l.b16 %v241
  %v1087 = vunpack.c.h.b16 %v241
  %v1088 = vunpack.c.l.b16 %v242
  %v1089 = vunpack.c.h.b16 %v242
  %v1090 = vunpack.c.l.b16 %v243
  %v1091 = vunpack.c.h.b16 %v243
  %v1092 = vunpack.c.l.b16 %v244
  %v1093 = vunpack.c.h.b16 %v244
  %v1094 = vunpack.c.l.b16 %v245
  %v1095 = vunpack.c.h.b16 %v245
  %v1096 = vunpack.c.l.b16 %v246
  %v1097 = vunpack.c.h.b16 %v246
  %v1098 = vunpack.c.l.b16 %v247
  %v1099 = vunpack.c.h.b16 %v247
  %v1100 = vunpack.c.l.b16 %v248
  %v1101 = vunpack.c.h.b16 %v248
  %v1102 = vunpack.c.l.b16 %v249
  %v1103 = vunpack.c.h.b16 %v249
  %v1104 = vunpack.c.l.b16 %v250
  %v1105 = vunpack.c.h.b16 %v250
  %v1106 = vunpack.c.l.b16 %v251
  %v1107 = vunpack.c.h.b16 %v251
  %v1108 = vunpack.c.l.b16 %v252
  %v1109 = vunpack.c.h.b16 %v252
  %v1110 = vunpack.c.l.b16 %v253
  %v1111 = vunpack.c.h.b16 %v253
  %v1112 = vunpack.c.l.b16 %v254
  %v1113 = vunpack.c.h.b16 %v254
  %v1114 = vunpack.c.l.b16 %v255
  %v1115 = vunpack.c.h.b16 %v255
  %v1116 = vunpack.c.l.b16 %v256
  %v1117 = vunpack.c.h.b16 %v256
  %v1118 = vunpack.c.l.b16 %v257
  %v1119 = vunpack.c.h.b16 %v257
  %v1120 = vunpack.c.l.b16 %v258
  %v1121 = vunpack.c.h.b16 %v258
  %v1122 = vunpack.c.l.b16 %v259
  %v1123 = vunpack.c.h.b16 %v259
  %v1124 = vunpack.c.l.b16 %v260
  %v1125 = vunpack.c.h.b16 %v260
  %v1126 = vunpack.c.l.b16 %v261
  %v1127 = vunpack.c.h.b16 %v261
  %v1128 = vunpack.c.l.b16 %v262
  %v1129 = vunpack.c.h.b16 %v262
  %v1130 = vunpack.c.l.b16 %v263
  %v1131 = vunpack.c.h.b16 %v263
  %v1132 = vunpack.c.l.b16 %v264
  %v1133 = vunpack.c.h.b16 %v264
  %v1134 = vunpack.c.l.b16 %v265
  %v1135 = vunpack.c.h.b16 %v265
  %v1136 = vunpack.c.l.b16 %v266
  %v1137 = vunpack.c.h.b16 %v266
  %v1138 = vunpack.c.l.b16 %v267
  %v1139 = vunpack.c.h.b16 %v267
  %v1140 = vunpack.c.l.b16 %v268
  %v1141 = vunpack.c.h.b16 %v268
  %v1142 = vunpack.c.l.b16 %v269
  %v1143 = vunpack.c.h.b16 %v269
  %v1144 = vunpack.c.l.b16 %v270
  %v1145 = vunpack.c.h.b16 %v270
  %v1146 = vunpack.c.l.b16 %v271
  %v1147 = vunpack.c.h.b16 %v271
  %v1148 = vunpack.c.l.b16 %v272
  %v1149 = vunpack.c.h.b16 %v272
  %v1150 = vunpack.c.l.b16 %v273
  %v1151 = vunpack.c.h.b16 %v273
  %v1152 = vunpack.c.l.b16 %v274
  %v1153 = vunpack.c.h.b16 %v274
  %v1154 = vunpack.c.l.b16 %v275
  %v1155 = vunpack.c.h.b16 %v275
  %v1156 = vunpack.c.l.b16 %v276
  %v1157 = vunpack.c.h.b16 %v276
  %v1158 = vunpack.c.l.b16 %v277
  %v1159 = vunpack.c.h.b16 %v277
  %v1160 = vunpack.c.l.b16 %v278
  %v1161 = vunpack.c.h.b16 %v278
  %v1162 = vunpack.c.l.b16 %v279
  %v1163 = vunpack.c.h.b16 %v279
  %v1164 = vunpack.c.l.b16 %v280
  %v1165 = vunpack.c.h.b16 %v280
  %v1166 = vunpack.c.l.b16 %v281
  %v1167 = vunpack.c.h.b16 %v281
  %v1168 = vunpack.c.l.b16 %v282
  %v1169 = vunpack.c.h.b16 %v282
  %v1170 = vunpack.c.l.b16 %v283
  %v1171 = vunpack.c.h.b16 %v283
  %v1172 = vunpack.c.l.b16 %v284
  %v1173 = vunpack.c.h.b16 %v284
  %v1174 = vunpack.c.l.b16 %v285
  %v1175 = vunpack.c.h.b16 %v285
  %v1176 = vunpack.c.l.b16 %v286
  %v1177 = vunpack.c.h.b16 %v286
  %v1178 = vunpack.c.l.b16 %v287
  %v1179 = vunpack.c.h.b16 %v287
  %v1180 = vunpack.c.l.b16 %v288
  %v1181 = vunpack.c.h.b16 %v288
  %v1182 = vunpack.c.l.b16 %v289
  %v1183 = vunpack.c.h.b16 %v289
  %v1184 = vunpack.c.l.b16 %v290
  %v1185 = vunpack.c.h.b16 %v290
  %v1186 = vunpack.c.l.b16 %v291
  %v1187 = vunpack.c.h.b16 %v291
  %v1188 = vunpack.c.l.b16 %v292
  %v1189 = vunpack.c.h.b16 %v292
  %v1190 = vunpack.c.l.b16 %v293
  %v1191 = vunpack.c.h.b16 %v293
  %v1192 = vunpack.c.l.b16 %v294
  %v1193 = vunpack.c.h.b16 %v294
  %v1194 = vunpack.c.l.b16 %v295
  %v1195 = vunpack.c.h.b16 %v295
  %v1196 = vunpack.c.l.b16 %v296
  %v1197 = vunpack.c.h.b16 %v296
  %v1198 = vunpack.c.l.b16 %v297
  %v1199 = vunpack.c.h.b16 %v297
  %v1200 = vunpack.c.l.b16 %v298
  %v1201 = vunpack.c.h.b16 %v298
  %v1202 = vunpack.c.l.b16 %v299
  %v1203 = vunpack.c.h.b16 %v299
  %v1204 = vunpack.c.l.b16 %v300
  %v1205 = vunpack.c.h.b16 %v300
  %v1206 = vunpack.c.l.b16 %v301
  %v1207 = vunpack.c.h.b16 %v301
  %v1208 = vunpack.c.l.b16 %v302
  %v1209 = vunpack.c.h.b16 %v302
  %v1210 = vunpack.c.l.b16 %v303
  %v1211 = vunpack.c.h.b16 %v303
  %v1212 = vunpack.c.l.b16 %v304
  %v1213 = vunpack.c.h.b16 %v304
  %v1214 = vunpack.c.l.b16 %v305
  %v1215 = vunpack.c.h.b16 %v305
  %v1216 = vunpack.c.l.b16 %v306
  %v1217 = vunpack.c.h.b16 %v306
  %v1218 = vunpack.c.l.b16 %v307
  %v1219 = vunpack.c.h.b16 %v307
  %v1220 = vunpack.c.l.b16 %v308
  %v1221 = vunpack.c.h.b16 %v308
  %v1222 = vunpack.c.l.b16 %v309
  %v1223 = vunpack.c.h.b16 %v309
  %v1224 = vunpack.c.l.b16 %v310
  %v1225 = vunpack.c.h.b16 %v310
  %v1226 = vunpack.c.l.b16 %v311
  %v1227 = vunpack.c.h.b16 %v311
  %v1228 = vunpack.c.l.b16 %v312
  %v1229 = vunpack.c.h.b16 %v312
  %v1230 = vunpack.c.l.b16 %v313
  %v1231 = vunpack.c.h.b16 %v313
  %v1232 = vpack.c.b16 %v660, %v656
  %v1233 = vpack.c.b16 %v661, %v657
  %v1234 = vpack.c.b16 %v662, %v658
  %v1235 = vpack.c.b16 %v663, %v659
  %v1236 = vpack.c.b16 %v668, %v664
  %v1237 = vpack.c.b16 %v669, %v665
  %v1238 = vpack.c.b16 %v670, %v666
  %v1239 = vpack.c.b16 %v671, %v667
  %v1240 = vpack.c.b16 %v676, %v672
  %v1241 = vpack.c.b16 %v677, %v673
  %v1242 = vpack.c.b16 %v678, %v674
  %v1243 = vpack.c.b16 %v679, %v675
  %v1244 = vpack.c.b16 %v684, %v680
  %v1245 = vpack.c.b16 %v685, %v681
  %v1246 = vpack.c.b16 %v686, %v682
  %v1247 = vpack.c.b16 %v687, %v683
  %v1248 = vpack.c.b16 %v692, %v688
  %v1249 = vpack.c.b16 %v693, %v689
  %v1250 = vpack.c.b16 %v694, %v690
  %v1251 = vpack.c.b16 %v695, %v691
  %v1252 = vpack.c.b16 %v700, %v696
  %v1253 = vpack.c.b16 %v701, %v697
  %v1254 = vpack.c.b16 %v702, %v698
  %v1255 = vpack.c.b16 %v703, %v699
  %v1256 = vpack.c.b16 %v708, %v704
  %v1257 = vpack.c.b16 %v709, %v705
  %v1258 = vpack.c.b16 %v710, %v706
  %v1259 = vpack.c.b16 %v711, %v707
  %v1260 = vpack.c.b16 %v716, %v712
  %v1261 = vpack.c.b16 %v717, %v713
  %v1262 = vpack.c.b16 %v718, %v714
  %v1263 = vpack.c.b16 %v719, %v715
  %v1264 = vpack.c.b16 %v724, %v720
  %v1265 = vpack.c.b16 %v725, %v721
  %v1266 = vpack.c.b16 %v726, %v722
  %v1267 = vpack.c.b16 %v727, %v723
  %v1268 = vpack.c.b16 %v732, %v728
  %v1269 = vpack.c.b16 %v733, %v729
  %v1270 = vpack.c.b16 %v734, %v730
  %v1271 = vpack.c.b16 %v735, %v731
  %v1272 = vpack.c.b16 %v740, %v736
  %v1273 = vpack.c.b16 %v741, %v737
  %v1274 = vpack.c.b16 %v742, %v738
  %v1275 = vpack.c.b16 %v743, %v739
  %v1276 = vpack.c.b16 %v748, %v744
  %v1277 = vpack.c.b16 %v749, %v745
  %v1278 = vpack.c.b16 %v750, %v746
  %v1279 = vpack.c.b16 %v751, %v747
  %v1280 = vpack.c.b16 %v756, %v752
  %v1281 = vpack.c.b16 %v757, %v753
  %v1282 = vpack.c.b16 %v758, %v754
  %v1283 = vpack.c.b16 %v759, %v755
  %v1284 = vpack.c.b16 %v764, %v760
  %v1285 = vpack.c.b16 %v765, %v761
  %v1286 = vpack.c.b16 %v766, %v762
  %v1287 = vpack.c.b16 %v767, %v763
  %v1288 = vpack.c.b16 %v772, %v768
  %v1289 = vpack.c.b16 %v773, %v769
  %v1290 = vpack.c.b16 %v774, %v770
  %v1291 = vpack.c.b16 %v775, %v771
  %v1292 = vpack.c.b16 %v780, %v776
  %v1293 = vpack.c.b16 %v781, %v777
  %v1294 = vpack.c.b16 %v782, %v778
  %v1295 = vpack.c.b16 %v783, %v779
  %v1296 = vpack.c.b16 %v788, %v784
  %v1297 = vpack.c.b16 %v789, %v785
  %v1298 = vpack.c.b16 %v790, %v786
  %v1299 = vpack.c.b16 %v791, %v787
  %v1300 = vpack.c.b16 %v796, %v792
  %v1301 = vpack.c.b16 %v797, %v793
  %v1302 = vpack.c.b16 %v798, %v794
  %v1303 = vpack.c.b16 %v799, %v795
  %v1304 = vpack.c.b16 %v804, %v800
  %v1305 = vpack.c.b16 %v805, %v801
  %v1306 = vpack.c.b16 %v806, %v802
  %v1307 = vpack.c.b16 %v807, %v803
  %v1308 = vpack.c.b16 %v812, %v808
  %v1309 = vpack.c.b16 %v813, %v809
  %v1310 = vpack.c.b16 %v814, %v810
  %v1311 = vpack.c.b16 %v815, %v811
  %v1312 = vpack.c.b16 %v820, %v816
  %v1313 = vpack.c.b16 %v821, %v817
  %v1314 = vpack.c.b16 %v822, %v818
  %v1315 = vpack.c.b16 %v823, %v819
  %v1316 = vpack.c.b16 %v828, %v824
  %v1317 = vpack.c.b16 %v829, %v825
  %v1318 = vpack.c.b16 %v830, %v826
  %v1319 = vpack.c.b16 %v831, %v827
  %v1320 = vpack.c.b16 %v836, %v832
  %v1321 = vpack.c.b16 %v837, %v833
  %v1322 = vpack.c.b16 %v838, %v834
  %v1323 = vpack.c.b16 %v839, %v835
  %v1324 = vpack.c.b16 %v844, %v840
  %v1325 = vpack.c.b16 %v845, %v841
  %v1326 = vpack.c.b16 %v846, %v842
  %v1327 = vpack.c.b16 %v847, %v843
  %v1328 = vpack.c.b16 %v852, %v848
  %v1329 = vpack.c.b16 %v853, %v849
  %v1330 = vpack.c.b16 %v854, %v850
  %v1331 = vpack.c.b16 %v855, %v851
  %v1332 = vpack.c.b16 %v860, %v856
  %v1333 = vpack.c.b16 %v861, %v857
  %v1334 = vpack.c.b16 %v862, %v858
  %v1335 = vpack.c.b16 %v863, %v859
  %v1336 = vpack.c.b16 %v868, %v864
  %v1337 = vpack.c.b16 %v869, %v865
  %v1338 = vpack.c.b16 %v870, %v866
  %v1339 = vpack.c.b16 %v871, %v867
  %v1340 = vpack.c.b16 %v876, %v872
  %v1341 = vpack.c.b16 %v877, %v873
  %v1342 = vpack.c.b16 %v878, %v874
  %v1343 = vpack.c.b16 %v879, %v875
  %v1344 = vpack.c.b16 %v884, %v880
  %v1345 = vpack.c.b16 %v885, %v881
  %v1346 = vpack.c.b16 %v886, %v882
  %v1347 = vpack.c.b16 %v887, %v883
  %v1348 = vpack.c.b16 %v892, %v888
  %v1349 = vpack.c.b16 %v893, %v889
  %v1350 = vpack.c.b16 %v894, %v890
  %v1351 = vpack.c.b16 %v895, %v891
  %v1352 = vpack.c.b16 %v900, %v896
  %v1353 = vpack.c.b16 %v901, %v897
  %v1354 = vpack.c.b16 %v902, %v898
  %v1355 = vpack.c.b16 %v903, %v899
  %v1356 = vpack.c.b16 %v908, %v904
  %v1357 = vpack.c.b16 %v909, %v905
  %v1358 = vpack.c.b16 %v910, %v906
  %v1359 = vpack.c.b16 %v911, %v907
  %v1360 = vpack.c.b16 %v916, %v912
  %v1361 = vpack.c.b16 %v917, %v913
  %v1362 = vpack.c.b16 %v918, %v914
  %v1363 = vpack.c.b16 %v919, %v915
  %v1364 = vpack.c.b16 %v924, %v920
  %v1365 = vpack.c.b16 %v925, %v921
  %v1366 = vpack.c.b16 %v926, %v922
  %v1367 = vpack.c.b16 %v927, %v923
  %v1368 = vpack.c.b16 %v932, %v928
  %v1369 = vpack.c.b16 %v933, %v929
  %v1370 = vpack.c.b16 %v934, %v930
  %v1371 = vpack.c.b16 %v935, %v931
  %v1372 = vpack.c.b16 %v940, %v936
  %v1373 = vpack.c.b16 %v941, %v937
  %v1374 = vpack.c.b16 %v942, %v938
  %v1375 = vpack.c.b16 %v943, %v939
  %v1376 = vpack.c.b16 %v948, %v944
  %v1377 = vpack.c.b16 %v949, %v945
  %v1378 = vpack.c.b16 %v950, %v946
  %v1379 = vpack.c.b16 %v951, %v947
  %v1380 = vpack.c.b16 %v956, %v952
  %v1381 = vpack.c.b16 %v957, %v953
  %v1382 = vpack.c.b16 %v958, %v954
  %v1383 = vpack.c.b16 %v959, %v955
  %v1384 = vpack.c.b16 %v964, %v960
  %v1385 = vpack.c.b16 %v965, %v961
  %v1386 = vpack.c.b16 %v966, %v962
  %v1387 = vpack.c.b16 %v967, %v963
  %v1388 = vpack.c.b16 %v972, %v968
  %v1389 = vpack.c.b16 %v973, %v969
  %v1390 = vpack.c.b16 %v974, %v970
  %v1391 = vpack.c.b16 %v975, %v971
  %v1392 = vpack.c.b16 %v980, %v976
  %v1393 = vpack.c.b16 %v981, %v977
  %v1394 = vpack.c.b16 %v982, %v978
  %v1395 = vpack.c.b16 %v983, %v979
  %v1396 = vpack.c.b16 %v988, %v984
  %v1397 = vpack.c.b16 %v989, %v985
  %v1398 = vpack.c.b16 %v990, %v986
  %v1399 = vpack.c.b16 %v991, %v987
  %v1400 = vpack.c.b16 %v996, %v992
  %v1401 = vpack.c.b16 %v997, %v993
  %v1402 = vpack.c.b16 %v998, %v994
  %v1403 = vpack.c.b16 %v999, %v995
  %v1404 = vpack.c.b16 %v1004, %v1000
  %v1405 = vpack.c.b16 %v1005, %v1001
  %v1406 = vpack.c.b16 %v1006, %v1002
  %v1407 = vpack.c.b16 %v1007, %v1003
  %v1408 = vpack.c.b16 %v1012, %v1008
  %v1409 = vpack.c.b16 %v1013, %v1009
  %v1410 = vpack.c.b16 %v1014, %v1010
  %v1411 = vpack.c.b16 %v1015, %v1011
  %v1412 = vpack.c.b16 %v1020, %v1016
  %v1413 = vpack.c.b16 %v1021, %v1017
  %v1414 = vpack.c.b16 %v1022, %v1018
  %v1415 = vpack.c.b16 %v1023, %v1019
  %v1416 = vpack.c.b16 %v1028, %v1024
  %v1417 = vpack.c.b16 %v1029, %v1025
  %v1418 = vpack.c.b16 %v1030, %v1026
  %v1419 = vpack.c.b16 %v1031, %v1027
  %v1420 = vpack.c.b16 %v1036, %v1032
  %v1421 = vpack.c.b16 %v1037, %v1033
  %v1422 = vpack.c.b16 %v1038, %v1034
  %v1423 = vpack.c.b16 %v1039, %v1035
  %v1424 = vpack.c.b16 %v1044, %v1040
  %v1425 = vpack.c.b16 %v1045, %v1041
  %v1426 = vpack.c.b16 %v1046, %v1042
  %v1427 = vpack.c.b16 %v1047, %v1043
  %v1428 = vpack.c.b16 %v1052, %v1048
  %v1429 = vpack.c.b16 %v1053, %v1049
  %v1430 = vpack.c.b16 %v1054, %v1050
  %v1431 = vpack.c.b16 %v1055, %v1051
  %v1432 = vpack.c.b16 %v1060, %v1056
  %v1433 = vpack.c.b16 %v1061, %v1057
  %v1434 = vpack.c.b16 %v1062, %v1058
  %v1435 = vpack.c.b16 %v1063, %v1059
  %v1436 = vpack.c.b16 %v1068, %v1064
  %v1437 = vpack.c.b16 %v1069, %v1065
  %v1438 = vpack.c.b16 %v1070, %v1066
  %v1439 = vpack.c.b16 %v1071, %v1067
  %v1440 = vpack.c.b16 %v1076, %v1072
  %v1441 = vpack.c.b16 %v1077, %v1073
  %v1442 = vpack.c.b16 %v1078, %v1074
  %v1443 = vpack.c.b16 %v1079, %v1075
  %v1444 = vpack.c.b16 %v1084, %v1080
  %v1445 = vpack.c.b16 %v1085, %v1081
  %v1446 = vpack.c.b16 %v1086, %v1082
  %v1447 = vpack.c.b16 %v1087, %v1083
  %v1448 = vpack.c.b16 %v1092, %v1088
  %v1449 = vpack.c.b16 %v1093, %v1089
  %v1450 = vpack.c.b16 %v1094, %v1090
  %v1451 = vpack.c.b16 %v1095, %v1091
  %v1452 = vpack.c.b16 %v1100, %v1096
  %v1453 = vpack.c.b16 %v1101, %v1097
  %v1454 = vpack.c.b16 %v1102, %v1098
  %v1455 = vpack.c.b16 %v1103, %v1099
  %v1456 = vpack.c.b16 %v1108, %v1104
  %v1457 = vpack.c.b16 %v1109, %v1105
  %v1458 = vpack.c.b16 %v1110, %v1106
  %v1459 = vpack.c.b16 %v1111, %v1107
  %v1460 = vpack.c.b16 %v1116, %v1112
  %v1461 = vpack.c.b16 %v1117, %v1113
  %v1462 = vpack.c.b16 %v1118, %v1114
  %v1463 = vpack.c.b16 %v1119, %v1115
  %v1464 = vpack.c.b16 %v1124, %v1120
  %v1465 = vpack.c.b16 %v1125, %v1121
  %v1466 = vpack.c.b16 %v1126, %v1122
  %v1467 = vpack.c.b16 %v1127, %v1123
  %v1468 = vpack.c.b16 %v1132, %v1128
  %v1469 = vpack.c.b16 %v1133, %v1129
  %v1470 = vpack.c.b16 %v1134, %v1130
  %v1471 = vpack.c.b16 %v1135, %v1131
  %v1472 = vpack.c.b16 %v1140, %v1136
  %v1473 = vpack.c.b16 %v1141, %v1137
  %v1474 = vpack.c.b16 %v1142, %v1138
  %v1475 = vpack.c.b16 %v1143, %v1139
  %v1476 = vpack.c.b16 %v1148, %v1144
  %v1477 = vpack.c.b16 %v1149, %v1145
  %v1478 = vpack.c.b16 %v1150, %v1146
  %v1479 = vpack.c.b16 %v1151, %v1147
  %v1480 = vpack.c.b16 %v1156, %v1152
  %v1481 = vpack.c.b16 %v1157, %v1153
  %v1482 = vpack.c.b16 %v1158, %v1154
  %v1483 = vpack.c.b16 %v1159, %v1155
  %v1484 = vpack.c.b16 %v1164, %v1160
  %v1485 = vpack.c.b16 %v1165, %v1161
  %v1486 = vpack.c.b16 %v1166, %v1162
  %v1487 = vpack.c.b16 %v1167, %v1163
  %v1488 = vpack.c.b16 %v1172, %v1168
  %v1489 = vpack.c.b16 %v1173, %v1169
  %v1490 = vpack.c.b16 %v1174, %v1170
  %v1491 = vpack.c.b16 %v1175, %v1171
  %v1492 = vpack.c.b16 %v1180, %v1176
  %v1493 = vpack.c.b16 %v1181, %v1177
  %v1494 = vpack.c.b16 %v1182, %v1178
  %v1495 = vpack.c.b16 %v1183, %v1179
  %v1496 = vpack.c.b16 %v1188, %v1184
  %v1497 = vpack.c.b16 %v1189, %v1185
  %v1498 = vpack.c.b16 %v1190, %v1186
  %v1499 = vpack.c.b16 %v1191, %v1187
  %v1500 = vpack.c.b16 %v1196, %v1192
  %v1501 = vpack.c.b16 %v1197, %v1193
  %v1502 = vpack.c.b16 %v1198, %v1194
  %v1503 = vpack.c.b16 %v1199, %v1195
  %v1504 = vpack.c.b16 %v1204, %v1200
  %v1505 = vpack.c.b16 %v1205, %v1201
  %v1506 = vpack.c.b16 %v1206, %v1202
  %v1507 = vpack.c.b16 %v1207, %v1203
  %v1508 = vpack.c.b16 %v1212, %v1208
  %v1509 = vpack.c.b16 %v1213, %v1209
  %v1510 = vpack.c.b16 %v1214, %v1210
  %v1511 = vpack.c.b16 %v1215, %v1211
  %v1512 = vpack.c.b16 %v1220, %v1216
  %v1513 = vpack.c.b16 %v1221, %v1217
  %v1514 = vpack.c.b16 %v1222, %v1218
  %v1515 = vpack.c.b16 %v1223, %v1219
  %v1516 = vpack.c.b16 %v1228, %v1224
  %v1517 = vpack.c.b16 %v1229, %v1225
  %v1518 = vpack.c.b16 %v1230, %v1226
  %v1519 = vpack.c.b16 %v1231, %v1227
  %1808 = vmatprep.subr.bf16.mxu0 %v1233
  %1809 = vmatpush1.bf16.msra.mxu0 %v1232
  %1810 = vmatprep.subr.bf16.mxu0 %v1237
  %1811 = vmatpush1.bf16.msra.mxu0 %v1236
  %1812 = vmatprep.subr.bf16.mxu0 %v1241
  %1813 = vmatpush1.bf16.msra.mxu0 %v1240
  %1814 = vmatprep.subr.bf16.mxu0 %v1245
  %1815 = vmatpush1.bf16.msra.mxu0 %v1244
  %1816 = vmatprep.subr.bf16.mxu0 %v1249
  %1817 = vmatpush1.bf16.msra.mxu0 %v1248
  %1818 = vmatprep.subr.bf16.mxu0 %v1253
  %1819 = vmatpush1.bf16.msra.mxu0 %v1252
  %1820 = vmatprep.subr.bf16.mxu0 %v1257
  %1821 = vmatpush1.bf16.msra.mxu0 %v1256
  %1822 = vmatprep.subr.bf16.mxu0 %v1261
  %1823 = vmatpush1.bf16.msra.mxu0 %v1260
  %1824 = vmatprep.subr.bf16.mxu0 %v1265
  %1825 = vmatpush1.bf16.msra.mxu0 %v1264
  %1826 = vmatprep.subr.bf16.mxu0 %v1269
  %1827 = vmatpush1.bf16.msra.mxu0 %v1268
  %1828 = vmatprep.subr.bf16.mxu0 %v1273
  %1829 = vmatpush1.bf16.msra.mxu0 %v1272
  %1830 = vmatprep.subr.bf16.mxu0 %v1277
  %1831 = vmatpush1.bf16.msra.mxu0 %v1276
  %1832 = vmatprep.subr.bf16.mxu0 %v1281
  %1833 = vmatpush1.bf16.msra.mxu0 %v1280
  %1834 = vmatprep.subr.bf16.mxu0 %v1285
  %1835 = vmatpush1.bf16.msra.mxu0 %v1284
  %1836 = vmatprep.subr.bf16.mxu0 %v1289
  %1837 = vmatpush1.bf16.msra.mxu0 %v1288
  %1838 = vmatprep.subr.bf16.mxu0 %v1293
  %1839 = vmatpush1.bf16.msra.mxu0 %v1292
  %1840 = vmatprep.mubr.bf16.mxu0 %v351
  %1841 = vmatmul.mubr.bf16.gmra.mrb[0].mxu0 %v350
  %v1842 = vpop.f32.mrb[0].mxu0
  %v1843 = vadd.f32 %v319, %v1842
  %v1844 = vpop.f32.mrb[0].mxu0
  %v1845 = vadd.f32 %v323, %v1844
  %v1846 = vpop.f32.mrb[0].mxu0
  %v1847 = vpop.f32.mrb[0].mxu0
  %1848 = vdwg.mxu0
  %1849 = vmatprep.subr.bf16.mxu0 %v1297
  %1850 = vmatpush1.bf16.msra.mxu0 %v1296
  %1851 = vmatprep.subr.bf16.mxu0 %v1301
  %1852 = vmatpush1.bf16.msra.mxu0 %v1300
  %1853 = vmatprep.subr.bf16.mxu0 %v1305
  %1854 = vmatpush1.bf16.msra.mxu0 %v1304
  %1855 = vmatprep.subr.bf16.mxu0 %v1309
  %1856 = vmatpush1.bf16.msra.mxu0 %v1308
  %1857 = vmatprep.subr.bf16.mxu0 %v1313
  %1858 = vmatpush1.bf16.msra.mxu0 %v1312
  %1859 = vmatprep.subr.bf16.mxu0 %v1317
  %1860 = vmatpush1.bf16.msra.mxu0 %v1316
  %1861 = vmatprep.subr.bf16.mxu0 %v1321
  %1862 = vmatpush1.bf16.msra.mxu0 %v1320
  %1863 = vmatprep.subr.bf16.mxu0 %v1325
  %1864 = vmatpush1.bf16.msra.mxu0 %v1324
  %1865 = vmatprep.subr.bf16.mxu0 %v1329
  %1866 = vmatpush1.bf16.msra.mxu0 %v1328
  %1867 = vmatprep.subr.bf16.mxu0 %v1333
  %1868 = vmatpush1.bf16.msra.mxu0 %v1332
  %1869 = vmatprep.subr.bf16.mxu0 %v1337
  %1870 = vmatpush1.bf16.msra.mxu0 %v1336
  %1871 = vmatprep.subr.bf16.mxu0 %v1341
  %1872 = vmatpush1.bf16.msra.mxu0 %v1340
  %1873 = vmatprep.subr.bf16.mxu0 %v1345
  %1874 = vmatpush1.bf16.msra.mxu0 %v1344
  %1875 = vmatprep.subr.bf16.mxu0 %v1349
  %1876 = vmatpush1.bf16.msra.mxu0 %v1348
  %1877 = vmatprep.subr.bf16.mxu0 %v1353
  %1878 = vmatpush1.bf16.msra.mxu0 %v1352
  %1879 = vmatprep.subr.bf16.mxu0 %v1357
  %1880 = vmatpush1.bf16.msra.mxu0 %v1356
  %1881 = vmatprep.mubr.bf16.mxu0 %v353
  %1882 = vmatmul.mubr.bf16.gmra.mrb[0].mxu0 %v352
  %v1883 = vpop.f32.mrb[0].mxu0
  %v1884 = vadd.f32 %v1843, %v1883
  %v1885 = vpop.f32.mrb[0].mxu0
  %v1886 = vadd.f32 %v1845, %v1885
  %v1887 = vpop.f32.mrb[0].mxu0
  %v1888 = vpop.f32.mrb[0].mxu0
  %1889 = vdwg.mxu0
  %1890 = vmatprep.subr.bf16.mxu0 %v1361
  %1891 = vmatpush1.bf16.msra.mxu0 %v1360
  %1892 = vmatprep.subr.bf16.mxu0 %v1365
  %1893 = vmatpush1.bf16.msra.mxu0 %v1364
  %1894 = vmatprep.subr.bf16.mxu0 %v1369
  %1895 = vmatpush1.bf16.msra.mxu0 %v1368
  %1896 = vmatprep.subr.bf16.mxu0 %v1373
  %1897 = vmatpush1.bf16.msra.mxu0 %v1372
  %1898 = vmatprep.subr.bf16.mxu0 %v1377
  %1899 = vmatpush1.bf16.msra.mxu0 %v1376
  %1900 = vmatprep.subr.bf16.mxu0 %v1381
  %1901 = vmatpush1.bf16.msra.mxu0 %v1380
  %1902 = vmatprep.subr.bf16.mxu0 %v1385
  %1903 = vmatpush1.bf16.msra.mxu0 %v1384
  %1904 = vmatprep.subr.bf16.mxu0 %v1389
  %1905 = vmatpush1.bf16.msra.mxu0 %v1388
  %1906 = vmatprep.subr.bf16.mxu0 %v1393
  %1907 = vmatpush1.bf16.msra.mxu0 %v1392
  %1908 = vmatprep.subr.bf16.mxu0 %v1397
  %1909 = vmatpush1.bf16.msra.mxu0 %v1396
  %1910 = vmatprep.subr.bf16.mxu0 %v1401
  %1911 = vmatpush1.bf16.msra.mxu0 %v1400
  %1912 = vmatprep.subr.bf16.mxu0 %v1405
  %1913 = vmatpush1.bf16.msra.mxu0 %v1404
  %1914 = vmatprep.subr.bf16.mxu0 %v1409
  %1915 = vmatpush1.bf16.msra.mxu0 %v1408
  %1916 = vmatprep.subr.bf16.mxu0 %v1413
  %1917 = vmatpush1.bf16.msra.mxu0 %v1412
  %1918 = vmatprep.subr.bf16.mxu0 %v1417
  %1919 = vmatpush1.bf16.msra.mxu0 %v1416
  %1920 = vmatprep.subr.bf16.mxu0 %v1421
  %1921 = vmatpush1.bf16.msra.mxu0 %v1420
  %1922 = vmatprep.mubr.bf16.mxu0 %v355
  %1923 = vmatmul.mubr.bf16.gmra.mrb[0].mxu0 %v354
  %v1924 = vpop.f32.mrb[0].mxu0
  %v1925 = vadd.f32 %v1884, %v1924
  %v1926 = vpop.f32.mrb[0].mxu0
  %v1927 = vadd.f32 %v1886, %v1926
  %v1928 = vpop.f32.mrb[0].mxu0
  %v1929 = vpop.f32.mrb[0].mxu0
  %1930 = vdwg.mxu0
  %1931 = vmatprep.subr.bf16.mxu0 %v1425
  %1932 = vmatpush1.bf16.msra.mxu0 %v1424
  %1933 = vmatprep.subr.bf16.mxu0 %v1429
  %1934 = vmatpush1.bf16.msra.mxu0 %v1428
  %1935 = vmatprep.subr.bf16.mxu0 %v1433
  %1936 = vmatpush1.bf16.msra.mxu0 %v1432
  %1937 = vmatprep.subr.bf16.mxu0 %v1437
  %1938 = vmatpush1.bf16.msra.mxu0 %v1436
  %1939 = vmatprep.subr.bf16.mxu0 %v1441
  %1940 = vmatpush1.bf16.msra.mxu0 %v1440
  %1941 = vmatprep.subr.bf16.mxu0 %v1445
  %1942 = vmatpush1.bf16.msra.mxu0 %v1444
  %1943 = vmatprep.subr.bf16.mxu0 %v1449
  %1944 = vmatpush1.bf16.msra.mxu0 %v1448
  %1945 = vmatprep.subr.bf16.mxu0 %v1453
  %1946 = vmatpush1.bf16.msra.mxu0 %v1452
  %1947 = vmatprep.subr.bf16.mxu0 %v1457
  %1948 = vmatpush1.bf16.msra.mxu0 %v1456
  %1949 = vmatprep.subr.bf16.mxu0 %v1461
  %1950 = vmatpush1.bf16.msra.mxu0 %v1460
  %1951 = vmatprep.subr.bf16.mxu0 %v1465
  %1952 = vmatpush1.bf16.msra.mxu0 %v1464
  %1953 = vmatprep.subr.bf16.mxu0 %v1469
  %1954 = vmatpush1.bf16.msra.mxu0 %v1468
  %1955 = vmatprep.subr.bf16.mxu0 %v1473
  %1956 = vmatpush1.bf16.msra.mxu0 %v1472
  %1957 = vmatprep.subr.bf16.mxu0 %v1477
  %1958 = vmatpush1.bf16.msra.mxu0 %v1476
  %1959 = vmatprep.subr.bf16.mxu0 %v1481
  %1960 = vmatpush1.bf16.msra.mxu0 %v1480
  %1961 = vmatprep.subr.bf16.mxu0 %v1485
  %1962 = vmatpush1.bf16.msra.mxu0 %v1484
  %1963 = vmatprep.mubr.bf16.mxu0 %v357
  %1964 = vmatmul.mubr.bf16.gmra.mrb[0].mxu0 %v356
  %v1965 = vpop.f32.mrb[0].mxu0
  %v1966 = vadd.f32 %v1925, %v1965
  %v1967 = vpop.f32.mrb[0].mxu0
  %v1968 = vadd.f32 %v1927, %v1967
  %v1969 = vpop.f32.mrb[0].mxu0
  %v1970 = vpop.f32.mrb[0].mxu0
  %1971 = vdwg.mxu0
  %1972 = vmatprep.subr.bf16.mxu0 %v1489
  %1973 = vmatpush1.bf16.msra.mxu0 %v1488
  %1974 = vmatprep.subr.bf16.mxu0 %v1493
  %1975 = vmatpush1.bf16.msra.mxu0 %v1492
  %1976 = vmatprep.subr.bf16.mxu0 %v1497
  %1977 = vmatpush1.bf16.msra.mxu0 %v1496
  %1978 = vmatprep.subr.bf16.mxu0 %v1501
  %1979 = vmatpush1.bf16.msra.mxu0 %v1500
  %1980 = vmatprep.subr.bf16.mxu0 %v1505
  %1981 = vmatpush1.bf16.msra.mxu0 %v1504
  %1982 = vmatprep.subr.bf16.mxu0 %v1509
  %1983 = vmatpush1.bf16.msra.mxu0 %v1508
  %1984 = vmatprep.subr.bf16.mxu0 %v1513
  %1985 = vmatpush1.bf16.msra.mxu0 %v1512
  %1986 = vmatprep.subr.bf16.mxu0 %v1517
  %1987 = vmatpush1.bf16.msra.mxu0 %v1516
  %1988 = vmatprep.subr.bf16.mxu0 0
  %1989 = vmatpush1.bf16.msra.mxu0 0
  %1990 = vmatprep.subr.bf16.mxu0 0
  %1991 = vmatpush1.bf16.msra.mxu0 0
  %1992 = vmatprep.subr.bf16.mxu0 0
  %1993 = vmatpush1.bf16.msra.mxu0 0
  %1994 = vmatprep.subr.bf16.mxu0 0
  %1995 = vmatpush1.bf16.msra.mxu0 0
  %1996 = vmatprep.subr.bf16.mxu0 0
  %1997 = vmatpush1.bf16.msra.mxu0 0
  %1998 = vmatprep.subr.bf16.mxu0 0
  %1999 = vmatpush1.bf16.msra.mxu0 0
  %2000 = vmatprep.subr.bf16.mxu0 0
  %2001 = vmatpush1.bf16.msra.mxu0 0
  %2002 = vmatprep.subr.bf16.mxu0 0
  %2003 = vmatpush1.bf16.msra.mxu0 0
  %2004 = vmatprep.mubr.bf16.mxu0 0
  %2005 = vmatmul.mubr.bf16.gmra.mrb[0].mxu0 %v358
  %v2006 = vpop.f32.mrb[0].mxu0
  %v2007 = vadd.f32 %v1966, %v2006
  %v2008 = vpop.f32.mrb[0].mxu0
  %v2009 = vadd.f32 %v1968, %v2008
  %v2010 = vpop.f32.mrb[0].mxu0
  %v2011 = vpop.f32.mrb[0].mxu0
  %2012 = vdwg.mxu0
  %2013 = vmatprep.subr.bf16.mxu0 %v1235
  %2014 = vmatpush1.bf16.msra.mxu0 %v1234
  %2015 = vmatprep.subr.bf16.mxu0 %v1239
  %2016 = vmatpush1.bf16.msra.mxu0 %v1238
  %2017 = vmatprep.subr.bf16.mxu0 %v1243
  %2018 = vmatpush1.bf16.msra.mxu0 %v1242
  %2019 = vmatprep.subr.bf16.mxu0 %v1247
  %2020 = vmatpush1.bf16.msra.mxu0 %v1246
  %2021 = vmatprep.subr.bf16.mxu0 %v1251
  %2022 = vmatpush1.bf16.msra.mxu0 %v1250
  %2023 = vmatprep.subr.bf16.mxu0 %v1255
  %2024 = vmatpush1.bf16.msra.mxu0 %v1254
  %2025 = vmatprep.subr.bf16.mxu0 %v1259
  %2026 = vmatpush1.bf16.msra.mxu0 %v1258
  %2027 = vmatprep.subr.bf16.mxu0 %v1263
  %2028 = vmatpush1.bf16.msra.mxu0 %v1262
  %2029 = vmatprep.subr.bf16.mxu0 %v1267
  %2030 = vmatpush1.bf16.msra.mxu0 %v1266
  %2031 = vmatprep.subr.bf16.mxu0 %v1271
  %2032 = vmatpush1.bf16.msra.mxu0 %v1270
  %2033 = vmatprep.subr.bf16.mxu0 %v1275
  %2034 = vmatpush1.bf16.msra.mxu0 %v1274
  %2035 = vmatprep.subr.bf16.mxu0 %v1279
  %2036 = vmatpush1.bf16.msra.mxu0 %v1278
  %2037 = vmatprep.subr.bf16.mxu0 %v1283
  %2038 = vmatpush1.bf16.msra.mxu0 %v1282
  %2039 = vmatprep.subr.bf16.mxu0 %v1287
  %2040 = vmatpush1.bf16.msra.mxu0 %v1286
  %2041 = vmatprep.subr.bf16.mxu0 %v1291
  %2042 = vmatpush1.bf16.msra.mxu0 %v1290
  %2043 = vmatprep.subr.bf16.mxu0 %v1295
  %2044 = vmatpush1.bf16.msra.mxu0 %v1294
  %2045 = vmatprep.mubr.bf16.mxu0 %v351
  %2046 = vmatmul.mubr.bf16.gmra.mrb[0].mxu0 %v350
  %v2047 = vpop.f32.mrb[0].mxu0
  %v2048 = vadd.f32 %v327, %v2047
  %v2049 = vpop.f32.mrb[0].mxu0
  %v2050 = vadd.f32 %v331, %v2049
  %v2051 = vpop.f32.mrb[0].mxu0
  %v2052 = vpop.f32.mrb[0].mxu0
  %2053 = vdwg.mxu0
  %2054 = vmatprep.subr.bf16.mxu0 %v1299
  %2055 = vmatpush1.bf16.msra.mxu0 %v1298
  %2056 = vmatprep.subr.bf16.mxu0 %v1303
  %2057 = vmatpush1.bf16.msra.mxu0 %v1302
  %2058 = vmatprep.subr.bf16.mxu0 %v1307
  %2059 = vmatpush1.bf16.msra.mxu0 %v1306
  %2060 = vmatprep.subr.bf16.mxu0 %v1311
  %2061 = vmatpush1.bf16.msra.mxu0 %v1310
  %2062 = vmatprep.subr.bf16.mxu0 %v1315
  %2063 = vmatpush1.bf16.msra.mxu0 %v1314
  %2064 = vmatprep.subr.bf16.mxu0 %v1319
  %2065 = vmatpush1.bf16.msra.mxu0 %v1318
  %2066 = vmatprep.subr.bf16.mxu0 %v1323
  %2067 = vmatpush1.bf16.msra.mxu0 %v1322
  %2068 = vmatprep.subr.bf16.mxu0 %v1327
  %2069 = vmatpush1.bf16.msra.mxu0 %v1326
  %2070 = vmatprep.subr.bf16.mxu0 %v1331
  %2071 = vmatpush1.bf16.msra.mxu0 %v1330
  %2072 = vmatprep.subr.bf16.mxu0 %v1335
  %2073 = vmatpush1.bf16.msra.mxu0 %v1334
  %2074 = vmatprep.subr.bf16.mxu0 %v1339
  %2075 = vmatpush1.bf16.msra.mxu0 %v1338
  %2076 = vmatprep.subr.bf16.mxu0 %v1343
  %2077 = vmatpush1.bf16.msra.mxu0 %v1342
  %2078 = vmatprep.subr.bf16.mxu0 %v1347
  %2079 = vmatpush1.bf16.msra.mxu0 %v1346
  %2080 = vmatprep.subr.bf16.mxu0 %v1351
  %2081 = vmatpush1.bf16.msra.mxu0 %v1350
  %2082 = vmatprep.subr.bf16.mxu0 %v1355
  %2083 = vmatpush1.bf16.msra.mxu0 %v1354
  %2084 = vmatprep.subr.bf16.mxu0 %v1359
  %2085 = vmatpush1.bf16.msra.mxu0 %v1358
  %2086 = vmatprep.mubr.bf16.mxu0 %v353
  %2087 = vmatmul.mubr.bf16.gmra.mrb[0].mxu0 %v352
  %v2088 = vpop.f32.mrb[0].mxu0
  %v2089 = vadd.f32 %v2048, %v2088
  %v2090 = vpop.f32.mrb[0].mxu0
  %v2091 = vadd.f32 %v2050, %v2090
  %v2092 = vpop.f32.mrb[0].mxu0
  %v2093 = vpop.f32.mrb[0].mxu0
  %2094 = vdwg.mxu0
  %2095 = vmatprep.subr.bf16.mxu0 %v1363
  %2096 = vmatpush1.bf16.msra.mxu0 %v1362
  %2097 = vmatprep.subr.bf16.mxu0 %v1367
  %2098 = vmatpush1.bf16.msra.mxu0 %v1366
  %2099 = vmatprep.subr.bf16.mxu0 %v1371
  %2100 = vmatpush1.bf16.msra.mxu0 %v1370
  %2101 = vmatprep.subr.bf16.mxu0 %v1375
  %2102 = vmatpush1.bf16.msra.mxu0 %v1374
  %2103 = vmatprep.subr.bf16.mxu0 %v1379
  %2104 = vmatpush1.bf16.msra.mxu0 %v1378
  %2105 = vmatprep.subr.bf16.mxu0 %v1383
  %2106 = vmatpush1.bf16.msra.mxu0 %v1382
  %2107 = vmatprep.subr.bf16.mxu0 %v1387
  %2108 = vmatpush1.bf16.msra.mxu0 %v1386
  %2109 = vmatprep.subr.bf16.mxu0 %v1391
  %2110 = vmatpush1.bf16.msra.mxu0 %v1390
  %2111 = vmatprep.subr.bf16.mxu0 %v1395
  %2112 = vmatpush1.bf16.msra.mxu0 %v1394
  %2113 = vmatprep.subr.bf16.mxu0 %v1399
  %2114 = vmatpush1.bf16.msra.mxu0 %v1398
  %2115 = vmatprep.subr.bf16.mxu0 %v1403
  %2116 = vmatpush1.bf16.msra.mxu0 %v1402
  %2117 = vmatprep.subr.bf16.mxu0 %v1407
  %2118 = vmatpush1.bf16.msra.mxu0 %v1406
  %2119 = vmatprep.subr.bf16.mxu0 %v1411
  %2120 = vmatpush1.bf16.msra.mxu0 %v1410
  %2121 = vmatprep.subr.bf16.mxu0 %v1415
  %2122 = vmatpush1.bf16.msra.mxu0 %v1414
  %2123 = vmatprep.subr.bf16.mxu0 %v1419
  %2124 = vmatpush1.bf16.msra.mxu0 %v1418
  %2125 = vmatprep.subr.bf16.mxu0 %v1423
  %2126 = vmatpush1.bf16.msra.mxu0 %v1422
  %2127 = vmatprep.mubr.bf16.mxu0 %v355
  %2128 = vmatmul.mubr.bf16.gmra.mrb[0].mxu0 %v354
  %v2129 = vpop.f32.mrb[0].mxu0
  %v2130 = vadd.f32 %v2089, %v2129
  %v2131 = vpop.f32.mrb[0].mxu0
  %v2132 = vadd.f32 %v2091, %v2131
  %v2133 = vpop.f32.mrb[0].mxu0
  %v2134 = vpop.f32.mrb[0].mxu0
  %2135 = vdwg.mxu0
  %2136 = vmatprep.subr.bf16.mxu0 %v1427
  %2137 = vmatpush1.bf16.msra.mxu0 %v1426
  %2138 = vmatprep.subr.bf16.mxu0 %v1431
  %2139 = vmatpush1.bf16.msra.mxu0 %v1430
  %2140 = vmatprep.subr.bf16.mxu0 %v1435
  %2141 = vmatpush1.bf16.msra.mxu0 %v1434
  %2142 = vmatprep.subr.bf16.mxu0 %v1439
  %2143 = vmatpush1.bf16.msra.mxu0 %v1438
  %2144 = vmatprep.subr.bf16.mxu0 %v1443
  %2145 = vmatpush1.bf16.msra.mxu0 %v1442
  %2146 = vmatprep.subr.bf16.mxu0 %v1447
  %2147 = vmatpush1.bf16.msra.mxu0 %v1446
  %2148 = vmatprep.subr.bf16.mxu0 %v1451
  %2149 = vmatpush1.bf16.msra.mxu0 %v1450
  %2150 = vmatprep.subr.bf16.mxu0 %v1455
  %2151 = vmatpush1.bf16.msra.mxu0 %v1454
  %2152 = vmatprep.subr.bf16.mxu0 %v1459
  %2153 = vmatpush1.bf16.msra.mxu0 %v1458
  %2154 = vmatprep.subr.bf16.mxu0 %v1463
  %2155 = vmatpush1.bf16.msra.mxu0 %v1462
  %2156 = vmatprep.subr.bf16.mxu0 %v1467
  %2157 = vmatpush1.bf16.msra.mxu0 %v1466
  %2158 = vmatprep.subr.bf16.mxu0 %v1471
  %2159 = vmatpush1.bf16.msra.mxu0 %v1470
  %2160 = vmatprep.subr.bf16.mxu0 %v1475
  %2161 = vmatpush1.bf16.msra.mxu0 %v1474
  %2162 = vmatprep.subr.bf16.mxu0 %v1479
  %2163 = vmatpush1.bf16.msra.mxu0 %v1478
  %2164 = vmatprep.subr.bf16.mxu0 %v1483
  %2165 = vmatpush1.bf16.msra.mxu0 %v1482
  %2166 = vmatprep.subr.bf16.mxu0 %v1487
  %2167 = vmatpush1.bf16.msra.mxu0 %v1486
  %2168 = vmatprep.mubr.bf16.mxu0 %v357
  %2169 = vmatmul.mubr.bf16.gmra.mrb[0].mxu0 %v356
  %v2170 = vpop.f32.mrb[0].mxu0
  %v2171 = vadd.f32 %v2130, %v2170
  %v2172 = vpop.f32.mrb[0].mxu0
  %v2173 = vadd.f32 %v2132, %v2172
  %v2174 = vpop.f32.mrb[0].mxu0
  %v2175 = vpop.f32.mrb[0].mxu0
  %2176 = vdwg.mxu0
  %2177 = vmatprep.subr.bf16.mxu0 %v1491
  %2178 = vmatpush1.bf16.msra.mxu0 %v1490
  %2179 = vmatprep.subr.bf16.mxu0 %v1495
  %2180 = vmatpush1.bf16.msra.mxu0 %v1494
  %2181 = vmatprep.subr.bf16.mxu0 %v1499
  %2182 = vmatpush1.bf16.msra.mxu0 %v1498
  %2183 = vmatprep.subr.bf16.mxu0 %v1503
  %2184 = vmatpush1.bf16.msra.mxu0 %v1502
  %2185 = vmatprep.subr.bf16.mxu0 %v1507
  %2186 = vmatpush1.bf16.msra.mxu0 %v1506
  %2187 = vmatprep.subr.bf16.mxu0 %v1511
  %2188 = vmatpush1.bf16.msra.mxu0 %v1510
  %2189 = vmatprep.subr.bf16.mxu0 %v1515
  %2190 = vmatpush1.bf16.msra.mxu0 %v1514
  %2191 = vmatprep.subr.bf16.mxu0 %v1519
  %2192 = vmatpush1.bf16.msra.mxu0 %v1518
  %2193 = vmatprep.subr.bf16.mxu0 0
  %2194 = vmatpush1.bf16.msra.mxu0 0
  %2195 = vmatprep.subr.bf16.mxu0 0
  %2196 = vmatpush1.bf16.msra.mxu0 0
  %2197 = vmatprep.subr.bf16.mxu0 0
  %2198 = vmatpush1.bf16.msra.mxu0 0
  %2199 = vmatprep.subr.bf16.mxu0 0
  %2200 = vmatpush1.bf16.msra.mxu0 0
  %2201 = vmatprep.subr.bf16.mxu0 0
  %2202 = vmatpush1.bf16.msra.mxu0 0
  %2203 = vmatprep.subr.bf16.mxu0 0
  %2204 = vmatpush1.bf16.msra.mxu0 0
  %2205 = vmatprep.subr.bf16.mxu0 0
  %2206 = vmatpush1.bf16.msra.mxu0 0
  %2207 = vmatprep.subr.bf16.mxu0 0
  %2208 = vmatpush1.bf16.msra.mxu0 0
  %2209 = vmatprep.mubr.bf16.mxu0 0
  %2210 = vmatmul.mubr.bf16.gmra.mrb[0].mxu0 %v358
  %v2211 = vpop.f32.mrb[0].mxu0
  %v2212 = vadd.f32 %v2171, %v2211
  %v2213 = vpop.f32.mrb[0].mxu0
  %v2214 = vadd.f32 %v2173, %v2213
  %v2215 = vpop.f32.mrb[0].mxu0
  %v2216 = vpop.f32.mrb[0].mxu0
  %2217 = vdwg.mxu0
  %v2218 = vpack.c.bf16 %v2007, %v2007
  %v2219 = vpack.c.bf16 %v2009, %v2009
  %v2220 = vpack.c.bf16 %v2212, %v2212
  %v2221 = vpack.c.bf16 %v2214, %v2214
  %v2222 = vld [vmem:[%s3] sm:$0xf]
  %v2223 = vld [vmem:[%s3 + $0x4] sm:$0xf]
  %v2224 = vld [vmem:[%s3 + $0x8] sm:$0xf]
  %v2225 = vld [vmem:[%s3 + $0xc] sm:$0xf]
  %v2226 = vld [vmem:[%s3 + $0x10] sm:$0xf]
  %v2227 = vld [vmem:[%s3 + $0x14] sm:$0xf]
  %v2228 = vld [vmem:[%s3 + $0x18] sm:$0xf]
  %v2229 = vld [vmem:[%s3 + $0x1c] sm:$0xf]
  %v2230 = vld [vmem:[%s3 + $0x20] sm:$0xf]
  %v2231 = vld [vmem:[%s3 + $0x24] sm:$0xf]
  %v2232 = vld [vmem:[%s3 + $0x28] sm:$0xf]
  %v2233 = vld [vmem:[%s3 + $0x2c] sm:$0xf]
  %v2234 = vld [vmem:[%s3 + $0x30] sm:$0xf]
  %v2235 = vld [vmem:[%s3 + $0x34] sm:$0xf]
  %v2236 = vld [vmem:[%s3 + $0x38] sm:$0xf]
  %v2237 = vld [vmem:[%s3 + $0x3c] sm:$0xf]
  %v2238 = vld [vmem:[%s3 + $0x40] sm:$0xf]
  %v2239 = vld [vmem:[%s3 + $0x44] sm:$0xf]
  %v2240 = vld [vmem:[%s3 + $0x48] sm:$0xf]
  %v2241 = vld [vmem:[%s3 + $0x4c] sm:$0xf]
  %v2242 = vld [vmem:[%s3 + $0x50] sm:$0xf]
  %v2243 = vld [vmem:[%s3 + $0x54] sm:$0xf]
  %v2244 = vld [vmem:[%s3 + $0x58] sm:$0xf]
  %v2245 = vld [vmem:[%s3 + $0x5c] sm:$0xf]
  %v2246 = vld [vmem:[%s3 + $0x60] sm:$0xf]
  %v2247 = vld [vmem:[%s3 + $0x64] sm:$0xf]
  %v2248 = vld [vmem:[%s3 + $0x68] sm:$0xf]
  %v2249 = vld [vmem:[%s3 + $0x6c] sm:$0xf]
  %v2250 = vld [vmem:[%s3 + $0x70] sm:$0xf]
  %v2251 = vld [vmem:[%s3 + $0x74] sm:$0xf]
  %v2252 = vld [vmem:[%s3 + $0x78] sm:$0xf]
  %v2253 = vld [vmem:[%s3 + $0x7c] sm:$0xf]
  %v2254 = vld [vmem:[%s3 + $0x80] sm:$0xf]
  %v2255 = vld [vmem:[%s3 + $0x84] sm:$0xf]
  %v2256 = vld [vmem:[%s3 + $0x88] sm:$0xf]
  %v2257 = vld [vmem:[%s3 + $0x8c] sm:$0xf]
  %v2258 = vld [vmem:[%s3 + $0x90] sm:$0xf]
  %v2259 = vld [vmem:[%s3 + $0x94] sm:$0xf]
  %v2260 = vld [vmem:[%s3 + $0x98] sm:$0xf]
  %v2261 = vld [vmem:[%s3 + $0x9c] sm:$0xf]
  %v2262 = vld [vmem:[%s3 + $0xa0] sm:$0xf]
  %v2263 = vld [vmem:[%s3 + $0xa4] sm:$0xf]
  %v2264 = vld [vmem:[%s3 + $0xa8] sm:$0xf]
  %v2265 = vld [vmem:[%s3 + $0xac] sm:$0xf]
  %v2266 = vld [vmem:[%s3 + $0xb0] sm:$0xf]
  %v2267 = vld [vmem:[%s3 + $0xb4] sm:$0xf]
  %v2268 = vld [vmem:[%s3 + $0xb8] sm:$0xf]
  %v2269 = vld [vmem:[%s3 + $0xbc] sm:$0xf]
  %v2270 = vld [vmem:[%s3 + $0xc0] sm:$0xf]
  %v2271 = vld [vmem:[%s3 + $0xc4] sm:$0xf]
  %v2272 = vld [vmem:[%s3 + $0xc8] sm:$0xf]
  %v2273 = vld [vmem:[%s3 + $0xcc] sm:$0xf]
  %v2274 = vld [vmem:[%s3 + $0xd0] sm:$0xf]
  %v2275 = vld [vmem:[%s3 + $0xd4] sm:$0xf]
  %v2276 = vld [vmem:[%s3 + $0xd8] sm:$0xf]
  %v2277 = vld [vmem:[%s3 + $0xdc] sm:$0xf]
  %v2278 = vld [vmem:[%s3 + $0xe0] sm:$0xf]
  %v2279 = vld [vmem:[%s3 + $0xe4] sm:$0xf]
  %v2280 = vld [vmem:[%s3 + $0xe8] sm:$0xf]
  %v2281 = vld [vmem:[%s3 + $0xec] sm:$0xf]
  %v2282 = vld [vmem:[%s3 + $0xf0] sm:$0xf]
  %v2283 = vld [vmem:[%s3 + $0xf4] sm:$0xf]
  %v2284 = vld [vmem:[%s3 + $0xf8] sm:$0xf]
  %v2285 = vld [vmem:[%s3 + $0xfc] sm:$0xf]
  %v2286 = vld [vmem:[%s4] sm:$0x1]
  %v2288 = vlaneseq
  %v2289 = vshrl.u32 %v2288, 7
  %v2290 = vsub.s32 0, %v2289
  %v2291 = vrot.slane %v2286, %v2290
  %v2357 = vunpack.c.l.b16 %v2222
  %v2358 = vunpack.c.l.b16 %v2223
  %v2359 = vunpack.c.l.b16 %v2224
  %v2360 = vunpack.c.l.b16 %v2225
  %v2361 = vunpack.c.l.b16 %v2226
  %v2362 = vunpack.c.l.b16 %v2227
  %v2363 = vunpack.c.l.b16 %v2228
  %v2364 = vunpack.c.l.b16 %v2229
  %v2365 = vunpack.c.l.b16 %v2230
  %v2366 = vunpack.c.l.b16 %v2231
  %v2367 = vunpack.c.l.b16 %v2232
  %v2368 = vunpack.c.l.b16 %v2233
  %v2369 = vunpack.c.l.b16 %v2234
  %v2370 = vunpack.c.l.b16 %v2235
  %v2371 = vunpack.c.l.b16 %v2236
  %v2372 = vunpack.c.l.b16 %v2237
  %v2373 = vunpack.c.l.b16 %v2238
  %v2374 = vunpack.c.l.b16 %v2239
  %v2375 = vunpack.c.l.b16 %v2240
  %v2376 = vunpack.c.l.b16 %v2241
  %v2377 = vunpack.c.l.b16 %v2242
  %v2378 = vunpack.c.l.b16 %v2243
  %v2379 = vunpack.c.l.b16 %v2244
  %v2380 = vunpack.c.l.b16 %v2245
  %v2381 = vunpack.c.l.b16 %v2246
  %v2382 = vunpack.c.l.b16 %v2247
  %v2383 = vunpack.c.l.b16 %v2248
  %v2384 = vunpack.c.l.b16 %v2249
  %v2385 = vunpack.c.l.b16 %v2250
  %v2386 = vunpack.c.l.b16 %v2251
  %v2387 = vunpack.c.l.b16 %v2252
  %v2388 = vunpack.c.l.b16 %v2253
  %v2389 = vunpack.c.l.b16 %v2254
  %v2390 = vunpack.c.l.b16 %v2255
  %v2391 = vunpack.c.l.b16 %v2256
  %v2392 = vunpack.c.l.b16 %v2257
  %v2393 = vunpack.c.l.b16 %v2258
  %v2394 = vunpack.c.l.b16 %v2259
  %v2395 = vunpack.c.l.b16 %v2260
  %v2396 = vunpack.c.l.b16 %v2261
  %v2397 = vunpack.c.l.b16 %v2262
  %v2398 = vunpack.c.l.b16 %v2263
  %v2399 = vunpack.c.l.b16 %v2264
  %v2400 = vunpack.c.l.b16 %v2265
  %v2401 = vunpack.c.l.b16 %v2266
  %v2402 = vunpack.c.l.b16 %v2267
  %v2403 = vunpack.c.l.b16 %v2268
  %v2404 = vunpack.c.l.b16 %v2269
  %v2405 = vunpack.c.l.b16 %v2270
  %v2406 = vunpack.c.l.b16 %v2271
  %v2407 = vunpack.c.l.b16 %v2272
  %v2408 = vunpack.c.l.b16 %v2273
  %v2409 = vunpack.c.l.b16 %v2274
  %v2410 = vunpack.c.l.b16 %v2275
  %v2411 = vunpack.c.l.b16 %v2276
  %v2412 = vunpack.c.l.b16 %v2277
  %v2413 = vunpack.c.l.b16 %v2278
  %v2414 = vunpack.c.l.b16 %v2279
  %v2415 = vunpack.c.l.b16 %v2280
  %v2416 = vunpack.c.l.b16 %v2281
  %v2417 = vunpack.c.l.b16 %v2282
  %v2418 = vunpack.c.l.b16 %v2283
  %v2419 = vunpack.c.l.b16 %v2284
  %v2420 = vunpack.c.l.b16 %v2285
  %v2421 = vpack.c.b16 %v2358, %v2357
  %v2422 = vpack.c.b16 %v2360, %v2359
  %v2423 = vpack.c.b16 %v2362, %v2361
  %v2424 = vpack.c.b16 %v2364, %v2363
  %v2425 = vpack.c.b16 %v2366, %v2365
  %v2426 = vpack.c.b16 %v2368, %v2367
  %v2427 = vpack.c.b16 %v2370, %v2369
  %v2428 = vpack.c.b16 %v2372, %v2371
  %v2429 = vpack.c.b16 %v2374, %v2373
  %v2430 = vpack.c.b16 %v2376, %v2375
  %v2431 = vpack.c.b16 %v2378, %v2377
  %v2432 = vpack.c.b16 %v2380, %v2379
  %v2433 = vpack.c.b16 %v2382, %v2381
  %v2434 = vpack.c.b16 %v2384, %v2383
  %v2435 = vpack.c.b16 %v2386, %v2385
  %v2436 = vpack.c.b16 %v2388, %v2387
  %v2437 = vpack.c.b16 %v2390, %v2389
  %v2438 = vpack.c.b16 %v2392, %v2391
  %v2439 = vpack.c.b16 %v2394, %v2393
  %v2440 = vpack.c.b16 %v2396, %v2395
  %v2441 = vpack.c.b16 %v2398, %v2397
  %v2442 = vpack.c.b16 %v2400, %v2399
  %v2443 = vpack.c.b16 %v2402, %v2401
  %v2444 = vpack.c.b16 %v2404, %v2403
  %v2445 = vpack.c.b16 %v2406, %v2405
  %v2446 = vpack.c.b16 %v2408, %v2407
  %v2447 = vpack.c.b16 %v2410, %v2409
  %v2448 = vpack.c.b16 %v2412, %v2411
  %v2449 = vpack.c.b16 %v2414, %v2413
  %v2450 = vpack.c.b16 %v2416, %v2415
  %v2451 = vpack.c.b16 %v2418, %v2417
  %v2452 = vpack.c.b16 %v2420, %v2419
  %2485 = vmatprep.subr.bf16.mxu0 0
  %2486 = vmatpush1.bf16.msra.mxu0 %v2421
  %2487 = vmatprep.subr.bf16.mxu0 0
  %2488 = vmatpush1.bf16.msra.mxu0 %v2422
  %2489 = vmatprep.subr.bf16.mxu0 0
  %2490 = vmatpush1.bf16.msra.mxu0 %v2423
  %2491 = vmatprep.subr.bf16.mxu0 0
  %2492 = vmatpush1.bf16.msra.mxu0 %v2424
  %2493 = vmatprep.subr.bf16.mxu0 0
  %2494 = vmatpush1.bf16.msra.mxu0 %v2425
  %2495 = vmatprep.subr.bf16.mxu0 0
  %2496 = vmatpush1.bf16.msra.mxu0 %v2426
  %2497 = vmatprep.subr.bf16.mxu0 0
  %2498 = vmatpush1.bf16.msra.mxu0 %v2427
  %2499 = vmatprep.subr.bf16.mxu0 0
  %2500 = vmatpush1.bf16.msra.mxu0 %v2428
  %2501 = vmatprep.subr.bf16.mxu0 0
  %2502 = vmatpush1.bf16.msra.mxu0 %v2429
  %2503 = vmatprep.subr.bf16.mxu0 0
  %2504 = vmatpush1.bf16.msra.mxu0 %v2430
  %2505 = vmatprep.subr.bf16.mxu0 0
  %2506 = vmatpush1.bf16.msra.mxu0 %v2431
  %2507 = vmatprep.subr.bf16.mxu0 0
  %2508 = vmatpush1.bf16.msra.mxu0 %v2432
  %2509 = vmatprep.subr.bf16.mxu0 0
  %2510 = vmatpush1.bf16.msra.mxu0 %v2433
  %2511 = vmatprep.subr.bf16.mxu0 0
  %2512 = vmatpush1.bf16.msra.mxu0 %v2434
  %2513 = vmatprep.subr.bf16.mxu0 0
  %2514 = vmatpush1.bf16.msra.mxu0 %v2435
  %2515 = vmatprep.subr.bf16.mxu0 0
  %2516 = vmatpush1.bf16.msra.mxu0 %v2436
  %2517 = vmatprep.mubr.bf16.mxu0 %v2219
  %2518 = vmatmul.mubr.bf16.gmra.mrb[0].mxu0 %v2218
  %v2519 = vpop.f32.mrb[0].mxu0
  %v2520 = vadd.f32 %v2291, %v2519
  %v2521 = vpop.f32.mrb[0].mxu0
  %v2522 = vpop.f32.mrb[0].mxu0
  %v2523 = vpop.f32.mrb[0].mxu0
  %2524 = vdwg.mxu0
  %2525 = vmatprep.subr.bf16.mxu0 0
  %2526 = vmatpush1.bf16.msra.mxu0 %v2437
  %2527 = vmatprep.subr.bf16.mxu0 0
  %2528 = vmatpush1.bf16.msra.mxu0 %v2438
  %2529 = vmatprep.subr.bf16.mxu0 0
  %2530 = vmatpush1.bf16.msra.mxu0 %v2439
  %2531 = vmatprep.subr.bf16.mxu0 0
  %2532 = vmatpush1.bf16.msra.mxu0 %v2440
  %2533 = vmatprep.subr.bf16.mxu0 0
  %2534 = vmatpush1.bf16.msra.mxu0 %v2441
  %2535 = vmatprep.subr.bf16.mxu0 0
  %2536 = vmatpush1.bf16.msra.mxu0 %v2442
  %2537 = vmatprep.subr.bf16.mxu0 0
  %2538 = vmatpush1.bf16.msra.mxu0 %v2443
  %2539 = vmatprep.subr.bf16.mxu0 0
  %2540 = vmatpush1.bf16.msra.mxu0 %v2444
  %2541 = vmatprep.subr.bf16.mxu0 0
  %2542 = vmatpush1.bf16.msra.mxu0 %v2445
  %2543 = vmatprep.subr.bf16.mxu0 0
  %2544 = vmatpush1.bf16.msra.mxu0 %v2446
  %2545 = vmatprep.subr.bf16.mxu0 0
  %2546 = vmatpush1.bf16.msra.mxu0 %v2447
  %2547 = vmatprep.subr.bf16.mxu0 0
  %2548 = vmatpush1.bf16.msra.mxu0 %v2448
  %2549 = vmatprep.subr.bf16.mxu0 0
  %2550 = vmatpush1.bf16.msra.mxu0 %v2449
  %2551 = vmatprep.subr.bf16.mxu0 0
  %2552 = vmatpush1.bf16.msra.mxu0 %v2450
  %2553 = vmatprep.subr.bf16.mxu0 0
  %2554 = vmatpush1.bf16.msra.mxu0 %v2451
  %2555 = vmatprep.subr.bf16.mxu0 0
  %2556 = vmatpush1.bf16.msra.mxu0 %v2452
  %2557 = vmatprep.mubr.bf16.mxu0 %v2221
  %2558 = vmatmul.mubr.bf16.gmra.mrb[0].mxu0 %v2220
  %v2559 = vpop.f32.mrb[0].mxu0
  %v2560 = vadd.f32 %v2520, %v2559
  %v2561 = vpop.f32.mrb[0].mxu0
  %v2562 = vpop.f32.mrb[0].mxu0
  %v2563 = vpop.f32.mrb[0].mxu0
  %2564 = vdwg.mxu0
  %2565 = vst [vmem:[%s5] sm:$0xff] %v2560
  // Predicated region
  $region22: #{ppo_agent_forward.9} parent=0 // pred_check
    _
  $region23: #{ppo_agent_forward.9} parent=0 // pred_check_branch
    %2567 = sbr.rel (0) target = $region25
  $region24: #{ppo_agent_forward.9} parent=0 // pred_region
    _
  $region25: #{ppo_agent_forward.9} parent=0 // pred_fallthru
    _
  // Predicated region
  $region26: #{ppo_agent_forward.9} parent=0 // pred_check
    _
  $region27: #{ppo_agent_forward.9} parent=0 // pred_check_branch
    %2569 = sbr.rel (0) target = $region29
  $region28: #{ppo_agent_forward.9} parent=0 // pred_region
    _
  $region29: #{ppo_agent_forward.9} parent=0 // pred_fallthru
    _

</llo_original>
